<compile_context>
chip_gen: v7x
topology: tpu7x:2x2x1
jax: 0.10.0
libtpu: 0.0.40
codegen_flags: <defaults>
</compile_context>

<pallas_src>
import numpy as np

import jax
import jax.numpy as jnp
from jax import lax
from jax.experimental import pallas as pl


# ----------------------------------------------------------------------------
# Model configuration
# ----------------------------------------------------------------------------
IN_CHANNELS = 4                       # input image channels
BACKBONE_CHANNELS = [8, 16, 32]       # == in_channels_list passed to the FPN
OUT_CHANNELS = 16                     # FPN out_channels
BATCH = 2
HEIGHT = WIDTH = 16


# ----------------------------------------------------------------------------
# Parameter initialization (deterministic, synthetic)
# ----------------------------------------------------------------------------
def _init_conv(key, kh, kw, cin, cout):
    kw_key, kb_key = jax.random.split(key)
    scale = 1.0 / (kh * kw * cin) ** 0.5
    w = jax.random.uniform(kw_key, (kh, kw, cin, cout), jnp.float32, -scale, scale)
    b = jax.random.uniform(kb_key, (cout,), jnp.float32, -scale, scale)
    return w, b


def init_params(key):
    params = {}
    cin = IN_CHANNELS
    keys = jax.random.split(key, 3 * len(BACKBONE_CHANNELS))
    k = 0
    # synthetic backbone: three 3x3 stride-2 convs with ReLU
    for i, cout in enumerate(BACKBONE_CHANNELS):
        params[f"body_w{i}"], params[f"body_b{i}"] = _init_conv(keys[k], 3, 3, cin, cout)
        k += 1
        cin = cout
    # FPN inner (1x1) and layer (3x3) blocks
    for i, c in enumerate(BACKBONE_CHANNELS):
        params[f"inner_w{i}"], params[f"inner_b{i}"] = _init_conv(keys[k], 1, 1, c, OUT_CHANNELS)
        k += 1
        params[f"layer_w{i}"], params[f"layer_b{i}"] = _init_conv(keys[k], 3, 3, OUT_CHANNELS, OUT_CHANNELS)
        k += 1
    return params


# ----------------------------------------------------------------------------
# Constant 0/1 selection matrices (built once on the host, off the hot path)
# ----------------------------------------------------------------------------
def _conv_tap_select(hin, win, stride, ksize=3, pad=1):
    """Per-tap, PER-IMAGE gather matrices for a KxK conv: (K*K, Hout*Wout, Hin*Win)."""
    hout = (hin + 2 * pad - ksize) // stride + 1
    wout = (win + 2 * pad - ksize) // stride + 1
    g = np.zeros((ksize * ksize, hout * wout, hin * win), np.float32)
    for dy in range(ksize):
        for dx in range(ksize):
            t = dy * ksize + dx
            for oh in range(hout):
                ih = stride * oh + dy - pad
                if ih < 0 or ih >= hin:
                    continue                      # zero padding -> all-zero row
                for ow in range(wout):
                    iw = stride * ow + dx - pad
                    if iw < 0 or iw >= win:
                        continue
                    g[t, oh * wout + ow, ih * win + iw] = 1.0
    return g, hout, wout


def _upsample_select(hin, win):
    """2x nearest-neighbor upsample as a per-image (4*Hin*Win, Hin*Win) selection matrix."""
    hout, wout = 2 * hin, 2 * win
    u = np.zeros((hout * wout, hin * win), np.float32)
    for oh in range(hout):
        for ow in range(wout):
            u[oh * wout + ow, (oh // 2) * win + (ow // 2)] = 1.0
    return u


def _feature_sizes(height, width, n_levels):
    sizes = []
    h, w = height, width
    for _ in range(n_levels):
        h = (h + 2 - 3) // 2 + 1
        w = (w + 2 - 3) // 2 + 1
        sizes.append((h, w))
    return sizes


def prepare_operands(params, batch=BATCH, height=HEIGHT, width=WIDTH):
    """Pack weights / biases / selection matrices for the fused kernel.

    Activations are (H*W, N*C): the spatial gathers are per-image, the batch
    block-diagonal lives in the (tiny) channel-mixing weight matrices instead.
    """
    bf16, f32 = jnp.bfloat16, jnp.float32
    eye_n = np.eye(batch, dtype=np.float32)
    ops = []

    # spatial sizes of the three backbone levels
    sizes = [(height, width)]
    body_g = []
    for _ in BACKBONE_CHANNELS:
        g, hout, wout = _conv_tap_select(sizes[-1][0], sizes[-1][1], stride=2)
        body_g.append(g)
        sizes.append((hout, wout))
    feat_sizes = sizes[1:]                       # [(8,8), (4,4), (2,2)] for 16x16 input

    def bd_w_taps(w_taps):                       # (taps, cin, cout) -> (taps, N*cin, N*cout)
        return np.stack([np.kron(eye_n, t) for t in w_taps])

    def bd_b(b):                                 # (cout,) -> (1, N*cout)
        return np.tile(np.asarray(b, np.float32), batch).reshape(1, -1)

    # backbone convs (3x3, stride 2, pad 1) -- stride-2 / padding baked into gathers
    cin = IN_CHANNELS
    for i, cout in enumerate(BACKBONE_CHANNELS):
        w = np.asarray(params[f"body_w{i}"], np.float32).reshape(9, cin, cout)
        ops.append(jnp.asarray(body_g[i], bf16))                 # (9, HWout, HWin)
        ops.append(jnp.asarray(bd_w_taps(w), bf16))              # (9, N*cin, N*cout)
        ops.append(jnp.asarray(bd_b(params[f"body_b{i}"]), f32))
        cin = cout

    # FPN lateral 1x1 convs
    for i, c in enumerate(BACKBONE_CHANNELS):
        wi = np.asarray(params[f"inner_w{i}"], np.float32).reshape(c, OUT_CHANNELS)
        ops.append(jnp.asarray(np.kron(eye_n, wi), bf16))        # (N*c, N*out)
        ops.append(jnp.asarray(bd_b(params[f"inner_b{i}"]), f32))

    # FPN output 3x3 convs (stride 1, pad 1)
    for i, (fh, fw) in enumerate(feat_sizes):
        g, _, _ = _conv_tap_select(fh, fw, stride=1)
        wl = np.asarray(params[f"layer_w{i}"], np.float32).reshape(9, OUT_CHANNELS, OUT_CHANNELS)
        ops.append(jnp.asarray(g, bf16))
        ops.append(jnp.asarray(bd_w_taps(wl), bf16))
        ops.append(jnp.asarray(bd_b(params[f"layer_b{i}"]), f32))

    # top-down 2x nearest-upsample selectors (coarsest->mid, mid->finest), per-image
    ops.append(jnp.asarray(_upsample_select(*feat_sizes[2]), bf16))
    ops.append(jnp.asarray(_upsample_select(*feat_sizes[1]), bf16))
    return ops


# ----------------------------------------------------------------------------
# The single fused Pallas kernel
# ----------------------------------------------------------------------------
def _fused_fpn_kernel(
        x_ref,
        gb0_ref, wb0_ref, bb0_ref,
        gb1_ref, wb1_ref, bb1_ref,
        gb2_ref, wb2_ref, bb2_ref,
        wi0_ref, bi0_ref, wi1_ref, bi1_ref, wi2_ref, bi2_ref,
        gl0_ref, wl0_ref, bl0_ref,
        gl1_ref, wl1_ref, bl1_ref,
        gl2_ref, wl2_ref, bl2_ref,
        u1_ref, u0_ref,
        o0_ref, o1_ref, o2_ref, opool_ref):
    """Whole BackboneWithFPN forward; all intermediates stay VMEM/vreg-resident."""
    bf16, f32 = jnp.bfloat16, jnp.float32

    def conv3x3(x_b, g_ref, w_ref, b_ref, relu):
        # x_b:   (HWin, N*Cin)        bf16 activation slab
        # g_ref: (taps, HWout, HWin)  bf16 per-image gather (padding/stride baked in)
        # w_ref: (taps, N*Cin, N*Cout) bf16 batch-block-diag weights, b_ref: (1, N*Cout) f32
        taps, m_out, _ = g_ref.shape
        c_out = w_ref.shape[2]
        acc = jnp.zeros((m_out, c_out), f32)
        for t in range(taps):                       # one MXU matmul pair per tap
            gathered = jnp.dot(g_ref[t], x_b,
                               preferred_element_type=f32).astype(bf16)
            acc = acc + jnp.dot(gathered, w_ref[t], preferred_element_type=f32)
        acc = acc + b_ref[...]                      # bias hoisted out of the tap loop
        if relu:
            acc = jnp.maximum(acc, 0.0)
        return acc

    def conv1x1(x_b, w_ref, b_ref):                 # 1x1 conv == plain matmul
        return jnp.dot(x_b, w_ref[...], preferred_element_type=f32) + b_ref[...]

    # ---- backbone: three 3x3 / stride-2 / pad-1 convs with ReLU -------------
    x0 = x_ref[...]
    f0 = conv3x3(x0, gb0_ref, wb0_ref, bb0_ref, relu=True).astype(bf16)   # (64, N*8)
    f1 = conv3x3(f0, gb1_ref, wb1_ref, bb1_ref, relu=True).astype(bf16)   # (16, N*16)
    f2 = conv3x3(f1, gb2_ref, wb2_ref, bb2_ref, relu=True).astype(bf16)   # (4,  N*32)

    # ---- FPN lateral 1x1 convs ----------------------------------------------
    i0 = conv1x1(f0, wi0_ref, bi0_ref)                                    # (64, N*16)
    i1 = conv1x1(f1, wi1_ref, bi1_ref)                                    # (16, N*16)
    i2 = conv1x1(f2, wi2_ref, bi2_ref)                                    # (4,  N*16)

    # ---- FPN top-down pathway (upsample-add fused in VMEM) -------------------
    last2 = i2.astype(bf16)
    r2 = conv3x3(last2, gl2_ref, wl2_ref, bl2_ref, relu=False)            # (4,  N*16)

    up1 = jnp.dot(u1_ref[...], last2, preferred_element_type=f32)         # 2x nearest
    last1 = (i1 + up1).astype(bf16)
    r1 = conv3x3(last1, gl1_ref, wl1_ref, bl1_ref, relu=False)            # (16, N*16)

    up0 = jnp.dot(u0_ref[...], last1, preferred_element_type=f32)
    last0 = (i0 + up0).astype(bf16)
    r0 = conv3x3(last0, gl0_ref, wl0_ref, bl0_ref, relu=False)            # (64, N*16)

    o0_ref[...] = r0
    o1_ref[...] = r1
    o2_ref[...] = r2
    # extra_blocks = LastLevelMaxPool(): max_pool2d(k=1, s=2) on the 2x2 coarsest
    # map picks the (0,0) pixel == row 0 of the (H*W, N*C) slab (exact, no matmul).
    opool_ref[...] = r2[0:1, :]


# ----------------------------------------------------------------------------
# Forward pass: BackboneWithFPN.forward(x) == fpn(body(x)) -- one pallas_call
# ----------------------------------------------------------------------------
@jax.jit
def backbone_with_fpn_forward(x_nchw, ops):
    n, c, height, width = x_nchw.shape
    feat_sizes = _feature_sizes(height, width, len(BACKBONE_CHANNELS))
    # the in-kernel max-pool shortcut assumes the coarsest map is 2x2
    assert feat_sizes[-1] == (2, 2)

    # NCHW -> (H*W, N*C) slab: spatial in sublanes, batch x channels in lanes
    x_flat = jnp.transpose(x_nchw, (2, 3, 0, 1)).reshape(height * width, n * c)
    x_flat = x_flat.astype(jnp.bfloat16)

    out_shape = tuple(
        jax.ShapeDtypeStruct((h * w, n * OUT_CHANNELS), jnp.float32) for h, w in feat_sizes
    ) + (jax.ShapeDtypeStruct((1, n * OUT_CHANNELS), jnp.float32),)

    o0, o1, o2, opool = pl.pallas_call(
        _fused_fpn_kernel, out_shape=out_shape,
    )(x_flat, *ops)

    def to_nchw(flat, h, w):
        return flat.reshape(h, w, n, OUT_CHANNELS).transpose(2, 3, 0, 1)

    return {
        "0": to_nchw(o0, *feat_sizes[0]),
        "1": to_nchw(o1, *feat_sizes[1]),
        "2": to_nchw(o2, *feat_sizes[2]),
        "pool": to_nchw(opool, 1, 1),
    }


# ----------------------------------------------------------------------------
# Pure-JAX float32 reference (for the correctness check only)
# ----------------------------------------------------------------------------
def reference_forward(x_nchw, params):
    x = jnp.transpose(x_nchw, (0, 2, 3, 1)).astype(jnp.float32)

    def conv(v, w, b, stride, pad, relu):
        y = lax.conv_general_dilated(
            v, w, window_strides=(stride, stride),
            padding=[(pad, pad), (pad, pad)],
            dimension_numbers=("NHWC", "HWIO", "NHWC"))
        y = y + b
        return jnp.maximum(y, 0.0) if relu else y

    feats = []
    h = x
    for i in range(len(BACKBONE_CHANNELS)):
        h = conv(h, params[f"body_w{i}"], params[f"body_b{i}"], 2, 1, True)
        feats.append(h)

    inners = [conv(f, params[f"inner_w{i}"], params[f"inner_b{i}"], 1, 0, False)
              for i, f in enumerate(feats)]
    last = inners[-1]
    top = len(feats) - 1
    results = [conv(last, params[f"layer_w{top}"], params[f"layer_b{top}"], 1, 1, False)]
    for i in range(len(feats) - 2, -1, -1):
        up = jnp.repeat(jnp.repeat(last, 2, axis=1), 2, axis=2)
        last = inners[i] + up
        results.insert(0, conv(last, params[f"layer_w{i}"], params[f"layer_b{i}"], 1, 1, False))
    results.append(results[-1][:, ::2, ::2, :])
    names = [str(i) for i in range(len(feats))] + ["pool"]
    return {n: jnp.transpose(r, (0, 3, 1, 2)) for n, r in zip(names, results)}


# ----------------------------------------------------------------------------
if __name__ == "__main__":
    key = jax.random.PRNGKey(0)
    pkey, xkey = jax.random.split(key)
    params = init_params(pkey)

    x = jax.random.normal(xkey, (BATCH, IN_CHANNELS, HEIGHT, WIDTH), dtype=jnp.float32)  # NCHW

    ops = prepare_operands(params)          # one-time operand packing (off the hot path)
    out = backbone_with_fpn_forward(x, ops)
    out = jax.block_until_ready(out)

    expected = {"0": (BATCH, OUT_CHANNELS, 8, 8),
                "1": (BATCH, OUT_CHANNELS, 4, 4),
                "2": (BATCH, OUT_CHANNELS, 2, 2),
                "pool": (BATCH, OUT_CHANNELS, 1, 1)}
    for name, shp in expected.items():
        assert out[name].shape == shp, (name, out[name].shape, shp)
        assert bool(jnp.all(jnp.isfinite(out[name])))

    # numerical check vs. float32 XLA reference (kernel matmuls use bf16 inputs
    # with f32 accumulation -> allow a loose relative tolerance)
    ref = reference_forward(x, params)
    for name in expected:
        a = out[name].astype(jnp.float32)
        b = ref[name]
        rel = jnp.linalg.norm(a - b) / (jnp.linalg.norm(b) + 1e-12)
        assert float(rel) < 5e-2, (name, float(rel))

    print("KERNEL_OK")
</pallas_src>

<mosaic_0001>
module attributes {stable_mosaic.version = 11 : i64} {
  func.func @_fused_fpn_kernel(%arg0: memref<256x8xbf16, #tpu.memory_space<vmem>>, %arg1: memref<9x64x256xbf16, #tpu.memory_space<vmem>>, %arg2: memref<9x8x16xbf16, #tpu.memory_space<vmem>>, %arg3: memref<1x16xf32, #tpu.memory_space<vmem>>, %arg4: memref<9x16x64xbf16, #tpu.memory_space<vmem>>, %arg5: memref<9x16x32xbf16, #tpu.memory_space<vmem>>, %arg6: memref<1x32xf32, #tpu.memory_space<vmem>>, %arg7: memref<9x4x16xbf16, #tpu.memory_space<vmem>>, %arg8: memref<9x32x64xbf16, #tpu.memory_space<vmem>>, %arg9: memref<1x64xf32, #tpu.memory_space<vmem>>, %arg10: memref<16x32xbf16, #tpu.memory_space<vmem>>, %arg11: memref<1x32xf32, #tpu.memory_space<vmem>>, %arg12: memref<32x32xbf16, #tpu.memory_space<vmem>>, %arg13: memref<1x32xf32, #tpu.memory_space<vmem>>, %arg14: memref<64x32xbf16, #tpu.memory_space<vmem>>, %arg15: memref<1x32xf32, #tpu.memory_space<vmem>>, %arg16: memref<9x64x64xbf16, #tpu.memory_space<vmem>>, %arg17: memref<9x32x32xbf16, #tpu.memory_space<vmem>>, %arg18: memref<1x32xf32, #tpu.memory_space<vmem>>, %arg19: memref<9x16x16xbf16, #tpu.memory_space<vmem>>, %arg20: memref<9x32x32xbf16, #tpu.memory_space<vmem>>, %arg21: memref<1x32xf32, #tpu.memory_space<vmem>>, %arg22: memref<9x4x4xbf16, #tpu.memory_space<vmem>>, %arg23: memref<9x32x32xbf16, #tpu.memory_space<vmem>>, %arg24: memref<1x32xf32, #tpu.memory_space<vmem>>, %arg25: memref<16x4xbf16, #tpu.memory_space<vmem>>, %arg26: memref<64x16xbf16, #tpu.memory_space<vmem>>, %arg27: memref<64x32xf32, #tpu.memory_space<vmem>>, %arg28: memref<16x32xf32, #tpu.memory_space<vmem>>, %arg29: memref<4x32xf32, #tpu.memory_space<vmem>>, %arg30: memref<1x32xf32, #tpu.memory_space<vmem>>) attributes {dimension_semantics = [], scalar_prefetch = 0 : i64, scratch_operands = 0 : i64, tpu.core_type = #tpu.core_type<tc>} {
    %c0 = arith.constant 0 : index
    %c0_0 = arith.constant 0 : index
    %0 = vector.load %arg0[%c0, %c0_0] : memref<256x8xbf16, #tpu.memory_space<vmem>>, vector<256x8xbf16>
    %cst = arith.constant 0.000000e+00 : f32
    %1 = vector.broadcast %cst : f32 to vector<64x16xf32>
    %c0_1 = arith.constant 0 : index
    %c0_2 = arith.constant 0 : index
    %c0_3 = arith.constant 0 : index
    %2 = vector.load %arg1[%c0_1, %c0_2, %c0_3] : memref<9x64x256xbf16, #tpu.memory_space<vmem>>, vector<1x64x256xbf16>
    %3 = vector.shape_cast %2 : vector<1x64x256xbf16> to vector<64x256xbf16>
    %cst_4 = arith.constant dense<0.000000e+00> : vector<64x8xf32>
    %4 = tpu.matmul %3, %0, %cst_4 {dimension_numbers = #tpu.dot_dimension_numbers<[1], [0], [0], [1], [0, 0, 1, 1], [], []>} : vector<64x256xbf16>, vector<256x8xbf16>, vector<64x8xf32> -> vector<64x8xf32>
    %5 = arith.truncf %4 : vector<64x8xf32> to vector<64x8xbf16>
    %c0_5 = arith.constant 0 : index
    %c0_6 = arith.constant 0 : index
    %c0_7 = arith.constant 0 : index
    %6 = vector.load %arg2[%c0_5, %c0_6, %c0_7] : memref<9x8x16xbf16, #tpu.memory_space<vmem>>, vector<1x8x16xbf16>
    %7 = vector.shape_cast %6 : vector<1x8x16xbf16> to vector<8x16xbf16>
    %cst_8 = arith.constant dense<0.000000e+00> : vector<64x16xf32>
    %8 = tpu.matmul %5, %7, %cst_8 {dimension_numbers = #tpu.dot_dimension_numbers<[1], [0], [0], [1], [0, 0, 1, 1], [], []>} : vector<64x8xbf16>, vector<8x16xbf16>, vector<64x16xf32> -> vector<64x16xf32>
    %9 = arith.addf %1, %8 : vector<64x16xf32>
    %c1 = arith.constant 1 : index
    %c0_9 = arith.constant 0 : index
    %c0_10 = arith.constant 0 : index
    %10 = vector.load %arg1[%c1, %c0_9, %c0_10] : memref<9x64x256xbf16, #tpu.memory_space<vmem>>, vector<1x64x256xbf16>
    %11 = vector.shape_cast %10 : vector<1x64x256xbf16> to vector<64x256xbf16>
    %cst_11 = arith.constant dense<0.000000e+00> : vector<64x8xf32>
    %12 = tpu.matmul %11, %0, %cst_11 {dimension_numbers = #tpu.dot_dimension_numbers<[1], [0], [0], [1], [0, 0, 1, 1], [], []>} : vector<64x256xbf16>, vector<256x8xbf16>, vector<64x8xf32> -> vector<64x8xf32>
    %13 = arith.truncf %12 : vector<64x8xf32> to vector<64x8xbf16>
    %c1_12 = arith.constant 1 : index
    %c0_13 = arith.constant 0 : index
    %c0_14 = arith.constant 0 : index
    %14 = vector.load %arg2[%c1_12, %c0_13, %c0_14] : memref<9x8x16xbf16, #tpu.memory_space<vmem>>, vector<1x8x16xbf16>
    %15 = vector.shape_cast %14 : vector<1x8x16xbf16> to vector<8x16xbf16>
    %cst_15 = arith.constant dense<0.000000e+00> : vector<64x16xf32>
    %16 = tpu.matmul %13, %15, %cst_15 {dimension_numbers = #tpu.dot_dimension_numbers<[1], [0], [0], [1], [0, 0, 1, 1], [], []>} : vector<64x8xbf16>, vector<8x16xbf16>, vector<64x16xf32> -> vector<64x16xf32>
    %17 = arith.addf %9, %16 : vector<64x16xf32>
    %c2 = arith.constant 2 : index
    %c0_16 = arith.constant 0 : index
    %c0_17 = arith.constant 0 : index
    %18 = vector.load %arg1[%c2, %c0_16, %c0_17] : memref<9x64x256xbf16, #tpu.memory_space<vmem>>, vector<1x64x256xbf16>
    %19 = vector.shape_cast %18 : vector<1x64x256xbf16> to vector<64x256xbf16>
    %cst_18 = arith.constant dense<0.000000e+00> : vector<64x8xf32>
    %20 = tpu.matmul %19, %0, %cst_18 {dimension_numbers = #tpu.dot_dimension_numbers<[1], [0], [0], [1], [0, 0, 1, 1], [], []>} : vector<64x256xbf16>, vector<256x8xbf16>, vector<64x8xf32> -> vector<64x8xf32>
    %21 = arith.truncf %20 : vector<64x8xf32> to vector<64x8xbf16>
    %c2_19 = arith.constant 2 : index
    %c0_20 = arith.constant 0 : index
    %c0_21 = arith.constant 0 : index
    %22 = vector.load %arg2[%c2_19, %c0_20, %c0_21] : memref<9x8x16xbf16, #tpu.memory_space<vmem>>, vector<1x8x16xbf16>
    %23 = vector.shape_cast %22 : vector<1x8x16xbf16> to vector<8x16xbf16>
    %cst_22 = arith.constant dense<0.000000e+00> : vector<64x16xf32>
    %24 = tpu.matmul %21, %23, %cst_22 {dimension_numbers = #tpu.dot_dimension_numbers<[1], [0], [0], [1], [0, 0, 1, 1], [], []>} : vector<64x8xbf16>, vector<8x16xbf16>, vector<64x16xf32> -> vector<64x16xf32>
    %25 = arith.addf %17, %24 : vector<64x16xf32>
    %c3 = arith.constant 3 : index
    %c0_23 = arith.constant 0 : index
    %c0_24 = arith.constant 0 : index
    %26 = vector.load %arg1[%c3, %c0_23, %c0_24] : memref<9x64x256xbf16, #tpu.memory_space<vmem>>, vector<1x64x256xbf16>
    %27 = vector.shape_cast %26 : vector<1x64x256xbf16> to vector<64x256xbf16>
    %cst_25 = arith.constant dense<0.000000e+00> : vector<64x8xf32>
    %28 = tpu.matmul %27, %0, %cst_25 {dimension_numbers = #tpu.dot_dimension_numbers<[1], [0], [0], [1], [0, 0, 1, 1], [], []>} : vector<64x256xbf16>, vector<256x8xbf16>, vector<64x8xf32> -> vector<64x8xf32>
    %29 = arith.truncf %28 : vector<64x8xf32> to vector<64x8xbf16>
    %c3_26 = arith.constant 3 : index
    %c0_27 = arith.constant 0 : index
    %c0_28 = arith.constant 0 : index
    %30 = vector.load %arg2[%c3_26, %c0_27, %c0_28] : memref<9x8x16xbf16, #tpu.memory_space<vmem>>, vector<1x8x16xbf16>
    %31 = vector.shape_cast %30 : vector<1x8x16xbf16> to vector<8x16xbf16>
    %cst_29 = arith.constant dense<0.000000e+00> : vector<64x16xf32>
    %32 = tpu.matmul %29, %31, %cst_29 {dimension_numbers = #tpu.dot_dimension_numbers<[1], [0], [0], [1], [0, 0, 1, 1], [], []>} : vector<64x8xbf16>, vector<8x16xbf16>, vector<64x16xf32> -> vector<64x16xf32>
    %33 = arith.addf %25, %32 : vector<64x16xf32>
    %c4 = arith.constant 4 : index
    %c0_30 = arith.constant 0 : index
    %c0_31 = arith.constant 0 : index
    %34 = vector.load %arg1[%c4, %c0_30, %c0_31] : memref<9x64x256xbf16, #tpu.memory_space<vmem>>, vector<1x64x256xbf16>
    %35 = vector.shape_cast %34 : vector<1x64x256xbf16> to vector<64x256xbf16>
    %cst_32 = arith.constant dense<0.000000e+00> : vector<64x8xf32>
    %36 = tpu.matmul %35, %0, %cst_32 {dimension_numbers = #tpu.dot_dimension_numbers<[1], [0], [0], [1], [0, 0, 1, 1], [], []>} : vector<64x256xbf16>, vector<256x8xbf16>, vector<64x8xf32> -> vector<64x8xf32>
    %37 = arith.truncf %36 : vector<64x8xf32> to vector<64x8xbf16>
    %c4_33 = arith.constant 4 : index
    %c0_34 = arith.constant 0 : index
    %c0_35 = arith.constant 0 : index
    %38 = vector.load %arg2[%c4_33, %c0_34, %c0_35] : memref<9x8x16xbf16, #tpu.memory_space<vmem>>, vector<1x8x16xbf16>
    %39 = vector.shape_cast %38 : vector<1x8x16xbf16> to vector<8x16xbf16>
    %cst_36 = arith.constant dense<0.000000e+00> : vector<64x16xf32>
    %40 = tpu.matmul %37, %39, %cst_36 {dimension_numbers = #tpu.dot_dimension_numbers<[1], [0], [0], [1], [0, 0, 1, 1], [], []>} : vector<64x8xbf16>, vector<8x16xbf16>, vector<64x16xf32> -> vector<64x16xf32>
    %41 = arith.addf %33, %40 : vector<64x16xf32>
    %c5 = arith.constant 5 : index
    %c0_37 = arith.constant 0 : index
    %c0_38 = arith.constant 0 : index
    %42 = vector.load %arg1[%c5, %c0_37, %c0_38] : memref<9x64x256xbf16, #tpu.memory_space<vmem>>, vector<1x64x256xbf16>
    %43 = vector.shape_cast %42 : vector<1x64x256xbf16> to vector<64x256xbf16>
    %cst_39 = arith.constant dense<0.000000e+00> : vector<64x8xf32>
    %44 = tpu.matmul %43, %0, %cst_39 {dimension_numbers = #tpu.dot_dimension_numbers<[1], [0], [0], [1], [0, 0, 1, 1], [], []>} : vector<64x256xbf16>, vector<256x8xbf16>, vector<64x8xf32> -> vector<64x8xf32>
    %45 = arith.truncf %44 : vector<64x8xf32> to vector<64x8xbf16>
    %c5_40 = arith.constant 5 : index
    %c0_41 = arith.constant 0 : index
    %c0_42 = arith.constant 0 : index
    %46 = vector.load %arg2[%c5_40, %c0_41, %c0_42] : memref<9x8x16xbf16, #tpu.memory_space<vmem>>, vector<1x8x16xbf16>
    %47 = vector.shape_cast %46 : vector<1x8x16xbf16> to vector<8x16xbf16>
    %cst_43 = arith.constant dense<0.000000e+00> : vector<64x16xf32>
    %48 = tpu.matmul %45, %47, %cst_43 {dimension_numbers = #tpu.dot_dimension_numbers<[1], [0], [0], [1], [0, 0, 1, 1], [], []>} : vector<64x8xbf16>, vector<8x16xbf16>, vector<64x16xf32> -> vector<64x16xf32>
    %49 = arith.addf %41, %48 : vector<64x16xf32>
    %c6 = arith.constant 6 : index
    %c0_44 = arith.constant 0 : index
    %c0_45 = arith.constant 0 : index
    %50 = vector.load %arg1[%c6, %c0_44, %c0_45] : memref<9x64x256xbf16, #tpu.memory_space<vmem>>, vector<1x64x256xbf16>
    %51 = vector.shape_cast %50 : vector<1x64x256xbf16> to vector<64x256xbf16>
    %cst_46 = arith.constant dense<0.000000e+00> : vector<64x8xf32>
    %52 = tpu.matmul %51, %0, %cst_46 {dimension_numbers = #tpu.dot_dimension_numbers<[1], [0], [0], [1], [0, 0, 1, 1], [], []>} : vector<64x256xbf16>, vector<256x8xbf16>, vector<64x8xf32> -> vector<64x8xf32>
    %53 = arith.truncf %52 : vector<64x8xf32> to vector<64x8xbf16>
    %c6_47 = arith.constant 6 : index
    %c0_48 = arith.constant 0 : index
    %c0_49 = arith.constant 0 : index
    %54 = vector.load %arg2[%c6_47, %c0_48, %c0_49] : memref<9x8x16xbf16, #tpu.memory_space<vmem>>, vector<1x8x16xbf16>
    %55 = vector.shape_cast %54 : vector<1x8x16xbf16> to vector<8x16xbf16>
    %cst_50 = arith.constant dense<0.000000e+00> : vector<64x16xf32>
    %56 = tpu.matmul %53, %55, %cst_50 {dimension_numbers = #tpu.dot_dimension_numbers<[1], [0], [0], [1], [0, 0, 1, 1], [], []>} : vector<64x8xbf16>, vector<8x16xbf16>, vector<64x16xf32> -> vector<64x16xf32>
    %57 = arith.addf %49, %56 : vector<64x16xf32>
    %c7 = arith.constant 7 : index
    %c0_51 = arith.constant 0 : index
    %c0_52 = arith.constant 0 : index
    %58 = vector.load %arg1[%c7, %c0_51, %c0_52] : memref<9x64x256xbf16, #tpu.memory_space<vmem>>, vector<1x64x256xbf16>
    %59 = vector.shape_cast %58 : vector<1x64x256xbf16> to vector<64x256xbf16>
    %cst_53 = arith.constant dense<0.000000e+00> : vector<64x8xf32>
    %60 = tpu.matmul %59, %0, %cst_53 {dimension_numbers = #tpu.dot_dimension_numbers<[1], [0], [0], [1], [0, 0, 1, 1], [], []>} : vector<64x256xbf16>, vector<256x8xbf16>, vector<64x8xf32> -> vector<64x8xf32>
    %61 = arith.truncf %60 : vector<64x8xf32> to vector<64x8xbf16>
    %c7_54 = arith.constant 7 : index
    %c0_55 = arith.constant 0 : index
    %c0_56 = arith.constant 0 : index
    %62 = vector.load %arg2[%c7_54, %c0_55, %c0_56] : memref<9x8x16xbf16, #tpu.memory_space<vmem>>, vector<1x8x16xbf16>
    %63 = vector.shape_cast %62 : vector<1x8x16xbf16> to vector<8x16xbf16>
    %cst_57 = arith.constant dense<0.000000e+00> : vector<64x16xf32>
    %64 = tpu.matmul %61, %63, %cst_57 {dimension_numbers = #tpu.dot_dimension_numbers<[1], [0], [0], [1], [0, 0, 1, 1], [], []>} : vector<64x8xbf16>, vector<8x16xbf16>, vector<64x16xf32> -> vector<64x16xf32>
    %65 = arith.addf %57, %64 : vector<64x16xf32>
    %c8 = arith.constant 8 : index
    %c0_58 = arith.constant 0 : index
    %c0_59 = arith.constant 0 : index
    %66 = vector.load %arg1[%c8, %c0_58, %c0_59] : memref<9x64x256xbf16, #tpu.memory_space<vmem>>, vector<1x64x256xbf16>
    %67 = vector.shape_cast %66 : vector<1x64x256xbf16> to vector<64x256xbf16>
    %cst_60 = arith.constant dense<0.000000e+00> : vector<64x8xf32>
    %68 = tpu.matmul %67, %0, %cst_60 {dimension_numbers = #tpu.dot_dimension_numbers<[1], [0], [0], [1], [0, 0, 1, 1], [], []>} : vector<64x256xbf16>, vector<256x8xbf16>, vector<64x8xf32> -> vector<64x8xf32>
    %69 = arith.truncf %68 : vector<64x8xf32> to vector<64x8xbf16>
    %c8_61 = arith.constant 8 : index
    %c0_62 = arith.constant 0 : index
    %c0_63 = arith.constant 0 : index
    %70 = vector.load %arg2[%c8_61, %c0_62, %c0_63] : memref<9x8x16xbf16, #tpu.memory_space<vmem>>, vector<1x8x16xbf16>
    %71 = vector.shape_cast %70 : vector<1x8x16xbf16> to vector<8x16xbf16>
    %cst_64 = arith.constant dense<0.000000e+00> : vector<64x16xf32>
    %72 = tpu.matmul %69, %71, %cst_64 {dimension_numbers = #tpu.dot_dimension_numbers<[1], [0], [0], [1], [0, 0, 1, 1], [], []>} : vector<64x8xbf16>, vector<8x16xbf16>, vector<64x16xf32> -> vector<64x16xf32>
    %73 = arith.addf %65, %72 : vector<64x16xf32>
    %c0_65 = arith.constant 0 : index
    %c0_66 = arith.constant 0 : index
    %74 = vector.load %arg3[%c0_65, %c0_66] : memref<1x16xf32, #tpu.memory_space<vmem>>, vector<1x16xf32>
    %75 = vector.broadcast %74 : vector<1x16xf32> to vector<64x16xf32>
    %76 = arith.addf %73, %75 : vector<64x16xf32>
    %cst_67 = arith.constant 0.000000e+00 : f32
    %77 = vector.broadcast %cst_67 : f32 to vector<64x16xf32>
    %78 = arith.maximumf %76, %77 : vector<64x16xf32>
    %79 = arith.truncf %78 : vector<64x16xf32> to vector<64x16xbf16>
    %cst_68 = arith.constant 0.000000e+00 : f32
    %80 = vector.broadcast %cst_68 : f32 to vector<16x32xf32>
    %c0_69 = arith.constant 0 : index
    %c0_70 = arith.constant 0 : index
    %c0_71 = arith.constant 0 : index
    %81 = vector.load %arg4[%c0_69, %c0_70, %c0_71] : memref<9x16x64xbf16, #tpu.memory_space<vmem>>, vector<1x16x64xbf16>
    %82 = vector.shape_cast %81 : vector<1x16x64xbf16> to vector<16x64xbf16>
    %cst_72 = arith.constant dense<0.000000e+00> : vector<16x16xf32>
    %83 = tpu.matmul %82, %79, %cst_72 {dimension_numbers = #tpu.dot_dimension_numbers<[1], [0], [0], [1], [0, 0, 1, 1], [], []>} : vector<16x64xbf16>, vector<64x16xbf16>, vector<16x16xf32> -> vector<16x16xf32>
    %84 = arith.truncf %83 : vector<16x16xf32> to vector<16x16xbf16>
    %c0_73 = arith.constant 0 : index
    %c0_74 = arith.constant 0 : index
    %c0_75 = arith.constant 0 : index
    %85 = vector.load %arg5[%c0_73, %c0_74, %c0_75] : memref<9x16x32xbf16, #tpu.memory_space<vmem>>, vector<1x16x32xbf16>
    %86 = vector.shape_cast %85 : vector<1x16x32xbf16> to vector<16x32xbf16>
    %cst_76 = arith.constant dense<0.000000e+00> : vector<16x32xf32>
    %87 = tpu.matmul %84, %86, %cst_76 {dimension_numbers = #tpu.dot_dimension_numbers<[1], [0], [0], [1], [0, 0, 1, 1], [], []>} : vector<16x16xbf16>, vector<16x32xbf16>, vector<16x32xf32> -> vector<16x32xf32>
    %88 = arith.addf %80, %87 : vector<16x32xf32>
    %c1_77 = arith.constant 1 : index
    %c0_78 = arith.constant 0 : index
    %c0_79 = arith.constant 0 : index
    %89 = vector.load %arg4[%c1_77, %c0_78, %c0_79] : memref<9x16x64xbf16, #tpu.memory_space<vmem>>, vector<1x16x64xbf16>
    %90 = vector.shape_cast %89 : vector<1x16x64xbf16> to vector<16x64xbf16>
    %cst_80 = arith.constant dense<0.000000e+00> : vector<16x16xf32>
    %91 = tpu.matmul %90, %79, %cst_80 {dimension_numbers = #tpu.dot_dimension_numbers<[1], [0], [0], [1], [0, 0, 1, 1], [], []>} : vector<16x64xbf16>, vector<64x16xbf16>, vector<16x16xf32> -> vector<16x16xf32>
    %92 = arith.truncf %91 : vector<16x16xf32> to vector<16x16xbf16>
    %c1_81 = arith.constant 1 : index
    %c0_82 = arith.constant 0 : index
    %c0_83 = arith.constant 0 : index
    %93 = vector.load %arg5[%c1_81, %c0_82, %c0_83] : memref<9x16x32xbf16, #tpu.memory_space<vmem>>, vector<1x16x32xbf16>
    %94 = vector.shape_cast %93 : vector<1x16x32xbf16> to vector<16x32xbf16>
    %cst_84 = arith.constant dense<0.000000e+00> : vector<16x32xf32>
    %95 = tpu.matmul %92, %94, %cst_84 {dimension_numbers = #tpu.dot_dimension_numbers<[1], [0], [0], [1], [0, 0, 1, 1], [], []>} : vector<16x16xbf16>, vector<16x32xbf16>, vector<16x32xf32> -> vector<16x32xf32>
    %96 = arith.addf %88, %95 : vector<16x32xf32>
    %c2_85 = arith.constant 2 : index
    %c0_86 = arith.constant 0 : index
    %c0_87 = arith.constant 0 : index
    %97 = vector.load %arg4[%c2_85, %c0_86, %c0_87] : memref<9x16x64xbf16, #tpu.memory_space<vmem>>, vector<1x16x64xbf16>
    %98 = vector.shape_cast %97 : vector<1x16x64xbf16> to vector<16x64xbf16>
    %cst_88 = arith.constant dense<0.000000e+00> : vector<16x16xf32>
    %99 = tpu.matmul %98, %79, %cst_88 {dimension_numbers = #tpu.dot_dimension_numbers<[1], [0], [0], [1], [0, 0, 1, 1], [], []>} : vector<16x64xbf16>, vector<64x16xbf16>, vector<16x16xf32> -> vector<16x16xf32>
    %100 = arith.truncf %99 : vector<16x16xf32> to vector<16x16xbf16>
    %c2_89 = arith.constant 2 : index
    %c0_90 = arith.constant 0 : index
    %c0_91 = arith.constant 0 : index
    %101 = vector.load %arg5[%c2_89, %c0_90, %c0_91] : memref<9x16x32xbf16, #tpu.memory_space<vmem>>, vector<1x16x32xbf16>
    %102 = vector.shape_cast %101 : vector<1x16x32xbf16> to vector<16x32xbf16>
    %cst_92 = arith.constant dense<0.000000e+00> : vector<16x32xf32>
    %103 = tpu.matmul %100, %102, %cst_92 {dimension_numbers = #tpu.dot_dimension_numbers<[1], [0], [0], [1], [0, 0, 1, 1], [], []>} : vector<16x16xbf16>, vector<16x32xbf16>, vector<16x32xf32> -> vector<16x32xf32>
    %104 = arith.addf %96, %103 : vector<16x32xf32>
    %c3_93 = arith.constant 3 : index
    %c0_94 = arith.constant 0 : index
    %c0_95 = arith.constant 0 : index
    %105 = vector.load %arg4[%c3_93, %c0_94, %c0_95] : memref<9x16x64xbf16, #tpu.memory_space<vmem>>, vector<1x16x64xbf16>
    %106 = vector.shape_cast %105 : vector<1x16x64xbf16> to vector<16x64xbf16>
    %cst_96 = arith.constant dense<0.000000e+00> : vector<16x16xf32>
    %107 = tpu.matmul %106, %79, %cst_96 {dimension_numbers = #tpu.dot_dimension_numbers<[1], [0], [0], [1], [0, 0, 1, 1], [], []>} : vector<16x64xbf16>, vector<64x16xbf16>, vector<16x16xf32> -> vector<16x16xf32>
    %108 = arith.truncf %107 : vector<16x16xf32> to vector<16x16xbf16>
    %c3_97 = arith.constant 3 : index
    %c0_98 = arith.constant 0 : index
    %c0_99 = arith.constant 0 : index
    %109 = vector.load %arg5[%c3_97, %c0_98, %c0_99] : memref<9x16x32xbf16, #tpu.memory_space<vmem>>, vector<1x16x32xbf16>
    %110 = vector.shape_cast %109 : vector<1x16x32xbf16> to vector<16x32xbf16>
    %cst_100 = arith.constant dense<0.000000e+00> : vector<16x32xf32>
    %111 = tpu.matmul %108, %110, %cst_100 {dimension_numbers = #tpu.dot_dimension_numbers<[1], [0], [0], [1], [0, 0, 1, 1], [], []>} : vector<16x16xbf16>, vector<16x32xbf16>, vector<16x32xf32> -> vector<16x32xf32>
    %112 = arith.addf %104, %111 : vector<16x32xf32>
    %c4_101 = arith.constant 4 : index
    %c0_102 = arith.constant 0 : index
    %c0_103 = arith.constant 0 : index
    %113 = vector.load %arg4[%c4_101, %c0_102, %c0_103] : memref<9x16x64xbf16, #tpu.memory_space<vmem>>, vector<1x16x64xbf16>
    %114 = vector.shape_cast %113 : vector<1x16x64xbf16> to vector<16x64xbf16>
    %cst_104 = arith.constant dense<0.000000e+00> : vector<16x16xf32>
    %115 = tpu.matmul %114, %79, %cst_104 {dimension_numbers = #tpu.dot_dimension_numbers<[1], [0], [0], [1], [0, 0, 1, 1], [], []>} : vector<16x64xbf16>, vector<64x16xbf16>, vector<16x16xf32> -> vector<16x16xf32>
    %116 = arith.truncf %115 : vector<16x16xf32> to vector<16x16xbf16>
    %c4_105 = arith.constant 4 : index
    %c0_106 = arith.constant 0 : index
    %c0_107 = arith.constant 0 : index
    %117 = vector.load %arg5[%c4_105, %c0_106, %c0_107] : memref<9x16x32xbf16, #tpu.memory_space<vmem>>, vector<1x16x32xbf16>
    %118 = vector.shape_cast %117 : vector<1x16x32xbf16> to vector<16x32xbf16>
    %cst_108 = arith.constant dense<0.000000e+00> : vector<16x32xf32>
    %119 = tpu.matmul %116, %118, %cst_108 {dimension_numbers = #tpu.dot_dimension_numbers<[1], [0], [0], [1], [0, 0, 1, 1], [], []>} : vector<16x16xbf16>, vector<16x32xbf16>, vector<16x32xf32> -> vector<16x32xf32>
    %120 = arith.addf %112, %119 : vector<16x32xf32>
    %c5_109 = arith.constant 5 : index
    %c0_110 = arith.constant 0 : index
    %c0_111 = arith.constant 0 : index
    %121 = vector.load %arg4[%c5_109, %c0_110, %c0_111] : memref<9x16x64xbf16, #tpu.memory_space<vmem>>, vector<1x16x64xbf16>
    %122 = vector.shape_cast %121 : vector<1x16x64xbf16> to vector<16x64xbf16>
    %cst_112 = arith.constant dense<0.000000e+00> : vector<16x16xf32>
    %123 = tpu.matmul %122, %79, %cst_112 {dimension_numbers = #tpu.dot_dimension_numbers<[1], [0], [0], [1], [0, 0, 1, 1], [], []>} : vector<16x64xbf16>, vector<64x16xbf16>, vector<16x16xf32> -> vector<16x16xf32>
    %124 = arith.truncf %123 : vector<16x16xf32> to vector<16x16xbf16>
    %c5_113 = arith.constant 5 : index
    %c0_114 = arith.constant 0 : index
    %c0_115 = arith.constant 0 : index
    %125 = vector.load %arg5[%c5_113, %c0_114, %c0_115] : memref<9x16x32xbf16, #tpu.memory_space<vmem>>, vector<1x16x32xbf16>
    %126 = vector.shape_cast %125 : vector<1x16x32xbf16> to vector<16x32xbf16>
    %cst_116 = arith.constant dense<0.000000e+00> : vector<16x32xf32>
    %127 = tpu.matmul %124, %126, %cst_116 {dimension_numbers = #tpu.dot_dimension_numbers<[1], [0], [0], [1], [0, 0, 1, 1], [], []>} : vector<16x16xbf16>, vector<16x32xbf16>, vector<16x32xf32> -> vector<16x32xf32>
    %128 = arith.addf %120, %127 : vector<16x32xf32>
    %c6_117 = arith.constant 6 : index
    %c0_118 = arith.constant 0 : index
    %c0_119 = arith.constant 0 : index
    %129 = vector.load %arg4[%c6_117, %c0_118, %c0_119] : memref<9x16x64xbf16, #tpu.memory_space<vmem>>, vector<1x16x64xbf16>
    %130 = vector.shape_cast %129 : vector<1x16x64xbf16> to vector<16x64xbf16>
    %cst_120 = arith.constant dense<0.000000e+00> : vector<16x16xf32>
    %131 = tpu.matmul %130, %79, %cst_120 {dimension_numbers = #tpu.dot_dimension_numbers<[1], [0], [0], [1], [0, 0, 1, 1], [], []>} : vector<16x64xbf16>, vector<64x16xbf16>, vector<16x16xf32> -> vector<16x16xf32>
    %132 = arith.truncf %131 : vector<16x16xf32> to vector<16x16xbf16>
    %c6_121 = arith.constant 6 : index
    %c0_122 = arith.constant 0 : index
    %c0_123 = arith.constant 0 : index
    %133 = vector.load %arg5[%c6_121, %c0_122, %c0_123] : memref<9x16x32xbf16, #tpu.memory_space<vmem>>, vector<1x16x32xbf16>
    %134 = vector.shape_cast %133 : vector<1x16x32xbf16> to vector<16x32xbf16>
    %cst_124 = arith.constant dense<0.000000e+00> : vector<16x32xf32>
    %135 = tpu.matmul %132, %134, %cst_124 {dimension_numbers = #tpu.dot_dimension_numbers<[1], [0], [0], [1], [0, 0, 1, 1], [], []>} : vector<16x16xbf16>, vector<16x32xbf16>, vector<16x32xf32> -> vector<16x32xf32>
    %136 = arith.addf %128, %135 : vector<16x32xf32>
    %c7_125 = arith.constant 7 : index
    %c0_126 = arith.constant 0 : index
    %c0_127 = arith.constant 0 : index
    %137 = vector.load %arg4[%c7_125, %c0_126, %c0_127] : memref<9x16x64xbf16, #tpu.memory_space<vmem>>, vector<1x16x64xbf16>
    %138 = vector.shape_cast %137 : vector<1x16x64xbf16> to vector<16x64xbf16>
    %cst_128 = arith.constant dense<0.000000e+00> : vector<16x16xf32>
    %139 = tpu.matmul %138, %79, %cst_128 {dimension_numbers = #tpu.dot_dimension_numbers<[1], [0], [0], [1], [0, 0, 1, 1], [], []>} : vector<16x64xbf16>, vector<64x16xbf16>, vector<16x16xf32> -> vector<16x16xf32>
    %140 = arith.truncf %139 : vector<16x16xf32> to vector<16x16xbf16>
    %c7_129 = arith.constant 7 : index
    %c0_130 = arith.constant 0 : index
    %c0_131 = arith.constant 0 : index
    %141 = vector.load %arg5[%c7_129, %c0_130, %c0_131] : memref<9x16x32xbf16, #tpu.memory_space<vmem>>, vector<1x16x32xbf16>
    %142 = vector.shape_cast %141 : vector<1x16x32xbf16> to vector<16x32xbf16>
    %cst_132 = arith.constant dense<0.000000e+00> : vector<16x32xf32>
    %143 = tpu.matmul %140, %142, %cst_132 {dimension_numbers = #tpu.dot_dimension_numbers<[1], [0], [0], [1], [0, 0, 1, 1], [], []>} : vector<16x16xbf16>, vector<16x32xbf16>, vector<16x32xf32> -> vector<16x32xf32>
    %144 = arith.addf %136, %143 : vector<16x32xf32>
    %c8_133 = arith.constant 8 : index
    %c0_134 = arith.constant 0 : index
    %c0_135 = arith.constant 0 : index
    %145 = vector.load %arg4[%c8_133, %c0_134, %c0_135] : memref<9x16x64xbf16, #tpu.memory_space<vmem>>, vector<1x16x64xbf16>
    %146 = vector.shape_cast %145 : vector<1x16x64xbf16> to vector<16x64xbf16>
    %cst_136 = arith.constant dense<0.000000e+00> : vector<16x16xf32>
    %147 = tpu.matmul %146, %79, %cst_136 {dimension_numbers = #tpu.dot_dimension_numbers<[1], [0], [0], [1], [0, 0, 1, 1], [], []>} : vector<16x64xbf16>, vector<64x16xbf16>, vector<16x16xf32> -> vector<16x16xf32>
    %148 = arith.truncf %147 : vector<16x16xf32> to vector<16x16xbf16>
    %c8_137 = arith.constant 8 : index
    %c0_138 = arith.constant 0 : index
    %c0_139 = arith.constant 0 : index
    %149 = vector.load %arg5[%c8_137, %c0_138, %c0_139] : memref<9x16x32xbf16, #tpu.memory_space<vmem>>, vector<1x16x32xbf16>
    %150 = vector.shape_cast %149 : vector<1x16x32xbf16> to vector<16x32xbf16>
    %cst_140 = arith.constant dense<0.000000e+00> : vector<16x32xf32>
    %151 = tpu.matmul %148, %150, %cst_140 {dimension_numbers = #tpu.dot_dimension_numbers<[1], [0], [0], [1], [0, 0, 1, 1], [], []>} : vector<16x16xbf16>, vector<16x32xbf16>, vector<16x32xf32> -> vector<16x32xf32>
    %152 = arith.addf %144, %151 : vector<16x32xf32>
    %c0_141 = arith.constant 0 : index
    %c0_142 = arith.constant 0 : index
    %153 = vector.load %arg6[%c0_141, %c0_142] : memref<1x32xf32, #tpu.memory_space<vmem>>, vector<1x32xf32>
    %154 = vector.broadcast %153 : vector<1x32xf32> to vector<16x32xf32>
    %155 = arith.addf %152, %154 : vector<16x32xf32>
    %cst_143 = arith.constant 0.000000e+00 : f32
    %156 = vector.broadcast %cst_143 : f32 to vector<16x32xf32>
    %157 = arith.maximumf %155, %156 : vector<16x32xf32>
    %158 = arith.truncf %157 : vector<16x32xf32> to vector<16x32xbf16>
    %cst_144 = arith.constant 0.000000e+00 : f32
    %159 = vector.broadcast %cst_144 : f32 to vector<4x64xf32>
    %c0_145 = arith.constant 0 : index
    %c0_146 = arith.constant 0 : index
    %c0_147 = arith.constant 0 : index
    %160 = vector.load %arg7[%c0_145, %c0_146, %c0_147] : memref<9x4x16xbf16, #tpu.memory_space<vmem>>, vector<1x4x16xbf16>
    %161 = vector.shape_cast %160 : vector<1x4x16xbf16> to vector<4x16xbf16>
    %cst_148 = arith.constant dense<0.000000e+00> : vector<4x32xf32>
    %162 = tpu.matmul %161, %158, %cst_148 {dimension_numbers = #tpu.dot_dimension_numbers<[1], [0], [0], [1], [0, 0, 1, 1], [], []>} : vector<4x16xbf16>, vector<16x32xbf16>, vector<4x32xf32> -> vector<4x32xf32>
    %163 = arith.truncf %162 : vector<4x32xf32> to vector<4x32xbf16>
    %c0_149 = arith.constant 0 : index
    %c0_150 = arith.constant 0 : index
    %c0_151 = arith.constant 0 : index
    %164 = vector.load %arg8[%c0_149, %c0_150, %c0_151] : memref<9x32x64xbf16, #tpu.memory_space<vmem>>, vector<1x32x64xbf16>
    %165 = vector.shape_cast %164 : vector<1x32x64xbf16> to vector<32x64xbf16>
    %cst_152 = arith.constant dense<0.000000e+00> : vector<4x64xf32>
    %166 = tpu.matmul %163, %165, %cst_152 {dimension_numbers = #tpu.dot_dimension_numbers<[1], [0], [0], [1], [0, 0, 1, 1], [], []>} : vector<4x32xbf16>, vector<32x64xbf16>, vector<4x64xf32> -> vector<4x64xf32>
    %167 = arith.addf %159, %166 : vector<4x64xf32>
    %c1_153 = arith.constant 1 : index
    %c0_154 = arith.constant 0 : index
    %c0_155 = arith.constant 0 : index
    %168 = vector.load %arg7[%c1_153, %c0_154, %c0_155] : memref<9x4x16xbf16, #tpu.memory_space<vmem>>, vector<1x4x16xbf16>
    %169 = vector.shape_cast %168 : vector<1x4x16xbf16> to vector<4x16xbf16>
    %cst_156 = arith.constant dense<0.000000e+00> : vector<4x32xf32>
    %170 = tpu.matmul %169, %158, %cst_156 {dimension_numbers = #tpu.dot_dimension_numbers<[1], [0], [0], [1], [0, 0, 1, 1], [], []>} : vector<4x16xbf16>, vector<16x32xbf16>, vector<4x32xf32> -> vector<4x32xf32>
    %171 = arith.truncf %170 : vector<4x32xf32> to vector<4x32xbf16>
    %c1_157 = arith.constant 1 : index
    %c0_158 = arith.constant 0 : index
    %c0_159 = arith.constant 0 : index
    %172 = vector.load %arg8[%c1_157, %c0_158, %c0_159] : memref<9x32x64xbf16, #tpu.memory_space<vmem>>, vector<1x32x64xbf16>
    %173 = vector.shape_cast %172 : vector<1x32x64xbf16> to vector<32x64xbf16>
    %cst_160 = arith.constant dense<0.000000e+00> : vector<4x64xf32>
    %174 = tpu.matmul %171, %173, %cst_160 {dimension_numbers = #tpu.dot_dimension_numbers<[1], [0], [0], [1], [0, 0, 1, 1], [], []>} : vector<4x32xbf16>, vector<32x64xbf16>, vector<4x64xf32> -> vector<4x64xf32>
    %175 = arith.addf %167, %174 : vector<4x64xf32>
    %c2_161 = arith.constant 2 : index
    %c0_162 = arith.constant 0 : index
    %c0_163 = arith.constant 0 : index
    %176 = vector.load %arg7[%c2_161, %c0_162, %c0_163] : memref<9x4x16xbf16, #tpu.memory_space<vmem>>, vector<1x4x16xbf16>
    %177 = vector.shape_cast %176 : vector<1x4x16xbf16> to vector<4x16xbf16>
    %cst_164 = arith.constant dense<0.000000e+00> : vector<4x32xf32>
    %178 = tpu.matmul %177, %158, %cst_164 {dimension_numbers = #tpu.dot_dimension_numbers<[1], [0], [0], [1], [0, 0, 1, 1], [], []>} : vector<4x16xbf16>, vector<16x32xbf16>, vector<4x32xf32> -> vector<4x32xf32>
    %179 = arith.truncf %178 : vector<4x32xf32> to vector<4x32xbf16>
    %c2_165 = arith.constant 2 : index
    %c0_166 = arith.constant 0 : index
    %c0_167 = arith.constant 0 : index
    %180 = vector.load %arg8[%c2_165, %c0_166, %c0_167] : memref<9x32x64xbf16, #tpu.memory_space<vmem>>, vector<1x32x64xbf16>
    %181 = vector.shape_cast %180 : vector<1x32x64xbf16> to vector<32x64xbf16>
    %cst_168 = arith.constant dense<0.000000e+00> : vector<4x64xf32>
    %182 = tpu.matmul %179, %181, %cst_168 {dimension_numbers = #tpu.dot_dimension_numbers<[1], [0], [0], [1], [0, 0, 1, 1], [], []>} : vector<4x32xbf16>, vector<32x64xbf16>, vector<4x64xf32> -> vector<4x64xf32>
    %183 = arith.addf %175, %182 : vector<4x64xf32>
    %c3_169 = arith.constant 3 : index
    %c0_170 = arith.constant 0 : index
    %c0_171 = arith.constant 0 : index
    %184 = vector.load %arg7[%c3_169, %c0_170, %c0_171] : memref<9x4x16xbf16, #tpu.memory_space<vmem>>, vector<1x4x16xbf16>
    %185 = vector.shape_cast %184 : vector<1x4x16xbf16> to vector<4x16xbf16>
    %cst_172 = arith.constant dense<0.000000e+00> : vector<4x32xf32>
    %186 = tpu.matmul %185, %158, %cst_172 {dimension_numbers = #tpu.dot_dimension_numbers<[1], [0], [0], [1], [0, 0, 1, 1], [], []>} : vector<4x16xbf16>, vector<16x32xbf16>, vector<4x32xf32> -> vector<4x32xf32>
    %187 = arith.truncf %186 : vector<4x32xf32> to vector<4x32xbf16>
    %c3_173 = arith.constant 3 : index
    %c0_174 = arith.constant 0 : index
    %c0_175 = arith.constant 0 : index
    %188 = vector.load %arg8[%c3_173, %c0_174, %c0_175] : memref<9x32x64xbf16, #tpu.memory_space<vmem>>, vector<1x32x64xbf16>
    %189 = vector.shape_cast %188 : vector<1x32x64xbf16> to vector<32x64xbf16>
    %cst_176 = arith.constant dense<0.000000e+00> : vector<4x64xf32>
    %190 = tpu.matmul %187, %189, %cst_176 {dimension_numbers = #tpu.dot_dimension_numbers<[1], [0], [0], [1], [0, 0, 1, 1], [], []>} : vector<4x32xbf16>, vector<32x64xbf16>, vector<4x64xf32> -> vector<4x64xf32>
    %191 = arith.addf %183, %190 : vector<4x64xf32>
    %c4_177 = arith.constant 4 : index
    %c0_178 = arith.constant 0 : index
    %c0_179 = arith.constant 0 : index
    %192 = vector.load %arg7[%c4_177, %c0_178, %c0_179] : memref<9x4x16xbf16, #tpu.memory_space<vmem>>, vector<1x4x16xbf16>
    %193 = vector.shape_cast %192 : vector<1x4x16xbf16> to vector<4x16xbf16>
    %cst_180 = arith.constant dense<0.000000e+00> : vector<4x32xf32>
    %194 = tpu.matmul %193, %158, %cst_180 {dimension_numbers = #tpu.dot_dimension_numbers<[1], [0], [0], [1], [0, 0, 1, 1], [], []>} : vector<4x16xbf16>, vector<16x32xbf16>, vector<4x32xf32> -> vector<4x32xf32>
    %195 = arith.truncf %194 : vector<4x32xf32> to vector<4x32xbf16>
    %c4_181 = arith.constant 4 : index
    %c0_182 = arith.constant 0 : index
    %c0_183 = arith.constant 0 : index
    %196 = vector.load %arg8[%c4_181, %c0_182, %c0_183] : memref<9x32x64xbf16, #tpu.memory_space<vmem>>, vector<1x32x64xbf16>
    %197 = vector.shape_cast %196 : vector<1x32x64xbf16> to vector<32x64xbf16>
    %cst_184 = arith.constant dense<0.000000e+00> : vector<4x64xf32>
    %198 = tpu.matmul %195, %197, %cst_184 {dimension_numbers = #tpu.dot_dimension_numbers<[1], [0], [0], [1], [0, 0, 1, 1], [], []>} : vector<4x32xbf16>, vector<32x64xbf16>, vector<4x64xf32> -> vector<4x64xf32>
    %199 = arith.addf %191, %198 : vector<4x64xf32>
    %c5_185 = arith.constant 5 : index
    %c0_186 = arith.constant 0 : index
    %c0_187 = arith.constant 0 : index
    %200 = vector.load %arg7[%c5_185, %c0_186, %c0_187] : memref<9x4x16xbf16, #tpu.memory_space<vmem>>, vector<1x4x16xbf16>
    %201 = vector.shape_cast %200 : vector<1x4x16xbf16> to vector<4x16xbf16>
    %cst_188 = arith.constant dense<0.000000e+00> : vector<4x32xf32>
    %202 = tpu.matmul %201, %158, %cst_188 {dimension_numbers = #tpu.dot_dimension_numbers<[1], [0], [0], [1], [0, 0, 1, 1], [], []>} : vector<4x16xbf16>, vector<16x32xbf16>, vector<4x32xf32> -> vector<4x32xf32>
    %203 = arith.truncf %202 : vector<4x32xf32> to vector<4x32xbf16>
    %c5_189 = arith.constant 5 : index
    %c0_190 = arith.constant 0 : index
    %c0_191 = arith.constant 0 : index
    %204 = vector.load %arg8[%c5_189, %c0_190, %c0_191] : memref<9x32x64xbf16, #tpu.memory_space<vmem>>, vector<1x32x64xbf16>
    %205 = vector.shape_cast %204 : vector<1x32x64xbf16> to vector<32x64xbf16>
    %cst_192 = arith.constant dense<0.000000e+00> : vector<4x64xf32>
    %206 = tpu.matmul %203, %205, %cst_192 {dimension_numbers = #tpu.dot_dimension_numbers<[1], [0], [0], [1], [0, 0, 1, 1], [], []>} : vector<4x32xbf16>, vector<32x64xbf16>, vector<4x64xf32> -> vector<4x64xf32>
    %207 = arith.addf %199, %206 : vector<4x64xf32>
    %c6_193 = arith.constant 6 : index
    %c0_194 = arith.constant 0 : index
    %c0_195 = arith.constant 0 : index
    %208 = vector.load %arg7[%c6_193, %c0_194, %c0_195] : memref<9x4x16xbf16, #tpu.memory_space<vmem>>, vector<1x4x16xbf16>
    %209 = vector.shape_cast %208 : vector<1x4x16xbf16> to vector<4x16xbf16>
    %cst_196 = arith.constant dense<0.000000e+00> : vector<4x32xf32>
    %210 = tpu.matmul %209, %158, %cst_196 {dimension_numbers = #tpu.dot_dimension_numbers<[1], [0], [0], [1], [0, 0, 1, 1], [], []>} : vector<4x16xbf16>, vector<16x32xbf16>, vector<4x32xf32> -> vector<4x32xf32>
    %211 = arith.truncf %210 : vector<4x32xf32> to vector<4x32xbf16>
    %c6_197 = arith.constant 6 : index
    %c0_198 = arith.constant 0 : index
    %c0_199 = arith.constant 0 : index
    %212 = vector.load %arg8[%c6_197, %c0_198, %c0_199] : memref<9x32x64xbf16, #tpu.memory_space<vmem>>, vector<1x32x64xbf16>
    %213 = vector.shape_cast %212 : vector<1x32x64xbf16> to vector<32x64xbf16>
    %cst_200 = arith.constant dense<0.000000e+00> : vector<4x64xf32>
    %214 = tpu.matmul %211, %213, %cst_200 {dimension_numbers = #tpu.dot_dimension_numbers<[1], [0], [0], [1], [0, 0, 1, 1], [], []>} : vector<4x32xbf16>, vector<32x64xbf16>, vector<4x64xf32> -> vector<4x64xf32>
    %215 = arith.addf %207, %214 : vector<4x64xf32>
    %c7_201 = arith.constant 7 : index
    %c0_202 = arith.constant 0 : index
    %c0_203 = arith.constant 0 : index
    %216 = vector.load %arg7[%c7_201, %c0_202, %c0_203] : memref<9x4x16xbf16, #tpu.memory_space<vmem>>, vector<1x4x16xbf16>
    %217 = vector.shape_cast %216 : vector<1x4x16xbf16> to vector<4x16xbf16>
    %cst_204 = arith.constant dense<0.000000e+00> : vector<4x32xf32>
    %218 = tpu.matmul %217, %158, %cst_204 {dimension_numbers = #tpu.dot_dimension_numbers<[1], [0], [0], [1], [0, 0, 1, 1], [], []>} : vector<4x16xbf16>, vector<16x32xbf16>, vector<4x32xf32> -> vector<4x32xf32>
    %219 = arith.truncf %218 : vector<4x32xf32> to vector<4x32xbf16>
    %c7_205 = arith.constant 7 : index
    %c0_206 = arith.constant 0 : index
    %c0_207 = arith.constant 0 : index
    %220 = vector.load %arg8[%c7_205, %c0_206, %c0_207] : memref<9x32x64xbf16, #tpu.memory_space<vmem>>, vector<1x32x64xbf16>
    %221 = vector.shape_cast %220 : vector<1x32x64xbf16> to vector<32x64xbf16>
    %cst_208 = arith.constant dense<0.000000e+00> : vector<4x64xf32>
    %222 = tpu.matmul %219, %221, %cst_208 {dimension_numbers = #tpu.dot_dimension_numbers<[1], [0], [0], [1], [0, 0, 1, 1], [], []>} : vector<4x32xbf16>, vector<32x64xbf16>, vector<4x64xf32> -> vector<4x64xf32>
    %223 = arith.addf %215, %222 : vector<4x64xf32>
    %c8_209 = arith.constant 8 : index
    %c0_210 = arith.constant 0 : index
    %c0_211 = arith.constant 0 : index
    %224 = vector.load %arg7[%c8_209, %c0_210, %c0_211] : memref<9x4x16xbf16, #tpu.memory_space<vmem>>, vector<1x4x16xbf16>
    %225 = vector.shape_cast %224 : vector<1x4x16xbf16> to vector<4x16xbf16>
    %cst_212 = arith.constant dense<0.000000e+00> : vector<4x32xf32>
    %226 = tpu.matmul %225, %158, %cst_212 {dimension_numbers = #tpu.dot_dimension_numbers<[1], [0], [0], [1], [0, 0, 1, 1], [], []>} : vector<4x16xbf16>, vector<16x32xbf16>, vector<4x32xf32> -> vector<4x32xf32>
    %227 = arith.truncf %226 : vector<4x32xf32> to vector<4x32xbf16>
    %c8_213 = arith.constant 8 : index
    %c0_214 = arith.constant 0 : index
    %c0_215 = arith.constant 0 : index
    %228 = vector.load %arg8[%c8_213, %c0_214, %c0_215] : memref<9x32x64xbf16, #tpu.memory_space<vmem>>, vector<1x32x64xbf16>
    %229 = vector.shape_cast %228 : vector<1x32x64xbf16> to vector<32x64xbf16>
    %cst_216 = arith.constant dense<0.000000e+00> : vector<4x64xf32>
    %230 = tpu.matmul %227, %229, %cst_216 {dimension_numbers = #tpu.dot_dimension_numbers<[1], [0], [0], [1], [0, 0, 1, 1], [], []>} : vector<4x32xbf16>, vector<32x64xbf16>, vector<4x64xf32> -> vector<4x64xf32>
    %231 = arith.addf %223, %230 : vector<4x64xf32>
    %c0_217 = arith.constant 0 : index
    %c0_218 = arith.constant 0 : index
    %232 = vector.load %arg9[%c0_217, %c0_218] : memref<1x64xf32, #tpu.memory_space<vmem>>, vector<1x64xf32>
    %233 = vector.broadcast %232 : vector<1x64xf32> to vector<4x64xf32>
    %234 = arith.addf %231, %233 : vector<4x64xf32>
    %cst_219 = arith.constant 0.000000e+00 : f32
    %235 = vector.broadcast %cst_219 : f32 to vector<4x64xf32>
    %236 = arith.maximumf %234, %235 : vector<4x64xf32>
    %237 = arith.truncf %236 : vector<4x64xf32> to vector<4x64xbf16>
    %c0_220 = arith.constant 0 : index
    %c0_221 = arith.constant 0 : index
    %238 = vector.load %arg10[%c0_220, %c0_221] : memref<16x32xbf16, #tpu.memory_space<vmem>>, vector<16x32xbf16>
    %cst_222 = arith.constant dense<0.000000e+00> : vector<64x32xf32>
    %239 = tpu.matmul %79, %238, %cst_222 {dimension_numbers = #tpu.dot_dimension_numbers<[1], [0], [0], [1], [0, 0, 1, 1], [], []>} : vector<64x16xbf16>, vector<16x32xbf16>, vector<64x32xf32> -> vector<64x32xf32>
    %c0_223 = arith.constant 0 : index
    %c0_224 = arith.constant 0 : index
    %240 = vector.load %arg11[%c0_223, %c0_224] : memref<1x32xf32, #tpu.memory_space<vmem>>, vector<1x32xf32>
    %241 = vector.broadcast %240 : vector<1x32xf32> to vector<64x32xf32>
    %242 = arith.addf %239, %241 : vector<64x32xf32>
    %c0_225 = arith.constant 0 : index
    %c0_226 = arith.constant 0 : index
    %243 = vector.load %arg12[%c0_225, %c0_226] : memref<32x32xbf16, #tpu.memory_space<vmem>>, vector<32x32xbf16>
    %cst_227 = arith.constant dense<0.000000e+00> : vector<16x32xf32>
    %244 = tpu.matmul %158, %243, %cst_227 {dimension_numbers = #tpu.dot_dimension_numbers<[1], [0], [0], [1], [0, 0, 1, 1], [], []>} : vector<16x32xbf16>, vector<32x32xbf16>, vector<16x32xf32> -> vector<16x32xf32>
    %c0_228 = arith.constant 0 : index
    %c0_229 = arith.constant 0 : index
    %245 = vector.load %arg13[%c0_228, %c0_229] : memref<1x32xf32, #tpu.memory_space<vmem>>, vector<1x32xf32>
    %246 = vector.broadcast %245 : vector<1x32xf32> to vector<16x32xf32>
    %247 = arith.addf %244, %246 : vector<16x32xf32>
    %c0_230 = arith.constant 0 : index
    %c0_231 = arith.constant 0 : index
    %248 = vector.load %arg14[%c0_230, %c0_231] : memref<64x32xbf16, #tpu.memory_space<vmem>>, vector<64x32xbf16>
    %cst_232 = arith.constant dense<0.000000e+00> : vector<4x32xf32>
    %249 = tpu.matmul %237, %248, %cst_232 {dimension_numbers = #tpu.dot_dimension_numbers<[1], [0], [0], [1], [0, 0, 1, 1], [], []>} : vector<4x64xbf16>, vector<64x32xbf16>, vector<4x32xf32> -> vector<4x32xf32>
    %c0_233 = arith.constant 0 : index
    %c0_234 = arith.constant 0 : index
    %250 = vector.load %arg15[%c0_233, %c0_234] : memref<1x32xf32, #tpu.memory_space<vmem>>, vector<1x32xf32>
    %251 = vector.broadcast %250 : vector<1x32xf32> to vector<4x32xf32>
    %252 = arith.addf %249, %251 : vector<4x32xf32>
    %253 = arith.truncf %252 : vector<4x32xf32> to vector<4x32xbf16>
    %cst_235 = arith.constant 0.000000e+00 : f32
    %254 = vector.broadcast %cst_235 : f32 to vector<4x32xf32>
    %c0_236 = arith.constant 0 : index
    %c0_237 = arith.constant 0 : index
    %c0_238 = arith.constant 0 : index
    %255 = vector.load %arg22[%c0_236, %c0_237, %c0_238] : memref<9x4x4xbf16, #tpu.memory_space<vmem>>, vector<1x4x4xbf16>
    %256 = vector.shape_cast %255 : vector<1x4x4xbf16> to vector<4x4xbf16>
    %cst_239 = arith.constant dense<0.000000e+00> : vector<4x32xf32>
    %257 = tpu.matmul %256, %253, %cst_239 {dimension_numbers = #tpu.dot_dimension_numbers<[1], [0], [0], [1], [0, 0, 1, 1], [], []>} : vector<4x4xbf16>, vector<4x32xbf16>, vector<4x32xf32> -> vector<4x32xf32>
    %258 = arith.truncf %257 : vector<4x32xf32> to vector<4x32xbf16>
    %c0_240 = arith.constant 0 : index
    %c0_241 = arith.constant 0 : index
    %c0_242 = arith.constant 0 : index
    %259 = vector.load %arg23[%c0_240, %c0_241, %c0_242] : memref<9x32x32xbf16, #tpu.memory_space<vmem>>, vector<1x32x32xbf16>
    %260 = vector.shape_cast %259 : vector<1x32x32xbf16> to vector<32x32xbf16>
    %cst_243 = arith.constant dense<0.000000e+00> : vector<4x32xf32>
    %261 = tpu.matmul %258, %260, %cst_243 {dimension_numbers = #tpu.dot_dimension_numbers<[1], [0], [0], [1], [0, 0, 1, 1], [], []>} : vector<4x32xbf16>, vector<32x32xbf16>, vector<4x32xf32> -> vector<4x32xf32>
    %262 = arith.addf %254, %261 : vector<4x32xf32>
    %c1_244 = arith.constant 1 : index
    %c0_245 = arith.constant 0 : index
    %c0_246 = arith.constant 0 : index
    %263 = vector.load %arg22[%c1_244, %c0_245, %c0_246] : memref<9x4x4xbf16, #tpu.memory_space<vmem>>, vector<1x4x4xbf16>
    %264 = vector.shape_cast %263 : vector<1x4x4xbf16> to vector<4x4xbf16>
    %cst_247 = arith.constant dense<0.000000e+00> : vector<4x32xf32>
    %265 = tpu.matmul %264, %253, %cst_247 {dimension_numbers = #tpu.dot_dimension_numbers<[1], [0], [0], [1], [0, 0, 1, 1], [], []>} : vector<4x4xbf16>, vector<4x32xbf16>, vector<4x32xf32> -> vector<4x32xf32>
    %266 = arith.truncf %265 : vector<4x32xf32> to vector<4x32xbf16>
    %c1_248 = arith.constant 1 : index
    %c0_249 = arith.constant 0 : index
    %c0_250 = arith.constant 0 : index
    %267 = vector.load %arg23[%c1_248, %c0_249, %c0_250] : memref<9x32x32xbf16, #tpu.memory_space<vmem>>, vector<1x32x32xbf16>
    %268 = vector.shape_cast %267 : vector<1x32x32xbf16> to vector<32x32xbf16>
    %cst_251 = arith.constant dense<0.000000e+00> : vector<4x32xf32>
    %269 = tpu.matmul %266, %268, %cst_251 {dimension_numbers = #tpu.dot_dimension_numbers<[1], [0], [0], [1], [0, 0, 1, 1], [], []>} : vector<4x32xbf16>, vector<32x32xbf16>, vector<4x32xf32> -> vector<4x32xf32>
    %270 = arith.addf %262, %269 : vector<4x32xf32>
    %c2_252 = arith.constant 2 : index
    %c0_253 = arith.constant 0 : index
    %c0_254 = arith.constant 0 : index
    %271 = vector.load %arg22[%c2_252, %c0_253, %c0_254] : memref<9x4x4xbf16, #tpu.memory_space<vmem>>, vector<1x4x4xbf16>
    %272 = vector.shape_cast %271 : vector<1x4x4xbf16> to vector<4x4xbf16>
    %cst_255 = arith.constant dense<0.000000e+00> : vector<4x32xf32>
    %273 = tpu.matmul %272, %253, %cst_255 {dimension_numbers = #tpu.dot_dimension_numbers<[1], [0], [0], [1], [0, 0, 1, 1], [], []>} : vector<4x4xbf16>, vector<4x32xbf16>, vector<4x32xf32> -> vector<4x32xf32>
    %274 = arith.truncf %273 : vector<4x32xf32> to vector<4x32xbf16>
    %c2_256 = arith.constant 2 : index
    %c0_257 = arith.constant 0 : index
    %c0_258 = arith.constant 0 : index
    %275 = vector.load %arg23[%c2_256, %c0_257, %c0_258] : memref<9x32x32xbf16, #tpu.memory_space<vmem>>, vector<1x32x32xbf16>
    %276 = vector.shape_cast %275 : vector<1x32x32xbf16> to vector<32x32xbf16>
    %cst_259 = arith.constant dense<0.000000e+00> : vector<4x32xf32>
    %277 = tpu.matmul %274, %276, %cst_259 {dimension_numbers = #tpu.dot_dimension_numbers<[1], [0], [0], [1], [0, 0, 1, 1], [], []>} : vector<4x32xbf16>, vector<32x32xbf16>, vector<4x32xf32> -> vector<4x32xf32>
    %278 = arith.addf %270, %277 : vector<4x32xf32>
    %c3_260 = arith.constant 3 : index
    %c0_261 = arith.constant 0 : index
    %c0_262 = arith.constant 0 : index
    %279 = vector.load %arg22[%c3_260, %c0_261, %c0_262] : memref<9x4x4xbf16, #tpu.memory_space<vmem>>, vector<1x4x4xbf16>
    %280 = vector.shape_cast %279 : vector<1x4x4xbf16> to vector<4x4xbf16>
    %cst_263 = arith.constant dense<0.000000e+00> : vector<4x32xf32>
    %281 = tpu.matmul %280, %253, %cst_263 {dimension_numbers = #tpu.dot_dimension_numbers<[1], [0], [0], [1], [0, 0, 1, 1], [], []>} : vector<4x4xbf16>, vector<4x32xbf16>, vector<4x32xf32> -> vector<4x32xf32>
    %282 = arith.truncf %281 : vector<4x32xf32> to vector<4x32xbf16>
    %c3_264 = arith.constant 3 : index
    %c0_265 = arith.constant 0 : index
    %c0_266 = arith.constant 0 : index
    %283 = vector.load %arg23[%c3_264, %c0_265, %c0_266] : memref<9x32x32xbf16, #tpu.memory_space<vmem>>, vector<1x32x32xbf16>
    %284 = vector.shape_cast %283 : vector<1x32x32xbf16> to vector<32x32xbf16>
    %cst_267 = arith.constant dense<0.000000e+00> : vector<4x32xf32>
    %285 = tpu.matmul %282, %284, %cst_267 {dimension_numbers = #tpu.dot_dimension_numbers<[1], [0], [0], [1], [0, 0, 1, 1], [], []>} : vector<4x32xbf16>, vector<32x32xbf16>, vector<4x32xf32> -> vector<4x32xf32>
    %286 = arith.addf %278, %285 : vector<4x32xf32>
    %c4_268 = arith.constant 4 : index
    %c0_269 = arith.constant 0 : index
    %c0_270 = arith.constant 0 : index
    %287 = vector.load %arg22[%c4_268, %c0_269, %c0_270] : memref<9x4x4xbf16, #tpu.memory_space<vmem>>, vector<1x4x4xbf16>
    %288 = vector.shape_cast %287 : vector<1x4x4xbf16> to vector<4x4xbf16>
    %cst_271 = arith.constant dense<0.000000e+00> : vector<4x32xf32>
    %289 = tpu.matmul %288, %253, %cst_271 {dimension_numbers = #tpu.dot_dimension_numbers<[1], [0], [0], [1], [0, 0, 1, 1], [], []>} : vector<4x4xbf16>, vector<4x32xbf16>, vector<4x32xf32> -> vector<4x32xf32>
    %290 = arith.truncf %289 : vector<4x32xf32> to vector<4x32xbf16>
    %c4_272 = arith.constant 4 : index
    %c0_273 = arith.constant 0 : index
    %c0_274 = arith.constant 0 : index
    %291 = vector.load %arg23[%c4_272, %c0_273, %c0_274] : memref<9x32x32xbf16, #tpu.memory_space<vmem>>, vector<1x32x32xbf16>
    %292 = vector.shape_cast %291 : vector<1x32x32xbf16> to vector<32x32xbf16>
    %cst_275 = arith.constant dense<0.000000e+00> : vector<4x32xf32>
    %293 = tpu.matmul %290, %292, %cst_275 {dimension_numbers = #tpu.dot_dimension_numbers<[1], [0], [0], [1], [0, 0, 1, 1], [], []>} : vector<4x32xbf16>, vector<32x32xbf16>, vector<4x32xf32> -> vector<4x32xf32>
    %294 = arith.addf %286, %293 : vector<4x32xf32>
    %c5_276 = arith.constant 5 : index
    %c0_277 = arith.constant 0 : index
    %c0_278 = arith.constant 0 : index
    %295 = vector.load %arg22[%c5_276, %c0_277, %c0_278] : memref<9x4x4xbf16, #tpu.memory_space<vmem>>, vector<1x4x4xbf16>
    %296 = vector.shape_cast %295 : vector<1x4x4xbf16> to vector<4x4xbf16>
    %cst_279 = arith.constant dense<0.000000e+00> : vector<4x32xf32>
    %297 = tpu.matmul %296, %253, %cst_279 {dimension_numbers = #tpu.dot_dimension_numbers<[1], [0], [0], [1], [0, 0, 1, 1], [], []>} : vector<4x4xbf16>, vector<4x32xbf16>, vector<4x32xf32> -> vector<4x32xf32>
    %298 = arith.truncf %297 : vector<4x32xf32> to vector<4x32xbf16>
    %c5_280 = arith.constant 5 : index
    %c0_281 = arith.constant 0 : index
    %c0_282 = arith.constant 0 : index
    %299 = vector.load %arg23[%c5_280, %c0_281, %c0_282] : memref<9x32x32xbf16, #tpu.memory_space<vmem>>, vector<1x32x32xbf16>
    %300 = vector.shape_cast %299 : vector<1x32x32xbf16> to vector<32x32xbf16>
    %cst_283 = arith.constant dense<0.000000e+00> : vector<4x32xf32>
    %301 = tpu.matmul %298, %300, %cst_283 {dimension_numbers = #tpu.dot_dimension_numbers<[1], [0], [0], [1], [0, 0, 1, 1], [], []>} : vector<4x32xbf16>, vector<32x32xbf16>, vector<4x32xf32> -> vector<4x32xf32>
    %302 = arith.addf %294, %301 : vector<4x32xf32>
    %c6_284 = arith.constant 6 : index
    %c0_285 = arith.constant 0 : index
    %c0_286 = arith.constant 0 : index
    %303 = vector.load %arg22[%c6_284, %c0_285, %c0_286] : memref<9x4x4xbf16, #tpu.memory_space<vmem>>, vector<1x4x4xbf16>
    %304 = vector.shape_cast %303 : vector<1x4x4xbf16> to vector<4x4xbf16>
    %cst_287 = arith.constant dense<0.000000e+00> : vector<4x32xf32>
    %305 = tpu.matmul %304, %253, %cst_287 {dimension_numbers = #tpu.dot_dimension_numbers<[1], [0], [0], [1], [0, 0, 1, 1], [], []>} : vector<4x4xbf16>, vector<4x32xbf16>, vector<4x32xf32> -> vector<4x32xf32>
    %306 = arith.truncf %305 : vector<4x32xf32> to vector<4x32xbf16>
    %c6_288 = arith.constant 6 : index
    %c0_289 = arith.constant 0 : index
    %c0_290 = arith.constant 0 : index
    %307 = vector.load %arg23[%c6_288, %c0_289, %c0_290] : memref<9x32x32xbf16, #tpu.memory_space<vmem>>, vector<1x32x32xbf16>
    %308 = vector.shape_cast %307 : vector<1x32x32xbf16> to vector<32x32xbf16>
    %cst_291 = arith.constant dense<0.000000e+00> : vector<4x32xf32>
    %309 = tpu.matmul %306, %308, %cst_291 {dimension_numbers = #tpu.dot_dimension_numbers<[1], [0], [0], [1], [0, 0, 1, 1], [], []>} : vector<4x32xbf16>, vector<32x32xbf16>, vector<4x32xf32> -> vector<4x32xf32>
    %310 = arith.addf %302, %309 : vector<4x32xf32>
    %c7_292 = arith.constant 7 : index
    %c0_293 = arith.constant 0 : index
    %c0_294 = arith.constant 0 : index
    %311 = vector.load %arg22[%c7_292, %c0_293, %c0_294] : memref<9x4x4xbf16, #tpu.memory_space<vmem>>, vector<1x4x4xbf16>
    %312 = vector.shape_cast %311 : vector<1x4x4xbf16> to vector<4x4xbf16>
    %cst_295 = arith.constant dense<0.000000e+00> : vector<4x32xf32>
    %313 = tpu.matmul %312, %253, %cst_295 {dimension_numbers = #tpu.dot_dimension_numbers<[1], [0], [0], [1], [0, 0, 1, 1], [], []>} : vector<4x4xbf16>, vector<4x32xbf16>, vector<4x32xf32> -> vector<4x32xf32>
    %314 = arith.truncf %313 : vector<4x32xf32> to vector<4x32xbf16>
    %c7_296 = arith.constant 7 : index
    %c0_297 = arith.constant 0 : index
    %c0_298 = arith.constant 0 : index
    %315 = vector.load %arg23[%c7_296, %c0_297, %c0_298] : memref<9x32x32xbf16, #tpu.memory_space<vmem>>, vector<1x32x32xbf16>
    %316 = vector.shape_cast %315 : vector<1x32x32xbf16> to vector<32x32xbf16>
    %cst_299 = arith.constant dense<0.000000e+00> : vector<4x32xf32>
    %317 = tpu.matmul %314, %316, %cst_299 {dimension_numbers = #tpu.dot_dimension_numbers<[1], [0], [0], [1], [0, 0, 1, 1], [], []>} : vector<4x32xbf16>, vector<32x32xbf16>, vector<4x32xf32> -> vector<4x32xf32>
    %318 = arith.addf %310, %317 : vector<4x32xf32>
    %c8_300 = arith.constant 8 : index
    %c0_301 = arith.constant 0 : index
    %c0_302 = arith.constant 0 : index
    %319 = vector.load %arg22[%c8_300, %c0_301, %c0_302] : memref<9x4x4xbf16, #tpu.memory_space<vmem>>, vector<1x4x4xbf16>
    %320 = vector.shape_cast %319 : vector<1x4x4xbf16> to vector<4x4xbf16>
    %cst_303 = arith.constant dense<0.000000e+00> : vector<4x32xf32>
    %321 = tpu.matmul %320, %253, %cst_303 {dimension_numbers = #tpu.dot_dimension_numbers<[1], [0], [0], [1], [0, 0, 1, 1], [], []>} : vector<4x4xbf16>, vector<4x32xbf16>, vector<4x32xf32> -> vector<4x32xf32>
    %322 = arith.truncf %321 : vector<4x32xf32> to vector<4x32xbf16>
    %c8_304 = arith.constant 8 : index
    %c0_305 = arith.constant 0 : index
    %c0_306 = arith.constant 0 : index
    %323 = vector.load %arg23[%c8_304, %c0_305, %c0_306] : memref<9x32x32xbf16, #tpu.memory_space<vmem>>, vector<1x32x32xbf16>
    %324 = vector.shape_cast %323 : vector<1x32x32xbf16> to vector<32x32xbf16>
    %cst_307 = arith.constant dense<0.000000e+00> : vector<4x32xf32>
    %325 = tpu.matmul %322, %324, %cst_307 {dimension_numbers = #tpu.dot_dimension_numbers<[1], [0], [0], [1], [0, 0, 1, 1], [], []>} : vector<4x32xbf16>, vector<32x32xbf16>, vector<4x32xf32> -> vector<4x32xf32>
    %326 = arith.addf %318, %325 : vector<4x32xf32>
    %c0_308 = arith.constant 0 : index
    %c0_309 = arith.constant 0 : index
    %327 = vector.load %arg24[%c0_308, %c0_309] : memref<1x32xf32, #tpu.memory_space<vmem>>, vector<1x32xf32>
    %328 = vector.broadcast %327 : vector<1x32xf32> to vector<4x32xf32>
    %329 = arith.addf %326, %328 : vector<4x32xf32>
    %c0_310 = arith.constant 0 : index
    %c0_311 = arith.constant 0 : index
    %330 = vector.load %arg25[%c0_310, %c0_311] : memref<16x4xbf16, #tpu.memory_space<vmem>>, vector<16x4xbf16>
    %cst_312 = arith.constant dense<0.000000e+00> : vector<16x32xf32>
    %331 = tpu.matmul %330, %253, %cst_312 {dimension_numbers = #tpu.dot_dimension_numbers<[1], [0], [0], [1], [0, 0, 1, 1], [], []>} : vector<16x4xbf16>, vector<4x32xbf16>, vector<16x32xf32> -> vector<16x32xf32>
    %332 = arith.addf %247, %331 : vector<16x32xf32>
    %333 = arith.truncf %332 : vector<16x32xf32> to vector<16x32xbf16>
    %cst_313 = arith.constant 0.000000e+00 : f32
    %334 = vector.broadcast %cst_313 : f32 to vector<16x32xf32>
    %c0_314 = arith.constant 0 : index
    %c0_315 = arith.constant 0 : index
    %c0_316 = arith.constant 0 : index
    %335 = vector.load %arg19[%c0_314, %c0_315, %c0_316] : memref<9x16x16xbf16, #tpu.memory_space<vmem>>, vector<1x16x16xbf16>
    %336 = vector.shape_cast %335 : vector<1x16x16xbf16> to vector<16x16xbf16>
    %cst_317 = arith.constant dense<0.000000e+00> : vector<16x32xf32>
    %337 = tpu.matmul %336, %333, %cst_317 {dimension_numbers = #tpu.dot_dimension_numbers<[1], [0], [0], [1], [0, 0, 1, 1], [], []>} : vector<16x16xbf16>, vector<16x32xbf16>, vector<16x32xf32> -> vector<16x32xf32>
    %338 = arith.truncf %337 : vector<16x32xf32> to vector<16x32xbf16>
    %c0_318 = arith.constant 0 : index
    %c0_319 = arith.constant 0 : index
    %c0_320 = arith.constant 0 : index
    %339 = vector.load %arg20[%c0_318, %c0_319, %c0_320] : memref<9x32x32xbf16, #tpu.memory_space<vmem>>, vector<1x32x32xbf16>
    %340 = vector.shape_cast %339 : vector<1x32x32xbf16> to vector<32x32xbf16>
    %cst_321 = arith.constant dense<0.000000e+00> : vector<16x32xf32>
    %341 = tpu.matmul %338, %340, %cst_321 {dimension_numbers = #tpu.dot_dimension_numbers<[1], [0], [0], [1], [0, 0, 1, 1], [], []>} : vector<16x32xbf16>, vector<32x32xbf16>, vector<16x32xf32> -> vector<16x32xf32>
    %342 = arith.addf %334, %341 : vector<16x32xf32>
    %c1_322 = arith.constant 1 : index
    %c0_323 = arith.constant 0 : index
    %c0_324 = arith.constant 0 : index
    %343 = vector.load %arg19[%c1_322, %c0_323, %c0_324] : memref<9x16x16xbf16, #tpu.memory_space<vmem>>, vector<1x16x16xbf16>
    %344 = vector.shape_cast %343 : vector<1x16x16xbf16> to vector<16x16xbf16>
    %cst_325 = arith.constant dense<0.000000e+00> : vector<16x32xf32>
    %345 = tpu.matmul %344, %333, %cst_325 {dimension_numbers = #tpu.dot_dimension_numbers<[1], [0], [0], [1], [0, 0, 1, 1], [], []>} : vector<16x16xbf16>, vector<16x32xbf16>, vector<16x32xf32> -> vector<16x32xf32>
    %346 = arith.truncf %345 : vector<16x32xf32> to vector<16x32xbf16>
    %c1_326 = arith.constant 1 : index
    %c0_327 = arith.constant 0 : index
    %c0_328 = arith.constant 0 : index
    %347 = vector.load %arg20[%c1_326, %c0_327, %c0_328] : memref<9x32x32xbf16, #tpu.memory_space<vmem>>, vector<1x32x32xbf16>
    %348 = vector.shape_cast %347 : vector<1x32x32xbf16> to vector<32x32xbf16>
    %cst_329 = arith.constant dense<0.000000e+00> : vector<16x32xf32>
    %349 = tpu.matmul %346, %348, %cst_329 {dimension_numbers = #tpu.dot_dimension_numbers<[1], [0], [0], [1], [0, 0, 1, 1], [], []>} : vector<16x32xbf16>, vector<32x32xbf16>, vector<16x32xf32> -> vector<16x32xf32>
    %350 = arith.addf %342, %349 : vector<16x32xf32>
    %c2_330 = arith.constant 2 : index
    %c0_331 = arith.constant 0 : index
    %c0_332 = arith.constant 0 : index
    %351 = vector.load %arg19[%c2_330, %c0_331, %c0_332] : memref<9x16x16xbf16, #tpu.memory_space<vmem>>, vector<1x16x16xbf16>
    %352 = vector.shape_cast %351 : vector<1x16x16xbf16> to vector<16x16xbf16>
    %cst_333 = arith.constant dense<0.000000e+00> : vector<16x32xf32>
    %353 = tpu.matmul %352, %333, %cst_333 {dimension_numbers = #tpu.dot_dimension_numbers<[1], [0], [0], [1], [0, 0, 1, 1], [], []>} : vector<16x16xbf16>, vector<16x32xbf16>, vector<16x32xf32> -> vector<16x32xf32>
    %354 = arith.truncf %353 : vector<16x32xf32> to vector<16x32xbf16>
    %c2_334 = arith.constant 2 : index
    %c0_335 = arith.constant 0 : index
    %c0_336 = arith.constant 0 : index
    %355 = vector.load %arg20[%c2_334, %c0_335, %c0_336] : memref<9x32x32xbf16, #tpu.memory_space<vmem>>, vector<1x32x32xbf16>
    %356 = vector.shape_cast %355 : vector<1x32x32xbf16> to vector<32x32xbf16>
    %cst_337 = arith.constant dense<0.000000e+00> : vector<16x32xf32>
    %357 = tpu.matmul %354, %356, %cst_337 {dimension_numbers = #tpu.dot_dimension_numbers<[1], [0], [0], [1], [0, 0, 1, 1], [], []>} : vector<16x32xbf16>, vector<32x32xbf16>, vector<16x32xf32> -> vector<16x32xf32>
    %358 = arith.addf %350, %357 : vector<16x32xf32>
    %c3_338 = arith.constant 3 : index
    %c0_339 = arith.constant 0 : index
    %c0_340 = arith.constant 0 : index
    %359 = vector.load %arg19[%c3_338, %c0_339, %c0_340] : memref<9x16x16xbf16, #tpu.memory_space<vmem>>, vector<1x16x16xbf16>
    %360 = vector.shape_cast %359 : vector<1x16x16xbf16> to vector<16x16xbf16>
    %cst_341 = arith.constant dense<0.000000e+00> : vector<16x32xf32>
    %361 = tpu.matmul %360, %333, %cst_341 {dimension_numbers = #tpu.dot_dimension_numbers<[1], [0], [0], [1], [0, 0, 1, 1], [], []>} : vector<16x16xbf16>, vector<16x32xbf16>, vector<16x32xf32> -> vector<16x32xf32>
    %362 = arith.truncf %361 : vector<16x32xf32> to vector<16x32xbf16>
    %c3_342 = arith.constant 3 : index
    %c0_343 = arith.constant 0 : index
    %c0_344 = arith.constant 0 : index
    %363 = vector.load %arg20[%c3_342, %c0_343, %c0_344] : memref<9x32x32xbf16, #tpu.memory_space<vmem>>, vector<1x32x32xbf16>
    %364 = vector.shape_cast %363 : vector<1x32x32xbf16> to vector<32x32xbf16>
    %cst_345 = arith.constant dense<0.000000e+00> : vector<16x32xf32>
    %365 = tpu.matmul %362, %364, %cst_345 {dimension_numbers = #tpu.dot_dimension_numbers<[1], [0], [0], [1], [0, 0, 1, 1], [], []>} : vector<16x32xbf16>, vector<32x32xbf16>, vector<16x32xf32> -> vector<16x32xf32>
    %366 = arith.addf %358, %365 : vector<16x32xf32>
    %c4_346 = arith.constant 4 : index
    %c0_347 = arith.constant 0 : index
    %c0_348 = arith.constant 0 : index
    %367 = vector.load %arg19[%c4_346, %c0_347, %c0_348] : memref<9x16x16xbf16, #tpu.memory_space<vmem>>, vector<1x16x16xbf16>
    %368 = vector.shape_cast %367 : vector<1x16x16xbf16> to vector<16x16xbf16>
    %cst_349 = arith.constant dense<0.000000e+00> : vector<16x32xf32>
    %369 = tpu.matmul %368, %333, %cst_349 {dimension_numbers = #tpu.dot_dimension_numbers<[1], [0], [0], [1], [0, 0, 1, 1], [], []>} : vector<16x16xbf16>, vector<16x32xbf16>, vector<16x32xf32> -> vector<16x32xf32>
    %370 = arith.truncf %369 : vector<16x32xf32> to vector<16x32xbf16>
    %c4_350 = arith.constant 4 : index
    %c0_351 = arith.constant 0 : index
    %c0_352 = arith.constant 0 : index
    %371 = vector.load %arg20[%c4_350, %c0_351, %c0_352] : memref<9x32x32xbf16, #tpu.memory_space<vmem>>, vector<1x32x32xbf16>
    %372 = vector.shape_cast %371 : vector<1x32x32xbf16> to vector<32x32xbf16>
    %cst_353 = arith.constant dense<0.000000e+00> : vector<16x32xf32>
    %373 = tpu.matmul %370, %372, %cst_353 {dimension_numbers = #tpu.dot_dimension_numbers<[1], [0], [0], [1], [0, 0, 1, 1], [], []>} : vector<16x32xbf16>, vector<32x32xbf16>, vector<16x32xf32> -> vector<16x32xf32>
    %374 = arith.addf %366, %373 : vector<16x32xf32>
    %c5_354 = arith.constant 5 : index
    %c0_355 = arith.constant 0 : index
    %c0_356 = arith.constant 0 : index
    %375 = vector.load %arg19[%c5_354, %c0_355, %c0_356] : memref<9x16x16xbf16, #tpu.memory_space<vmem>>, vector<1x16x16xbf16>
    %376 = vector.shape_cast %375 : vector<1x16x16xbf16> to vector<16x16xbf16>
    %cst_357 = arith.constant dense<0.000000e+00> : vector<16x32xf32>
    %377 = tpu.matmul %376, %333, %cst_357 {dimension_numbers = #tpu.dot_dimension_numbers<[1], [0], [0], [1], [0, 0, 1, 1], [], []>} : vector<16x16xbf16>, vector<16x32xbf16>, vector<16x32xf32> -> vector<16x32xf32>
    %378 = arith.truncf %377 : vector<16x32xf32> to vector<16x32xbf16>
    %c5_358 = arith.constant 5 : index
    %c0_359 = arith.constant 0 : index
    %c0_360 = arith.constant 0 : index
    %379 = vector.load %arg20[%c5_358, %c0_359, %c0_360] : memref<9x32x32xbf16, #tpu.memory_space<vmem>>, vector<1x32x32xbf16>
    %380 = vector.shape_cast %379 : vector<1x32x32xbf16> to vector<32x32xbf16>
    %cst_361 = arith.constant dense<0.000000e+00> : vector<16x32xf32>
    %381 = tpu.matmul %378, %380, %cst_361 {dimension_numbers = #tpu.dot_dimension_numbers<[1], [0], [0], [1], [0, 0, 1, 1], [], []>} : vector<16x32xbf16>, vector<32x32xbf16>, vector<16x32xf32> -> vector<16x32xf32>
    %382 = arith.addf %374, %381 : vector<16x32xf32>
    %c6_362 = arith.constant 6 : index
    %c0_363 = arith.constant 0 : index
    %c0_364 = arith.constant 0 : index
    %383 = vector.load %arg19[%c6_362, %c0_363, %c0_364] : memref<9x16x16xbf16, #tpu.memory_space<vmem>>, vector<1x16x16xbf16>
    %384 = vector.shape_cast %383 : vector<1x16x16xbf16> to vector<16x16xbf16>
    %cst_365 = arith.constant dense<0.000000e+00> : vector<16x32xf32>
    %385 = tpu.matmul %384, %333, %cst_365 {dimension_numbers = #tpu.dot_dimension_numbers<[1], [0], [0], [1], [0, 0, 1, 1], [], []>} : vector<16x16xbf16>, vector<16x32xbf16>, vector<16x32xf32> -> vector<16x32xf32>
    %386 = arith.truncf %385 : vector<16x32xf32> to vector<16x32xbf16>
    %c6_366 = arith.constant 6 : index
    %c0_367 = arith.constant 0 : index
    %c0_368 = arith.constant 0 : index
    %387 = vector.load %arg20[%c6_366, %c0_367, %c0_368] : memref<9x32x32xbf16, #tpu.memory_space<vmem>>, vector<1x32x32xbf16>
    %388 = vector.shape_cast %387 : vector<1x32x32xbf16> to vector<32x32xbf16>
    %cst_369 = arith.constant dense<0.000000e+00> : vector<16x32xf32>
    %389 = tpu.matmul %386, %388, %cst_369 {dimension_numbers = #tpu.dot_dimension_numbers<[1], [0], [0], [1], [0, 0, 1, 1], [], []>} : vector<16x32xbf16>, vector<32x32xbf16>, vector<16x32xf32> -> vector<16x32xf32>
    %390 = arith.addf %382, %389 : vector<16x32xf32>
    %c7_370 = arith.constant 7 : index
    %c0_371 = arith.constant 0 : index
    %c0_372 = arith.constant 0 : index
    %391 = vector.load %arg19[%c7_370, %c0_371, %c0_372] : memref<9x16x16xbf16, #tpu.memory_space<vmem>>, vector<1x16x16xbf16>
    %392 = vector.shape_cast %391 : vector<1x16x16xbf16> to vector<16x16xbf16>
    %cst_373 = arith.constant dense<0.000000e+00> : vector<16x32xf32>
    %393 = tpu.matmul %392, %333, %cst_373 {dimension_numbers = #tpu.dot_dimension_numbers<[1], [0], [0], [1], [0, 0, 1, 1], [], []>} : vector<16x16xbf16>, vector<16x32xbf16>, vector<16x32xf32> -> vector<16x32xf32>
    %394 = arith.truncf %393 : vector<16x32xf32> to vector<16x32xbf16>
    %c7_374 = arith.constant 7 : index
    %c0_375 = arith.constant 0 : index
    %c0_376 = arith.constant 0 : index
    %395 = vector.load %arg20[%c7_374, %c0_375, %c0_376] : memref<9x32x32xbf16, #tpu.memory_space<vmem>>, vector<1x32x32xbf16>
    %396 = vector.shape_cast %395 : vector<1x32x32xbf16> to vector<32x32xbf16>
    %cst_377 = arith.constant dense<0.000000e+00> : vector<16x32xf32>
    %397 = tpu.matmul %394, %396, %cst_377 {dimension_numbers = #tpu.dot_dimension_numbers<[1], [0], [0], [1], [0, 0, 1, 1], [], []>} : vector<16x32xbf16>, vector<32x32xbf16>, vector<16x32xf32> -> vector<16x32xf32>
    %398 = arith.addf %390, %397 : vector<16x32xf32>
    %c8_378 = arith.constant 8 : index
    %c0_379 = arith.constant 0 : index
    %c0_380 = arith.constant 0 : index
    %399 = vector.load %arg19[%c8_378, %c0_379, %c0_380] : memref<9x16x16xbf16, #tpu.memory_space<vmem>>, vector<1x16x16xbf16>
    %400 = vector.shape_cast %399 : vector<1x16x16xbf16> to vector<16x16xbf16>
    %cst_381 = arith.constant dense<0.000000e+00> : vector<16x32xf32>
    %401 = tpu.matmul %400, %333, %cst_381 {dimension_numbers = #tpu.dot_dimension_numbers<[1], [0], [0], [1], [0, 0, 1, 1], [], []>} : vector<16x16xbf16>, vector<16x32xbf16>, vector<16x32xf32> -> vector<16x32xf32>
    %402 = arith.truncf %401 : vector<16x32xf32> to vector<16x32xbf16>
    %c8_382 = arith.constant 8 : index
    %c0_383 = arith.constant 0 : index
    %c0_384 = arith.constant 0 : index
    %403 = vector.load %arg20[%c8_382, %c0_383, %c0_384] : memref<9x32x32xbf16, #tpu.memory_space<vmem>>, vector<1x32x32xbf16>
    %404 = vector.shape_cast %403 : vector<1x32x32xbf16> to vector<32x32xbf16>
    %cst_385 = arith.constant dense<0.000000e+00> : vector<16x32xf32>
    %405 = tpu.matmul %402, %404, %cst_385 {dimension_numbers = #tpu.dot_dimension_numbers<[1], [0], [0], [1], [0, 0, 1, 1], [], []>} : vector<16x32xbf16>, vector<32x32xbf16>, vector<16x32xf32> -> vector<16x32xf32>
    %406 = arith.addf %398, %405 : vector<16x32xf32>
    %c0_386 = arith.constant 0 : index
    %c0_387 = arith.constant 0 : index
    %407 = vector.load %arg21[%c0_386, %c0_387] : memref<1x32xf32, #tpu.memory_space<vmem>>, vector<1x32xf32>
    %408 = vector.broadcast %407 : vector<1x32xf32> to vector<16x32xf32>
    %409 = arith.addf %406, %408 : vector<16x32xf32>
    %c0_388 = arith.constant 0 : index
    %c0_389 = arith.constant 0 : index
    %410 = vector.load %arg26[%c0_388, %c0_389] : memref<64x16xbf16, #tpu.memory_space<vmem>>, vector<64x16xbf16>
    %cst_390 = arith.constant dense<0.000000e+00> : vector<64x32xf32>
    %411 = tpu.matmul %410, %333, %cst_390 {dimension_numbers = #tpu.dot_dimension_numbers<[1], [0], [0], [1], [0, 0, 1, 1], [], []>} : vector<64x16xbf16>, vector<16x32xbf16>, vector<64x32xf32> -> vector<64x32xf32>
    %412 = arith.addf %242, %411 : vector<64x32xf32>
    %413 = arith.truncf %412 : vector<64x32xf32> to vector<64x32xbf16>
    %cst_391 = arith.constant 0.000000e+00 : f32
    %414 = vector.broadcast %cst_391 : f32 to vector<64x32xf32>
    %c0_392 = arith.constant 0 : index
    %c0_393 = arith.constant 0 : index
    %c0_394 = arith.constant 0 : index
    %415 = vector.load %arg16[%c0_392, %c0_393, %c0_394] : memref<9x64x64xbf16, #tpu.memory_space<vmem>>, vector<1x64x64xbf16>
    %416 = vector.shape_cast %415 : vector<1x64x64xbf16> to vector<64x64xbf16>
    %cst_395 = arith.constant dense<0.000000e+00> : vector<64x32xf32>
    %417 = tpu.matmul %416, %413, %cst_395 {dimension_numbers = #tpu.dot_dimension_numbers<[1], [0], [0], [1], [0, 0, 1, 1], [], []>} : vector<64x64xbf16>, vector<64x32xbf16>, vector<64x32xf32> -> vector<64x32xf32>
    %418 = arith.truncf %417 : vector<64x32xf32> to vector<64x32xbf16>
    %c0_396 = arith.constant 0 : index
    %c0_397 = arith.constant 0 : index
    %c0_398 = arith.constant 0 : index
    %419 = vector.load %arg17[%c0_396, %c0_397, %c0_398] : memref<9x32x32xbf16, #tpu.memory_space<vmem>>, vector<1x32x32xbf16>
    %420 = vector.shape_cast %419 : vector<1x32x32xbf16> to vector<32x32xbf16>
    %cst_399 = arith.constant dense<0.000000e+00> : vector<64x32xf32>
    %421 = tpu.matmul %418, %420, %cst_399 {dimension_numbers = #tpu.dot_dimension_numbers<[1], [0], [0], [1], [0, 0, 1, 1], [], []>} : vector<64x32xbf16>, vector<32x32xbf16>, vector<64x32xf32> -> vector<64x32xf32>
    %422 = arith.addf %414, %421 : vector<64x32xf32>
    %c1_400 = arith.constant 1 : index
    %c0_401 = arith.constant 0 : index
    %c0_402 = arith.constant 0 : index
    %423 = vector.load %arg16[%c1_400, %c0_401, %c0_402] : memref<9x64x64xbf16, #tpu.memory_space<vmem>>, vector<1x64x64xbf16>
    %424 = vector.shape_cast %423 : vector<1x64x64xbf16> to vector<64x64xbf16>
    %cst_403 = arith.constant dense<0.000000e+00> : vector<64x32xf32>
    %425 = tpu.matmul %424, %413, %cst_403 {dimension_numbers = #tpu.dot_dimension_numbers<[1], [0], [0], [1], [0, 0, 1, 1], [], []>} : vector<64x64xbf16>, vector<64x32xbf16>, vector<64x32xf32> -> vector<64x32xf32>
    %426 = arith.truncf %425 : vector<64x32xf32> to vector<64x32xbf16>
    %c1_404 = arith.constant 1 : index
    %c0_405 = arith.constant 0 : index
    %c0_406 = arith.constant 0 : index
    %427 = vector.load %arg17[%c1_404, %c0_405, %c0_406] : memref<9x32x32xbf16, #tpu.memory_space<vmem>>, vector<1x32x32xbf16>
    %428 = vector.shape_cast %427 : vector<1x32x32xbf16> to vector<32x32xbf16>
    %cst_407 = arith.constant dense<0.000000e+00> : vector<64x32xf32>
    %429 = tpu.matmul %426, %428, %cst_407 {dimension_numbers = #tpu.dot_dimension_numbers<[1], [0], [0], [1], [0, 0, 1, 1], [], []>} : vector<64x32xbf16>, vector<32x32xbf16>, vector<64x32xf32> -> vector<64x32xf32>
    %430 = arith.addf %422, %429 : vector<64x32xf32>
    %c2_408 = arith.constant 2 : index
    %c0_409 = arith.constant 0 : index
    %c0_410 = arith.constant 0 : index
    %431 = vector.load %arg16[%c2_408, %c0_409, %c0_410] : memref<9x64x64xbf16, #tpu.memory_space<vmem>>, vector<1x64x64xbf16>
    %432 = vector.shape_cast %431 : vector<1x64x64xbf16> to vector<64x64xbf16>
    %cst_411 = arith.constant dense<0.000000e+00> : vector<64x32xf32>
    %433 = tpu.matmul %432, %413, %cst_411 {dimension_numbers = #tpu.dot_dimension_numbers<[1], [0], [0], [1], [0, 0, 1, 1], [], []>} : vector<64x64xbf16>, vector<64x32xbf16>, vector<64x32xf32> -> vector<64x32xf32>
    %434 = arith.truncf %433 : vector<64x32xf32> to vector<64x32xbf16>
    %c2_412 = arith.constant 2 : index
    %c0_413 = arith.constant 0 : index
    %c0_414 = arith.constant 0 : index
    %435 = vector.load %arg17[%c2_412, %c0_413, %c0_414] : memref<9x32x32xbf16, #tpu.memory_space<vmem>>, vector<1x32x32xbf16>
    %436 = vector.shape_cast %435 : vector<1x32x32xbf16> to vector<32x32xbf16>
    %cst_415 = arith.constant dense<0.000000e+00> : vector<64x32xf32>
    %437 = tpu.matmul %434, %436, %cst_415 {dimension_numbers = #tpu.dot_dimension_numbers<[1], [0], [0], [1], [0, 0, 1, 1], [], []>} : vector<64x32xbf16>, vector<32x32xbf16>, vector<64x32xf32> -> vector<64x32xf32>
    %438 = arith.addf %430, %437 : vector<64x32xf32>
    %c3_416 = arith.constant 3 : index
    %c0_417 = arith.constant 0 : index
    %c0_418 = arith.constant 0 : index
    %439 = vector.load %arg16[%c3_416, %c0_417, %c0_418] : memref<9x64x64xbf16, #tpu.memory_space<vmem>>, vector<1x64x64xbf16>
    %440 = vector.shape_cast %439 : vector<1x64x64xbf16> to vector<64x64xbf16>
    %cst_419 = arith.constant dense<0.000000e+00> : vector<64x32xf32>
    %441 = tpu.matmul %440, %413, %cst_419 {dimension_numbers = #tpu.dot_dimension_numbers<[1], [0], [0], [1], [0, 0, 1, 1], [], []>} : vector<64x64xbf16>, vector<64x32xbf16>, vector<64x32xf32> -> vector<64x32xf32>
    %442 = arith.truncf %441 : vector<64x32xf32> to vector<64x32xbf16>
    %c3_420 = arith.constant 3 : index
    %c0_421 = arith.constant 0 : index
    %c0_422 = arith.constant 0 : index
    %443 = vector.load %arg17[%c3_420, %c0_421, %c0_422] : memref<9x32x32xbf16, #tpu.memory_space<vmem>>, vector<1x32x32xbf16>
    %444 = vector.shape_cast %443 : vector<1x32x32xbf16> to vector<32x32xbf16>
    %cst_423 = arith.constant dense<0.000000e+00> : vector<64x32xf32>
    %445 = tpu.matmul %442, %444, %cst_423 {dimension_numbers = #tpu.dot_dimension_numbers<[1], [0], [0], [1], [0, 0, 1, 1], [], []>} : vector<64x32xbf16>, vector<32x32xbf16>, vector<64x32xf32> -> vector<64x32xf32>
    %446 = arith.addf %438, %445 : vector<64x32xf32>
    %c4_424 = arith.constant 4 : index
    %c0_425 = arith.constant 0 : index
    %c0_426 = arith.constant 0 : index
    %447 = vector.load %arg16[%c4_424, %c0_425, %c0_426] : memref<9x64x64xbf16, #tpu.memory_space<vmem>>, vector<1x64x64xbf16>
    %448 = vector.shape_cast %447 : vector<1x64x64xbf16> to vector<64x64xbf16>
    %cst_427 = arith.constant dense<0.000000e+00> : vector<64x32xf32>
    %449 = tpu.matmul %448, %413, %cst_427 {dimension_numbers = #tpu.dot_dimension_numbers<[1], [0], [0], [1], [0, 0, 1, 1], [], []>} : vector<64x64xbf16>, vector<64x32xbf16>, vector<64x32xf32> -> vector<64x32xf32>
    %450 = arith.truncf %449 : vector<64x32xf32> to vector<64x32xbf16>
    %c4_428 = arith.constant 4 : index
    %c0_429 = arith.constant 0 : index
    %c0_430 = arith.constant 0 : index
    %451 = vector.load %arg17[%c4_428, %c0_429, %c0_430] : memref<9x32x32xbf16, #tpu.memory_space<vmem>>, vector<1x32x32xbf16>
    %452 = vector.shape_cast %451 : vector<1x32x32xbf16> to vector<32x32xbf16>
    %cst_431 = arith.constant dense<0.000000e+00> : vector<64x32xf32>
    %453 = tpu.matmul %450, %452, %cst_431 {dimension_numbers = #tpu.dot_dimension_numbers<[1], [0], [0], [1], [0, 0, 1, 1], [], []>} : vector<64x32xbf16>, vector<32x32xbf16>, vector<64x32xf32> -> vector<64x32xf32>
    %454 = arith.addf %446, %453 : vector<64x32xf32>
    %c5_432 = arith.constant 5 : index
    %c0_433 = arith.constant 0 : index
    %c0_434 = arith.constant 0 : index
    %455 = vector.load %arg16[%c5_432, %c0_433, %c0_434] : memref<9x64x64xbf16, #tpu.memory_space<vmem>>, vector<1x64x64xbf16>
    %456 = vector.shape_cast %455 : vector<1x64x64xbf16> to vector<64x64xbf16>
    %cst_435 = arith.constant dense<0.000000e+00> : vector<64x32xf32>
    %457 = tpu.matmul %456, %413, %cst_435 {dimension_numbers = #tpu.dot_dimension_numbers<[1], [0], [0], [1], [0, 0, 1, 1], [], []>} : vector<64x64xbf16>, vector<64x32xbf16>, vector<64x32xf32> -> vector<64x32xf32>
    %458 = arith.truncf %457 : vector<64x32xf32> to vector<64x32xbf16>
    %c5_436 = arith.constant 5 : index
    %c0_437 = arith.constant 0 : index
    %c0_438 = arith.constant 0 : index
    %459 = vector.load %arg17[%c5_436, %c0_437, %c0_438] : memref<9x32x32xbf16, #tpu.memory_space<vmem>>, vector<1x32x32xbf16>
    %460 = vector.shape_cast %459 : vector<1x32x32xbf16> to vector<32x32xbf16>
    %cst_439 = arith.constant dense<0.000000e+00> : vector<64x32xf32>
    %461 = tpu.matmul %458, %460, %cst_439 {dimension_numbers = #tpu.dot_dimension_numbers<[1], [0], [0], [1], [0, 0, 1, 1], [], []>} : vector<64x32xbf16>, vector<32x32xbf16>, vector<64x32xf32> -> vector<64x32xf32>
    %462 = arith.addf %454, %461 : vector<64x32xf32>
    %c6_440 = arith.constant 6 : index
    %c0_441 = arith.constant 0 : index
    %c0_442 = arith.constant 0 : index
    %463 = vector.load %arg16[%c6_440, %c0_441, %c0_442] : memref<9x64x64xbf16, #tpu.memory_space<vmem>>, vector<1x64x64xbf16>
    %464 = vector.shape_cast %463 : vector<1x64x64xbf16> to vector<64x64xbf16>
    %cst_443 = arith.constant dense<0.000000e+00> : vector<64x32xf32>
    %465 = tpu.matmul %464, %413, %cst_443 {dimension_numbers = #tpu.dot_dimension_numbers<[1], [0], [0], [1], [0, 0, 1, 1], [], []>} : vector<64x64xbf16>, vector<64x32xbf16>, vector<64x32xf32> -> vector<64x32xf32>
    %466 = arith.truncf %465 : vector<64x32xf32> to vector<64x32xbf16>
    %c6_444 = arith.constant 6 : index
    %c0_445 = arith.constant 0 : index
    %c0_446 = arith.constant 0 : index
    %467 = vector.load %arg17[%c6_444, %c0_445, %c0_446] : memref<9x32x32xbf16, #tpu.memory_space<vmem>>, vector<1x32x32xbf16>
    %468 = vector.shape_cast %467 : vector<1x32x32xbf16> to vector<32x32xbf16>
    %cst_447 = arith.constant dense<0.000000e+00> : vector<64x32xf32>
    %469 = tpu.matmul %466, %468, %cst_447 {dimension_numbers = #tpu.dot_dimension_numbers<[1], [0], [0], [1], [0, 0, 1, 1], [], []>} : vector<64x32xbf16>, vector<32x32xbf16>, vector<64x32xf32> -> vector<64x32xf32>
    %470 = arith.addf %462, %469 : vector<64x32xf32>
    %c7_448 = arith.constant 7 : index
    %c0_449 = arith.constant 0 : index
    %c0_450 = arith.constant 0 : index
    %471 = vector.load %arg16[%c7_448, %c0_449, %c0_450] : memref<9x64x64xbf16, #tpu.memory_space<vmem>>, vector<1x64x64xbf16>
    %472 = vector.shape_cast %471 : vector<1x64x64xbf16> to vector<64x64xbf16>
    %cst_451 = arith.constant dense<0.000000e+00> : vector<64x32xf32>
    %473 = tpu.matmul %472, %413, %cst_451 {dimension_numbers = #tpu.dot_dimension_numbers<[1], [0], [0], [1], [0, 0, 1, 1], [], []>} : vector<64x64xbf16>, vector<64x32xbf16>, vector<64x32xf32> -> vector<64x32xf32>
    %474 = arith.truncf %473 : vector<64x32xf32> to vector<64x32xbf16>
    %c7_452 = arith.constant 7 : index
    %c0_453 = arith.constant 0 : index
    %c0_454 = arith.constant 0 : index
    %475 = vector.load %arg17[%c7_452, %c0_453, %c0_454] : memref<9x32x32xbf16, #tpu.memory_space<vmem>>, vector<1x32x32xbf16>
    %476 = vector.shape_cast %475 : vector<1x32x32xbf16> to vector<32x32xbf16>
    %cst_455 = arith.constant dense<0.000000e+00> : vector<64x32xf32>
    %477 = tpu.matmul %474, %476, %cst_455 {dimension_numbers = #tpu.dot_dimension_numbers<[1], [0], [0], [1], [0, 0, 1, 1], [], []>} : vector<64x32xbf16>, vector<32x32xbf16>, vector<64x32xf32> -> vector<64x32xf32>
    %478 = arith.addf %470, %477 : vector<64x32xf32>
    %c8_456 = arith.constant 8 : index
    %c0_457 = arith.constant 0 : index
    %c0_458 = arith.constant 0 : index
    %479 = vector.load %arg16[%c8_456, %c0_457, %c0_458] : memref<9x64x64xbf16, #tpu.memory_space<vmem>>, vector<1x64x64xbf16>
    %480 = vector.shape_cast %479 : vector<1x64x64xbf16> to vector<64x64xbf16>
    %cst_459 = arith.constant dense<0.000000e+00> : vector<64x32xf32>
    %481 = tpu.matmul %480, %413, %cst_459 {dimension_numbers = #tpu.dot_dimension_numbers<[1], [0], [0], [1], [0, 0, 1, 1], [], []>} : vector<64x64xbf16>, vector<64x32xbf16>, vector<64x32xf32> -> vector<64x32xf32>
    %482 = arith.truncf %481 : vector<64x32xf32> to vector<64x32xbf16>
    %c8_460 = arith.constant 8 : index
    %c0_461 = arith.constant 0 : index
    %c0_462 = arith.constant 0 : index
    %483 = vector.load %arg17[%c8_460, %c0_461, %c0_462] : memref<9x32x32xbf16, #tpu.memory_space<vmem>>, vector<1x32x32xbf16>
    %484 = vector.shape_cast %483 : vector<1x32x32xbf16> to vector<32x32xbf16>
    %cst_463 = arith.constant dense<0.000000e+00> : vector<64x32xf32>
    %485 = tpu.matmul %482, %484, %cst_463 {dimension_numbers = #tpu.dot_dimension_numbers<[1], [0], [0], [1], [0, 0, 1, 1], [], []>} : vector<64x32xbf16>, vector<32x32xbf16>, vector<64x32xf32> -> vector<64x32xf32>
    %486 = arith.addf %478, %485 : vector<64x32xf32>
    %c0_464 = arith.constant 0 : index
    %c0_465 = arith.constant 0 : index
    %487 = vector.load %arg18[%c0_464, %c0_465] : memref<1x32xf32, #tpu.memory_space<vmem>>, vector<1x32xf32>
    %488 = vector.broadcast %487 : vector<1x32xf32> to vector<64x32xf32>
    %489 = arith.addf %486, %488 : vector<64x32xf32>
    %c0_466 = arith.constant 0 : index
    %c0_467 = arith.constant 0 : index
    %490 = vector.load %arg27[%c0_466, %c0_467] : memref<64x32xf32, #tpu.memory_space<vmem>>, vector<64x32xf32>
    tpu.vector_store %arg27[%c0_466, %c0_467], %489 {strides = array<i32>} : memref<64x32xf32, #tpu.memory_space<vmem>>, vector<64x32xf32>,
    %c0_468 = arith.constant 0 : index
    %c0_469 = arith.constant 0 : index
    %491 = vector.load %arg28[%c0_468, %c0_469] : memref<16x32xf32, #tpu.memory_space<vmem>>, vector<16x32xf32>
    tpu.vector_store %arg28[%c0_468, %c0_469], %409 {strides = array<i32>} : memref<16x32xf32, #tpu.memory_space<vmem>>, vector<16x32xf32>,
    %c0_470 = arith.constant 0 : index
    %c0_471 = arith.constant 0 : index
    %492 = vector.load %arg29[%c0_470, %c0_471] : memref<4x32xf32, #tpu.memory_space<vmem>>, vector<4x32xf32>
    tpu.vector_store %arg29[%c0_470, %c0_471], %329 {strides = array<i32>} : memref<4x32xf32, #tpu.memory_space<vmem>>, vector<4x32xf32>,
    %493 = vector.extract_strided_slice %329 {offsets = [0, 0], sizes = [1, 32], strides = [1, 1]} : vector<4x32xf32> to vector<1x32xf32>
    %c0_472 = arith.constant 0 : index
    %c0_473 = arith.constant 0 : index
    %494 = vector.load %arg30[%c0_472, %c0_473] : memref<1x32xf32, #tpu.memory_space<vmem>>, vector<1x32xf32>
    tpu.vector_store %arg30[%c0_472, %c0_473], %493 {strides = array<i32>} : memref<1x32xf32, #tpu.memory_space<vmem>>, vector<1x32xf32>,
    return
  }
}

</mosaic_0001>

<llo_original>
// kernel: backbone_with_fpn_forward.1
$region0: #{backbone_with_fpn_forward.1}
  #allocation0 [shape = 'u32[]', space=smem, size = 0x4, offset = 0x4, fixed_abs, tag = 'smem constant byte address 0x4 - core index']
  #allocation1 [shape = 'u32[144,128]{1,0:T(1,128)}', space=vmem, size = 0x12000, scoped, tag = 'internal scratch']
  %s0 = inlined_call_operand.smem [shape: u32[31], index: -1, kind: input, shape index: {}]
  %s1 = sld [smem:[%s0]]
  %s2 = scalar_lea.smem %s0, 1
  %s3 = sld [smem:[%s2]]
  %s4 = scalar_lea.smem %s0, 2
  %s5 = sld [smem:[%s4]]
  %s6 = scalar_lea.smem %s0, 3
  %s7 = sld [smem:[%s6]]
  %s8 = scalar_lea.smem %s0, 4
  %s9 = sld [smem:[%s8]]
  %s10 = scalar_lea.smem %s0, 5
  %s11 = sld [smem:[%s10]]
  %s12 = scalar_lea.smem %s0, 6
  %s13 = sld [smem:[%s12]]
  %s14 = scalar_lea.smem %s0, 7
  %s15 = sld [smem:[%s14]]
  %s16 = scalar_lea.smem %s0, 8
  %s17 = sld [smem:[%s16]]
  %s18 = scalar_lea.smem %s0, 9
  %s19 = sld [smem:[%s18]]
  %s20 = scalar_lea.smem %s0, 10
  %s21 = sld [smem:[%s20]]
  %s22 = scalar_lea.smem %s0, 11
  %s23 = sld [smem:[%s22]]
  %s24 = scalar_lea.smem %s0, 12
  %s25 = sld [smem:[%s24]]
  %s26 = scalar_lea.smem %s0, 13
  %s27 = sld [smem:[%s26]]
  %s28 = scalar_lea.smem %s0, 14
  %s29 = sld [smem:[%s28]]
  %s30 = scalar_lea.smem %s0, 15
  %s31 = sld [smem:[%s30]]
  %s32 = scalar_lea.smem %s0, 16
  %s33 = sld [smem:[%s32]]
  %s34 = scalar_lea.smem %s0, 17
  %s35 = sld [smem:[%s34]]
  %s36 = scalar_lea.smem %s0, 18
  %s37 = sld [smem:[%s36]]
  %s38 = scalar_lea.smem %s0, 19
  %s39 = sld [smem:[%s38]]
  %s40 = scalar_lea.smem %s0, 20
  %s41 = sld [smem:[%s40]]
  %s42 = scalar_lea.smem %s0, 21
  %s43 = sld [smem:[%s42]]
  %s44 = scalar_lea.smem %s0, 22
  %s45 = sld [smem:[%s44]]
  %s46 = scalar_lea.smem %s0, 23
  %s47 = sld [smem:[%s46]]
  %s48 = scalar_lea.smem %s0, 24
  %s49 = sld [smem:[%s48]]
  %s50 = scalar_lea.smem %s0, 25
  %s51 = sld [smem:[%s50]]
  %s52 = scalar_lea.smem %s0, 26
  %s53 = sld [smem:[%s52]]
  %s54 = scalar_lea.smem %s0, 27
  %s55 = sld [smem:[%s54]]
  %s56 = scalar_lea.smem %s0, 28
  %s57 = sld [smem:[%s56]]
  %s58 = scalar_lea.smem %s0, 29
  %s59 = sld [smem:[%s58]]
  %s60 = scalar_lea.smem %s0, 30
  %s61 = sld [smem:[%s60]]
  %62 = xla_tuple %s55, %s57, %s59, %s61
  %s63 = sld [smem:[#allocation0]]
  $region214: #{backbone_with_fpn_forward.1} parent=0
    _
  %s65 = ssub.s32 1, %s63
  %s66 = scalar_select 0, %s65, %s63
  $region1: #{backbone_with_fpn_forward.1} parent=0
    #allocation2 [shape = 'u8[18432]{0}', space=vmem, size = 0x4800, scoped, tag = 'input window, operand 2, single buffered']
    #allocation3 [shape = 's32[1]{0}', space=sflag, size = 0x4, scoped, tag = 'scoped memory for backbone_with_fpn_forward.1']
    #allocation4 [shape = 'u8[36864]{0}', space=vmem, size = 0x9000, scoped, tag = 'input window, operand 4, single buffered']
    #allocation5 [shape = 's32[1]{0}', space=sflag, size = 0x4, scoped, tag = 'scoped memory for backbone_with_fpn_forward.1']
    #allocation6 [shape = 'u8[36864]{0}', space=vmem, size = 0x9000, scoped, tag = 'input window, operand 5, single buffered']
    #allocation7 [shape = 'u8[73728]{0}', space=vmem, size = 0x12000, scoped, tag = 'input window, operand 8, single buffered']
    #allocation8 [shape = 's32[1]{0}', space=sflag, size = 0x4, scoped, tag = 'scoped memory for backbone_with_fpn_forward.1']
    #allocation9 [shape = 'u8[512]{0}', space=vmem, size = 0x400, scoped, tag = 'input window, operand 9, single buffered']
    #allocation10 [shape = 'u8[4096]{0}', space=vmem, size = 0x1000, scoped, tag = 'input window, operand 10, single buffered']
    #allocation11 [shape = 's32[1]{0}', space=sflag, size = 0x4, scoped, tag = 'scoped memory for backbone_with_fpn_forward.1']
    #allocation12 [shape = 'u8[512]{0}', space=vmem, size = 0x400, scoped, tag = 'input window, operand 11, single buffered']
    #allocation13 [shape = 'u8[8192]{0}', space=vmem, size = 0x2000, scoped, tag = 'input window, operand 12, single buffered']
    #allocation14 [shape = 's32[1]{0}', space=sflag, size = 0x4, scoped, tag = 'scoped memory for backbone_with_fpn_forward.1']
    #allocation15 [shape = 'u8[512]{0}', space=vmem, size = 0x400, scoped, tag = 'input window, operand 13, single buffered']
    #allocation16 [shape = 'u8[512]{0}', space=vmem, size = 0x400, scoped, tag = 'input window, operand 15, single buffered']
    #allocation17 [shape = 's32[1]{0}', space=sflag, size = 0x4, scoped, tag = 'scoped memory for backbone_with_fpn_forward.1']
    #allocation18 [shape = 'u8[147456]{0}', space=vmem, size = 0x24000, scoped, tag = 'input window, operand 16, single buffered']
    #allocation19 [shape = 'u8[73728]{0}', space=vmem, size = 0x12000, scoped, tag = 'input window, operand 17, single buffered']
    #allocation20 [shape = 's32[1]{0}', space=sflag, size = 0x4, scoped, tag = 'scoped memory for backbone_with_fpn_forward.1']
    #allocation21 [shape = 'u8[512]{0}', space=vmem, size = 0x400, scoped, tag = 'input window, operand 18, single buffered']
    #allocation22 [shape = 'u8[36864]{0}', space=vmem, size = 0x9000, scoped, tag = 'input window, operand 19, single buffered']
    #allocation23 [shape = 's32[1]{0}', space=sflag, size = 0x4, scoped, tag = 'scoped memory for backbone_with_fpn_forward.1']
    #allocation24 [shape = 'u8[73728]{0}', space=vmem, size = 0x12000, scoped, tag = 'input window, operand 20, single buffered']
    #allocation25 [shape = 'u8[512]{0}', space=vmem, size = 0x400, scoped, tag = 'input window, operand 21, single buffered']
    #allocation26 [shape = 's32[1]{0}', space=sflag, size = 0x4, scoped, tag = 'scoped memory for backbone_with_fpn_forward.1']
    #allocation27 [shape = 'u8[73728]{0}', space=vmem, size = 0x12000, scoped, tag = 'input window, operand 23, single buffered']
    #allocation28 [shape = 'u8[512]{0}', space=vmem, size = 0x400, scoped, tag = 'input window, operand 24, single buffered']
    #allocation29 [shape = 's32[1]{0}', space=sflag, size = 0x4, scoped, tag = 'scoped memory for backbone_with_fpn_forward.1']
    %67 = vsyncpa [#allocation3], 0
    %68 = vsyncpa [#allocation5], 0
    %69 = vsyncpa [#allocation8], 0
    %70 = vsyncpa [#allocation11], 0
    %71 = vsyncpa [#allocation14], 0
    %72 = vsyncpa [#allocation17], 0
    %73 = vsyncpa [#allocation20], 0
    %74 = vsyncpa [#allocation23], 0
    %75 = vsyncpa [#allocation26], 0
    %76 = vsyncpa [#allocation29], 0
    // Predicated region
    $region2: #{backbone_with_fpn_forward.1} parent=1 // pred_check
      _
    $region3: #{backbone_with_fpn_forward.1} parent=1 // pred_check_branch
      %78 = sbr.rel (0) target = $region5
    $region4: #{backbone_with_fpn_forward.1} parent=1 // pred_region
      _
    $region5: #{backbone_with_fpn_forward.1} parent=1 // pred_fallthru
      _
    // Predicated region
    $region6: #{backbone_with_fpn_forward.1} parent=1 // pred_check
      _
    $region7: #{backbone_with_fpn_forward.1} parent=1 // pred_check_branch
      %80 = sbr.rel (0) target = $region9
    $region8: #{backbone_with_fpn_forward.1} parent=1 // pred_region
      _
    $region9: #{backbone_with_fpn_forward.1} parent=1 // pred_fallthru
      _
    // Predicated region
    $region10: #{backbone_with_fpn_forward.1} parent=1 // pred_check
      _
    $region11: #{backbone_with_fpn_forward.1} parent=1 // pred_check_branch
      %82 = sbr.rel (0) target = $region13
    $region12: #{backbone_with_fpn_forward.1} parent=1 // pred_region
      %s84 = ssub.s32 576, 576
      %85 = vsyncadd [#allocation3], %s84
      %s86 = sshll.u32 [#allocation2], 4
      %s87 = int_to_ptr.vmem [resolvable:$true] %s86
      %92 = dma.hbm_to_vmem [thread:$0]  %s5, 576, %s87, [#allocation3], 64, 64, 4
    $region13: #{backbone_with_fpn_forward.1} parent=1 // pred_fallthru
      _
    // Predicated region
    $region14: #{backbone_with_fpn_forward.1} parent=1 // pred_check
      _
    $region15: #{backbone_with_fpn_forward.1} parent=1 // pred_check_branch
      %94 = sbr.rel (0) target = $region17
    $region16: #{backbone_with_fpn_forward.1} parent=1 // pred_region
      _
    $region17: #{backbone_with_fpn_forward.1} parent=1 // pred_fallthru
      _
    // Predicated region
    $region18: #{backbone_with_fpn_forward.1} parent=1 // pred_check
      _
    $region19: #{backbone_with_fpn_forward.1} parent=1 // pred_check_branch
      %96 = sbr.rel (0) target = $region21
    $region20: #{backbone_with_fpn_forward.1} parent=1 // pred_region
      %s98 = ssub.s32 1152, 1152
      %99 = vsyncadd [#allocation5], %s98
      %s100 = sshll.u32 [#allocation4], 4
      %s101 = int_to_ptr.vmem [resolvable:$true] %s100
      %106 = dma.hbm_to_vmem [thread:$0]  %s9, 1152, %s101, [#allocation5], 64, 64, 4
    $region21: #{backbone_with_fpn_forward.1} parent=1 // pred_fallthru
      _
    // Predicated region
    $region22: #{backbone_with_fpn_forward.1} parent=1 // pred_check
      _
    $region23: #{backbone_with_fpn_forward.1} parent=1 // pred_check_branch
      %108 = sbr.rel (0) target = $region25
    $region24: #{backbone_with_fpn_forward.1} parent=1 // pred_region
      %s110 = ssub.s32 1152, 1152
      %111 = vsyncadd [#allocation5], %s110
      %s112 = sshll.u32 [#allocation6], 4
      %s113 = int_to_ptr.vmem [resolvable:$true] %s112
      %118 = dma.hbm_to_vmem [thread:$0]  %s11, 1152, %s113, [#allocation5], 64, 64, 4
    $region25: #{backbone_with_fpn_forward.1} parent=1 // pred_fallthru
      _
    // Predicated region
    $region26: #{backbone_with_fpn_forward.1} parent=1 // pred_check
      _
    $region27: #{backbone_with_fpn_forward.1} parent=1 // pred_check_branch
      %120 = sbr.rel (0) target = $region29
    $region28: #{backbone_with_fpn_forward.1} parent=1 // pred_region
      _
    $region29: #{backbone_with_fpn_forward.1} parent=1 // pred_fallthru
      _
    // Predicated region
    $region30: #{backbone_with_fpn_forward.1} parent=1 // pred_check
      _
    $region31: #{backbone_with_fpn_forward.1} parent=1 // pred_check_branch
      %122 = sbr.rel (0) target = $region33
    $region32: #{backbone_with_fpn_forward.1} parent=1 // pred_region
      _
    $region33: #{backbone_with_fpn_forward.1} parent=1 // pred_fallthru
      _
    // Predicated region
    $region34: #{backbone_with_fpn_forward.1} parent=1 // pred_check
      _
    $region35: #{backbone_with_fpn_forward.1} parent=1 // pred_check_branch
      %124 = sbr.rel (0) target = $region37
    $region36: #{backbone_with_fpn_forward.1} parent=1 // pred_region
      %s126 = ssub.s32 2304, 2304
      %127 = vsyncadd [#allocation8], %s126
      %s128 = sshll.u32 [#allocation7], 4
      %s129 = int_to_ptr.vmem [resolvable:$true] %s128
      %134 = dma.hbm_to_vmem [thread:$0]  %s17, 2304, %s129, [#allocation8], 64, 64, 4
    $region37: #{backbone_with_fpn_forward.1} parent=1 // pred_fallthru
      _
    // Predicated region
    $region38: #{backbone_with_fpn_forward.1} parent=1 // pred_check
      _
    $region39: #{backbone_with_fpn_forward.1} parent=1 // pred_check_branch
      %136 = sbr.rel (0) target = $region41
    $region40: #{backbone_with_fpn_forward.1} parent=1 // pred_region
      %s138 = ssub.s32 16, 16
      %139 = vsyncadd [#allocation8], %s138
      %s141 = sshll.u32 [#allocation9], 4
      %s142 = int_to_ptr.vmem [resolvable:$true] %s141
      %144 = dma.hbm_to_vmem [thread:$0]  %s19, 16, %s142, [#allocation8]
    $region41: #{backbone_with_fpn_forward.1} parent=1 // pred_fallthru
      _
    // Predicated region
    $region42: #{backbone_with_fpn_forward.1} parent=1 // pred_check
      _
    $region43: #{backbone_with_fpn_forward.1} parent=1 // pred_check_branch
      %146 = sbr.rel (0) target = $region45
    $region44: #{backbone_with_fpn_forward.1} parent=1 // pred_region
      %s148 = ssub.s32 128, 128
      %149 = vsyncadd [#allocation11], %s148
      %s150 = sshll.u32 [#allocation10], 4
      %s151 = int_to_ptr.vmem [resolvable:$true] %s150
      %156 = dma.hbm_to_vmem [thread:$0]  %s21, 128, %s151, [#allocation11], 64, 64, 4
    $region45: #{backbone_with_fpn_forward.1} parent=1 // pred_fallthru
      _
    // Predicated region
    $region46: #{backbone_with_fpn_forward.1} parent=1 // pred_check
      _
    $region47: #{backbone_with_fpn_forward.1} parent=1 // pred_check_branch
      %158 = sbr.rel (0) target = $region49
    $region48: #{backbone_with_fpn_forward.1} parent=1 // pred_region
      %s160 = ssub.s32 16, 16
      %161 = vsyncadd [#allocation11], %s160
      %s163 = sshll.u32 [#allocation12], 4
      %s164 = int_to_ptr.vmem [resolvable:$true] %s163
      %166 = dma.hbm_to_vmem [thread:$0]  %s23, 16, %s164, [#allocation11]
    $region49: #{backbone_with_fpn_forward.1} parent=1 // pred_fallthru
      _
    // Predicated region
    $region50: #{backbone_with_fpn_forward.1} parent=1 // pred_check
      _
    $region51: #{backbone_with_fpn_forward.1} parent=1 // pred_check_branch
      %168 = sbr.rel (0) target = $region53
    $region52: #{backbone_with_fpn_forward.1} parent=1 // pred_region
      %s170 = ssub.s32 256, 256
      %171 = vsyncadd [#allocation14], %s170
      %s172 = sshll.u32 [#allocation13], 4
      %s173 = int_to_ptr.vmem [resolvable:$true] %s172
      %178 = dma.hbm_to_vmem [thread:$0]  %s25, 256, %s173, [#allocation14], 64, 64, 4
    $region53: #{backbone_with_fpn_forward.1} parent=1 // pred_fallthru
      _
    // Predicated region
    $region54: #{backbone_with_fpn_forward.1} parent=1 // pred_check
      _
    $region55: #{backbone_with_fpn_forward.1} parent=1 // pred_check_branch
      %180 = sbr.rel (0) target = $region57
    $region56: #{backbone_with_fpn_forward.1} parent=1 // pred_region
      %s182 = ssub.s32 16, 16
      %183 = vsyncadd [#allocation14], %s182
      %s185 = sshll.u32 [#allocation15], 4
      %s186 = int_to_ptr.vmem [resolvable:$true] %s185
      %188 = dma.hbm_to_vmem [thread:$0]  %s27, 16, %s186, [#allocation14]
    $region57: #{backbone_with_fpn_forward.1} parent=1 // pred_fallthru
      _
    // Predicated region
    $region58: #{backbone_with_fpn_forward.1} parent=1 // pred_check
      _
    $region59: #{backbone_with_fpn_forward.1} parent=1 // pred_check_branch
      %190 = sbr.rel (0) target = $region61
    $region60: #{backbone_with_fpn_forward.1} parent=1 // pred_region
      _
    $region61: #{backbone_with_fpn_forward.1} parent=1 // pred_fallthru
      _
    // Predicated region
    $region62: #{backbone_with_fpn_forward.1} parent=1 // pred_check
      _
    $region63: #{backbone_with_fpn_forward.1} parent=1 // pred_check_branch
      %192 = sbr.rel (0) target = $region65
    $region64: #{backbone_with_fpn_forward.1} parent=1 // pred_region
      %s194 = ssub.s32 16, 16
      %195 = vsyncadd [#allocation17], %s194
      %s197 = sshll.u32 [#allocation16], 4
      %s198 = int_to_ptr.vmem [resolvable:$true] %s197
      %200 = dma.hbm_to_vmem [thread:$0]  %s31, 16, %s198, [#allocation17]
    $region65: #{backbone_with_fpn_forward.1} parent=1 // pred_fallthru
      _
    // Predicated region
    $region66: #{backbone_with_fpn_forward.1} parent=1 // pred_check
      _
    $region67: #{backbone_with_fpn_forward.1} parent=1 // pred_check_branch
      %202 = sbr.rel (0) target = $region69
    $region68: #{backbone_with_fpn_forward.1} parent=1 // pred_region
      %s204 = ssub.s32 4608, 4608
      %205 = vsyncadd [#allocation17], %s204
      %s206 = sshll.u32 [#allocation18], 4
      %s207 = int_to_ptr.vmem [resolvable:$true] %s206
      %212 = dma.hbm_to_vmem [thread:$0]  %s33, 4608, %s207, [#allocation17], 64, 64, 4
    $region69: #{backbone_with_fpn_forward.1} parent=1 // pred_fallthru
      _
    // Predicated region
    $region70: #{backbone_with_fpn_forward.1} parent=1 // pred_check
      _
    $region71: #{backbone_with_fpn_forward.1} parent=1 // pred_check_branch
      %214 = sbr.rel (0) target = $region73
    $region72: #{backbone_with_fpn_forward.1} parent=1 // pred_region
      %s216 = ssub.s32 2304, 2304
      %217 = vsyncadd [#allocation20], %s216
      %s218 = sshll.u32 [#allocation19], 4
      %s219 = int_to_ptr.vmem [resolvable:$true] %s218
      %224 = dma.hbm_to_vmem [thread:$0]  %s35, 2304, %s219, [#allocation20], 64, 64, 4
    $region73: #{backbone_with_fpn_forward.1} parent=1 // pred_fallthru
      _
    // Predicated region
    $region74: #{backbone_with_fpn_forward.1} parent=1 // pred_check
      _
    $region75: #{backbone_with_fpn_forward.1} parent=1 // pred_check_branch
      %226 = sbr.rel (0) target = $region77
    $region76: #{backbone_with_fpn_forward.1} parent=1 // pred_region
      %s228 = ssub.s32 16, 16
      %229 = vsyncadd [#allocation20], %s228
      %s231 = sshll.u32 [#allocation21], 4
      %s232 = int_to_ptr.vmem [resolvable:$true] %s231
      %234 = dma.hbm_to_vmem [thread:$0]  %s37, 16, %s232, [#allocation20]
    $region77: #{backbone_with_fpn_forward.1} parent=1 // pred_fallthru
      _
    // Predicated region
    $region78: #{backbone_with_fpn_forward.1} parent=1 // pred_check
      _
    $region79: #{backbone_with_fpn_forward.1} parent=1 // pred_check_branch
      %236 = sbr.rel (0) target = $region81
    $region80: #{backbone_with_fpn_forward.1} parent=1 // pred_region
      %s238 = ssub.s32 1152, 1152
      %239 = vsyncadd [#allocation23], %s238
      %s240 = sshll.u32 [#allocation22], 4
      %s241 = int_to_ptr.vmem [resolvable:$true] %s240
      %246 = dma.hbm_to_vmem [thread:$0]  %s39, 1152, %s241, [#allocation23], 64, 64, 4
    $region81: #{backbone_with_fpn_forward.1} parent=1 // pred_fallthru
      _
    // Predicated region
    $region82: #{backbone_with_fpn_forward.1} parent=1 // pred_check
      _
    $region83: #{backbone_with_fpn_forward.1} parent=1 // pred_check_branch
      %248 = sbr.rel (0) target = $region85
    $region84: #{backbone_with_fpn_forward.1} parent=1 // pred_region
      %s250 = ssub.s32 2304, 2304
      %251 = vsyncadd [#allocation23], %s250
      %s252 = sshll.u32 [#allocation24], 4
      %s253 = int_to_ptr.vmem [resolvable:$true] %s252
      %258 = dma.hbm_to_vmem [thread:$0]  %s41, 2304, %s253, [#allocation23], 64, 64, 4
    $region85: #{backbone_with_fpn_forward.1} parent=1 // pred_fallthru
      _
    // Predicated region
    $region86: #{backbone_with_fpn_forward.1} parent=1 // pred_check
      _
    $region87: #{backbone_with_fpn_forward.1} parent=1 // pred_check_branch
      %260 = sbr.rel (0) target = $region89
    $region88: #{backbone_with_fpn_forward.1} parent=1 // pred_region
      %s262 = ssub.s32 16, 16
      %263 = vsyncadd [#allocation26], %s262
      %s265 = sshll.u32 [#allocation25], 4
      %s266 = int_to_ptr.vmem [resolvable:$true] %s265
      %268 = dma.hbm_to_vmem [thread:$0]  %s43, 16, %s266, [#allocation26]
    $region89: #{backbone_with_fpn_forward.1} parent=1 // pred_fallthru
      _
    // Predicated region
    $region90: #{backbone_with_fpn_forward.1} parent=1 // pred_check
      _
    $region91: #{backbone_with_fpn_forward.1} parent=1 // pred_check_branch
      %270 = sbr.rel (0) target = $region93
    $region92: #{backbone_with_fpn_forward.1} parent=1 // pred_region
      _
    $region93: #{backbone_with_fpn_forward.1} parent=1 // pred_fallthru
      _
    // Predicated region
    $region94: #{backbone_with_fpn_forward.1} parent=1 // pred_check
      _
    $region95: #{backbone_with_fpn_forward.1} parent=1 // pred_check_branch
      %272 = sbr.rel (0) target = $region97
    $region96: #{backbone_with_fpn_forward.1} parent=1 // pred_region
      %s274 = ssub.s32 2304, 2304
      %275 = vsyncadd [#allocation26], %s274
      %s276 = sshll.u32 [#allocation27], 4
      %s277 = int_to_ptr.vmem [resolvable:$true] %s276
      %282 = dma.hbm_to_vmem [thread:$0]  %s47, 2304, %s277, [#allocation26], 64, 64, 4
    $region97: #{backbone_with_fpn_forward.1} parent=1 // pred_fallthru
      _
    // Predicated region
    $region98: #{backbone_with_fpn_forward.1} parent=1 // pred_check
      _
    $region99: #{backbone_with_fpn_forward.1} parent=1 // pred_check_branch
      %284 = sbr.rel (0) target = $region101
    $region100: #{backbone_with_fpn_forward.1} parent=1 // pred_region
      %s286 = ssub.s32 16, 16
      %287 = vsyncadd [#allocation29], %s286
      %s289 = sshll.u32 [#allocation28], 4
      %s290 = int_to_ptr.vmem [resolvable:$true] %s289
      %292 = dma.hbm_to_vmem [thread:$0]  %s49, 16, %s290, [#allocation29]
    $region101: #{backbone_with_fpn_forward.1} parent=1 // pred_fallthru
      _
    // Predicated region
    $region102: #{backbone_with_fpn_forward.1} parent=1 // pred_check
      _
    $region103: #{backbone_with_fpn_forward.1} parent=1 // pred_check_branch
      %294 = sbr.rel (0) target = $region105
    $region104: #{backbone_with_fpn_forward.1} parent=1 // pred_region
      _
    $region105: #{backbone_with_fpn_forward.1} parent=1 // pred_fallthru
      _
    // Predicated region
    $region106: #{backbone_with_fpn_forward.1} parent=1 // pred_check
      _
    $region107: #{backbone_with_fpn_forward.1} parent=1 // pred_check_branch
      %296 = sbr.rel (0) target = $region109
    $region108: #{backbone_with_fpn_forward.1} parent=1 // pred_region
      _
    $region109: #{backbone_with_fpn_forward.1} parent=1 // pred_fallthru
      _
    // Predicated region
    $region110: #{backbone_with_fpn_forward.1} parent=1 // pred_check
      _
    $region111: #{backbone_with_fpn_forward.1} parent=1 // pred_check_branch
      %298 = sbr.rel (0) target = $region113
    $region112: #{backbone_with_fpn_forward.1} parent=1 // pred_region
      %299 = dma.done [#allocation3], 576
    $region113: #{backbone_with_fpn_forward.1} parent=1 // pred_fallthru
      _
    // Predicated region
    $region114: #{backbone_with_fpn_forward.1} parent=1 // pred_check
      _
    $region115: #{backbone_with_fpn_forward.1} parent=1 // pred_check_branch
      %301 = sbr.rel (0) target = $region117
    $region116: #{backbone_with_fpn_forward.1} parent=1 // pred_region
      %302 = dma.done [#allocation5], 1152
    $region117: #{backbone_with_fpn_forward.1} parent=1 // pred_fallthru
      _
    // Predicated region
    $region118: #{backbone_with_fpn_forward.1} parent=1 // pred_check
      _
    $region119: #{backbone_with_fpn_forward.1} parent=1 // pred_check_branch
      %304 = sbr.rel (0) target = $region121
    $region120: #{backbone_with_fpn_forward.1} parent=1 // pred_region
      %305 = dma.done [#allocation5], 1152
    $region121: #{backbone_with_fpn_forward.1} parent=1 // pred_fallthru
      _
    // Predicated region
    $region122: #{backbone_with_fpn_forward.1} parent=1 // pred_check
      _
    $region123: #{backbone_with_fpn_forward.1} parent=1 // pred_check_branch
      %307 = sbr.rel (0) target = $region125
    $region124: #{backbone_with_fpn_forward.1} parent=1 // pred_region
      %308 = dma.done [#allocation8], 2304
    $region125: #{backbone_with_fpn_forward.1} parent=1 // pred_fallthru
      _
    // Predicated region
    $region126: #{backbone_with_fpn_forward.1} parent=1 // pred_check
      _
    $region127: #{backbone_with_fpn_forward.1} parent=1 // pred_check_branch
      %310 = sbr.rel (0) target = $region129
    $region128: #{backbone_with_fpn_forward.1} parent=1 // pred_region
      %311 = dma.done [#allocation8], 16
    $region129: #{backbone_with_fpn_forward.1} parent=1 // pred_fallthru
      _
    // Predicated region
    $region130: #{backbone_with_fpn_forward.1} parent=1 // pred_check
      _
    $region131: #{backbone_with_fpn_forward.1} parent=1 // pred_check_branch
      %313 = sbr.rel (0) target = $region133
    $region132: #{backbone_with_fpn_forward.1} parent=1 // pred_region
      %314 = dma.done [#allocation11], 128
    $region133: #{backbone_with_fpn_forward.1} parent=1 // pred_fallthru
      _
    // Predicated region
    $region134: #{backbone_with_fpn_forward.1} parent=1 // pred_check
      _
    $region135: #{backbone_with_fpn_forward.1} parent=1 // pred_check_branch
      %316 = sbr.rel (0) target = $region137
    $region136: #{backbone_with_fpn_forward.1} parent=1 // pred_region
      %317 = dma.done [#allocation11], 16
    $region137: #{backbone_with_fpn_forward.1} parent=1 // pred_fallthru
      _
    // Predicated region
    $region138: #{backbone_with_fpn_forward.1} parent=1 // pred_check
      _
    $region139: #{backbone_with_fpn_forward.1} parent=1 // pred_check_branch
      %319 = sbr.rel (0) target = $region141
    $region140: #{backbone_with_fpn_forward.1} parent=1 // pred_region
      %320 = dma.done [#allocation14], 256
    $region141: #{backbone_with_fpn_forward.1} parent=1 // pred_fallthru
      _
    // Predicated region
    $region142: #{backbone_with_fpn_forward.1} parent=1 // pred_check
      _
    $region143: #{backbone_with_fpn_forward.1} parent=1 // pred_check_branch
      %322 = sbr.rel (0) target = $region145
    $region144: #{backbone_with_fpn_forward.1} parent=1 // pred_region
      %323 = dma.done [#allocation14], 16
    $region145: #{backbone_with_fpn_forward.1} parent=1 // pred_fallthru
      _
    // Predicated region
    $region146: #{backbone_with_fpn_forward.1} parent=1 // pred_check
      _
    $region147: #{backbone_with_fpn_forward.1} parent=1 // pred_check_branch
      %325 = sbr.rel (0) target = $region149
    $region148: #{backbone_with_fpn_forward.1} parent=1 // pred_region
      %326 = dma.done [#allocation17], 16
    $region149: #{backbone_with_fpn_forward.1} parent=1 // pred_fallthru
      _
    // Predicated region
    $region150: #{backbone_with_fpn_forward.1} parent=1 // pred_check
      _
    $region151: #{backbone_with_fpn_forward.1} parent=1 // pred_check_branch
      %328 = sbr.rel (0) target = $region153
    $region152: #{backbone_with_fpn_forward.1} parent=1 // pred_region
      %329 = dma.done [#allocation17], 4608
    $region153: #{backbone_with_fpn_forward.1} parent=1 // pred_fallthru
      _
    // Predicated region
    $region154: #{backbone_with_fpn_forward.1} parent=1 // pred_check
      _
    $region155: #{backbone_with_fpn_forward.1} parent=1 // pred_check_branch
      %331 = sbr.rel (0) target = $region157
    $region156: #{backbone_with_fpn_forward.1} parent=1 // pred_region
      %332 = dma.done [#allocation20], 2304
    $region157: #{backbone_with_fpn_forward.1} parent=1 // pred_fallthru
      _
    // Predicated region
    $region158: #{backbone_with_fpn_forward.1} parent=1 // pred_check
      _
    $region159: #{backbone_with_fpn_forward.1} parent=1 // pred_check_branch
      %334 = sbr.rel (0) target = $region161
    $region160: #{backbone_with_fpn_forward.1} parent=1 // pred_region
      %335 = dma.done [#allocation20], 16
    $region161: #{backbone_with_fpn_forward.1} parent=1 // pred_fallthru
      _
    // Predicated region
    $region162: #{backbone_with_fpn_forward.1} parent=1 // pred_check
      _
    $region163: #{backbone_with_fpn_forward.1} parent=1 // pred_check_branch
      %337 = sbr.rel (0) target = $region165
    $region164: #{backbone_with_fpn_forward.1} parent=1 // pred_region
      %338 = dma.done [#allocation23], 1152
    $region165: #{backbone_with_fpn_forward.1} parent=1 // pred_fallthru
      _
    // Predicated region
    $region166: #{backbone_with_fpn_forward.1} parent=1 // pred_check
      _
    $region167: #{backbone_with_fpn_forward.1} parent=1 // pred_check_branch
      %340 = sbr.rel (0) target = $region169
    $region168: #{backbone_with_fpn_forward.1} parent=1 // pred_region
      %341 = dma.done [#allocation23], 2304
    $region169: #{backbone_with_fpn_forward.1} parent=1 // pred_fallthru
      _
    // Predicated region
    $region170: #{backbone_with_fpn_forward.1} parent=1 // pred_check
      _
    $region171: #{backbone_with_fpn_forward.1} parent=1 // pred_check_branch
      %343 = sbr.rel (0) target = $region173
    $region172: #{backbone_with_fpn_forward.1} parent=1 // pred_region
      %344 = dma.done [#allocation26], 16
    $region173: #{backbone_with_fpn_forward.1} parent=1 // pred_fallthru
      _
    // Predicated region
    $region174: #{backbone_with_fpn_forward.1} parent=1 // pred_check
      _
    $region175: #{backbone_with_fpn_forward.1} parent=1 // pred_check_branch
      %346 = sbr.rel (0) target = $region177
    $region176: #{backbone_with_fpn_forward.1} parent=1 // pred_region
      %347 = dma.done [#allocation26], 2304
    $region177: #{backbone_with_fpn_forward.1} parent=1 // pred_fallthru
      _
    // Predicated region
    $region178: #{backbone_with_fpn_forward.1} parent=1 // pred_check
      _
    $region179: #{backbone_with_fpn_forward.1} parent=1 // pred_check_branch
      %349 = sbr.rel (0) target = $region181
    $region180: #{backbone_with_fpn_forward.1} parent=1 // pred_region
      %350 = dma.done [#allocation29], 16
    $region181: #{backbone_with_fpn_forward.1} parent=1 // pred_fallthru
      _
    %v352 = vld [vmem:[%s1] sm:$0xf]
    %v353 = vld [vmem:[%s1 + $0x4] sm:$0xf]
    %v354 = vld [vmem:[%s1 + $0x8] sm:$0xf]
    %v355 = vld [vmem:[%s1 + $0xc] sm:$0xf]
    %v356 = vld [vmem:[%s1 + $0x10] sm:$0xf]
    %v357 = vld [vmem:[%s1 + $0x14] sm:$0xf]
    %v358 = vld [vmem:[%s1 + $0x18] sm:$0xf]
    %v359 = vld [vmem:[%s1 + $0x1c] sm:$0xf]
    %v360 = vld [vmem:[%s1 + $0x20] sm:$0xf]
    %v361 = vld [vmem:[%s1 + $0x24] sm:$0xf]
    %v362 = vld [vmem:[%s1 + $0x28] sm:$0xf]
    %v363 = vld [vmem:[%s1 + $0x2c] sm:$0xf]
    %v364 = vld [vmem:[%s1 + $0x30] sm:$0xf]
    %v365 = vld [vmem:[%s1 + $0x34] sm:$0xf]
    %v366 = vld [vmem:[%s1 + $0x38] sm:$0xf]
    %v367 = vld [vmem:[%s1 + $0x3c] sm:$0xf]
    %v368 = vld [vmem:[%s1 + $0x40] sm:$0xf]
    %v369 = vld [vmem:[%s1 + $0x44] sm:$0xf]
    %v370 = vld [vmem:[%s1 + $0x48] sm:$0xf]
    %v371 = vld [vmem:[%s1 + $0x4c] sm:$0xf]
    %v372 = vld [vmem:[%s1 + $0x50] sm:$0xf]
    %v373 = vld [vmem:[%s1 + $0x54] sm:$0xf]
    %v374 = vld [vmem:[%s1 + $0x58] sm:$0xf]
    %v375 = vld [vmem:[%s1 + $0x5c] sm:$0xf]
    %v376 = vld [vmem:[%s1 + $0x60] sm:$0xf]
    %v377 = vld [vmem:[%s1 + $0x64] sm:$0xf]
    %v378 = vld [vmem:[%s1 + $0x68] sm:$0xf]
    %v379 = vld [vmem:[%s1 + $0x6c] sm:$0xf]
    %v380 = vld [vmem:[%s1 + $0x70] sm:$0xf]
    %v381 = vld [vmem:[%s1 + $0x74] sm:$0xf]
    %v382 = vld [vmem:[%s1 + $0x78] sm:$0xf]
    %v383 = vld [vmem:[%s1 + $0x7c] sm:$0xf]
    %v384 = vld [vmem:[%s3] sm:$0xff]
    %v385 = vld [vmem:[%s3 + $0x8] sm:$0xff]
    %v386 = vld [vmem:[%s3 + $0x10] sm:$0xff]
    %v387 = vld [vmem:[%s3 + $0x18] sm:$0xff]
    %v388 = vld [vmem:[%s3 + $0x20] sm:$0xff]
    %v389 = vld [vmem:[%s3 + $0x28] sm:$0xff]
    %v390 = vld [vmem:[%s3 + $0x30] sm:$0xff]
    %v391 = vld [vmem:[%s3 + $0x38] sm:$0xff]
    %v400 = vunpack.c.l.b16 %v384
    %v401 = vunpack.c.h.b16 %v384
    %v402 = vunpack.c.l.b16 %v385
    %v403 = vunpack.c.h.b16 %v385
    %v404 = vunpack.c.l.b16 %v386
    %v405 = vunpack.c.h.b16 %v386
    %v406 = vunpack.c.l.b16 %v387
    %v407 = vunpack.c.h.b16 %v387
    %v408 = vunpack.c.l.b16 %v388
    %v409 = vunpack.c.h.b16 %v388
    %v410 = vunpack.c.l.b16 %v389
    %v411 = vunpack.c.h.b16 %v389
    %v412 = vunpack.c.l.b16 %v390
    %v413 = vunpack.c.h.b16 %v390
    %v414 = vunpack.c.l.b16 %v391
    %v415 = vunpack.c.h.b16 %v391
    %v416 = vpack.c.b16 %v402, %v400
    %v417 = vpack.c.b16 %v403, %v401
    %v418 = vpack.c.b16 %v406, %v404
    %v419 = vpack.c.b16 %v407, %v405
    %v420 = vpack.c.b16 %v410, %v408
    %v421 = vpack.c.b16 %v411, %v409
    %v422 = vpack.c.b16 %v414, %v412
    %v423 = vpack.c.b16 %v415, %v413
    %v464 = vunpack.c.l.b16 %v352
    %v465 = vunpack.c.l.b16 %v353
    %v466 = vunpack.c.l.b16 %v354
    %v467 = vunpack.c.l.b16 %v355
    %v468 = vunpack.c.l.b16 %v356
    %v469 = vunpack.c.l.b16 %v357
    %v470 = vunpack.c.l.b16 %v358
    %v471 = vunpack.c.l.b16 %v359
    %v472 = vunpack.c.l.b16 %v360
    %v473 = vunpack.c.l.b16 %v361
    %v474 = vunpack.c.l.b16 %v362
    %v475 = vunpack.c.l.b16 %v363
    %v476 = vunpack.c.l.b16 %v364
    %v477 = vunpack.c.l.b16 %v365
    %v478 = vunpack.c.l.b16 %v366
    %v479 = vunpack.c.l.b16 %v367
    %v480 = vunpack.c.l.b16 %v368
    %v481 = vunpack.c.l.b16 %v369
    %v482 = vunpack.c.l.b16 %v370
    %v483 = vunpack.c.l.b16 %v371
    %v484 = vunpack.c.l.b16 %v372
    %v485 = vunpack.c.l.b16 %v373
    %v486 = vunpack.c.l.b16 %v374
    %v487 = vunpack.c.l.b16 %v375
    %v488 = vunpack.c.l.b16 %v376
    %v489 = vunpack.c.l.b16 %v377
    %v490 = vunpack.c.l.b16 %v378
    %v491 = vunpack.c.l.b16 %v379
    %v492 = vunpack.c.l.b16 %v380
    %v493 = vunpack.c.l.b16 %v381
    %v494 = vunpack.c.l.b16 %v382
    %v495 = vunpack.c.l.b16 %v383
    %v496 = vpack.c.b16 %v465, %v464
    %v497 = vpack.c.b16 %v467, %v466
    %v498 = vpack.c.b16 %v469, %v468
    %v499 = vpack.c.b16 %v471, %v470
    %v500 = vpack.c.b16 %v473, %v472
    %v501 = vpack.c.b16 %v475, %v474
    %v502 = vpack.c.b16 %v477, %v476
    %v503 = vpack.c.b16 %v479, %v478
    %v504 = vpack.c.b16 %v481, %v480
    %v505 = vpack.c.b16 %v483, %v482
    %v506 = vpack.c.b16 %v485, %v484
    %v507 = vpack.c.b16 %v487, %v486
    %v508 = vpack.c.b16 %v489, %v488
    %v509 = vpack.c.b16 %v491, %v490
    %v510 = vpack.c.b16 %v493, %v492
    %v511 = vpack.c.b16 %v495, %v494
    %528 = vmatprep.subr.bf16.mxu0 0
    %529 = vmatpush1.bf16.msra.mxu0 %v496
    %530 = vmatprep.subr.bf16.mxu0 0
    %531 = vmatpush1.bf16.msra.mxu0 %v497
    %532 = vmatprep.subr.bf16.mxu0 0
    %533 = vmatpush1.bf16.msra.mxu0 %v498
    %534 = vmatprep.subr.bf16.mxu0 0
    %535 = vmatpush1.bf16.msra.mxu0 %v499
    %536 = vmatprep.subr.bf16.mxu0 0
    %537 = vmatpush1.bf16.msra.mxu0 %v500
    %538 = vmatprep.subr.bf16.mxu0 0
    %539 = vmatpush1.bf16.msra.mxu0 %v501
    %540 = vmatprep.subr.bf16.mxu0 0
    %541 = vmatpush1.bf16.msra.mxu0 %v502
    %542 = vmatprep.subr.bf16.mxu0 0
    %543 = vmatpush1.bf16.msra.mxu0 %v503
    %544 = vmatprep.subr.bf16.mxu0 0
    %545 = vmatpush1.bf16.msra.mxu0 %v504
    %546 = vmatprep.subr.bf16.mxu0 0
    %547 = vmatpush1.bf16.msra.mxu0 %v505
    %548 = vmatprep.subr.bf16.mxu0 0
    %549 = vmatpush1.bf16.msra.mxu0 %v506
    %550 = vmatprep.subr.bf16.mxu0 0
    %551 = vmatpush1.bf16.msra.mxu0 %v507
    %552 = vmatprep.subr.bf16.mxu0 0
    %553 = vmatpush1.bf16.msra.mxu0 %v508
    %554 = vmatprep.subr.bf16.mxu0 0
    %555 = vmatpush1.bf16.msra.mxu0 %v509
    %556 = vmatprep.subr.bf16.mxu0 0
    %557 = vmatpush1.bf16.msra.mxu0 %v510
    %558 = vmatprep.subr.bf16.mxu0 0
    %559 = vmatpush1.bf16.msra.mxu0 %v511
    %560 = vmatprep.mubr.bf16.mxu0 %v417
    %561 = vmatmul.mubr.bf16.gmra.mrb[0].mxu0 %v416
    %v562 = vpop.f32.mrb[0].mxu0
    %v563 = vadd.f32 0.0, %v562
    %v564 = vpop.f32.mrb[0].mxu0
    %v565 = vpop.f32.mrb[0].mxu0
    %v566 = vadd.f32 0.0, %v565
    %v567 = vpop.f32.mrb[0].mxu0
    %568 = vmatprep.mubr.bf16.mxu0 %v419
    %569 = vmatmul.mubr.bf16.gmra.mrb[0].mxu0 %v418
    %v570 = vpop.f32.mrb[0].mxu0
    %v571 = vadd.f32 0.0, %v570
    %v572 = vpop.f32.mrb[0].mxu0
    %v573 = vpop.f32.mrb[0].mxu0
    %v574 = vadd.f32 0.0, %v573
    %v575 = vpop.f32.mrb[0].mxu0
    %576 = vmatprep.mubr.bf16.mxu0 %v421
    %577 = vmatmul.mubr.bf16.gmra.mrb[0].mxu0 %v420
    %v578 = vpop.f32.mrb[0].mxu0
    %v579 = vadd.f32 0.0, %v578
    %v580 = vpop.f32.mrb[0].mxu0
    %v581 = vpop.f32.mrb[0].mxu0
    %v582 = vadd.f32 0.0, %v581
    %v583 = vpop.f32.mrb[0].mxu0
    %584 = vmatprep.mubr.bf16.mxu0 %v423
    %585 = vmatmul.mubr.bf16.gmra.mrb[0].mxu0 %v422
    %v586 = vpop.f32.mrb[0].mxu0
    %v587 = vadd.f32 0.0, %v586
    %v588 = vpop.f32.mrb[0].mxu0
    %v589 = vpop.f32.mrb[0].mxu0
    %v590 = vadd.f32 0.0, %v589
    %v591 = vpop.f32.mrb[0].mxu0
    %592 = vdwg.mxu0
    %v593 = vpack.c.bf16 %v566, %v563
    %v594 = vpack.c.bf16 %v574, %v571
    %v595 = vpack.c.bf16 %v582, %v579
    %v596 = vpack.c.bf16 %v590, %v587
    %v597 = vld [vmem:[#allocation2] sm:$0xf]
    %s598 = scalar_lea.vmem %s3, 64
    %v599 = vld [vmem:[%s598] sm:$0xff]
    %v600 = vld [vmem:[%s598 + $0x8] sm:$0xff]
    %v601 = vld [vmem:[%s598 + $0x10] sm:$0xff]
    %v602 = vld [vmem:[%s598 + $0x18] sm:$0xff]
    %v603 = vld [vmem:[%s598 + $0x20] sm:$0xff]
    %v604 = vld [vmem:[%s598 + $0x28] sm:$0xff]
    %v605 = vld [vmem:[%s598 + $0x30] sm:$0xff]
    %v606 = vld [vmem:[%s598 + $0x38] sm:$0xff]
    %v615 = vunpack.c.l.b16 %v599
    %v616 = vunpack.c.h.b16 %v599
    %v617 = vunpack.c.l.b16 %v600
    %v618 = vunpack.c.h.b16 %v600
    %v619 = vunpack.c.l.b16 %v601
    %v620 = vunpack.c.h.b16 %v601
    %v621 = vunpack.c.l.b16 %v602
    %v622 = vunpack.c.h.b16 %v602
    %v623 = vunpack.c.l.b16 %v603
    %v624 = vunpack.c.h.b16 %v603
    %v625 = vunpack.c.l.b16 %v604
    %v626 = vunpack.c.h.b16 %v604
    %v627 = vunpack.c.l.b16 %v605
    %v628 = vunpack.c.h.b16 %v605
    %v629 = vunpack.c.l.b16 %v606
    %v630 = vunpack.c.h.b16 %v606
    %v631 = vpack.c.b16 %v617, %v615
    %v632 = vpack.c.b16 %v618, %v616
    %v633 = vpack.c.b16 %v621, %v619
    %v634 = vpack.c.b16 %v622, %v620
    %v635 = vpack.c.b16 %v625, %v623
    %v636 = vpack.c.b16 %v626, %v624
    %v637 = vpack.c.b16 %v629, %v627
    %v638 = vpack.c.b16 %v630, %v628
    %647 = vmatprep.subr.bf16.mxu0 0
    %648 = vmatpush1.bf16.msra.mxu0 %v496
    %649 = vmatprep.subr.bf16.mxu0 0
    %650 = vmatpush1.bf16.msra.mxu0 %v497
    %651 = vmatprep.subr.bf16.mxu0 0
    %652 = vmatpush1.bf16.msra.mxu0 %v498
    %653 = vmatprep.subr.bf16.mxu0 0
    %654 = vmatpush1.bf16.msra.mxu0 %v499
    %655 = vmatprep.subr.bf16.mxu0 0
    %656 = vmatpush1.bf16.msra.mxu0 %v500
    %657 = vmatprep.subr.bf16.mxu0 0
    %658 = vmatpush1.bf16.msra.mxu0 %v501
    %659 = vmatprep.subr.bf16.mxu0 0
    %660 = vmatpush1.bf16.msra.mxu0 %v502
    %661 = vmatprep.subr.bf16.mxu0 0
    %662 = vmatpush1.bf16.msra.mxu0 %v503
    %663 = vmatprep.subr.bf16.mxu0 0
    %664 = vmatpush1.bf16.msra.mxu0 %v504
    %665 = vmatprep.subr.bf16.mxu0 0
    %666 = vmatpush1.bf16.msra.mxu0 %v505
    %667 = vmatprep.subr.bf16.mxu0 0
    %668 = vmatpush1.bf16.msra.mxu0 %v506
    %669 = vmatprep.subr.bf16.mxu0 0
    %670 = vmatpush1.bf16.msra.mxu0 %v507
    %671 = vmatprep.subr.bf16.mxu0 0
    %672 = vmatpush1.bf16.msra.mxu0 %v508
    %673 = vmatprep.subr.bf16.mxu0 0
    %674 = vmatpush1.bf16.msra.mxu0 %v509
    %675 = vmatprep.subr.bf16.mxu0 0
    %676 = vmatpush1.bf16.msra.mxu0 %v510
    %677 = vmatprep.subr.bf16.mxu0 0
    %678 = vmatpush1.bf16.msra.mxu0 %v511
    %679 = vmatprep.mubr.bf16.mxu0 %v632
    %680 = vmatmul.mubr.bf16.gmra.mrb[0].mxu0 %v631
    %v681 = vpop.f32.mrb[0].mxu0
    %v682 = vadd.f32 0.0, %v681
    %v683 = vpop.f32.mrb[0].mxu0
    %v684 = vpop.f32.mrb[0].mxu0
    %v685 = vadd.f32 0.0, %v684
    %v686 = vpop.f32.mrb[0].mxu0
    %687 = vmatprep.mubr.bf16.mxu0 %v634
    %688 = vmatmul.mubr.bf16.gmra.mrb[0].mxu0 %v633
    %v689 = vpop.f32.mrb[0].mxu0
    %v690 = vadd.f32 0.0, %v689
    %v691 = vpop.f32.mrb[0].mxu0
    %v692 = vpop.f32.mrb[0].mxu0
    %v693 = vadd.f32 0.0, %v692
    %v694 = vpop.f32.mrb[0].mxu0
    %695 = vmatprep.mubr.bf16.mxu0 %v636
    %696 = vmatmul.mubr.bf16.gmra.mrb[0].mxu0 %v635
    %v697 = vpop.f32.mrb[0].mxu0
    %v698 = vadd.f32 0.0, %v697
    %v699 = vpop.f32.mrb[0].mxu0
    %v700 = vpop.f32.mrb[0].mxu0
    %v701 = vadd.f32 0.0, %v700
    %v702 = vpop.f32.mrb[0].mxu0
    %703 = vmatprep.mubr.bf16.mxu0 %v638
    %704 = vmatmul.mubr.bf16.gmra.mrb[0].mxu0 %v637
    %v705 = vpop.f32.mrb[0].mxu0
    %v706 = vadd.f32 0.0, %v705
    %v707 = vpop.f32.mrb[0].mxu0
    %v708 = vpop.f32.mrb[0].mxu0
    %v709 = vadd.f32 0.0, %v708
    %v710 = vpop.f32.mrb[0].mxu0
    %711 = vdwg.mxu0
    %v712 = vpack.c.bf16 %v685, %v682
    %v713 = vpack.c.bf16 %v693, %v690
    %v714 = vpack.c.bf16 %v701, %v698
    %v715 = vpack.c.bf16 %v709, %v706
    %s716 = scalar_lea.vmem [#allocation2], 4
    %v717 = vld [vmem:[%s716] sm:$0xf]
    %vm718 = vcmask 64512
    %v720 = vsel %vm718, %v712, 0
    %v723 = vsel %vm718, %v713, 0
    %v726 = vsel %vm718, %v714, 0
    %v729 = vsel %vm718, %v715, 0
    %vm731 = vcmask 1043456
    %v733 = vsel %vm731, %v717, 0
    %735 = vmatprep.subr.bf16.mxu0 0
    %736 = vmatpush1.bf16.msra.mxu0 %v733
    %737 = vmatprep.subr.bf16.mxu0 0
    %738 = vmatpush1.bf16.msra.mxu0 0
    %739 = vmatprep.subr.bf16.mxu0 0
    %740 = vmatpush1.bf16.msra.mxu0 0
    %741 = vmatprep.subr.bf16.mxu0 0
    %742 = vmatpush1.bf16.msra.mxu0 0
    %743 = vmatprep.subr.bf16.mxu0 0
    %744 = vmatpush1.bf16.msra.mxu0 0
    %745 = vmatprep.subr.bf16.mxu0 0
    %746 = vmatpush1.bf16.msra.mxu0 0
    %747 = vmatprep.subr.bf16.mxu0 0
    %748 = vmatpush1.bf16.msra.mxu0 0
    %749 = vmatprep.subr.bf16.mxu0 0
    %750 = vmatpush1.bf16.msra.mxu0 0
    %751 = vmatprep.subr.bf16.mxu0 0
    %752 = vmatpush1.bf16.msra.mxu0 0
    %753 = vmatprep.subr.bf16.mxu0 0
    %754 = vmatpush1.bf16.msra.mxu0 0
    %755 = vmatprep.subr.bf16.mxu0 0
    %756 = vmatpush1.bf16.msra.mxu0 0
    %757 = vmatprep.subr.bf16.mxu0 0
    %758 = vmatpush1.bf16.msra.mxu0 0
    %759 = vmatprep.subr.bf16.mxu0 0
    %760 = vmatpush1.bf16.msra.mxu0 0
    %761 = vmatprep.subr.bf16.mxu0 0
    %762 = vmatpush1.bf16.msra.mxu0 0
    %763 = vmatprep.subr.bf16.mxu0 0
    %764 = vmatpush1.bf16.msra.mxu0 0
    %765 = vmatprep.subr.bf16.mxu0 0
    %766 = vmatpush1.bf16.msra.mxu0 0
    %767 = vmatprep.mubr.bf16.mxu0 0
    %768 = vmatmul.mubr.bf16.gmra.mrb[0].mxu0 %v720
    %v769 = vpop.f32.mrb[0].mxu0
    %v770 = vadd.f32 0.0, %v769
    %v771 = vpop.f32.mrb[0].mxu0
    %v772 = vpop.f32.mrb[0].mxu0
    %v773 = vadd.f32 0.0, %v772
    %v774 = vpop.f32.mrb[0].mxu0
    %775 = vmatprep.mubr.bf16.mxu0 0
    %776 = vmatmul.mubr.bf16.gmra.mrb[0].mxu0 %v723
    %v777 = vpop.f32.mrb[0].mxu0
    %v778 = vadd.f32 0.0, %v777
    %v779 = vpop.f32.mrb[0].mxu0
    %v780 = vpop.f32.mrb[0].mxu0
    %v781 = vadd.f32 0.0, %v780
    %v782 = vpop.f32.mrb[0].mxu0
    %783 = vmatprep.mubr.bf16.mxu0 0
    %784 = vmatmul.mubr.bf16.gmra.mrb[0].mxu0 %v726
    %v785 = vpop.f32.mrb[0].mxu0
    %v786 = vadd.f32 0.0, %v785
    %v787 = vpop.f32.mrb[0].mxu0
    %v788 = vpop.f32.mrb[0].mxu0
    %v789 = vadd.f32 0.0, %v788
    %v790 = vpop.f32.mrb[0].mxu0
    %791 = vmatprep.mubr.bf16.mxu0 0
    %792 = vmatmul.mubr.bf16.gmra.mrb[0].mxu0 %v729
    %v793 = vpop.f32.mrb[0].mxu0
    %v794 = vadd.f32 0.0, %v793
    %v795 = vpop.f32.mrb[0].mxu0
    %v796 = vpop.f32.mrb[0].mxu0
    %v797 = vadd.f32 0.0, %v796
    %v798 = vpop.f32.mrb[0].mxu0
    %799 = vdwg.mxu0
    %v801 = vsel %vm718, %v593, 0
    %v804 = vsel %vm718, %v594, 0
    %v807 = vsel %vm718, %v595, 0
    %v810 = vsel %vm718, %v596, 0
    %v813 = vsel %vm731, %v597, 0
    %815 = vmatprep.subr.bf16.mxu0 0
    %816 = vmatpush1.bf16.msra.mxu0 %v813
    %817 = vmatprep.subr.bf16.mxu0 0
    %818 = vmatpush1.bf16.msra.mxu0 0
    %819 = vmatprep.subr.bf16.mxu0 0
    %820 = vmatpush1.bf16.msra.mxu0 0
    %821 = vmatprep.subr.bf16.mxu0 0
    %822 = vmatpush1.bf16.msra.mxu0 0
    %823 = vmatprep.subr.bf16.mxu0 0
    %824 = vmatpush1.bf16.msra.mxu0 0
    %825 = vmatprep.subr.bf16.mxu0 0
    %826 = vmatpush1.bf16.msra.mxu0 0
    %827 = vmatprep.subr.bf16.mxu0 0
    %828 = vmatpush1.bf16.msra.mxu0 0
    %829 = vmatprep.subr.bf16.mxu0 0
    %830 = vmatpush1.bf16.msra.mxu0 0
    %831 = vmatprep.subr.bf16.mxu0 0
    %832 = vmatpush1.bf16.msra.mxu0 0
    %833 = vmatprep.subr.bf16.mxu0 0
    %834 = vmatpush1.bf16.msra.mxu0 0
    %835 = vmatprep.subr.bf16.mxu0 0
    %836 = vmatpush1.bf16.msra.mxu0 0
    %837 = vmatprep.subr.bf16.mxu0 0
    %838 = vmatpush1.bf16.msra.mxu0 0
    %839 = vmatprep.subr.bf16.mxu0 0
    %840 = vmatpush1.bf16.msra.mxu0 0
    %841 = vmatprep.subr.bf16.mxu0 0
    %842 = vmatpush1.bf16.msra.mxu0 0
    %843 = vmatprep.subr.bf16.mxu0 0
    %844 = vmatpush1.bf16.msra.mxu0 0
    %845 = vmatprep.subr.bf16.mxu0 0
    %846 = vmatpush1.bf16.msra.mxu0 0
    %847 = vmatprep.mubr.bf16.mxu0 0
    %848 = vmatmul.mubr.bf16.gmra.mrb[0].mxu0 %v801
    %v849 = vpop.f32.mrb[0].mxu0
    %v850 = vadd.f32 %v770, %v849
    %v851 = vpop.f32.mrb[0].mxu0
    %v852 = vpop.f32.mrb[0].mxu0
    %v853 = vadd.f32 %v773, %v852
    %v854 = vpop.f32.mrb[0].mxu0
    %855 = vmatprep.mubr.bf16.mxu0 0
    %856 = vmatmul.mubr.bf16.gmra.mrb[0].mxu0 %v804
    %v857 = vpop.f32.mrb[0].mxu0
    %v858 = vadd.f32 %v778, %v857
    %v859 = vpop.f32.mrb[0].mxu0
    %v860 = vpop.f32.mrb[0].mxu0
    %v861 = vadd.f32 %v781, %v860
    %v862 = vpop.f32.mrb[0].mxu0
    %863 = vmatprep.mubr.bf16.mxu0 0
    %864 = vmatmul.mubr.bf16.gmra.mrb[0].mxu0 %v807
    %v865 = vpop.f32.mrb[0].mxu0
    %v866 = vadd.f32 %v786, %v865
    %v867 = vpop.f32.mrb[0].mxu0
    %v868 = vpop.f32.mrb[0].mxu0
    %v869 = vadd.f32 %v789, %v868
    %v870 = vpop.f32.mrb[0].mxu0
    %871 = vmatprep.mubr.bf16.mxu0 0
    %872 = vmatmul.mubr.bf16.gmra.mrb[0].mxu0 %v810
    %v873 = vpop.f32.mrb[0].mxu0
    %v874 = vadd.f32 %v794, %v873
    %v875 = vpop.f32.mrb[0].mxu0
    %v876 = vpop.f32.mrb[0].mxu0
    %v877 = vadd.f32 %v797, %v876
    %v878 = vpop.f32.mrb[0].mxu0
    %879 = vdwg.mxu0
    %s880 = scalar_lea.vmem %s3, 128
    %v881 = vld [vmem:[%s880] sm:$0xff]
    %v882 = vld [vmem:[%s880 + $0x8] sm:$0xff]
    %v883 = vld [vmem:[%s880 + $0x10] sm:$0xff]
    %v884 = vld [vmem:[%s880 + $0x18] sm:$0xff]
    %v885 = vld [vmem:[%s880 + $0x20] sm:$0xff]
    %v886 = vld [vmem:[%s880 + $0x28] sm:$0xff]
    %v887 = vld [vmem:[%s880 + $0x30] sm:$0xff]
    %v888 = vld [vmem:[%s880 + $0x38] sm:$0xff]
    %v897 = vunpack.c.l.b16 %v881
    %v898 = vunpack.c.h.b16 %v881
    %v899 = vunpack.c.l.b16 %v882
    %v900 = vunpack.c.h.b16 %v882
    %v901 = vunpack.c.l.b16 %v883
    %v902 = vunpack.c.h.b16 %v883
    %v903 = vunpack.c.l.b16 %v884
    %v904 = vunpack.c.h.b16 %v884
    %v905 = vunpack.c.l.b16 %v885
    %v906 = vunpack.c.h.b16 %v885
    %v907 = vunpack.c.l.b16 %v886
    %v908 = vunpack.c.h.b16 %v886
    %v909 = vunpack.c.l.b16 %v887
    %v910 = vunpack.c.h.b16 %v887
    %v911 = vunpack.c.l.b16 %v888
    %v912 = vunpack.c.h.b16 %v888
    %v913 = vpack.c.b16 %v899, %v897
    %v914 = vpack.c.b16 %v900, %v898
    %v915 = vpack.c.b16 %v903, %v901
    %v916 = vpack.c.b16 %v904, %v902
    %v917 = vpack.c.b16 %v907, %v905
    %v918 = vpack.c.b16 %v908, %v906
    %v919 = vpack.c.b16 %v911, %v909
    %v920 = vpack.c.b16 %v912, %v910
    %929 = vmatprep.subr.bf16.mxu0 0
    %930 = vmatpush1.bf16.msra.mxu0 %v496
    %931 = vmatprep.subr.bf16.mxu0 0
    %932 = vmatpush1.bf16.msra.mxu0 %v497
    %933 = vmatprep.subr.bf16.mxu0 0
    %934 = vmatpush1.bf16.msra.mxu0 %v498
    %935 = vmatprep.subr.bf16.mxu0 0
    %936 = vmatpush1.bf16.msra.mxu0 %v499
    %937 = vmatprep.subr.bf16.mxu0 0
    %938 = vmatpush1.bf16.msra.mxu0 %v500
    %939 = vmatprep.subr.bf16.mxu0 0
    %940 = vmatpush1.bf16.msra.mxu0 %v501
    %941 = vmatprep.subr.bf16.mxu0 0
    %942 = vmatpush1.bf16.msra.mxu0 %v502
    %943 = vmatprep.subr.bf16.mxu0 0
    %944 = vmatpush1.bf16.msra.mxu0 %v503
    %945 = vmatprep.subr.bf16.mxu0 0
    %946 = vmatpush1.bf16.msra.mxu0 %v504
    %947 = vmatprep.subr.bf16.mxu0 0
    %948 = vmatpush1.bf16.msra.mxu0 %v505
    %949 = vmatprep.subr.bf16.mxu0 0
    %950 = vmatpush1.bf16.msra.mxu0 %v506
    %951 = vmatprep.subr.bf16.mxu0 0
    %952 = vmatpush1.bf16.msra.mxu0 %v507
    %953 = vmatprep.subr.bf16.mxu0 0
    %954 = vmatpush1.bf16.msra.mxu0 %v508
    %955 = vmatprep.subr.bf16.mxu0 0
    %956 = vmatpush1.bf16.msra.mxu0 %v509
    %957 = vmatprep.subr.bf16.mxu0 0
    %958 = vmatpush1.bf16.msra.mxu0 %v510
    %959 = vmatprep.subr.bf16.mxu0 0
    %960 = vmatpush1.bf16.msra.mxu0 %v511
    %961 = vmatprep.mubr.bf16.mxu0 %v914
    %962 = vmatmul.mubr.bf16.gmra.mrb[0].mxu0 %v913
    %v963 = vpop.f32.mrb[0].mxu0
    %v964 = vadd.f32 0.0, %v963
    %v965 = vpop.f32.mrb[0].mxu0
    %v966 = vpop.f32.mrb[0].mxu0
    %v967 = vadd.f32 0.0, %v966
    %v968 = vpop.f32.mrb[0].mxu0
    %969 = vmatprep.mubr.bf16.mxu0 %v916
    %970 = vmatmul.mubr.bf16.gmra.mrb[0].mxu0 %v915
    %v971 = vpop.f32.mrb[0].mxu0
    %v972 = vadd.f32 0.0, %v971
    %v973 = vpop.f32.mrb[0].mxu0
    %v974 = vpop.f32.mrb[0].mxu0
    %v975 = vadd.f32 0.0, %v974
    %v976 = vpop.f32.mrb[0].mxu0
    %977 = vmatprep.mubr.bf16.mxu0 %v918
    %978 = vmatmul.mubr.bf16.gmra.mrb[0].mxu0 %v917
    %v979 = vpop.f32.mrb[0].mxu0
    %v980 = vadd.f32 0.0, %v979
    %v981 = vpop.f32.mrb[0].mxu0
    %v982 = vpop.f32.mrb[0].mxu0
    %v983 = vadd.f32 0.0, %v982
    %v984 = vpop.f32.mrb[0].mxu0
    %985 = vmatprep.mubr.bf16.mxu0 %v920
    %986 = vmatmul.mubr.bf16.gmra.mrb[0].mxu0 %v919
    %v987 = vpop.f32.mrb[0].mxu0
    %v988 = vadd.f32 0.0, %v987
    %v989 = vpop.f32.mrb[0].mxu0
    %v990 = vpop.f32.mrb[0].mxu0
    %v991 = vadd.f32 0.0, %v990
    %v992 = vpop.f32.mrb[0].mxu0
    %993 = vdwg.mxu0
    %v994 = vpack.c.bf16 %v967, %v964
    %v995 = vpack.c.bf16 %v975, %v972
    %v996 = vpack.c.bf16 %v983, %v980
    %v997 = vpack.c.bf16 %v991, %v988
    %s998 = scalar_lea.vmem [#allocation2], 8
    %v999 = vld [vmem:[%s998] sm:$0xf]
    %v1001 = vsel %vm718, %v994, 0
    %v1004 = vsel %vm718, %v995, 0
    %v1007 = vsel %vm718, %v996, 0
    %v1010 = vsel %vm718, %v997, 0
    %v1013 = vsel %vm731, %v999, 0
    %1015 = vmatprep.subr.bf16.mxu0 0
    %1016 = vmatpush1.bf16.msra.mxu0 %v1013
    %1017 = vmatprep.subr.bf16.mxu0 0
    %1018 = vmatpush1.bf16.msra.mxu0 0
    %1019 = vmatprep.subr.bf16.mxu0 0
    %1020 = vmatpush1.bf16.msra.mxu0 0
    %1021 = vmatprep.subr.bf16.mxu0 0
    %1022 = vmatpush1.bf16.msra.mxu0 0
    %1023 = vmatprep.subr.bf16.mxu0 0
    %1024 = vmatpush1.bf16.msra.mxu0 0
    %1025 = vmatprep.subr.bf16.mxu0 0
    %1026 = vmatpush1.bf16.msra.mxu0 0
    %1027 = vmatprep.subr.bf16.mxu0 0
    %1028 = vmatpush1.bf16.msra.mxu0 0
    %1029 = vmatprep.subr.bf16.mxu0 0
    %1030 = vmatpush1.bf16.msra.mxu0 0
    %1031 = vmatprep.subr.bf16.mxu0 0
    %1032 = vmatpush1.bf16.msra.mxu0 0
    %1033 = vmatprep.subr.bf16.mxu0 0
    %1034 = vmatpush1.bf16.msra.mxu0 0
    %1035 = vmatprep.subr.bf16.mxu0 0
    %1036 = vmatpush1.bf16.msra.mxu0 0
    %1037 = vmatprep.subr.bf16.mxu0 0
    %1038 = vmatpush1.bf16.msra.mxu0 0
    %1039 = vmatprep.subr.bf16.mxu0 0
    %1040 = vmatpush1.bf16.msra.mxu0 0
    %1041 = vmatprep.subr.bf16.mxu0 0
    %1042 = vmatpush1.bf16.msra.mxu0 0
    %1043 = vmatprep.subr.bf16.mxu0 0
    %1044 = vmatpush1.bf16.msra.mxu0 0
    %1045 = vmatprep.subr.bf16.mxu0 0
    %1046 = vmatpush1.bf16.msra.mxu0 0
    %1047 = vmatprep.mubr.bf16.mxu0 0
    %1048 = vmatmul.mubr.bf16.gmra.mrb[0].mxu0 %v1001
    %v1049 = vpop.f32.mrb[0].mxu0
    %v1050 = vadd.f32 0.0, %v1049
    %v1051 = vpop.f32.mrb[0].mxu0
    %v1052 = vpop.f32.mrb[0].mxu0
    %v1053 = vadd.f32 0.0, %v1052
    %v1054 = vpop.f32.mrb[0].mxu0
    %1055 = vmatprep.mubr.bf16.mxu0 0
    %1056 = vmatmul.mubr.bf16.gmra.mrb[0].mxu0 %v1004
    %v1057 = vpop.f32.mrb[0].mxu0
    %v1058 = vadd.f32 0.0, %v1057
    %v1059 = vpop.f32.mrb[0].mxu0
    %v1060 = vpop.f32.mrb[0].mxu0
    %v1061 = vadd.f32 0.0, %v1060
    %v1062 = vpop.f32.mrb[0].mxu0
    %1063 = vmatprep.mubr.bf16.mxu0 0
    %1064 = vmatmul.mubr.bf16.gmra.mrb[0].mxu0 %v1007
    %v1065 = vpop.f32.mrb[0].mxu0
    %v1066 = vadd.f32 0.0, %v1065
    %v1067 = vpop.f32.mrb[0].mxu0
    %v1068 = vpop.f32.mrb[0].mxu0
    %v1069 = vadd.f32 0.0, %v1068
    %v1070 = vpop.f32.mrb[0].mxu0
    %1071 = vmatprep.mubr.bf16.mxu0 0
    %1072 = vmatmul.mubr.bf16.gmra.mrb[0].mxu0 %v1010
    %v1073 = vpop.f32.mrb[0].mxu0
    %v1074 = vadd.f32 0.0, %v1073
    %v1075 = vpop.f32.mrb[0].mxu0
    %v1076 = vpop.f32.mrb[0].mxu0
    %v1077 = vadd.f32 0.0, %v1076
    %v1078 = vpop.f32.mrb[0].mxu0
    %1079 = vdwg.mxu0
    %v1080 = vadd.f32 %v850, %v1050
    %v1081 = vadd.f32 %v853, %v1053
    %v1082 = vadd.f32 %v858, %v1058
    %v1083 = vadd.f32 %v861, %v1061
    %v1084 = vadd.f32 %v866, %v1066
    %v1085 = vadd.f32 %v869, %v1069
    %v1086 = vadd.f32 %v874, %v1074
    %v1087 = vadd.f32 %v877, %v1077
    %s1088 = scalar_lea.vmem %s3, 192
    %v1089 = vld [vmem:[%s1088] sm:$0xff]
    %v1090 = vld [vmem:[%s1088 + $0x8] sm:$0xff]
    %v1091 = vld [vmem:[%s1088 + $0x10] sm:$0xff]
    %v1092 = vld [vmem:[%s1088 + $0x18] sm:$0xff]
    %v1093 = vld [vmem:[%s1088 + $0x20] sm:$0xff]
    %v1094 = vld [vmem:[%s1088 + $0x28] sm:$0xff]
    %v1095 = vld [vmem:[%s1088 + $0x30] sm:$0xff]
    %v1096 = vld [vmem:[%s1088 + $0x38] sm:$0xff]
    %v1105 = vunpack.c.l.b16 %v1089
    %v1106 = vunpack.c.h.b16 %v1089
    %v1107 = vunpack.c.l.b16 %v1090
    %v1108 = vunpack.c.h.b16 %v1090
    %v1109 = vunpack.c.l.b16 %v1091
    %v1110 = vunpack.c.h.b16 %v1091
    %v1111 = vunpack.c.l.b16 %v1092
    %v1112 = vunpack.c.h.b16 %v1092
    %v1113 = vunpack.c.l.b16 %v1093
    %v1114 = vunpack.c.h.b16 %v1093
    %v1115 = vunpack.c.l.b16 %v1094
    %v1116 = vunpack.c.h.b16 %v1094
    %v1117 = vunpack.c.l.b16 %v1095
    %v1118 = vunpack.c.h.b16 %v1095
    %v1119 = vunpack.c.l.b16 %v1096
    %v1120 = vunpack.c.h.b16 %v1096
    %v1121 = vpack.c.b16 %v1107, %v1105
    %v1122 = vpack.c.b16 %v1108, %v1106
    %v1123 = vpack.c.b16 %v1111, %v1109
    %v1124 = vpack.c.b16 %v1112, %v1110
    %v1125 = vpack.c.b16 %v1115, %v1113
    %v1126 = vpack.c.b16 %v1116, %v1114
    %v1127 = vpack.c.b16 %v1119, %v1117
    %v1128 = vpack.c.b16 %v1120, %v1118
    %1137 = vmatprep.subr.bf16.mxu0 0
    %1138 = vmatpush1.bf16.msra.mxu0 %v496
    %1139 = vmatprep.subr.bf16.mxu0 0
    %1140 = vmatpush1.bf16.msra.mxu0 %v497
    %1141 = vmatprep.subr.bf16.mxu0 0
    %1142 = vmatpush1.bf16.msra.mxu0 %v498
    %1143 = vmatprep.subr.bf16.mxu0 0
    %1144 = vmatpush1.bf16.msra.mxu0 %v499
    %1145 = vmatprep.subr.bf16.mxu0 0
    %1146 = vmatpush1.bf16.msra.mxu0 %v500
    %1147 = vmatprep.subr.bf16.mxu0 0
    %1148 = vmatpush1.bf16.msra.mxu0 %v501
    %1149 = vmatprep.subr.bf16.mxu0 0
    %1150 = vmatpush1.bf16.msra.mxu0 %v502
    %1151 = vmatprep.subr.bf16.mxu0 0
    %1152 = vmatpush1.bf16.msra.mxu0 %v503
    %1153 = vmatprep.subr.bf16.mxu0 0
    %1154 = vmatpush1.bf16.msra.mxu0 %v504
    %1155 = vmatprep.subr.bf16.mxu0 0
    %1156 = vmatpush1.bf16.msra.mxu0 %v505
    %1157 = vmatprep.subr.bf16.mxu0 0
    %1158 = vmatpush1.bf16.msra.mxu0 %v506
    %1159 = vmatprep.subr.bf16.mxu0 0
    %1160 = vmatpush1.bf16.msra.mxu0 %v507
    %1161 = vmatprep.subr.bf16.mxu0 0
    %1162 = vmatpush1.bf16.msra.mxu0 %v508
    %1163 = vmatprep.subr.bf16.mxu0 0
    %1164 = vmatpush1.bf16.msra.mxu0 %v509
    %1165 = vmatprep.subr.bf16.mxu0 0
    %1166 = vmatpush1.bf16.msra.mxu0 %v510
    %1167 = vmatprep.subr.bf16.mxu0 0
    %1168 = vmatpush1.bf16.msra.mxu0 %v511
    %1169 = vmatprep.mubr.bf16.mxu0 %v1122
    %1170 = vmatmul.mubr.bf16.gmra.mrb[0].mxu0 %v1121
    %v1171 = vpop.f32.mrb[0].mxu0
    %v1172 = vadd.f32 0.0, %v1171
    %v1173 = vpop.f32.mrb[0].mxu0
    %v1174 = vpop.f32.mrb[0].mxu0
    %v1175 = vadd.f32 0.0, %v1174
    %v1176 = vpop.f32.mrb[0].mxu0
    %1177 = vmatprep.mubr.bf16.mxu0 %v1124
    %1178 = vmatmul.mubr.bf16.gmra.mrb[0].mxu0 %v1123
    %v1179 = vpop.f32.mrb[0].mxu0
    %v1180 = vadd.f32 0.0, %v1179
    %v1181 = vpop.f32.mrb[0].mxu0
    %v1182 = vpop.f32.mrb[0].mxu0
    %v1183 = vadd.f32 0.0, %v1182
    %v1184 = vpop.f32.mrb[0].mxu0
    %1185 = vmatprep.mubr.bf16.mxu0 %v1126
    %1186 = vmatmul.mubr.bf16.gmra.mrb[0].mxu0 %v1125
    %v1187 = vpop.f32.mrb[0].mxu0
    %v1188 = vadd.f32 0.0, %v1187
    %v1189 = vpop.f32.mrb[0].mxu0
    %v1190 = vpop.f32.mrb[0].mxu0
    %v1191 = vadd.f32 0.0, %v1190
    %v1192 = vpop.f32.mrb[0].mxu0
    %1193 = vmatprep.mubr.bf16.mxu0 %v1128
    %1194 = vmatmul.mubr.bf16.gmra.mrb[0].mxu0 %v1127
    %v1195 = vpop.f32.mrb[0].mxu0
    %v1196 = vadd.f32 0.0, %v1195
    %v1197 = vpop.f32.mrb[0].mxu0
    %v1198 = vpop.f32.mrb[0].mxu0
    %v1199 = vadd.f32 0.0, %v1198
    %v1200 = vpop.f32.mrb[0].mxu0
    %1201 = vdwg.mxu0
    %v1202 = vpack.c.bf16 %v1175, %v1172
    %v1203 = vpack.c.bf16 %v1183, %v1180
    %v1204 = vpack.c.bf16 %v1191, %v1188
    %v1205 = vpack.c.bf16 %v1199, %v1196
    %s1206 = scalar_lea.vmem [#allocation2], 12
    %v1207 = vld [vmem:[%s1206] sm:$0xf]
    %v1209 = vsel %vm718, %v1202, 0
    %v1212 = vsel %vm718, %v1203, 0
    %v1215 = vsel %vm718, %v1204, 0
    %v1218 = vsel %vm718, %v1205, 0
    %v1221 = vsel %vm731, %v1207, 0
    %1223 = vmatprep.subr.bf16.mxu0 0
    %1224 = vmatpush1.bf16.msra.mxu0 %v1221
    %1225 = vmatprep.subr.bf16.mxu0 0
    %1226 = vmatpush1.bf16.msra.mxu0 0
    %1227 = vmatprep.subr.bf16.mxu0 0
    %1228 = vmatpush1.bf16.msra.mxu0 0
    %1229 = vmatprep.subr.bf16.mxu0 0
    %1230 = vmatpush1.bf16.msra.mxu0 0
    %1231 = vmatprep.subr.bf16.mxu0 0
    %1232 = vmatpush1.bf16.msra.mxu0 0
    %1233 = vmatprep.subr.bf16.mxu0 0
    %1234 = vmatpush1.bf16.msra.mxu0 0
    %1235 = vmatprep.subr.bf16.mxu0 0
    %1236 = vmatpush1.bf16.msra.mxu0 0
    %1237 = vmatprep.subr.bf16.mxu0 0
    %1238 = vmatpush1.bf16.msra.mxu0 0
    %1239 = vmatprep.subr.bf16.mxu0 0
    %1240 = vmatpush1.bf16.msra.mxu0 0
    %1241 = vmatprep.subr.bf16.mxu0 0
    %1242 = vmatpush1.bf16.msra.mxu0 0
    %1243 = vmatprep.subr.bf16.mxu0 0
    %1244 = vmatpush1.bf16.msra.mxu0 0
    %1245 = vmatprep.subr.bf16.mxu0 0
    %1246 = vmatpush1.bf16.msra.mxu0 0
    %1247 = vmatprep.subr.bf16.mxu0 0
    %1248 = vmatpush1.bf16.msra.mxu0 0
    %1249 = vmatprep.subr.bf16.mxu0 0
    %1250 = vmatpush1.bf16.msra.mxu0 0
    %1251 = vmatprep.subr.bf16.mxu0 0
    %1252 = vmatpush1.bf16.msra.mxu0 0
    %1253 = vmatprep.subr.bf16.mxu0 0
    %1254 = vmatpush1.bf16.msra.mxu0 0
    %1255 = vmatprep.mubr.bf16.mxu0 0
    %1256 = vmatmul.mubr.bf16.gmra.mrb[0].mxu0 %v1209
    %v1257 = vpop.f32.mrb[0].mxu0
    %v1258 = vadd.f32 0.0, %v1257
    %v1259 = vpop.f32.mrb[0].mxu0
    %v1260 = vpop.f32.mrb[0].mxu0
    %v1261 = vadd.f32 0.0, %v1260
    %v1262 = vpop.f32.mrb[0].mxu0
    %1263 = vmatprep.mubr.bf16.mxu0 0
    %1264 = vmatmul.mubr.bf16.gmra.mrb[0].mxu0 %v1212
    %v1265 = vpop.f32.mrb[0].mxu0
    %v1266 = vadd.f32 0.0, %v1265
    %v1267 = vpop.f32.mrb[0].mxu0
    %v1268 = vpop.f32.mrb[0].mxu0
    %v1269 = vadd.f32 0.0, %v1268
    %v1270 = vpop.f32.mrb[0].mxu0
    %1271 = vmatprep.mubr.bf16.mxu0 0
    %1272 = vmatmul.mubr.bf16.gmra.mrb[0].mxu0 %v1215
    %v1273 = vpop.f32.mrb[0].mxu0
    %v1274 = vadd.f32 0.0, %v1273
    %v1275 = vpop.f32.mrb[0].mxu0
    %v1276 = vpop.f32.mrb[0].mxu0
    %v1277 = vadd.f32 0.0, %v1276
    %v1278 = vpop.f32.mrb[0].mxu0
    %1279 = vmatprep.mubr.bf16.mxu0 0
    %1280 = vmatmul.mubr.bf16.gmra.mrb[0].mxu0 %v1218
    %v1281 = vpop.f32.mrb[0].mxu0
    %v1282 = vadd.f32 0.0, %v1281
    %v1283 = vpop.f32.mrb[0].mxu0
    %v1284 = vpop.f32.mrb[0].mxu0
    %v1285 = vadd.f32 0.0, %v1284
    %v1286 = vpop.f32.mrb[0].mxu0
    %1287 = vdwg.mxu0
    %v1288 = vadd.f32 %v1080, %v1258
    %v1289 = vadd.f32 %v1081, %v1261
    %v1290 = vadd.f32 %v1082, %v1266
    %v1291 = vadd.f32 %v1083, %v1269
    %v1292 = vadd.f32 %v1084, %v1274
    %v1293 = vadd.f32 %v1085, %v1277
    %v1294 = vadd.f32 %v1086, %v1282
    %v1295 = vadd.f32 %v1087, %v1285
    %s1296 = scalar_lea.vmem %s3, 256
    %v1297 = vld [vmem:[%s1296] sm:$0xff]
    %v1298 = vld [vmem:[%s1296 + $0x8] sm:$0xff]
    %v1299 = vld [vmem:[%s1296 + $0x10] sm:$0xff]
    %v1300 = vld [vmem:[%s1296 + $0x18] sm:$0xff]
    %v1301 = vld [vmem:[%s1296 + $0x20] sm:$0xff]
    %v1302 = vld [vmem:[%s1296 + $0x28] sm:$0xff]
    %v1303 = vld [vmem:[%s1296 + $0x30] sm:$0xff]
    %v1304 = vld [vmem:[%s1296 + $0x38] sm:$0xff]
    %v1313 = vunpack.c.l.b16 %v1297
    %v1314 = vunpack.c.h.b16 %v1297
    %v1315 = vunpack.c.l.b16 %v1298
    %v1316 = vunpack.c.h.b16 %v1298
    %v1317 = vunpack.c.l.b16 %v1299
    %v1318 = vunpack.c.h.b16 %v1299
    %v1319 = vunpack.c.l.b16 %v1300
    %v1320 = vunpack.c.h.b16 %v1300
    %v1321 = vunpack.c.l.b16 %v1301
    %v1322 = vunpack.c.h.b16 %v1301
    %v1323 = vunpack.c.l.b16 %v1302
    %v1324 = vunpack.c.h.b16 %v1302
    %v1325 = vunpack.c.l.b16 %v1303
    %v1326 = vunpack.c.h.b16 %v1303
    %v1327 = vunpack.c.l.b16 %v1304
    %v1328 = vunpack.c.h.b16 %v1304
    %v1329 = vpack.c.b16 %v1315, %v1313
    %v1330 = vpack.c.b16 %v1316, %v1314
    %v1331 = vpack.c.b16 %v1319, %v1317
    %v1332 = vpack.c.b16 %v1320, %v1318
    %v1333 = vpack.c.b16 %v1323, %v1321
    %v1334 = vpack.c.b16 %v1324, %v1322
    %v1335 = vpack.c.b16 %v1327, %v1325
    %v1336 = vpack.c.b16 %v1328, %v1326
    %1345 = vmatprep.subr.bf16.mxu0 0
    %1346 = vmatpush1.bf16.msra.mxu0 %v496
    %1347 = vmatprep.subr.bf16.mxu0 0
    %1348 = vmatpush1.bf16.msra.mxu0 %v497
    %1349 = vmatprep.subr.bf16.mxu0 0
    %1350 = vmatpush1.bf16.msra.mxu0 %v498
    %1351 = vmatprep.subr.bf16.mxu0 0
    %1352 = vmatpush1.bf16.msra.mxu0 %v499
    %1353 = vmatprep.subr.bf16.mxu0 0
    %1354 = vmatpush1.bf16.msra.mxu0 %v500
    %1355 = vmatprep.subr.bf16.mxu0 0
    %1356 = vmatpush1.bf16.msra.mxu0 %v501
    %1357 = vmatprep.subr.bf16.mxu0 0
    %1358 = vmatpush1.bf16.msra.mxu0 %v502
    %1359 = vmatprep.subr.bf16.mxu0 0
    %1360 = vmatpush1.bf16.msra.mxu0 %v503
    %1361 = vmatprep.subr.bf16.mxu0 0
    %1362 = vmatpush1.bf16.msra.mxu0 %v504
    %1363 = vmatprep.subr.bf16.mxu0 0
    %1364 = vmatpush1.bf16.msra.mxu0 %v505
    %1365 = vmatprep.subr.bf16.mxu0 0
    %1366 = vmatpush1.bf16.msra.mxu0 %v506
    %1367 = vmatprep.subr.bf16.mxu0 0
    %1368 = vmatpush1.bf16.msra.mxu0 %v507
    %1369 = vmatprep.subr.bf16.mxu0 0
    %1370 = vmatpush1.bf16.msra.mxu0 %v508
    %1371 = vmatprep.subr.bf16.mxu0 0
    %1372 = vmatpush1.bf16.msra.mxu0 %v509
    %1373 = vmatprep.subr.bf16.mxu0 0
    %1374 = vmatpush1.bf16.msra.mxu0 %v510
    %1375 = vmatprep.subr.bf16.mxu0 0
    %1376 = vmatpush1.bf16.msra.mxu0 %v511
    %1377 = vmatprep.mubr.bf16.mxu0 %v1330
    %1378 = vmatmul.mubr.bf16.gmra.mrb[0].mxu0 %v1329
    %v1379 = vpop.f32.mrb[0].mxu0
    %v1380 = vadd.f32 0.0, %v1379
    %v1381 = vpop.f32.mrb[0].mxu0
    %v1382 = vpop.f32.mrb[0].mxu0
    %v1383 = vadd.f32 0.0, %v1382
    %v1384 = vpop.f32.mrb[0].mxu0
    %1385 = vmatprep.mubr.bf16.mxu0 %v1332
    %1386 = vmatmul.mubr.bf16.gmra.mrb[0].mxu0 %v1331
    %v1387 = vpop.f32.mrb[0].mxu0
    %v1388 = vadd.f32 0.0, %v1387
    %v1389 = vpop.f32.mrb[0].mxu0
    %v1390 = vpop.f32.mrb[0].mxu0
    %v1391 = vadd.f32 0.0, %v1390
    %v1392 = vpop.f32.mrb[0].mxu0
    %1393 = vmatprep.mubr.bf16.mxu0 %v1334
    %1394 = vmatmul.mubr.bf16.gmra.mrb[0].mxu0 %v1333
    %v1395 = vpop.f32.mrb[0].mxu0
    %v1396 = vadd.f32 0.0, %v1395
    %v1397 = vpop.f32.mrb[0].mxu0
    %v1398 = vpop.f32.mrb[0].mxu0
    %v1399 = vadd.f32 0.0, %v1398
    %v1400 = vpop.f32.mrb[0].mxu0
    %1401 = vmatprep.mubr.bf16.mxu0 %v1336
    %1402 = vmatmul.mubr.bf16.gmra.mrb[0].mxu0 %v1335
    %v1403 = vpop.f32.mrb[0].mxu0
    %v1404 = vadd.f32 0.0, %v1403
    %v1405 = vpop.f32.mrb[0].mxu0
    %v1406 = vpop.f32.mrb[0].mxu0
    %v1407 = vadd.f32 0.0, %v1406
    %v1408 = vpop.f32.mrb[0].mxu0
    %1409 = vdwg.mxu0
    %v1410 = vpack.c.bf16 %v1383, %v1380
    %v1411 = vpack.c.bf16 %v1391, %v1388
    %v1412 = vpack.c.bf16 %v1399, %v1396
    %v1413 = vpack.c.bf16 %v1407, %v1404
    %s1414 = scalar_lea.vmem [#allocation2], 16
    %v1415 = vld [vmem:[%s1414] sm:$0xf]
    %v1417 = vsel %vm718, %v1410, 0
    %v1420 = vsel %vm718, %v1411, 0
    %v1423 = vsel %vm718, %v1412, 0
    %v1426 = vsel %vm718, %v1413, 0
    %v1429 = vsel %vm731, %v1415, 0
    %1431 = vmatprep.subr.bf16.mxu0 0
    %1432 = vmatpush1.bf16.msra.mxu0 %v1429
    %1433 = vmatprep.subr.bf16.mxu0 0
    %1434 = vmatpush1.bf16.msra.mxu0 0
    %1435 = vmatprep.subr.bf16.mxu0 0
    %1436 = vmatpush1.bf16.msra.mxu0 0
    %1437 = vmatprep.subr.bf16.mxu0 0
    %1438 = vmatpush1.bf16.msra.mxu0 0
    %1439 = vmatprep.subr.bf16.mxu0 0
    %1440 = vmatpush1.bf16.msra.mxu0 0
    %1441 = vmatprep.subr.bf16.mxu0 0
    %1442 = vmatpush1.bf16.msra.mxu0 0
    %1443 = vmatprep.subr.bf16.mxu0 0
    %1444 = vmatpush1.bf16.msra.mxu0 0
    %1445 = vmatprep.subr.bf16.mxu0 0
    %1446 = vmatpush1.bf16.msra.mxu0 0
    %1447 = vmatprep.subr.bf16.mxu0 0
    %1448 = vmatpush1.bf16.msra.mxu0 0
    %1449 = vmatprep.subr.bf16.mxu0 0
    %1450 = vmatpush1.bf16.msra.mxu0 0
    %1451 = vmatprep.subr.bf16.mxu0 0
    %1452 = vmatpush1.bf16.msra.mxu0 0
    %1453 = vmatprep.subr.bf16.mxu0 0
    %1454 = vmatpush1.bf16.msra.mxu0 0
    %1455 = vmatprep.subr.bf16.mxu0 0
    %1456 = vmatpush1.bf16.msra.mxu0 0
    %1457 = vmatprep.subr.bf16.mxu0 0
    %1458 = vmatpush1.bf16.msra.mxu0 0
    %1459 = vmatprep.subr.bf16.mxu0 0
    %1460 = vmatpush1.bf16.msra.mxu0 0
    %1461 = vmatprep.subr.bf16.mxu0 0
    %1462 = vmatpush1.bf16.msra.mxu0 0
    %1463 = vmatprep.mubr.bf16.mxu0 0
    %1464 = vmatmul.mubr.bf16.gmra.mrb[0].mxu0 %v1417
    %v1465 = vpop.f32.mrb[0].mxu0
    %v1466 = vadd.f32 0.0, %v1465
    %v1467 = vpop.f32.mrb[0].mxu0
    %v1468 = vpop.f32.mrb[0].mxu0
    %v1469 = vadd.f32 0.0, %v1468
    %v1470 = vpop.f32.mrb[0].mxu0
    %1471 = vmatprep.mubr.bf16.mxu0 0
    %1472 = vmatmul.mubr.bf16.gmra.mrb[0].mxu0 %v1420
    %v1473 = vpop.f32.mrb[0].mxu0
    %v1474 = vadd.f32 0.0, %v1473
    %v1475 = vpop.f32.mrb[0].mxu0
    %v1476 = vpop.f32.mrb[0].mxu0
    %v1477 = vadd.f32 0.0, %v1476
    %v1478 = vpop.f32.mrb[0].mxu0
    %1479 = vmatprep.mubr.bf16.mxu0 0
    %1480 = vmatmul.mubr.bf16.gmra.mrb[0].mxu0 %v1423
    %v1481 = vpop.f32.mrb[0].mxu0
    %v1482 = vadd.f32 0.0, %v1481
    %v1483 = vpop.f32.mrb[0].mxu0
    %v1484 = vpop.f32.mrb[0].mxu0
    %v1485 = vadd.f32 0.0, %v1484
    %v1486 = vpop.f32.mrb[0].mxu0
    %1487 = vmatprep.mubr.bf16.mxu0 0
    %1488 = vmatmul.mubr.bf16.gmra.mrb[0].mxu0 %v1426
    %v1489 = vpop.f32.mrb[0].mxu0
    %v1490 = vadd.f32 0.0, %v1489
    %v1491 = vpop.f32.mrb[0].mxu0
    %v1492 = vpop.f32.mrb[0].mxu0
    %v1493 = vadd.f32 0.0, %v1492
    %v1494 = vpop.f32.mrb[0].mxu0
    %1495 = vdwg.mxu0
    %v1496 = vadd.f32 %v1288, %v1466
    %v1497 = vadd.f32 %v1289, %v1469
    %v1498 = vadd.f32 %v1290, %v1474
    %v1499 = vadd.f32 %v1291, %v1477
    %v1500 = vadd.f32 %v1292, %v1482
    %v1501 = vadd.f32 %v1293, %v1485
    %v1502 = vadd.f32 %v1294, %v1490
    %v1503 = vadd.f32 %v1295, %v1493
    %s1504 = scalar_lea.vmem %s3, 320
    %v1505 = vld [vmem:[%s1504] sm:$0xff]
    %v1506 = vld [vmem:[%s1504 + $0x8] sm:$0xff]
    %v1507 = vld [vmem:[%s1504 + $0x10] sm:$0xff]
    %v1508 = vld [vmem:[%s1504 + $0x18] sm:$0xff]
    %v1509 = vld [vmem:[%s1504 + $0x20] sm:$0xff]
    %v1510 = vld [vmem:[%s1504 + $0x28] sm:$0xff]
    %v1511 = vld [vmem:[%s1504 + $0x30] sm:$0xff]
    %v1512 = vld [vmem:[%s1504 + $0x38] sm:$0xff]
    %v1521 = vunpack.c.l.b16 %v1505
    %v1522 = vunpack.c.h.b16 %v1505
    %v1523 = vunpack.c.l.b16 %v1506
    %v1524 = vunpack.c.h.b16 %v1506
    %v1525 = vunpack.c.l.b16 %v1507
    %v1526 = vunpack.c.h.b16 %v1507
    %v1527 = vunpack.c.l.b16 %v1508
    %v1528 = vunpack.c.h.b16 %v1508
    %v1529 = vunpack.c.l.b16 %v1509
    %v1530 = vunpack.c.h.b16 %v1509
    %v1531 = vunpack.c.l.b16 %v1510
    %v1532 = vunpack.c.h.b16 %v1510
    %v1533 = vunpack.c.l.b16 %v1511
    %v1534 = vunpack.c.h.b16 %v1511
    %v1535 = vunpack.c.l.b16 %v1512
    %v1536 = vunpack.c.h.b16 %v1512
    %v1537 = vpack.c.b16 %v1523, %v1521
    %v1538 = vpack.c.b16 %v1524, %v1522
    %v1539 = vpack.c.b16 %v1527, %v1525
    %v1540 = vpack.c.b16 %v1528, %v1526
    %v1541 = vpack.c.b16 %v1531, %v1529
    %v1542 = vpack.c.b16 %v1532, %v1530
    %v1543 = vpack.c.b16 %v1535, %v1533
    %v1544 = vpack.c.b16 %v1536, %v1534
    %1553 = vmatprep.subr.bf16.mxu0 0
    %1554 = vmatpush1.bf16.msra.mxu0 %v496
    %1555 = vmatprep.subr.bf16.mxu0 0
    %1556 = vmatpush1.bf16.msra.mxu0 %v497
    %1557 = vmatprep.subr.bf16.mxu0 0
    %1558 = vmatpush1.bf16.msra.mxu0 %v498
    %1559 = vmatprep.subr.bf16.mxu0 0
    %1560 = vmatpush1.bf16.msra.mxu0 %v499
    %1561 = vmatprep.subr.bf16.mxu0 0
    %1562 = vmatpush1.bf16.msra.mxu0 %v500
    %1563 = vmatprep.subr.bf16.mxu0 0
    %1564 = vmatpush1.bf16.msra.mxu0 %v501
    %1565 = vmatprep.subr.bf16.mxu0 0
    %1566 = vmatpush1.bf16.msra.mxu0 %v502
    %1567 = vmatprep.subr.bf16.mxu0 0
    %1568 = vmatpush1.bf16.msra.mxu0 %v503
    %1569 = vmatprep.subr.bf16.mxu0 0
    %1570 = vmatpush1.bf16.msra.mxu0 %v504
    %1571 = vmatprep.subr.bf16.mxu0 0
    %1572 = vmatpush1.bf16.msra.mxu0 %v505
    %1573 = vmatprep.subr.bf16.mxu0 0
    %1574 = vmatpush1.bf16.msra.mxu0 %v506
    %1575 = vmatprep.subr.bf16.mxu0 0
    %1576 = vmatpush1.bf16.msra.mxu0 %v507
    %1577 = vmatprep.subr.bf16.mxu0 0
    %1578 = vmatpush1.bf16.msra.mxu0 %v508
    %1579 = vmatprep.subr.bf16.mxu0 0
    %1580 = vmatpush1.bf16.msra.mxu0 %v509
    %1581 = vmatprep.subr.bf16.mxu0 0
    %1582 = vmatpush1.bf16.msra.mxu0 %v510
    %1583 = vmatprep.subr.bf16.mxu0 0
    %1584 = vmatpush1.bf16.msra.mxu0 %v511
    %1585 = vmatprep.mubr.bf16.mxu0 %v1538
    %1586 = vmatmul.mubr.bf16.gmra.mrb[0].mxu0 %v1537
    %v1587 = vpop.f32.mrb[0].mxu0
    %v1588 = vadd.f32 0.0, %v1587
    %v1589 = vpop.f32.mrb[0].mxu0
    %v1590 = vpop.f32.mrb[0].mxu0
    %v1591 = vadd.f32 0.0, %v1590
    %v1592 = vpop.f32.mrb[0].mxu0
    %1593 = vmatprep.mubr.bf16.mxu0 %v1540
    %1594 = vmatmul.mubr.bf16.gmra.mrb[0].mxu0 %v1539
    %v1595 = vpop.f32.mrb[0].mxu0
    %v1596 = vadd.f32 0.0, %v1595
    %v1597 = vpop.f32.mrb[0].mxu0
    %v1598 = vpop.f32.mrb[0].mxu0
    %v1599 = vadd.f32 0.0, %v1598
    %v1600 = vpop.f32.mrb[0].mxu0
    %1601 = vmatprep.mubr.bf16.mxu0 %v1542
    %1602 = vmatmul.mubr.bf16.gmra.mrb[0].mxu0 %v1541
    %v1603 = vpop.f32.mrb[0].mxu0
    %v1604 = vadd.f32 0.0, %v1603
    %v1605 = vpop.f32.mrb[0].mxu0
    %v1606 = vpop.f32.mrb[0].mxu0
    %v1607 = vadd.f32 0.0, %v1606
    %v1608 = vpop.f32.mrb[0].mxu0
    %1609 = vmatprep.mubr.bf16.mxu0 %v1544
    %1610 = vmatmul.mubr.bf16.gmra.mrb[0].mxu0 %v1543
    %v1611 = vpop.f32.mrb[0].mxu0
    %v1612 = vadd.f32 0.0, %v1611
    %v1613 = vpop.f32.mrb[0].mxu0
    %v1614 = vpop.f32.mrb[0].mxu0
    %v1615 = vadd.f32 0.0, %v1614
    %v1616 = vpop.f32.mrb[0].mxu0
    %1617 = vdwg.mxu0
    %v1618 = vpack.c.bf16 %v1591, %v1588
    %v1619 = vpack.c.bf16 %v1599, %v1596
    %v1620 = vpack.c.bf16 %v1607, %v1604
    %v1621 = vpack.c.bf16 %v1615, %v1612
    %s1622 = scalar_lea.vmem [#allocation2], 20
    %v1623 = vld [vmem:[%s1622] sm:$0xf]
    %v1625 = vsel %vm718, %v1618, 0
    %v1628 = vsel %vm718, %v1619, 0
    %v1631 = vsel %vm718, %v1620, 0
    %v1634 = vsel %vm718, %v1621, 0
    %v1637 = vsel %vm731, %v1623, 0
    %1639 = vmatprep.subr.bf16.mxu0 0
    %1640 = vmatpush1.bf16.msra.mxu0 %v1637
    %1641 = vmatprep.subr.bf16.mxu0 0
    %1642 = vmatpush1.bf16.msra.mxu0 0
    %1643 = vmatprep.subr.bf16.mxu0 0
    %1644 = vmatpush1.bf16.msra.mxu0 0
    %1645 = vmatprep.subr.bf16.mxu0 0
    %1646 = vmatpush1.bf16.msra.mxu0 0
    %1647 = vmatprep.subr.bf16.mxu0 0
    %1648 = vmatpush1.bf16.msra.mxu0 0
    %1649 = vmatprep.subr.bf16.mxu0 0
    %1650 = vmatpush1.bf16.msra.mxu0 0
    %1651 = vmatprep.subr.bf16.mxu0 0
    %1652 = vmatpush1.bf16.msra.mxu0 0
    %1653 = vmatprep.subr.bf16.mxu0 0
    %1654 = vmatpush1.bf16.msra.mxu0 0
    %1655 = vmatprep.subr.bf16.mxu0 0
    %1656 = vmatpush1.bf16.msra.mxu0 0
    %1657 = vmatprep.subr.bf16.mxu0 0
    %1658 = vmatpush1.bf16.msra.mxu0 0
    %1659 = vmatprep.subr.bf16.mxu0 0
    %1660 = vmatpush1.bf16.msra.mxu0 0
    %1661 = vmatprep.subr.bf16.mxu0 0
    %1662 = vmatpush1.bf16.msra.mxu0 0
    %1663 = vmatprep.subr.bf16.mxu0 0
    %1664 = vmatpush1.bf16.msra.mxu0 0
    %1665 = vmatprep.subr.bf16.mxu0 0
    %1666 = vmatpush1.bf16.msra.mxu0 0
    %1667 = vmatprep.subr.bf16.mxu0 0
    %1668 = vmatpush1.bf16.msra.mxu0 0
    %1669 = vmatprep.subr.bf16.mxu0 0
    %1670 = vmatpush1.bf16.msra.mxu0 0
    %1671 = vmatprep.mubr.bf16.mxu0 0
    %1672 = vmatmul.mubr.bf16.gmra.mrb[0].mxu0 %v1625
    %v1673 = vpop.f32.mrb[0].mxu0
    %v1674 = vadd.f32 0.0, %v1673
    %v1675 = vpop.f32.mrb[0].mxu0
    %v1676 = vpop.f32.mrb[0].mxu0
    %v1677 = vadd.f32 0.0, %v1676
    %v1678 = vpop.f32.mrb[0].mxu0
    %1679 = vmatprep.mubr.bf16.mxu0 0
    %1680 = vmatmul.mubr.bf16.gmra.mrb[0].mxu0 %v1628
    %v1681 = vpop.f32.mrb[0].mxu0
    %v1682 = vadd.f32 0.0, %v1681
    %v1683 = vpop.f32.mrb[0].mxu0
    %v1684 = vpop.f32.mrb[0].mxu0
    %v1685 = vadd.f32 0.0, %v1684
    %v1686 = vpop.f32.mrb[0].mxu0
    %1687 = vmatprep.mubr.bf16.mxu0 0
    %1688 = vmatmul.mubr.bf16.gmra.mrb[0].mxu0 %v1631
    %v1689 = vpop.f32.mrb[0].mxu0
    %v1690 = vadd.f32 0.0, %v1689
    %v1691 = vpop.f32.mrb[0].mxu0
    %v1692 = vpop.f32.mrb[0].mxu0
    %v1693 = vadd.f32 0.0, %v1692
    %v1694 = vpop.f32.mrb[0].mxu0
    %1695 = vmatprep.mubr.bf16.mxu0 0
    %1696 = vmatmul.mubr.bf16.gmra.mrb[0].mxu0 %v1634
    %v1697 = vpop.f32.mrb[0].mxu0
    %v1698 = vadd.f32 0.0, %v1697
    %v1699 = vpop.f32.mrb[0].mxu0
    %v1700 = vpop.f32.mrb[0].mxu0
    %v1701 = vadd.f32 0.0, %v1700
    %v1702 = vpop.f32.mrb[0].mxu0
    %1703 = vdwg.mxu0
    %v1704 = vadd.f32 %v1496, %v1674
    %v1705 = vadd.f32 %v1497, %v1677
    %v1706 = vadd.f32 %v1498, %v1682
    %v1707 = vadd.f32 %v1499, %v1685
    %v1708 = vadd.f32 %v1500, %v1690
    %v1709 = vadd.f32 %v1501, %v1693
    %v1710 = vadd.f32 %v1502, %v1698
    %v1711 = vadd.f32 %v1503, %v1701
    %s1712 = scalar_lea.vmem %s3, 384
    %v1713 = vld [vmem:[%s1712] sm:$0xff]
    %v1714 = vld [vmem:[%s1712 + $0x8] sm:$0xff]
    %v1715 = vld [vmem:[%s1712 + $0x10] sm:$0xff]
    %v1716 = vld [vmem:[%s1712 + $0x18] sm:$0xff]
    %v1717 = vld [vmem:[%s1712 + $0x20] sm:$0xff]
    %v1718 = vld [vmem:[%s1712 + $0x28] sm:$0xff]
    %v1719 = vld [vmem:[%s1712 + $0x30] sm:$0xff]
    %v1720 = vld [vmem:[%s1712 + $0x38] sm:$0xff]
    %v1729 = vunpack.c.l.b16 %v1713
    %v1730 = vunpack.c.h.b16 %v1713
    %v1731 = vunpack.c.l.b16 %v1714
    %v1732 = vunpack.c.h.b16 %v1714
    %v1733 = vunpack.c.l.b16 %v1715
    %v1734 = vunpack.c.h.b16 %v1715
    %v1735 = vunpack.c.l.b16 %v1716
    %v1736 = vunpack.c.h.b16 %v1716
    %v1737 = vunpack.c.l.b16 %v1717
    %v1738 = vunpack.c.h.b16 %v1717
    %v1739 = vunpack.c.l.b16 %v1718
    %v1740 = vunpack.c.h.b16 %v1718
    %v1741 = vunpack.c.l.b16 %v1719
    %v1742 = vunpack.c.h.b16 %v1719
    %v1743 = vunpack.c.l.b16 %v1720
    %v1744 = vunpack.c.h.b16 %v1720
    %v1745 = vpack.c.b16 %v1731, %v1729
    %v1746 = vpack.c.b16 %v1732, %v1730
    %v1747 = vpack.c.b16 %v1735, %v1733
    %v1748 = vpack.c.b16 %v1736, %v1734
    %v1749 = vpack.c.b16 %v1739, %v1737
    %v1750 = vpack.c.b16 %v1740, %v1738
    %v1751 = vpack.c.b16 %v1743, %v1741
    %v1752 = vpack.c.b16 %v1744, %v1742
    %1761 = vmatprep.subr.bf16.mxu0 0
    %1762 = vmatpush1.bf16.msra.mxu0 %v496
    %1763 = vmatprep.subr.bf16.mxu0 0
    %1764 = vmatpush1.bf16.msra.mxu0 %v497
    %1765 = vmatprep.subr.bf16.mxu0 0
    %1766 = vmatpush1.bf16.msra.mxu0 %v498
    %1767 = vmatprep.subr.bf16.mxu0 0
    %1768 = vmatpush1.bf16.msra.mxu0 %v499
    %1769 = vmatprep.subr.bf16.mxu0 0
    %1770 = vmatpush1.bf16.msra.mxu0 %v500
    %1771 = vmatprep.subr.bf16.mxu0 0
    %1772 = vmatpush1.bf16.msra.mxu0 %v501
    %1773 = vmatprep.subr.bf16.mxu0 0
    %1774 = vmatpush1.bf16.msra.mxu0 %v502
    %1775 = vmatprep.subr.bf16.mxu0 0
    %1776 = vmatpush1.bf16.msra.mxu0 %v503
    %1777 = vmatprep.subr.bf16.mxu0 0
    %1778 = vmatpush1.bf16.msra.mxu0 %v504
    %1779 = vmatprep.subr.bf16.mxu0 0
    %1780 = vmatpush1.bf16.msra.mxu0 %v505
    %1781 = vmatprep.subr.bf16.mxu0 0
    %1782 = vmatpush1.bf16.msra.mxu0 %v506
    %1783 = vmatprep.subr.bf16.mxu0 0
    %1784 = vmatpush1.bf16.msra.mxu0 %v507
    %1785 = vmatprep.subr.bf16.mxu0 0
    %1786 = vmatpush1.bf16.msra.mxu0 %v508
    %1787 = vmatprep.subr.bf16.mxu0 0
    %1788 = vmatpush1.bf16.msra.mxu0 %v509
    %1789 = vmatprep.subr.bf16.mxu0 0
    %1790 = vmatpush1.bf16.msra.mxu0 %v510
    %1791 = vmatprep.subr.bf16.mxu0 0
    %1792 = vmatpush1.bf16.msra.mxu0 %v511
    %1793 = vmatprep.mubr.bf16.mxu0 %v1746
    %1794 = vmatmul.mubr.bf16.gmra.mrb[0].mxu0 %v1745
    %v1795 = vpop.f32.mrb[0].mxu0
    %v1796 = vadd.f32 0.0, %v1795
    %v1797 = vpop.f32.mrb[0].mxu0
    %v1798 = vpop.f32.mrb[0].mxu0
    %v1799 = vadd.f32 0.0, %v1798
    %v1800 = vpop.f32.mrb[0].mxu0
    %1801 = vmatprep.mubr.bf16.mxu0 %v1748
    %1802 = vmatmul.mubr.bf16.gmra.mrb[0].mxu0 %v1747
    %v1803 = vpop.f32.mrb[0].mxu0
    %v1804 = vadd.f32 0.0, %v1803
    %v1805 = vpop.f32.mrb[0].mxu0
    %v1806 = vpop.f32.mrb[0].mxu0
    %v1807 = vadd.f32 0.0, %v1806
    %v1808 = vpop.f32.mrb[0].mxu0
    %1809 = vmatprep.mubr.bf16.mxu0 %v1750
    %1810 = vmatmul.mubr.bf16.gmra.mrb[0].mxu0 %v1749
    %v1811 = vpop.f32.mrb[0].mxu0
    %v1812 = vadd.f32 0.0, %v1811
    %v1813 = vpop.f32.mrb[0].mxu0
    %v1814 = vpop.f32.mrb[0].mxu0
    %v1815 = vadd.f32 0.0, %v1814
    %v1816 = vpop.f32.mrb[0].mxu0
    %1817 = vmatprep.mubr.bf16.mxu0 %v1752
    %1818 = vmatmul.mubr.bf16.gmra.mrb[0].mxu0 %v1751
    %v1819 = vpop.f32.mrb[0].mxu0
    %v1820 = vadd.f32 0.0, %v1819
    %v1821 = vpop.f32.mrb[0].mxu0
    %v1822 = vpop.f32.mrb[0].mxu0
    %v1823 = vadd.f32 0.0, %v1822
    %v1824 = vpop.f32.mrb[0].mxu0
    %1825 = vdwg.mxu0
    %v1826 = vpack.c.bf16 %v1799, %v1796
    %v1827 = vpack.c.bf16 %v1807, %v1804
    %v1828 = vpack.c.bf16 %v1815, %v1812
    %v1829 = vpack.c.bf16 %v1823, %v1820
    %s1830 = scalar_lea.vmem [#allocation2], 24
    %v1831 = vld [vmem:[%s1830] sm:$0xf]
    %v1833 = vsel %vm718, %v1826, 0
    %v1836 = vsel %vm718, %v1827, 0
    %v1839 = vsel %vm718, %v1828, 0
    %v1842 = vsel %vm718, %v1829, 0
    %v1845 = vsel %vm731, %v1831, 0
    %1847 = vmatprep.subr.bf16.mxu0 0
    %1848 = vmatpush1.bf16.msra.mxu0 %v1845
    %1849 = vmatprep.subr.bf16.mxu0 0
    %1850 = vmatpush1.bf16.msra.mxu0 0
    %1851 = vmatprep.subr.bf16.mxu0 0
    %1852 = vmatpush1.bf16.msra.mxu0 0
    %1853 = vmatprep.subr.bf16.mxu0 0
    %1854 = vmatpush1.bf16.msra.mxu0 0
    %1855 = vmatprep.subr.bf16.mxu0 0
    %1856 = vmatpush1.bf16.msra.mxu0 0
    %1857 = vmatprep.subr.bf16.mxu0 0
    %1858 = vmatpush1.bf16.msra.mxu0 0
    %1859 = vmatprep.subr.bf16.mxu0 0
    %1860 = vmatpush1.bf16.msra.mxu0 0
    %1861 = vmatprep.subr.bf16.mxu0 0
    %1862 = vmatpush1.bf16.msra.mxu0 0
    %1863 = vmatprep.subr.bf16.mxu0 0
    %1864 = vmatpush1.bf16.msra.mxu0 0
    %1865 = vmatprep.subr.bf16.mxu0 0
    %1866 = vmatpush1.bf16.msra.mxu0 0
    %1867 = vmatprep.subr.bf16.mxu0 0
    %1868 = vmatpush1.bf16.msra.mxu0 0
    %1869 = vmatprep.subr.bf16.mxu0 0
    %1870 = vmatpush1.bf16.msra.mxu0 0
    %1871 = vmatprep.subr.bf16.mxu0 0
    %1872 = vmatpush1.bf16.msra.mxu0 0
    %1873 = vmatprep.subr.bf16.mxu0 0
    %1874 = vmatpush1.bf16.msra.mxu0 0
    %1875 = vmatprep.subr.bf16.mxu0 0
    %1876 = vmatpush1.bf16.msra.mxu0 0
    %1877 = vmatprep.subr.bf16.mxu0 0
    %1878 = vmatpush1.bf16.msra.mxu0 0
    %1879 = vmatprep.mubr.bf16.mxu0 0
    %1880 = vmatmul.mubr.bf16.gmra.mrb[0].mxu0 %v1833
    %v1881 = vpop.f32.mrb[0].mxu0
    %v1882 = vadd.f32 0.0, %v1881
    %v1883 = vpop.f32.mrb[0].mxu0
    %v1884 = vpop.f32.mrb[0].mxu0
    %v1885 = vadd.f32 0.0, %v1884
    %v1886 = vpop.f32.mrb[0].mxu0
    %1887 = vmatprep.mubr.bf16.mxu0 0
    %1888 = vmatmul.mubr.bf16.gmra.mrb[0].mxu0 %v1836
    %v1889 = vpop.f32.mrb[0].mxu0
    %v1890 = vadd.f32 0.0, %v1889
    %v1891 = vpop.f32.mrb[0].mxu0
    %v1892 = vpop.f32.mrb[0].mxu0
    %v1893 = vadd.f32 0.0, %v1892
    %v1894 = vpop.f32.mrb[0].mxu0
    %1895 = vmatprep.mubr.bf16.mxu0 0
    %1896 = vmatmul.mubr.bf16.gmra.mrb[0].mxu0 %v1839
    %v1897 = vpop.f32.mrb[0].mxu0
    %v1898 = vadd.f32 0.0, %v1897
    %v1899 = vpop.f32.mrb[0].mxu0
    %v1900 = vpop.f32.mrb[0].mxu0
    %v1901 = vadd.f32 0.0, %v1900
    %v1902 = vpop.f32.mrb[0].mxu0
    %1903 = vmatprep.mubr.bf16.mxu0 0
    %1904 = vmatmul.mubr.bf16.gmra.mrb[0].mxu0 %v1842
    %v1905 = vpop.f32.mrb[0].mxu0
    %v1906 = vadd.f32 0.0, %v1905
    %v1907 = vpop.f32.mrb[0].mxu0
    %v1908 = vpop.f32.mrb[0].mxu0
    %v1909 = vadd.f32 0.0, %v1908
    %v1910 = vpop.f32.mrb[0].mxu0
    %1911 = vdwg.mxu0
    %v1912 = vadd.f32 %v1704, %v1882
    %v1913 = vadd.f32 %v1705, %v1885
    %v1914 = vadd.f32 %v1706, %v1890
    %v1915 = vadd.f32 %v1707, %v1893
    %v1916 = vadd.f32 %v1708, %v1898
    %v1917 = vadd.f32 %v1709, %v1901
    %v1918 = vadd.f32 %v1710, %v1906
    %v1919 = vadd.f32 %v1711, %v1909
    %s1920 = scalar_lea.vmem %s3, 448
    %v1921 = vld [vmem:[%s1920] sm:$0xff]
    %v1922 = vld [vmem:[%s1920 + $0x8] sm:$0xff]
    %v1923 = vld [vmem:[%s1920 + $0x10] sm:$0xff]
    %v1924 = vld [vmem:[%s1920 + $0x18] sm:$0xff]
    %v1925 = vld [vmem:[%s1920 + $0x20] sm:$0xff]
    %v1926 = vld [vmem:[%s1920 + $0x28] sm:$0xff]
    %v1927 = vld [vmem:[%s1920 + $0x30] sm:$0xff]
    %v1928 = vld [vmem:[%s1920 + $0x38] sm:$0xff]
    %v1937 = vunpack.c.l.b16 %v1921
    %v1938 = vunpack.c.h.b16 %v1921
    %v1939 = vunpack.c.l.b16 %v1922
    %v1940 = vunpack.c.h.b16 %v1922
    %v1941 = vunpack.c.l.b16 %v1923
    %v1942 = vunpack.c.h.b16 %v1923
    %v1943 = vunpack.c.l.b16 %v1924
    %v1944 = vunpack.c.h.b16 %v1924
    %v1945 = vunpack.c.l.b16 %v1925
    %v1946 = vunpack.c.h.b16 %v1925
    %v1947 = vunpack.c.l.b16 %v1926
    %v1948 = vunpack.c.h.b16 %v1926
    %v1949 = vunpack.c.l.b16 %v1927
    %v1950 = vunpack.c.h.b16 %v1927
    %v1951 = vunpack.c.l.b16 %v1928
    %v1952 = vunpack.c.h.b16 %v1928
    %v1953 = vpack.c.b16 %v1939, %v1937
    %v1954 = vpack.c.b16 %v1940, %v1938
    %v1955 = vpack.c.b16 %v1943, %v1941
    %v1956 = vpack.c.b16 %v1944, %v1942
    %v1957 = vpack.c.b16 %v1947, %v1945
    %v1958 = vpack.c.b16 %v1948, %v1946
    %v1959 = vpack.c.b16 %v1951, %v1949
    %v1960 = vpack.c.b16 %v1952, %v1950
    %1969 = vmatprep.subr.bf16.mxu0 0
    %1970 = vmatpush1.bf16.msra.mxu0 %v496
    %1971 = vmatprep.subr.bf16.mxu0 0
    %1972 = vmatpush1.bf16.msra.mxu0 %v497
    %1973 = vmatprep.subr.bf16.mxu0 0
    %1974 = vmatpush1.bf16.msra.mxu0 %v498
    %1975 = vmatprep.subr.bf16.mxu0 0
    %1976 = vmatpush1.bf16.msra.mxu0 %v499
    %1977 = vmatprep.subr.bf16.mxu0 0
    %1978 = vmatpush1.bf16.msra.mxu0 %v500
    %1979 = vmatprep.subr.bf16.mxu0 0
    %1980 = vmatpush1.bf16.msra.mxu0 %v501
    %1981 = vmatprep.subr.bf16.mxu0 0
    %1982 = vmatpush1.bf16.msra.mxu0 %v502
    %1983 = vmatprep.subr.bf16.mxu0 0
    %1984 = vmatpush1.bf16.msra.mxu0 %v503
    %1985 = vmatprep.subr.bf16.mxu0 0
    %1986 = vmatpush1.bf16.msra.mxu0 %v504
    %1987 = vmatprep.subr.bf16.mxu0 0
    %1988 = vmatpush1.bf16.msra.mxu0 %v505
    %1989 = vmatprep.subr.bf16.mxu0 0
    %1990 = vmatpush1.bf16.msra.mxu0 %v506
    %1991 = vmatprep.subr.bf16.mxu0 0
    %1992 = vmatpush1.bf16.msra.mxu0 %v507
    %1993 = vmatprep.subr.bf16.mxu0 0
    %1994 = vmatpush1.bf16.msra.mxu0 %v508
    %1995 = vmatprep.subr.bf16.mxu0 0
    %1996 = vmatpush1.bf16.msra.mxu0 %v509
    %1997 = vmatprep.subr.bf16.mxu0 0
    %1998 = vmatpush1.bf16.msra.mxu0 %v510
    %1999 = vmatprep.subr.bf16.mxu0 0
    %2000 = vmatpush1.bf16.msra.mxu0 %v511
    %2001 = vmatprep.mubr.bf16.mxu0 %v1954
    %2002 = vmatmul.mubr.bf16.gmra.mrb[0].mxu0 %v1953
    %v2003 = vpop.f32.mrb[0].mxu0
    %v2004 = vadd.f32 0.0, %v2003
    %v2005 = vpop.f32.mrb[0].mxu0
    %v2006 = vpop.f32.mrb[0].mxu0
    %v2007 = vadd.f32 0.0, %v2006
    %v2008 = vpop.f32.mrb[0].mxu0
    %2009 = vmatprep.mubr.bf16.mxu0 %v1956
    %2010 = vmatmul.mubr.bf16.gmra.mrb[0].mxu0 %v1955
    %v2011 = vpop.f32.mrb[0].mxu0
    %v2012 = vadd.f32 0.0, %v2011
    %v2013 = vpop.f32.mrb[0].mxu0
    %v2014 = vpop.f32.mrb[0].mxu0
    %v2015 = vadd.f32 0.0, %v2014
    %v2016 = vpop.f32.mrb[0].mxu0
    %2017 = vmatprep.mubr.bf16.mxu0 %v1958
    %2018 = vmatmul.mubr.bf16.gmra.mrb[0].mxu0 %v1957
    %v2019 = vpop.f32.mrb[0].mxu0
    %v2020 = vadd.f32 0.0, %v2019
    %v2021 = vpop.f32.mrb[0].mxu0
    %v2022 = vpop.f32.mrb[0].mxu0
    %v2023 = vadd.f32 0.0, %v2022
    %v2024 = vpop.f32.mrb[0].mxu0
    %2025 = vmatprep.mubr.bf16.mxu0 %v1960
    %2026 = vmatmul.mubr.bf16.gmra.mrb[0].mxu0 %v1959
    %v2027 = vpop.f32.mrb[0].mxu0
    %v2028 = vadd.f32 0.0, %v2027
    %v2029 = vpop.f32.mrb[0].mxu0
    %v2030 = vpop.f32.mrb[0].mxu0
    %v2031 = vadd.f32 0.0, %v2030
    %v2032 = vpop.f32.mrb[0].mxu0
    %2033 = vdwg.mxu0
    %v2034 = vpack.c.bf16 %v2007, %v2004
    %v2035 = vpack.c.bf16 %v2015, %v2012
    %v2036 = vpack.c.bf16 %v2023, %v2020
    %v2037 = vpack.c.bf16 %v2031, %v2028
    %s2038 = scalar_lea.vmem [#allocation2], 28
    %v2039 = vld [vmem:[%s2038] sm:$0xf]
    %v2041 = vsel %vm718, %v2034, 0
    %v2044 = vsel %vm718, %v2035, 0
    %v2047 = vsel %vm718, %v2036, 0
    %v2050 = vsel %vm718, %v2037, 0
    %v2053 = vsel %vm731, %v2039, 0
    %2055 = vmatprep.subr.bf16.mxu0 0
    %2056 = vmatpush1.bf16.msra.mxu0 %v2053
    %2057 = vmatprep.subr.bf16.mxu0 0
    %2058 = vmatpush1.bf16.msra.mxu0 0
    %2059 = vmatprep.subr.bf16.mxu0 0
    %2060 = vmatpush1.bf16.msra.mxu0 0
    %2061 = vmatprep.subr.bf16.mxu0 0
    %2062 = vmatpush1.bf16.msra.mxu0 0
    %2063 = vmatprep.subr.bf16.mxu0 0
    %2064 = vmatpush1.bf16.msra.mxu0 0
    %2065 = vmatprep.subr.bf16.mxu0 0
    %2066 = vmatpush1.bf16.msra.mxu0 0
    %2067 = vmatprep.subr.bf16.mxu0 0
    %2068 = vmatpush1.bf16.msra.mxu0 0
    %2069 = vmatprep.subr.bf16.mxu0 0
    %2070 = vmatpush1.bf16.msra.mxu0 0
    %2071 = vmatprep.subr.bf16.mxu0 0
    %2072 = vmatpush1.bf16.msra.mxu0 0
    %2073 = vmatprep.subr.bf16.mxu0 0
    %2074 = vmatpush1.bf16.msra.mxu0 0
    %2075 = vmatprep.subr.bf16.mxu0 0
    %2076 = vmatpush1.bf16.msra.mxu0 0
    %2077 = vmatprep.subr.bf16.mxu0 0
    %2078 = vmatpush1.bf16.msra.mxu0 0
    %2079 = vmatprep.subr.bf16.mxu0 0
    %2080 = vmatpush1.bf16.msra.mxu0 0
    %2081 = vmatprep.subr.bf16.mxu0 0
    %2082 = vmatpush1.bf16.msra.mxu0 0
    %2083 = vmatprep.subr.bf16.mxu0 0
    %2084 = vmatpush1.bf16.msra.mxu0 0
    %2085 = vmatprep.subr.bf16.mxu0 0
    %2086 = vmatpush1.bf16.msra.mxu0 0
    %2087 = vmatprep.mubr.bf16.mxu0 0
    %2088 = vmatmul.mubr.bf16.gmra.mrb[0].mxu0 %v2041
    %v2089 = vpop.f32.mrb[0].mxu0
    %v2090 = vadd.f32 0.0, %v2089
    %v2091 = vpop.f32.mrb[0].mxu0
    %v2092 = vpop.f32.mrb[0].mxu0
    %v2093 = vadd.f32 0.0, %v2092
    %v2094 = vpop.f32.mrb[0].mxu0
    %2095 = vmatprep.mubr.bf16.mxu0 0
    %2096 = vmatmul.mubr.bf16.gmra.mrb[0].mxu0 %v2044
    %v2097 = vpop.f32.mrb[0].mxu0
    %v2098 = vadd.f32 0.0, %v2097
    %v2099 = vpop.f32.mrb[0].mxu0
    %v2100 = vpop.f32.mrb[0].mxu0
    %v2101 = vadd.f32 0.0, %v2100
    %v2102 = vpop.f32.mrb[0].mxu0
    %2103 = vmatprep.mubr.bf16.mxu0 0
    %2104 = vmatmul.mubr.bf16.gmra.mrb[0].mxu0 %v2047
    %v2105 = vpop.f32.mrb[0].mxu0
    %v2106 = vadd.f32 0.0, %v2105
    %v2107 = vpop.f32.mrb[0].mxu0
    %v2108 = vpop.f32.mrb[0].mxu0
    %v2109 = vadd.f32 0.0, %v2108
    %v2110 = vpop.f32.mrb[0].mxu0
    %2111 = vmatprep.mubr.bf16.mxu0 0
    %2112 = vmatmul.mubr.bf16.gmra.mrb[0].mxu0 %v2050
    %v2113 = vpop.f32.mrb[0].mxu0
    %v2114 = vadd.f32 0.0, %v2113
    %v2115 = vpop.f32.mrb[0].mxu0
    %v2116 = vpop.f32.mrb[0].mxu0
    %v2117 = vadd.f32 0.0, %v2116
    %v2118 = vpop.f32.mrb[0].mxu0
    %2119 = vdwg.mxu0
    %v2120 = vadd.f32 %v1912, %v2090
    %v2121 = vadd.f32 %v1913, %v2093
    %v2122 = vadd.f32 %v1914, %v2098
    %v2123 = vadd.f32 %v1915, %v2101
    %v2124 = vadd.f32 %v1916, %v2106
    %v2125 = vadd.f32 %v1917, %v2109
    %v2126 = vadd.f32 %v1918, %v2114
    %v2127 = vadd.f32 %v1919, %v2117
    %s2128 = scalar_lea.vmem %s3, 512
    %v2129 = vld [vmem:[%s2128] sm:$0xff]
    %v2130 = vld [vmem:[%s2128 + $0x8] sm:$0xff]
    %v2131 = vld [vmem:[%s2128 + $0x10] sm:$0xff]
    %v2132 = vld [vmem:[%s2128 + $0x18] sm:$0xff]
    %v2133 = vld [vmem:[%s2128 + $0x20] sm:$0xff]
    %v2134 = vld [vmem:[%s2128 + $0x28] sm:$0xff]
    %v2135 = vld [vmem:[%s2128 + $0x30] sm:$0xff]
    %v2136 = vld [vmem:[%s2128 + $0x38] sm:$0xff]
    %v2145 = vunpack.c.l.b16 %v2129
    %v2146 = vunpack.c.h.b16 %v2129
    %v2147 = vunpack.c.l.b16 %v2130
    %v2148 = vunpack.c.h.b16 %v2130
    %v2149 = vunpack.c.l.b16 %v2131
    %v2150 = vunpack.c.h.b16 %v2131
    %v2151 = vunpack.c.l.b16 %v2132
    %v2152 = vunpack.c.h.b16 %v2132
    %v2153 = vunpack.c.l.b16 %v2133
    %v2154 = vunpack.c.h.b16 %v2133
    %v2155 = vunpack.c.l.b16 %v2134
    %v2156 = vunpack.c.h.b16 %v2134
    %v2157 = vunpack.c.l.b16 %v2135
    %v2158 = vunpack.c.h.b16 %v2135
    %v2159 = vunpack.c.l.b16 %v2136
    %v2160 = vunpack.c.h.b16 %v2136
    %v2161 = vpack.c.b16 %v2147, %v2145
    %v2162 = vpack.c.b16 %v2148, %v2146
    %v2163 = vpack.c.b16 %v2151, %v2149
    %v2164 = vpack.c.b16 %v2152, %v2150
    %v2165 = vpack.c.b16 %v2155, %v2153
    %v2166 = vpack.c.b16 %v2156, %v2154
    %v2167 = vpack.c.b16 %v2159, %v2157
    %v2168 = vpack.c.b16 %v2160, %v2158
    %2177 = vmatprep.subr.bf16.mxu0 0
    %2178 = vmatpush1.bf16.msra.mxu0 %v496
    %2179 = vmatprep.subr.bf16.mxu0 0
    %2180 = vmatpush1.bf16.msra.mxu0 %v497
    %2181 = vmatprep.subr.bf16.mxu0 0
    %2182 = vmatpush1.bf16.msra.mxu0 %v498
    %2183 = vmatprep.subr.bf16.mxu0 0
    %2184 = vmatpush1.bf16.msra.mxu0 %v499
    %2185 = vmatprep.subr.bf16.mxu0 0
    %2186 = vmatpush1.bf16.msra.mxu0 %v500
    %2187 = vmatprep.subr.bf16.mxu0 0
    %2188 = vmatpush1.bf16.msra.mxu0 %v501
    %2189 = vmatprep.subr.bf16.mxu0 0
    %2190 = vmatpush1.bf16.msra.mxu0 %v502
    %2191 = vmatprep.subr.bf16.mxu0 0
    %2192 = vmatpush1.bf16.msra.mxu0 %v503
    %2193 = vmatprep.subr.bf16.mxu0 0
    %2194 = vmatpush1.bf16.msra.mxu0 %v504
    %2195 = vmatprep.subr.bf16.mxu0 0
    %2196 = vmatpush1.bf16.msra.mxu0 %v505
    %2197 = vmatprep.subr.bf16.mxu0 0
    %2198 = vmatpush1.bf16.msra.mxu0 %v506
    %2199 = vmatprep.subr.bf16.mxu0 0
    %2200 = vmatpush1.bf16.msra.mxu0 %v507
    %2201 = vmatprep.subr.bf16.mxu0 0
    %2202 = vmatpush1.bf16.msra.mxu0 %v508
    %2203 = vmatprep.subr.bf16.mxu0 0
    %2204 = vmatpush1.bf16.msra.mxu0 %v509
    %2205 = vmatprep.subr.bf16.mxu0 0
    %2206 = vmatpush1.bf16.msra.mxu0 %v510
    %2207 = vmatprep.subr.bf16.mxu0 0
    %2208 = vmatpush1.bf16.msra.mxu0 %v511
    %2209 = vmatprep.mubr.bf16.mxu0 %v2162
    %2210 = vmatmul.mubr.bf16.gmra.mrb[0].mxu0 %v2161
    %v2211 = vpop.f32.mrb[0].mxu0
    %v2212 = vadd.f32 0.0, %v2211
    %v2213 = vpop.f32.mrb[0].mxu0
    %v2214 = vpop.f32.mrb[0].mxu0
    %v2215 = vadd.f32 0.0, %v2214
    %v2216 = vpop.f32.mrb[0].mxu0
    %2217 = vmatprep.mubr.bf16.mxu0 %v2164
    %2218 = vmatmul.mubr.bf16.gmra.mrb[0].mxu0 %v2163
    %v2219 = vpop.f32.mrb[0].mxu0
    %v2220 = vadd.f32 0.0, %v2219
    %v2221 = vpop.f32.mrb[0].mxu0
    %v2222 = vpop.f32.mrb[0].mxu0
    %v2223 = vadd.f32 0.0, %v2222
    %v2224 = vpop.f32.mrb[0].mxu0
    %2225 = vmatprep.mubr.bf16.mxu0 %v2166
    %2226 = vmatmul.mubr.bf16.gmra.mrb[0].mxu0 %v2165
    %v2227 = vpop.f32.mrb[0].mxu0
    %v2228 = vadd.f32 0.0, %v2227
    %v2229 = vpop.f32.mrb[0].mxu0
    %v2230 = vpop.f32.mrb[0].mxu0
    %v2231 = vadd.f32 0.0, %v2230
    %v2232 = vpop.f32.mrb[0].mxu0
    %2233 = vmatprep.mubr.bf16.mxu0 %v2168
    %2234 = vmatmul.mubr.bf16.gmra.mrb[0].mxu0 %v2167
    %v2235 = vpop.f32.mrb[0].mxu0
    %v2236 = vadd.f32 0.0, %v2235
    %v2237 = vpop.f32.mrb[0].mxu0
    %v2238 = vpop.f32.mrb[0].mxu0
    %v2239 = vadd.f32 0.0, %v2238
    %v2240 = vpop.f32.mrb[0].mxu0
    %2241 = vdwg.mxu0
    %v2242 = vpack.c.bf16 %v2215, %v2212
    %v2243 = vpack.c.bf16 %v2223, %v2220
    %v2244 = vpack.c.bf16 %v2231, %v2228
    %v2245 = vpack.c.bf16 %v2239, %v2236
    %s2246 = scalar_lea.vmem [#allocation2], 32
    %v2247 = vld [vmem:[%s2246] sm:$0xf]
    %v2249 = vsel %vm718, %v2242, 0
    %v2252 = vsel %vm718, %v2243, 0
    %v2255 = vsel %vm718, %v2244, 0
    %v2258 = vsel %vm718, %v2245, 0
    %v2261 = vsel %vm731, %v2247, 0
    %2263 = vmatprep.subr.bf16.mxu0 0
    %2264 = vmatpush1.bf16.msra.mxu0 %v2261
    %2265 = vmatprep.subr.bf16.mxu0 0
    %2266 = vmatpush1.bf16.msra.mxu0 0
    %2267 = vmatprep.subr.bf16.mxu0 0
    %2268 = vmatpush1.bf16.msra.mxu0 0
    %2269 = vmatprep.subr.bf16.mxu0 0
    %2270 = vmatpush1.bf16.msra.mxu0 0
    %2271 = vmatprep.subr.bf16.mxu0 0
    %2272 = vmatpush1.bf16.msra.mxu0 0
    %2273 = vmatprep.subr.bf16.mxu0 0
    %2274 = vmatpush1.bf16.msra.mxu0 0
    %2275 = vmatprep.subr.bf16.mxu0 0
    %2276 = vmatpush1.bf16.msra.mxu0 0
    %2277 = vmatprep.subr.bf16.mxu0 0
    %2278 = vmatpush1.bf16.msra.mxu0 0
    %2279 = vmatprep.subr.bf16.mxu0 0
    %2280 = vmatpush1.bf16.msra.mxu0 0
    %2281 = vmatprep.subr.bf16.mxu0 0
    %2282 = vmatpush1.bf16.msra.mxu0 0
    %2283 = vmatprep.subr.bf16.mxu0 0
    %2284 = vmatpush1.bf16.msra.mxu0 0
    %2285 = vmatprep.subr.bf16.mxu0 0
    %2286 = vmatpush1.bf16.msra.mxu0 0
    %2287 = vmatprep.subr.bf16.mxu0 0
    %2288 = vmatpush1.bf16.msra.mxu0 0
    %2289 = vmatprep.subr.bf16.mxu0 0
    %2290 = vmatpush1.bf16.msra.mxu0 0
    %2291 = vmatprep.subr.bf16.mxu0 0
    %2292 = vmatpush1.bf16.msra.mxu0 0
    %2293 = vmatprep.subr.bf16.mxu0 0
    %2294 = vmatpush1.bf16.msra.mxu0 0
    %2295 = vmatprep.mubr.bf16.mxu0 0
    %2296 = vmatmul.mubr.bf16.gmra.mrb[0].mxu0 %v2249
    %v2297 = vpop.f32.mrb[0].mxu0
    %v2298 = vadd.f32 0.0, %v2297
    %v2299 = vpop.f32.mrb[0].mxu0
    %v2300 = vpop.f32.mrb[0].mxu0
    %v2301 = vadd.f32 0.0, %v2300
    %v2302 = vpop.f32.mrb[0].mxu0
    %2303 = vmatprep.mubr.bf16.mxu0 0
    %2304 = vmatmul.mubr.bf16.gmra.mrb[0].mxu0 %v2252
    %v2305 = vpop.f32.mrb[0].mxu0
    %v2306 = vadd.f32 0.0, %v2305
    %v2307 = vpop.f32.mrb[0].mxu0
    %v2308 = vpop.f32.mrb[0].mxu0
    %v2309 = vadd.f32 0.0, %v2308
    %v2310 = vpop.f32.mrb[0].mxu0
    %2311 = vmatprep.mubr.bf16.mxu0 0
    %2312 = vmatmul.mubr.bf16.gmra.mrb[0].mxu0 %v2255
    %v2313 = vpop.f32.mrb[0].mxu0
    %v2314 = vadd.f32 0.0, %v2313
    %v2315 = vpop.f32.mrb[0].mxu0
    %v2316 = vpop.f32.mrb[0].mxu0
    %v2317 = vadd.f32 0.0, %v2316
    %v2318 = vpop.f32.mrb[0].mxu0
    %2319 = vmatprep.mubr.bf16.mxu0 0
    %2320 = vmatmul.mubr.bf16.gmra.mrb[0].mxu0 %v2258
    %v2321 = vpop.f32.mrb[0].mxu0
    %v2322 = vadd.f32 0.0, %v2321
    %v2323 = vpop.f32.mrb[0].mxu0
    %v2324 = vpop.f32.mrb[0].mxu0
    %v2325 = vadd.f32 0.0, %v2324
    %v2326 = vpop.f32.mrb[0].mxu0
    %2327 = vdwg.mxu0
    %v2328 = vadd.f32 %v2120, %v2298
    %v2329 = vadd.f32 %v2121, %v2301
    %v2330 = vadd.f32 %v2122, %v2306
    %v2331 = vadd.f32 %v2123, %v2309
    %v2332 = vadd.f32 %v2124, %v2314
    %v2333 = vadd.f32 %v2125, %v2317
    %v2334 = vadd.f32 %v2126, %v2322
    %v2335 = vadd.f32 %v2127, %v2325
    %v2336 = vld [vmem:[%s7] sm:$0x1]
    %v2338 = vlaneseq
    %v2339 = vshrl.u32 %v2338, 7
    %v2340 = vsub.s32 0, %v2339
    %v2341 = vrot.slane %v2336, %v2340
    %v2343 = vadd.f32 %v2328, %v2341
    %v2344 = vadd.f32 %v2329, %v2341
    %v2345 = vadd.f32 %v2330, %v2341
    %v2346 = vadd.f32 %v2331, %v2341
    %v2347 = vadd.f32 %v2332, %v2341
    %v2348 = vadd.f32 %v2333, %v2341
    %v2349 = vadd.f32 %v2334, %v2341
    %v2350 = vadd.f32 %v2335, %v2341
    %v2351 = vmax.f32 %v2343, 0.0
    %v2352 = vmax.f32 %v2344, 0.0
    %v2353 = vmax.f32 %v2345, 0.0
    %v2354 = vmax.f32 %v2346, 0.0
    %v2355 = vmax.f32 %v2347, 0.0
    %v2356 = vmax.f32 %v2348, 0.0
    %v2357 = vmax.f32 %v2349, 0.0
    %v2358 = vmax.f32 %v2350, 0.0
    %v2359 = vpack.c.bf16 %v2352, %v2351
    %v2360 = vpack.c.bf16 %v2354, %v2353
    %v2361 = vpack.c.bf16 %v2356, %v2355
    %v2362 = vpack.c.bf16 %v2358, %v2357
    %v2363 = vld [vmem:[#allocation4] sm:$0xf]
    %v2364 = vld [vmem:[#allocation4 + $0x4] sm:$0xf]
    %v2367 = vunpack.c.l.b16 %v2363
    %v2368 = vunpack.c.l.b16 %v2364
    %v2369 = vpack.c.b16 %v2368, %v2367
    %vm2370 = vcmask 523264
    %v2372 = vsel %vm2370, %v2369, 0
    %2374 = vmatprep.subr.bf16.mxu0 0
    %2375 = vmatpush1.bf16.msra.mxu0 %v2359
    %2376 = vmatprep.subr.bf16.mxu0 0
    %2377 = vmatpush1.bf16.msra.mxu0 %v2360
    %2378 = vmatprep.subr.bf16.mxu0 0
    %2379 = vmatpush1.bf16.msra.mxu0 %v2361
    %2380 = vmatprep.subr.bf16.mxu0 0
    %2381 = vmatpush1.bf16.msra.mxu0 %v2362
    %2382 = vmatprep.subr.bf16.mxu0 0
    %2383 = vmatpush1.bf16.msra.mxu0 0
    %2384 = vmatprep.subr.bf16.mxu0 0
    %2385 = vmatpush1.bf16.msra.mxu0 0
    %2386 = vmatprep.subr.bf16.mxu0 0
    %2387 = vmatpush1.bf16.msra.mxu0 0
    %2388 = vmatprep.subr.bf16.mxu0 0
    %2389 = vmatpush1.bf16.msra.mxu0 0
    %2390 = vmatprep.subr.bf16.mxu0 0
    %2391 = vmatpush1.bf16.msra.mxu0 0
    %2392 = vmatprep.subr.bf16.mxu0 0
    %2393 = vmatpush1.bf16.msra.mxu0 0
    %2394 = vmatprep.subr.bf16.mxu0 0
    %2395 = vmatpush1.bf16.msra.mxu0 0
    %2396 = vmatprep.subr.bf16.mxu0 0
    %2397 = vmatpush1.bf16.msra.mxu0 0
    %2398 = vmatprep.subr.bf16.mxu0 0
    %2399 = vmatpush1.bf16.msra.mxu0 0
    %2400 = vmatprep.subr.bf16.mxu0 0
    %2401 = vmatpush1.bf16.msra.mxu0 0
    %2402 = vmatprep.subr.bf16.mxu0 0
    %2403 = vmatpush1.bf16.msra.mxu0 0
    %2404 = vmatprep.subr.bf16.mxu0 0
    %2405 = vmatpush1.bf16.msra.mxu0 0
    %2406 = vmatprep.mubr.bf16.mxu0 0
    %2407 = vmatmul.mubr.bf16.gmra.mrb[0].mxu0 %v2372
    %v2408 = vpop.f32.mrb[0].mxu0
    %v2409 = vadd.f32 0.0, %v2408
    %v2410 = vpop.f32.mrb[0].mxu0
    %v2411 = vpop.f32.mrb[0].mxu0
    %v2412 = vadd.f32 0.0, %v2411
    %v2413 = vpop.f32.mrb[0].mxu0
    %2414 = vdwg.mxu0
    %v2415 = vpack.c.bf16 %v2412, %v2409
    %v2416 = vld [vmem:[#allocation6] sm:$0xf]
    %v2417 = vld [vmem:[#allocation6 + $0x4] sm:$0xf]
    %s2418 = scalar_lea.vmem [#allocation4], 8
    %v2419 = vld [vmem:[%s2418] sm:$0xf]
    %v2420 = vld [vmem:[%s2418 + $0x4] sm:$0xf]
    %v2423 = vunpack.c.l.b16 %v2419
    %v2424 = vunpack.c.l.b16 %v2420
    %v2425 = vpack.c.b16 %v2424, %v2423
    %v2427 = vsel %vm2370, %v2425, 0
    %2429 = vmatprep.subr.bf16.mxu0 0
    %2430 = vmatpush1.bf16.msra.mxu0 %v2359
    %2431 = vmatprep.subr.bf16.mxu0 0
    %2432 = vmatpush1.bf16.msra.mxu0 %v2360
    %2433 = vmatprep.subr.bf16.mxu0 0
    %2434 = vmatpush1.bf16.msra.mxu0 %v2361
    %2435 = vmatprep.subr.bf16.mxu0 0
    %2436 = vmatpush1.bf16.msra.mxu0 %v2362
    %2437 = vmatprep.subr.bf16.mxu0 0
    %2438 = vmatpush1.bf16.msra.mxu0 0
    %2439 = vmatprep.subr.bf16.mxu0 0
    %2440 = vmatpush1.bf16.msra.mxu0 0
    %2441 = vmatprep.subr.bf16.mxu0 0
    %2442 = vmatpush1.bf16.msra.mxu0 0
    %2443 = vmatprep.subr.bf16.mxu0 0
    %2444 = vmatpush1.bf16.msra.mxu0 0
    %2445 = vmatprep.subr.bf16.mxu0 0
    %2446 = vmatpush1.bf16.msra.mxu0 0
    %2447 = vmatprep.subr.bf16.mxu0 0
    %2448 = vmatpush1.bf16.msra.mxu0 0
    %2449 = vmatprep.subr.bf16.mxu0 0
    %2450 = vmatpush1.bf16.msra.mxu0 0
    %2451 = vmatprep.subr.bf16.mxu0 0
    %2452 = vmatpush1.bf16.msra.mxu0 0
    %2453 = vmatprep.subr.bf16.mxu0 0
    %2454 = vmatpush1.bf16.msra.mxu0 0
    %2455 = vmatprep.subr.bf16.mxu0 0
    %2456 = vmatpush1.bf16.msra.mxu0 0
    %2457 = vmatprep.subr.bf16.mxu0 0
    %2458 = vmatpush1.bf16.msra.mxu0 0
    %2459 = vmatprep.subr.bf16.mxu0 0
    %2460 = vmatpush1.bf16.msra.mxu0 0
    %2461 = vmatprep.mubr.bf16.mxu0 0
    %2462 = vmatmul.mubr.bf16.gmra.mrb[0].mxu0 %v2427
    %v2463 = vpop.f32.mrb[0].mxu0
    %v2464 = vadd.f32 0.0, %v2463
    %v2465 = vpop.f32.mrb[0].mxu0
    %v2466 = vpop.f32.mrb[0].mxu0
    %v2467 = vadd.f32 0.0, %v2466
    %v2468 = vpop.f32.mrb[0].mxu0
    %2469 = vdwg.mxu0
    %v2470 = vpack.c.bf16 %v2467, %v2464
    %s2471 = scalar_lea.vmem [#allocation6], 8
    %v2472 = vld [vmem:[%s2471] sm:$0xf]
    %v2473 = vld [vmem:[%s2471 + $0x4] sm:$0xf]
    %v2476 = vunpack.c.l.b16 %v2472
    %v2477 = vunpack.c.l.b16 %v2473
    %v2478 = vpack.c.b16 %v2477, %v2476
    %vm2480 = vcmask 130048
    %v2482 = vsel %vm2480, %v2470, 0
    %2484 = vmatprep.subr.bf16.mxu0 0
    %2485 = vmatpush1.bf16.msra.mxu0 %v2478
    %2486 = vmatprep.subr.bf16.mxu0 0
    %2487 = vmatpush1.bf16.msra.mxu0 0
    %2488 = vmatprep.subr.bf16.mxu0 0
    %2489 = vmatpush1.bf16.msra.mxu0 0
    %2490 = vmatprep.subr.bf16.mxu0 0
    %2491 = vmatpush1.bf16.msra.mxu0 0
    %2492 = vmatprep.subr.bf16.mxu0 0
    %2493 = vmatpush1.bf16.msra.mxu0 0
    %2494 = vmatprep.subr.bf16.mxu0 0
    %2495 = vmatpush1.bf16.msra.mxu0 0
    %2496 = vmatprep.subr.bf16.mxu0 0
    %2497 = vmatpush1.bf16.msra.mxu0 0
    %2498 = vmatprep.subr.bf16.mxu0 0
    %2499 = vmatpush1.bf16.msra.mxu0 0
    %2500 = vmatprep.subr.bf16.mxu0 0
    %2501 = vmatpush1.bf16.msra.mxu0 0
    %2502 = vmatprep.subr.bf16.mxu0 0
    %2503 = vmatpush1.bf16.msra.mxu0 0
    %2504 = vmatprep.subr.bf16.mxu0 0
    %2505 = vmatpush1.bf16.msra.mxu0 0
    %2506 = vmatprep.subr.bf16.mxu0 0
    %2507 = vmatpush1.bf16.msra.mxu0 0
    %2508 = vmatprep.subr.bf16.mxu0 0
    %2509 = vmatpush1.bf16.msra.mxu0 0
    %2510 = vmatprep.subr.bf16.mxu0 0
    %2511 = vmatpush1.bf16.msra.mxu0 0
    %2512 = vmatprep.subr.bf16.mxu0 0
    %2513 = vmatpush1.bf16.msra.mxu0 0
    %2514 = vmatprep.subr.bf16.mxu0 0
    %2515 = vmatpush1.bf16.msra.mxu0 0
    %2516 = vmatprep.mubr.bf16.mxu0 0
    %2517 = vmatmul.mubr.bf16.gmra.mrb[0].mxu0 %v2482
    %v2518 = vpop.f32.mrb[0].mxu0
    %v2519 = vadd.f32 0.0, %v2518
    %v2520 = vpop.f32.mrb[0].mxu0
    %v2521 = vpop.f32.mrb[0].mxu0
    %v2522 = vadd.f32 0.0, %v2521
    %v2523 = vpop.f32.mrb[0].mxu0
    %2524 = vdwg.mxu0
    %v2527 = vunpack.c.l.b16 %v2416
    %v2528 = vunpack.c.l.b16 %v2417
    %v2529 = vpack.c.b16 %v2528, %v2527
    %v2532 = vsel %vm2480, %v2415, 0
    %2534 = vmatprep.subr.bf16.mxu0 0
    %2535 = vmatpush1.bf16.msra.mxu0 %v2529
    %2536 = vmatprep.subr.bf16.mxu0 0
    %2537 = vmatpush1.bf16.msra.mxu0 0
    %2538 = vmatprep.subr.bf16.mxu0 0
    %2539 = vmatpush1.bf16.msra.mxu0 0
    %2540 = vmatprep.subr.bf16.mxu0 0
    %2541 = vmatpush1.bf16.msra.mxu0 0
    %2542 = vmatprep.subr.bf16.mxu0 0
    %2543 = vmatpush1.bf16.msra.mxu0 0
    %2544 = vmatprep.subr.bf16.mxu0 0
    %2545 = vmatpush1.bf16.msra.mxu0 0
    %2546 = vmatprep.subr.bf16.mxu0 0
    %2547 = vmatpush1.bf16.msra.mxu0 0
    %2548 = vmatprep.subr.bf16.mxu0 0
    %2549 = vmatpush1.bf16.msra.mxu0 0
    %2550 = vmatprep.subr.bf16.mxu0 0
    %2551 = vmatpush1.bf16.msra.mxu0 0
    %2552 = vmatprep.subr.bf16.mxu0 0
    %2553 = vmatpush1.bf16.msra.mxu0 0
    %2554 = vmatprep.subr.bf16.mxu0 0
    %2555 = vmatpush1.bf16.msra.mxu0 0
    %2556 = vmatprep.subr.bf16.mxu0 0
    %2557 = vmatpush1.bf16.msra.mxu0 0
    %2558 = vmatprep.subr.bf16.mxu0 0
    %2559 = vmatpush1.bf16.msra.mxu0 0
    %2560 = vmatprep.subr.bf16.mxu0 0
    %2561 = vmatpush1.bf16.msra.mxu0 0
    %2562 = vmatprep.subr.bf16.mxu0 0
    %2563 = vmatpush1.bf16.msra.mxu0 0
    %2564 = vmatprep.subr.bf16.mxu0 0
    %2565 = vmatpush1.bf16.msra.mxu0 0
    %2566 = vmatprep.mubr.bf16.mxu0 0
    %2567 = vmatmul.mubr.bf16.gmra.mrb[0].mxu0 %v2532
    %v2568 = vpop.f32.mrb[0].mxu0
    %v2569 = vadd.f32 %v2519, %v2568
    %v2570 = vpop.f32.mrb[0].mxu0
    %v2571 = vpop.f32.mrb[0].mxu0
    %v2572 = vadd.f32 %v2522, %v2571
    %v2573 = vpop.f32.mrb[0].mxu0
    %2574 = vdwg.mxu0
    %s2575 = scalar_lea.vmem [#allocation4], 16
    %v2576 = vld [vmem:[%s2575] sm:$0xf]
    %v2577 = vld [vmem:[%s2575 + $0x4] sm:$0xf]
    %v2580 = vunpack.c.l.b16 %v2576
    %v2581 = vunpack.c.l.b16 %v2577
    %v2582 = vpack.c.b16 %v2581, %v2580
    %v2584 = vsel %vm2370, %v2582, 0
    %2586 = vmatprep.subr.bf16.mxu0 0
    %2587 = vmatpush1.bf16.msra.mxu0 %v2359
    %2588 = vmatprep.subr.bf16.mxu0 0
    %2589 = vmatpush1.bf16.msra.mxu0 %v2360
    %2590 = vmatprep.subr.bf16.mxu0 0
    %2591 = vmatpush1.bf16.msra.mxu0 %v2361
    %2592 = vmatprep.subr.bf16.mxu0 0
    %2593 = vmatpush1.bf16.msra.mxu0 %v2362
    %2594 = vmatprep.subr.bf16.mxu0 0
    %2595 = vmatpush1.bf16.msra.mxu0 0
    %2596 = vmatprep.subr.bf16.mxu0 0
    %2597 = vmatpush1.bf16.msra.mxu0 0
    %2598 = vmatprep.subr.bf16.mxu0 0
    %2599 = vmatpush1.bf16.msra.mxu0 0
    %2600 = vmatprep.subr.bf16.mxu0 0
    %2601 = vmatpush1.bf16.msra.mxu0 0
    %2602 = vmatprep.subr.bf16.mxu0 0
    %2603 = vmatpush1.bf16.msra.mxu0 0
    %2604 = vmatprep.subr.bf16.mxu0 0
    %2605 = vmatpush1.bf16.msra.mxu0 0
    %2606 = vmatprep.subr.bf16.mxu0 0
    %2607 = vmatpush1.bf16.msra.mxu0 0
    %2608 = vmatprep.subr.bf16.mxu0 0
    %2609 = vmatpush1.bf16.msra.mxu0 0
    %2610 = vmatprep.subr.bf16.mxu0 0
    %2611 = vmatpush1.bf16.msra.mxu0 0
    %2612 = vmatprep.subr.bf16.mxu0 0
    %2613 = vmatpush1.bf16.msra.mxu0 0
    %2614 = vmatprep.subr.bf16.mxu0 0
    %2615 = vmatpush1.bf16.msra.mxu0 0
    %2616 = vmatprep.subr.bf16.mxu0 0
    %2617 = vmatpush1.bf16.msra.mxu0 0
    %2618 = vmatprep.mubr.bf16.mxu0 0
    %2619 = vmatmul.mubr.bf16.gmra.mrb[0].mxu0 %v2584
    %v2620 = vpop.f32.mrb[0].mxu0
    %v2621 = vadd.f32 0.0, %v2620
    %v2622 = vpop.f32.mrb[0].mxu0
    %v2623 = vpop.f32.mrb[0].mxu0
    %v2624 = vadd.f32 0.0, %v2623
    %v2625 = vpop.f32.mrb[0].mxu0
    %2626 = vdwg.mxu0
    %v2627 = vpack.c.bf16 %v2624, %v2621
    %s2628 = scalar_lea.vmem [#allocation6], 16
    %v2629 = vld [vmem:[%s2628] sm:$0xf]
    %v2630 = vld [vmem:[%s2628 + $0x4] sm:$0xf]
    %v2633 = vunpack.c.l.b16 %v2629
    %v2634 = vunpack.c.l.b16 %v2630
    %v2635 = vpack.c.b16 %v2634, %v2633
    %v2638 = vsel %vm2480, %v2627, 0
    %2640 = vmatprep.subr.bf16.mxu0 0
    %2641 = vmatpush1.bf16.msra.mxu0 %v2635
    %2642 = vmatprep.subr.bf16.mxu0 0
    %2643 = vmatpush1.bf16.msra.mxu0 0
    %2644 = vmatprep.subr.bf16.mxu0 0
    %2645 = vmatpush1.bf16.msra.mxu0 0
    %2646 = vmatprep.subr.bf16.mxu0 0
    %2647 = vmatpush1.bf16.msra.mxu0 0
    %2648 = vmatprep.subr.bf16.mxu0 0
    %2649 = vmatpush1.bf16.msra.mxu0 0
    %2650 = vmatprep.subr.bf16.mxu0 0
    %2651 = vmatpush1.bf16.msra.mxu0 0
    %2652 = vmatprep.subr.bf16.mxu0 0
    %2653 = vmatpush1.bf16.msra.mxu0 0
    %2654 = vmatprep.subr.bf16.mxu0 0
    %2655 = vmatpush1.bf16.msra.mxu0 0
    %2656 = vmatprep.subr.bf16.mxu0 0
    %2657 = vmatpush1.bf16.msra.mxu0 0
    %2658 = vmatprep.subr.bf16.mxu0 0
    %2659 = vmatpush1.bf16.msra.mxu0 0
    %2660 = vmatprep.subr.bf16.mxu0 0
    %2661 = vmatpush1.bf16.msra.mxu0 0
    %2662 = vmatprep.subr.bf16.mxu0 0
    %2663 = vmatpush1.bf16.msra.mxu0 0
    %2664 = vmatprep.subr.bf16.mxu0 0
    %2665 = vmatpush1.bf16.msra.mxu0 0
    %2666 = vmatprep.subr.bf16.mxu0 0
    %2667 = vmatpush1.bf16.msra.mxu0 0
    %2668 = vmatprep.subr.bf16.mxu0 0
    %2669 = vmatpush1.bf16.msra.mxu0 0
    %2670 = vmatprep.subr.bf16.mxu0 0
    %2671 = vmatpush1.bf16.msra.mxu0 0
    %2672 = vmatprep.mubr.bf16.mxu0 0
    %2673 = vmatmul.mubr.bf16.gmra.mrb[0].mxu0 %v2638
    %v2674 = vpop.f32.mrb[0].mxu0
    %v2675 = vadd.f32 0.0, %v2674
    %v2676 = vpop.f32.mrb[0].mxu0
    %v2677 = vpop.f32.mrb[0].mxu0
    %v2678 = vadd.f32 0.0, %v2677
    %v2679 = vpop.f32.mrb[0].mxu0
    %2680 = vdwg.mxu0
    %v2681 = vadd.f32 %v2569, %v2675
    %v2682 = vadd.f32 %v2572, %v2678
    %s2683 = scalar_lea.vmem [#allocation4], 24
    %v2684 = vld [vmem:[%s2683] sm:$0xf]
    %v2685 = vld [vmem:[%s2683 + $0x4] sm:$0xf]
    %v2688 = vunpack.c.l.b16 %v2684
    %v2689 = vunpack.c.l.b16 %v2685
    %v2690 = vpack.c.b16 %v2689, %v2688
    %v2692 = vsel %vm2370, %v2690, 0
    %2694 = vmatprep.subr.bf16.mxu0 0
    %2695 = vmatpush1.bf16.msra.mxu0 %v2359
    %2696 = vmatprep.subr.bf16.mxu0 0
    %2697 = vmatpush1.bf16.msra.mxu0 %v2360
    %2698 = vmatprep.subr.bf16.mxu0 0
    %2699 = vmatpush1.bf16.msra.mxu0 %v2361
    %2700 = vmatprep.subr.bf16.mxu0 0
    %2701 = vmatpush1.bf16.msra.mxu0 %v2362
    %2702 = vmatprep.subr.bf16.mxu0 0
    %2703 = vmatpush1.bf16.msra.mxu0 0
    %2704 = vmatprep.subr.bf16.mxu0 0
    %2705 = vmatpush1.bf16.msra.mxu0 0
    %2706 = vmatprep.subr.bf16.mxu0 0
    %2707 = vmatpush1.bf16.msra.mxu0 0
    %2708 = vmatprep.subr.bf16.mxu0 0
    %2709 = vmatpush1.bf16.msra.mxu0 0
    %2710 = vmatprep.subr.bf16.mxu0 0
    %2711 = vmatpush1.bf16.msra.mxu0 0
    %2712 = vmatprep.subr.bf16.mxu0 0
    %2713 = vmatpush1.bf16.msra.mxu0 0
    %2714 = vmatprep.subr.bf16.mxu0 0
    %2715 = vmatpush1.bf16.msra.mxu0 0
    %2716 = vmatprep.subr.bf16.mxu0 0
    %2717 = vmatpush1.bf16.msra.mxu0 0
    %2718 = vmatprep.subr.bf16.mxu0 0
    %2719 = vmatpush1.bf16.msra.mxu0 0
    %2720 = vmatprep.subr.bf16.mxu0 0
    %2721 = vmatpush1.bf16.msra.mxu0 0
    %2722 = vmatprep.subr.bf16.mxu0 0
    %2723 = vmatpush1.bf16.msra.mxu0 0
    %2724 = vmatprep.subr.bf16.mxu0 0
    %2725 = vmatpush1.bf16.msra.mxu0 0
    %2726 = vmatprep.mubr.bf16.mxu0 0
    %2727 = vmatmul.mubr.bf16.gmra.mrb[0].mxu0 %v2692
    %v2728 = vpop.f32.mrb[0].mxu0
    %v2729 = vadd.f32 0.0, %v2728
    %v2730 = vpop.f32.mrb[0].mxu0
    %v2731 = vpop.f32.mrb[0].mxu0
    %v2732 = vadd.f32 0.0, %v2731
    %v2733 = vpop.f32.mrb[0].mxu0
    %2734 = vdwg.mxu0
    %v2735 = vpack.c.bf16 %v2732, %v2729
    %s2736 = scalar_lea.vmem [#allocation6], 24
    %v2737 = vld [vmem:[%s2736] sm:$0xf]
    %v2738 = vld [vmem:[%s2736 + $0x4] sm:$0xf]
    %v2741 = vunpack.c.l.b16 %v2737
    %v2742 = vunpack.c.l.b16 %v2738
    %v2743 = vpack.c.b16 %v2742, %v2741
    %v2746 = vsel %vm2480, %v2735, 0
    %2748 = vmatprep.subr.bf16.mxu0 0
    %2749 = vmatpush1.bf16.msra.mxu0 %v2743
    %2750 = vmatprep.subr.bf16.mxu0 0
    %2751 = vmatpush1.bf16.msra.mxu0 0
    %2752 = vmatprep.subr.bf16.mxu0 0
    %2753 = vmatpush1.bf16.msra.mxu0 0
    %2754 = vmatprep.subr.bf16.mxu0 0
    %2755 = vmatpush1.bf16.msra.mxu0 0
    %2756 = vmatprep.subr.bf16.mxu0 0
    %2757 = vmatpush1.bf16.msra.mxu0 0
    %2758 = vmatprep.subr.bf16.mxu0 0
    %2759 = vmatpush1.bf16.msra.mxu0 0
    %2760 = vmatprep.subr.bf16.mxu0 0
    %2761 = vmatpush1.bf16.msra.mxu0 0
    %2762 = vmatprep.subr.bf16.mxu0 0
    %2763 = vmatpush1.bf16.msra.mxu0 0
    %2764 = vmatprep.subr.bf16.mxu0 0
    %2765 = vmatpush1.bf16.msra.mxu0 0
    %2766 = vmatprep.subr.bf16.mxu0 0
    %2767 = vmatpush1.bf16.msra.mxu0 0
    %2768 = vmatprep.subr.bf16.mxu0 0
    %2769 = vmatpush1.bf16.msra.mxu0 0
    %2770 = vmatprep.subr.bf16.mxu0 0
    %2771 = vmatpush1.bf16.msra.mxu0 0
    %2772 = vmatprep.subr.bf16.mxu0 0
    %2773 = vmatpush1.bf16.msra.mxu0 0
    %2774 = vmatprep.subr.bf16.mxu0 0
    %2775 = vmatpush1.bf16.msra.mxu0 0
    %2776 = vmatprep.subr.bf16.mxu0 0
    %2777 = vmatpush1.bf16.msra.mxu0 0
    %2778 = vmatprep.subr.bf16.mxu0 0
    %2779 = vmatpush1.bf16.msra.mxu0 0
    %2780 = vmatprep.mubr.bf16.mxu0 0
    %2781 = vmatmul.mubr.bf16.gmra.mrb[0].mxu0 %v2746
    %v2782 = vpop.f32.mrb[0].mxu0
    %v2783 = vadd.f32 0.0, %v2782
    %v2784 = vpop.f32.mrb[0].mxu0
    %v2785 = vpop.f32.mrb[0].mxu0
    %v2786 = vadd.f32 0.0, %v2785
    %v2787 = vpop.f32.mrb[0].mxu0
    %2788 = vdwg.mxu0
    %v2789 = vadd.f32 %v2681, %v2783
    %v2790 = vadd.f32 %v2682, %v2786
    %s2791 = scalar_lea.vmem [#allocation4], 32
    %v2792 = vld [vmem:[%s2791] sm:$0xf]
    %v2793 = vld [vmem:[%s2791 + $0x4] sm:$0xf]
    %v2796 = vunpack.c.l.b16 %v2792
    %v2797 = vunpack.c.l.b16 %v2793
    %v2798 = vpack.c.b16 %v2797, %v2796
    %v2800 = vsel %vm2370, %v2798, 0
    %2802 = vmatprep.subr.bf16.mxu0 0
    %2803 = vmatpush1.bf16.msra.mxu0 %v2359
    %2804 = vmatprep.subr.bf16.mxu0 0
    %2805 = vmatpush1.bf16.msra.mxu0 %v2360
    %2806 = vmatprep.subr.bf16.mxu0 0
    %2807 = vmatpush1.bf16.msra.mxu0 %v2361
    %2808 = vmatprep.subr.bf16.mxu0 0
    %2809 = vmatpush1.bf16.msra.mxu0 %v2362
    %2810 = vmatprep.subr.bf16.mxu0 0
    %2811 = vmatpush1.bf16.msra.mxu0 0
    %2812 = vmatprep.subr.bf16.mxu0 0
    %2813 = vmatpush1.bf16.msra.mxu0 0
    %2814 = vmatprep.subr.bf16.mxu0 0
    %2815 = vmatpush1.bf16.msra.mxu0 0
    %2816 = vmatprep.subr.bf16.mxu0 0
    %2817 = vmatpush1.bf16.msra.mxu0 0
    %2818 = vmatprep.subr.bf16.mxu0 0
    %2819 = vmatpush1.bf16.msra.mxu0 0
    %2820 = vmatprep.subr.bf16.mxu0 0
    %2821 = vmatpush1.bf16.msra.mxu0 0
    %2822 = vmatprep.subr.bf16.mxu0 0
    %2823 = vmatpush1.bf16.msra.mxu0 0
    %2824 = vmatprep.subr.bf16.mxu0 0
    %2825 = vmatpush1.bf16.msra.mxu0 0
    %2826 = vmatprep.subr.bf16.mxu0 0
    %2827 = vmatpush1.bf16.msra.mxu0 0
    %2828 = vmatprep.subr.bf16.mxu0 0
    %2829 = vmatpush1.bf16.msra.mxu0 0
    %2830 = vmatprep.subr.bf16.mxu0 0
    %2831 = vmatpush1.bf16.msra.mxu0 0
    %2832 = vmatprep.subr.bf16.mxu0 0
    %2833 = vmatpush1.bf16.msra.mxu0 0
    %2834 = vmatprep.mubr.bf16.mxu0 0
    %2835 = vmatmul.mubr.bf16.gmra.mrb[0].mxu0 %v2800
    %v2836 = vpop.f32.mrb[0].mxu0
    %v2837 = vadd.f32 0.0, %v2836
    %v2838 = vpop.f32.mrb[0].mxu0
    %v2839 = vpop.f32.mrb[0].mxu0
    %v2840 = vadd.f32 0.0, %v2839
    %v2841 = vpop.f32.mrb[0].mxu0
    %2842 = vdwg.mxu0
    %v2843 = vpack.c.bf16 %v2840, %v2837
    %s2844 = scalar_lea.vmem [#allocation6], 32
    %v2845 = vld [vmem:[%s2844] sm:$0xf]
    %v2846 = vld [vmem:[%s2844 + $0x4] sm:$0xf]
    %v2849 = vunpack.c.l.b16 %v2845
    %v2850 = vunpack.c.l.b16 %v2846
    %v2851 = vpack.c.b16 %v2850, %v2849
    %v2854 = vsel %vm2480, %v2843, 0
    %2856 = vmatprep.subr.bf16.mxu0 0
    %2857 = vmatpush1.bf16.msra.mxu0 %v2851
    %2858 = vmatprep.subr.bf16.mxu0 0
    %2859 = vmatpush1.bf16.msra.mxu0 0
    %2860 = vmatprep.subr.bf16.mxu0 0
    %2861 = vmatpush1.bf16.msra.mxu0 0
    %2862 = vmatprep.subr.bf16.mxu0 0
    %2863 = vmatpush1.bf16.msra.mxu0 0
    %2864 = vmatprep.subr.bf16.mxu0 0
    %2865 = vmatpush1.bf16.msra.mxu0 0
    %2866 = vmatprep.subr.bf16.mxu0 0
    %2867 = vmatpush1.bf16.msra.mxu0 0
    %2868 = vmatprep.subr.bf16.mxu0 0
    %2869 = vmatpush1.bf16.msra.mxu0 0
    %2870 = vmatprep.subr.bf16.mxu0 0
    %2871 = vmatpush1.bf16.msra.mxu0 0
    %2872 = vmatprep.subr.bf16.mxu0 0
    %2873 = vmatpush1.bf16.msra.mxu0 0
    %2874 = vmatprep.subr.bf16.mxu0 0
    %2875 = vmatpush1.bf16.msra.mxu0 0
    %2876 = vmatprep.subr.bf16.mxu0 0
    %2877 = vmatpush1.bf16.msra.mxu0 0
    %2878 = vmatprep.subr.bf16.mxu0 0
    %2879 = vmatpush1.bf16.msra.mxu0 0
    %2880 = vmatprep.subr.bf16.mxu0 0
    %2881 = vmatpush1.bf16.msra.mxu0 0
    %2882 = vmatprep.subr.bf16.mxu0 0
    %2883 = vmatpush1.bf16.msra.mxu0 0
    %2884 = vmatprep.subr.bf16.mxu0 0
    %2885 = vmatpush1.bf16.msra.mxu0 0
    %2886 = vmatprep.subr.bf16.mxu0 0
    %2887 = vmatpush1.bf16.msra.mxu0 0
    %2888 = vmatprep.mubr.bf16.mxu0 0
    %2889 = vmatmul.mubr.bf16.gmra.mrb[0].mxu0 %v2854
    %v2890 = vpop.f32.mrb[0].mxu0
    %v2891 = vadd.f32 0.0, %v2890
    %v2892 = vpop.f32.mrb[0].mxu0
    %v2893 = vpop.f32.mrb[0].mxu0
    %v2894 = vadd.f32 0.0, %v2893
    %v2895 = vpop.f32.mrb[0].mxu0
    %2896 = vdwg.mxu0
    %v2897 = vadd.f32 %v2789, %v2891
    %v2898 = vadd.f32 %v2790, %v2894
    %s2899 = scalar_lea.vmem [#allocation4], 40
    %v2900 = vld [vmem:[%s2899] sm:$0xf]
    %v2901 = vld [vmem:[%s2899 + $0x4] sm:$0xf]
    %v2904 = vunpack.c.l.b16 %v2900
    %v2905 = vunpack.c.l.b16 %v2901
    %v2906 = vpack.c.b16 %v2905, %v2904
    %v2908 = vsel %vm2370, %v2906, 0
    %2910 = vmatprep.subr.bf16.mxu0 0
    %2911 = vmatpush1.bf16.msra.mxu0 %v2359
    %2912 = vmatprep.subr.bf16.mxu0 0
    %2913 = vmatpush1.bf16.msra.mxu0 %v2360
    %2914 = vmatprep.subr.bf16.mxu0 0
    %2915 = vmatpush1.bf16.msra.mxu0 %v2361
    %2916 = vmatprep.subr.bf16.mxu0 0
    %2917 = vmatpush1.bf16.msra.mxu0 %v2362
    %2918 = vmatprep.subr.bf16.mxu0 0
    %2919 = vmatpush1.bf16.msra.mxu0 0
    %2920 = vmatprep.subr.bf16.mxu0 0
    %2921 = vmatpush1.bf16.msra.mxu0 0
    %2922 = vmatprep.subr.bf16.mxu0 0
    %2923 = vmatpush1.bf16.msra.mxu0 0
    %2924 = vmatprep.subr.bf16.mxu0 0
    %2925 = vmatpush1.bf16.msra.mxu0 0
    %2926 = vmatprep.subr.bf16.mxu0 0
    %2927 = vmatpush1.bf16.msra.mxu0 0
    %2928 = vmatprep.subr.bf16.mxu0 0
    %2929 = vmatpush1.bf16.msra.mxu0 0
    %2930 = vmatprep.subr.bf16.mxu0 0
    %2931 = vmatpush1.bf16.msra.mxu0 0
    %2932 = vmatprep.subr.bf16.mxu0 0
    %2933 = vmatpush1.bf16.msra.mxu0 0
    %2934 = vmatprep.subr.bf16.mxu0 0
    %2935 = vmatpush1.bf16.msra.mxu0 0
    %2936 = vmatprep.subr.bf16.mxu0 0
    %2937 = vmatpush1.bf16.msra.mxu0 0
    %2938 = vmatprep.subr.bf16.mxu0 0
    %2939 = vmatpush1.bf16.msra.mxu0 0
    %2940 = vmatprep.subr.bf16.mxu0 0
    %2941 = vmatpush1.bf16.msra.mxu0 0
    %2942 = vmatprep.mubr.bf16.mxu0 0
    %2943 = vmatmul.mubr.bf16.gmra.mrb[0].mxu0 %v2908
    %v2944 = vpop.f32.mrb[0].mxu0
    %v2945 = vadd.f32 0.0, %v2944
    %v2946 = vpop.f32.mrb[0].mxu0
    %v2947 = vpop.f32.mrb[0].mxu0
    %v2948 = vadd.f32 0.0, %v2947
    %v2949 = vpop.f32.mrb[0].mxu0
    %2950 = vdwg.mxu0
    %v2951 = vpack.c.bf16 %v2948, %v2945
    %s2952 = scalar_lea.vmem [#allocation6], 40
    %v2953 = vld [vmem:[%s2952] sm:$0xf]
    %v2954 = vld [vmem:[%s2952 + $0x4] sm:$0xf]
    %v2957 = vunpack.c.l.b16 %v2953
    %v2958 = vunpack.c.l.b16 %v2954
    %v2959 = vpack.c.b16 %v2958, %v2957
    %v2962 = vsel %vm2480, %v2951, 0
    %2964 = vmatprep.subr.bf16.mxu0 0
    %2965 = vmatpush1.bf16.msra.mxu0 %v2959
    %2966 = vmatprep.subr.bf16.mxu0 0
    %2967 = vmatpush1.bf16.msra.mxu0 0
    %2968 = vmatprep.subr.bf16.mxu0 0
    %2969 = vmatpush1.bf16.msra.mxu0 0
    %2970 = vmatprep.subr.bf16.mxu0 0
    %2971 = vmatpush1.bf16.msra.mxu0 0
    %2972 = vmatprep.subr.bf16.mxu0 0
    %2973 = vmatpush1.bf16.msra.mxu0 0
    %2974 = vmatprep.subr.bf16.mxu0 0
    %2975 = vmatpush1.bf16.msra.mxu0 0
    %2976 = vmatprep.subr.bf16.mxu0 0
    %2977 = vmatpush1.bf16.msra.mxu0 0
    %2978 = vmatprep.subr.bf16.mxu0 0
    %2979 = vmatpush1.bf16.msra.mxu0 0
    %2980 = vmatprep.subr.bf16.mxu0 0
    %2981 = vmatpush1.bf16.msra.mxu0 0
    %2982 = vmatprep.subr.bf16.mxu0 0
    %2983 = vmatpush1.bf16.msra.mxu0 0
    %2984 = vmatprep.subr.bf16.mxu0 0
    %2985 = vmatpush1.bf16.msra.mxu0 0
    %2986 = vmatprep.subr.bf16.mxu0 0
    %2987 = vmatpush1.bf16.msra.mxu0 0
    %2988 = vmatprep.subr.bf16.mxu0 0
    %2989 = vmatpush1.bf16.msra.mxu0 0
    %2990 = vmatprep.subr.bf16.mxu0 0
    %2991 = vmatpush1.bf16.msra.mxu0 0
    %2992 = vmatprep.subr.bf16.mxu0 0
    %2993 = vmatpush1.bf16.msra.mxu0 0
    %2994 = vmatprep.subr.bf16.mxu0 0
    %2995 = vmatpush1.bf16.msra.mxu0 0
    %2996 = vmatprep.mubr.bf16.mxu0 0
    %2997 = vmatmul.mubr.bf16.gmra.mrb[0].mxu0 %v2962
    %v2998 = vpop.f32.mrb[0].mxu0
    %v2999 = vadd.f32 0.0, %v2998
    %v3000 = vpop.f32.mrb[0].mxu0
    %v3001 = vpop.f32.mrb[0].mxu0
    %v3002 = vadd.f32 0.0, %v3001
    %v3003 = vpop.f32.mrb[0].mxu0
    %3004 = vdwg.mxu0
    %v3005 = vadd.f32 %v2897, %v2999
    %v3006 = vadd.f32 %v2898, %v3002
    %s3007 = scalar_lea.vmem [#allocation4], 48
    %v3008 = vld [vmem:[%s3007] sm:$0xf]
    %v3009 = vld [vmem:[%s3007 + $0x4] sm:$0xf]
    %v3012 = vunpack.c.l.b16 %v3008
    %v3013 = vunpack.c.l.b16 %v3009
    %v3014 = vpack.c.b16 %v3013, %v3012
    %v3016 = vsel %vm2370, %v3014, 0
    %3018 = vmatprep.subr.bf16.mxu0 0
    %3019 = vmatpush1.bf16.msra.mxu0 %v2359
    %3020 = vmatprep.subr.bf16.mxu0 0
    %3021 = vmatpush1.bf16.msra.mxu0 %v2360
    %3022 = vmatprep.subr.bf16.mxu0 0
    %3023 = vmatpush1.bf16.msra.mxu0 %v2361
    %3024 = vmatprep.subr.bf16.mxu0 0
    %3025 = vmatpush1.bf16.msra.mxu0 %v2362
    %3026 = vmatprep.subr.bf16.mxu0 0
    %3027 = vmatpush1.bf16.msra.mxu0 0
    %3028 = vmatprep.subr.bf16.mxu0 0
    %3029 = vmatpush1.bf16.msra.mxu0 0
    %3030 = vmatprep.subr.bf16.mxu0 0
    %3031 = vmatpush1.bf16.msra.mxu0 0
    %3032 = vmatprep.subr.bf16.mxu0 0
    %3033 = vmatpush1.bf16.msra.mxu0 0
    %3034 = vmatprep.subr.bf16.mxu0 0
    %3035 = vmatpush1.bf16.msra.mxu0 0
    %3036 = vmatprep.subr.bf16.mxu0 0
    %3037 = vmatpush1.bf16.msra.mxu0 0
    %3038 = vmatprep.subr.bf16.mxu0 0
    %3039 = vmatpush1.bf16.msra.mxu0 0
    %3040 = vmatprep.subr.bf16.mxu0 0
    %3041 = vmatpush1.bf16.msra.mxu0 0
    %3042 = vmatprep.subr.bf16.mxu0 0
    %3043 = vmatpush1.bf16.msra.mxu0 0
    %3044 = vmatprep.subr.bf16.mxu0 0
    %3045 = vmatpush1.bf16.msra.mxu0 0
    %3046 = vmatprep.subr.bf16.mxu0 0
    %3047 = vmatpush1.bf16.msra.mxu0 0
    %3048 = vmatprep.subr.bf16.mxu0 0
    %3049 = vmatpush1.bf16.msra.mxu0 0
    %3050 = vmatprep.mubr.bf16.mxu0 0
    %3051 = vmatmul.mubr.bf16.gmra.mrb[0].mxu0 %v3016
    %v3052 = vpop.f32.mrb[0].mxu0
    %v3053 = vadd.f32 0.0, %v3052
    %v3054 = vpop.f32.mrb[0].mxu0
    %v3055 = vpop.f32.mrb[0].mxu0
    %v3056 = vadd.f32 0.0, %v3055
    %v3057 = vpop.f32.mrb[0].mxu0
    %3058 = vdwg.mxu0
    %v3059 = vpack.c.bf16 %v3056, %v3053
    %s3060 = scalar_lea.vmem [#allocation6], 48
    %v3061 = vld [vmem:[%s3060] sm:$0xf]
    %v3062 = vld [vmem:[%s3060 + $0x4] sm:$0xf]
    %v3065 = vunpack.c.l.b16 %v3061
    %v3066 = vunpack.c.l.b16 %v3062
    %v3067 = vpack.c.b16 %v3066, %v3065
    %v3070 = vsel %vm2480, %v3059, 0
    %3072 = vmatprep.subr.bf16.mxu0 0
    %3073 = vmatpush1.bf16.msra.mxu0 %v3067
    %3074 = vmatprep.subr.bf16.mxu0 0
    %3075 = vmatpush1.bf16.msra.mxu0 0
    %3076 = vmatprep.subr.bf16.mxu0 0
    %3077 = vmatpush1.bf16.msra.mxu0 0
    %3078 = vmatprep.subr.bf16.mxu0 0
    %3079 = vmatpush1.bf16.msra.mxu0 0
    %3080 = vmatprep.subr.bf16.mxu0 0
    %3081 = vmatpush1.bf16.msra.mxu0 0
    %3082 = vmatprep.subr.bf16.mxu0 0
    %3083 = vmatpush1.bf16.msra.mxu0 0
    %3084 = vmatprep.subr.bf16.mxu0 0
    %3085 = vmatpush1.bf16.msra.mxu0 0
    %3086 = vmatprep.subr.bf16.mxu0 0
    %3087 = vmatpush1.bf16.msra.mxu0 0
    %3088 = vmatprep.subr.bf16.mxu0 0
    %3089 = vmatpush1.bf16.msra.mxu0 0
    %3090 = vmatprep.subr.bf16.mxu0 0
    %3091 = vmatpush1.bf16.msra.mxu0 0
    %3092 = vmatprep.subr.bf16.mxu0 0
    %3093 = vmatpush1.bf16.msra.mxu0 0
    %3094 = vmatprep.subr.bf16.mxu0 0
    %3095 = vmatpush1.bf16.msra.mxu0 0
    %3096 = vmatprep.subr.bf16.mxu0 0
    %3097 = vmatpush1.bf16.msra.mxu0 0
    %3098 = vmatprep.subr.bf16.mxu0 0
    %3099 = vmatpush1.bf16.msra.mxu0 0
    %3100 = vmatprep.subr.bf16.mxu0 0
    %3101 = vmatpush1.bf16.msra.mxu0 0
    %3102 = vmatprep.subr.bf16.mxu0 0
    %3103 = vmatpush1.bf16.msra.mxu0 0
    %3104 = vmatprep.mubr.bf16.mxu0 0
    %3105 = vmatmul.mubr.bf16.gmra.mrb[0].mxu0 %v3070
    %v3106 = vpop.f32.mrb[0].mxu0
    %v3107 = vadd.f32 0.0, %v3106
    %v3108 = vpop.f32.mrb[0].mxu0
    %v3109 = vpop.f32.mrb[0].mxu0
    %v3110 = vadd.f32 0.0, %v3109
    %v3111 = vpop.f32.mrb[0].mxu0
    %3112 = vdwg.mxu0
    %v3113 = vadd.f32 %v3005, %v3107
    %v3114 = vadd.f32 %v3006, %v3110
    %s3115 = scalar_lea.vmem [#allocation4], 56
    %v3116 = vld [vmem:[%s3115] sm:$0xf]
    %v3117 = vld [vmem:[%s3115 + $0x4] sm:$0xf]
    %v3120 = vunpack.c.l.b16 %v3116
    %v3121 = vunpack.c.l.b16 %v3117
    %v3122 = vpack.c.b16 %v3121, %v3120
    %v3124 = vsel %vm2370, %v3122, 0
    %3126 = vmatprep.subr.bf16.mxu0 0
    %3127 = vmatpush1.bf16.msra.mxu0 %v2359
    %3128 = vmatprep.subr.bf16.mxu0 0
    %3129 = vmatpush1.bf16.msra.mxu0 %v2360
    %3130 = vmatprep.subr.bf16.mxu0 0
    %3131 = vmatpush1.bf16.msra.mxu0 %v2361
    %3132 = vmatprep.subr.bf16.mxu0 0
    %3133 = vmatpush1.bf16.msra.mxu0 %v2362
    %3134 = vmatprep.subr.bf16.mxu0 0
    %3135 = vmatpush1.bf16.msra.mxu0 0
    %3136 = vmatprep.subr.bf16.mxu0 0
    %3137 = vmatpush1.bf16.msra.mxu0 0
    %3138 = vmatprep.subr.bf16.mxu0 0
    %3139 = vmatpush1.bf16.msra.mxu0 0
    %3140 = vmatprep.subr.bf16.mxu0 0
    %3141 = vmatpush1.bf16.msra.mxu0 0
    %3142 = vmatprep.subr.bf16.mxu0 0
    %3143 = vmatpush1.bf16.msra.mxu0 0
    %3144 = vmatprep.subr.bf16.mxu0 0
    %3145 = vmatpush1.bf16.msra.mxu0 0
    %3146 = vmatprep.subr.bf16.mxu0 0
    %3147 = vmatpush1.bf16.msra.mxu0 0
    %3148 = vmatprep.subr.bf16.mxu0 0
    %3149 = vmatpush1.bf16.msra.mxu0 0
    %3150 = vmatprep.subr.bf16.mxu0 0
    %3151 = vmatpush1.bf16.msra.mxu0 0
    %3152 = vmatprep.subr.bf16.mxu0 0
    %3153 = vmatpush1.bf16.msra.mxu0 0
    %3154 = vmatprep.subr.bf16.mxu0 0
    %3155 = vmatpush1.bf16.msra.mxu0 0
    %3156 = vmatprep.subr.bf16.mxu0 0
    %3157 = vmatpush1.bf16.msra.mxu0 0
    %3158 = vmatprep.mubr.bf16.mxu0 0
    %3159 = vmatmul.mubr.bf16.gmra.mrb[0].mxu0 %v3124
    %v3160 = vpop.f32.mrb[0].mxu0
    %v3161 = vadd.f32 0.0, %v3160
    %v3162 = vpop.f32.mrb[0].mxu0
    %v3163 = vpop.f32.mrb[0].mxu0
    %v3164 = vadd.f32 0.0, %v3163
    %v3165 = vpop.f32.mrb[0].mxu0
    %3166 = vdwg.mxu0
    %v3167 = vpack.c.bf16 %v3164, %v3161
    %s3168 = scalar_lea.vmem [#allocation6], 56
    %v3169 = vld [vmem:[%s3168] sm:$0xf]
    %v3170 = vld [vmem:[%s3168 + $0x4] sm:$0xf]
    %v3173 = vunpack.c.l.b16 %v3169
    %v3174 = vunpack.c.l.b16 %v3170
    %v3175 = vpack.c.b16 %v3174, %v3173
    %v3178 = vsel %vm2480, %v3167, 0
    %3180 = vmatprep.subr.bf16.mxu0 0
    %3181 = vmatpush1.bf16.msra.mxu0 %v3175
    %3182 = vmatprep.subr.bf16.mxu0 0
    %3183 = vmatpush1.bf16.msra.mxu0 0
    %3184 = vmatprep.subr.bf16.mxu0 0
    %3185 = vmatpush1.bf16.msra.mxu0 0
    %3186 = vmatprep.subr.bf16.mxu0 0
    %3187 = vmatpush1.bf16.msra.mxu0 0
    %3188 = vmatprep.subr.bf16.mxu0 0
    %3189 = vmatpush1.bf16.msra.mxu0 0
    %3190 = vmatprep.subr.bf16.mxu0 0
    %3191 = vmatpush1.bf16.msra.mxu0 0
    %3192 = vmatprep.subr.bf16.mxu0 0
    %3193 = vmatpush1.bf16.msra.mxu0 0
    %3194 = vmatprep.subr.bf16.mxu0 0
    %3195 = vmatpush1.bf16.msra.mxu0 0
    %3196 = vmatprep.subr.bf16.mxu0 0
    %3197 = vmatpush1.bf16.msra.mxu0 0
    %3198 = vmatprep.subr.bf16.mxu0 0
    %3199 = vmatpush1.bf16.msra.mxu0 0
    %3200 = vmatprep.subr.bf16.mxu0 0
    %3201 = vmatpush1.bf16.msra.mxu0 0
    %3202 = vmatprep.subr.bf16.mxu0 0
    %3203 = vmatpush1.bf16.msra.mxu0 0
    %3204 = vmatprep.subr.bf16.mxu0 0
    %3205 = vmatpush1.bf16.msra.mxu0 0
    %3206 = vmatprep.subr.bf16.mxu0 0
    %3207 = vmatpush1.bf16.msra.mxu0 0
    %3208 = vmatprep.subr.bf16.mxu0 0
    %3209 = vmatpush1.bf16.msra.mxu0 0
    %3210 = vmatprep.subr.bf16.mxu0 0
    %3211 = vmatpush1.bf16.msra.mxu0 0
    %3212 = vmatprep.mubr.bf16.mxu0 0
    %3213 = vmatmul.mubr.bf16.gmra.mrb[0].mxu0 %v3178
    %v3214 = vpop.f32.mrb[0].mxu0
    %v3215 = vadd.f32 0.0, %v3214
    %v3216 = vpop.f32.mrb[0].mxu0
    %v3217 = vpop.f32.mrb[0].mxu0
    %v3218 = vadd.f32 0.0, %v3217
    %v3219 = vpop.f32.mrb[0].mxu0
    %3220 = vdwg.mxu0
    %v3221 = vadd.f32 %v3113, %v3215
    %v3222 = vadd.f32 %v3114, %v3218
    %s3223 = scalar_lea.vmem [#allocation4], 64
    %v3224 = vld [vmem:[%s3223] sm:$0xf]
    %v3225 = vld [vmem:[%s3223 + $0x4] sm:$0xf]
    %v3228 = vunpack.c.l.b16 %v3224
    %v3229 = vunpack.c.l.b16 %v3225
    %v3230 = vpack.c.b16 %v3229, %v3228
    %v3232 = vsel %vm2370, %v3230, 0
    %3234 = vmatprep.subr.bf16.mxu0 0
    %3235 = vmatpush1.bf16.msra.mxu0 %v2359
    %3236 = vmatprep.subr.bf16.mxu0 0
    %3237 = vmatpush1.bf16.msra.mxu0 %v2360
    %3238 = vmatprep.subr.bf16.mxu0 0
    %3239 = vmatpush1.bf16.msra.mxu0 %v2361
    %3240 = vmatprep.subr.bf16.mxu0 0
    %3241 = vmatpush1.bf16.msra.mxu0 %v2362
    %3242 = vmatprep.subr.bf16.mxu0 0
    %3243 = vmatpush1.bf16.msra.mxu0 0
    %3244 = vmatprep.subr.bf16.mxu0 0
    %3245 = vmatpush1.bf16.msra.mxu0 0
    %3246 = vmatprep.subr.bf16.mxu0 0
    %3247 = vmatpush1.bf16.msra.mxu0 0
    %3248 = vmatprep.subr.bf16.mxu0 0
    %3249 = vmatpush1.bf16.msra.mxu0 0
    %3250 = vmatprep.subr.bf16.mxu0 0
    %3251 = vmatpush1.bf16.msra.mxu0 0
    %3252 = vmatprep.subr.bf16.mxu0 0
    %3253 = vmatpush1.bf16.msra.mxu0 0
    %3254 = vmatprep.subr.bf16.mxu0 0
    %3255 = vmatpush1.bf16.msra.mxu0 0
    %3256 = vmatprep.subr.bf16.mxu0 0
    %3257 = vmatpush1.bf16.msra.mxu0 0
    %3258 = vmatprep.subr.bf16.mxu0 0
    %3259 = vmatpush1.bf16.msra.mxu0 0
    %3260 = vmatprep.subr.bf16.mxu0 0
    %3261 = vmatpush1.bf16.msra.mxu0 0
    %3262 = vmatprep.subr.bf16.mxu0 0
    %3263 = vmatpush1.bf16.msra.mxu0 0
    %3264 = vmatprep.subr.bf16.mxu0 0
    %3265 = vmatpush1.bf16.msra.mxu0 0
    %3266 = vmatprep.mubr.bf16.mxu0 0
    %3267 = vmatmul.mubr.bf16.gmra.mrb[0].mxu0 %v3232
    %v3268 = vpop.f32.mrb[0].mxu0
    %v3269 = vadd.f32 0.0, %v3268
    %v3270 = vpop.f32.mrb[0].mxu0
    %v3271 = vpop.f32.mrb[0].mxu0
    %v3272 = vadd.f32 0.0, %v3271
    %v3273 = vpop.f32.mrb[0].mxu0
    %3274 = vdwg.mxu0
    %v3275 = vpack.c.bf16 %v3272, %v3269
    %s3276 = scalar_lea.vmem [#allocation6], 64
    %v3277 = vld [vmem:[%s3276] sm:$0xf]
    %v3278 = vld [vmem:[%s3276 + $0x4] sm:$0xf]
    %v3281 = vunpack.c.l.b16 %v3277
    %v3282 = vunpack.c.l.b16 %v3278
    %v3283 = vpack.c.b16 %v3282, %v3281
    %v3286 = vsel %vm2480, %v3275, 0
    %3288 = vmatprep.subr.bf16.mxu0 0
    %3289 = vmatpush1.bf16.msra.mxu0 %v3283
    %3290 = vmatprep.subr.bf16.mxu0 0
    %3291 = vmatpush1.bf16.msra.mxu0 0
    %3292 = vmatprep.subr.bf16.mxu0 0
    %3293 = vmatpush1.bf16.msra.mxu0 0
    %3294 = vmatprep.subr.bf16.mxu0 0
    %3295 = vmatpush1.bf16.msra.mxu0 0
    %3296 = vmatprep.subr.bf16.mxu0 0
    %3297 = vmatpush1.bf16.msra.mxu0 0
    %3298 = vmatprep.subr.bf16.mxu0 0
    %3299 = vmatpush1.bf16.msra.mxu0 0
    %3300 = vmatprep.subr.bf16.mxu0 0
    %3301 = vmatpush1.bf16.msra.mxu0 0
    %3302 = vmatprep.subr.bf16.mxu0 0
    %3303 = vmatpush1.bf16.msra.mxu0 0
    %3304 = vmatprep.subr.bf16.mxu0 0
    %3305 = vmatpush1.bf16.msra.mxu0 0
    %3306 = vmatprep.subr.bf16.mxu0 0
    %3307 = vmatpush1.bf16.msra.mxu0 0
    %3308 = vmatprep.subr.bf16.mxu0 0
    %3309 = vmatpush1.bf16.msra.mxu0 0
    %3310 = vmatprep.subr.bf16.mxu0 0
    %3311 = vmatpush1.bf16.msra.mxu0 0
    %3312 = vmatprep.subr.bf16.mxu0 0
    %3313 = vmatpush1.bf16.msra.mxu0 0
    %3314 = vmatprep.subr.bf16.mxu0 0
    %3315 = vmatpush1.bf16.msra.mxu0 0
    %3316 = vmatprep.subr.bf16.mxu0 0
    %3317 = vmatpush1.bf16.msra.mxu0 0
    %3318 = vmatprep.subr.bf16.mxu0 0
    %3319 = vmatpush1.bf16.msra.mxu0 0
    %3320 = vmatprep.mubr.bf16.mxu0 0
    %3321 = vmatmul.mubr.bf16.gmra.mrb[0].mxu0 %v3286
    %v3322 = vpop.f32.mrb[0].mxu0
    %v3323 = vadd.f32 0.0, %v3322
    %v3324 = vpop.f32.mrb[0].mxu0
    %v3325 = vpop.f32.mrb[0].mxu0
    %v3326 = vadd.f32 0.0, %v3325
    %v3327 = vpop.f32.mrb[0].mxu0
    %3328 = vdwg.mxu0
    %v3329 = vadd.f32 %v3221, %v3323
    %v3330 = vadd.f32 %v3222, %v3326
    %v3331 = vld [vmem:[%s13] sm:$0x1]
    %v3333 = vlaneseq
    %v3334 = vshrl.u32 %v3333, 7
    %v3335 = vsub.s32 0, %v3334
    %v3336 = vrot.slane %v3331, %v3335
    %v3338 = vadd.f32 %v3329, %v3336
    %v3339 = vadd.f32 %v3330, %v3336
    %v3340 = vmax.f32 %v3338, 0.0
    %v3341 = vmax.f32 %v3339, 0.0
    %v3342 = vpack.c.bf16 %v3341, %v3340
    %v3343 = vld [vmem:[%s15] sm:$0x3]
    %v3345 = vsel %vm2480, %v3343, 0
    %3347 = vmatprep.subr.bf16.mxu0 0
    %3348 = vmatpush1.bf16.msra.mxu0 %v3342
    %3349 = vmatprep.subr.bf16.mxu0 0
    %3350 = vmatpush1.bf16.msra.mxu0 0
    %3351 = vmatprep.subr.bf16.mxu0 0
    %3352 = vmatpush1.bf16.msra.mxu0 0
    %3353 = vmatprep.subr.bf16.mxu0 0
    %3354 = vmatpush1.bf16.msra.mxu0 0
    %3355 = vmatprep.subr.bf16.mxu0 0
    %3356 = vmatpush1.bf16.msra.mxu0 0
    %3357 = vmatprep.subr.bf16.mxu0 0
    %3358 = vmatpush1.bf16.msra.mxu0 0
    %3359 = vmatprep.subr.bf16.mxu0 0
    %3360 = vmatpush1.bf16.msra.mxu0 0
    %3361 = vmatprep.subr.bf16.mxu0 0
    %3362 = vmatpush1.bf16.msra.mxu0 0
    %3363 = vmatprep.subr.bf16.mxu0 0
    %3364 = vmatpush1.bf16.msra.mxu0 0
    %3365 = vmatprep.subr.bf16.mxu0 0
    %3366 = vmatpush1.bf16.msra.mxu0 0
    %3367 = vmatprep.subr.bf16.mxu0 0
    %3368 = vmatpush1.bf16.msra.mxu0 0
    %3369 = vmatprep.subr.bf16.mxu0 0
    %3370 = vmatpush1.bf16.msra.mxu0 0
    %3371 = vmatprep.subr.bf16.mxu0 0
    %3372 = vmatpush1.bf16.msra.mxu0 0
    %3373 = vmatprep.subr.bf16.mxu0 0
    %3374 = vmatpush1.bf16.msra.mxu0 0
    %3375 = vmatprep.subr.bf16.mxu0 0
    %3376 = vmatpush1.bf16.msra.mxu0 0
    %3377 = vmatprep.subr.bf16.mxu0 0
    %3378 = vmatpush1.bf16.msra.mxu0 0
    %3379 = vmatprep.mubr.bf16.mxu0 0
    %3380 = vmatmul.mubr.bf16.gmra.mrb[0].mxu0 %v3345
    %v3381 = vpop.f32.mrb[0].mxu0
    %v3382 = vadd.f32 0.0, %v3381
    %v3383 = vpop.f32.mrb[0].mxu0
    %v3384 = vpop.f32.mrb[0].mxu0
    %v3385 = vpop.f32.mrb[0].mxu0
    %3386 = vdwg.mxu0
    %v3387 = vpack.c.bf16 %v3382, %v3382
    %v3388 = vld [vmem:[#allocation7] sm:$0xf]
    %v3389 = vld [vmem:[#allocation7 + $0x4] sm:$0xf]
    %v3390 = vld [vmem:[#allocation7 + $0x8] sm:$0xf]
    %v3391 = vld [vmem:[#allocation7 + $0xc] sm:$0xf]
    %s3392 = scalar_lea.vmem %s15, 2
    %v3393 = vld [vmem:[%s3392] sm:$0x3]
    %v3395 = vsel %vm2480, %v3393, 0
    %3397 = vmatprep.subr.bf16.mxu0 0
    %3398 = vmatpush1.bf16.msra.mxu0 %v3342
    %3399 = vmatprep.subr.bf16.mxu0 0
    %3400 = vmatpush1.bf16.msra.mxu0 0
    %3401 = vmatprep.subr.bf16.mxu0 0
    %3402 = vmatpush1.bf16.msra.mxu0 0
    %3403 = vmatprep.subr.bf16.mxu0 0
    %3404 = vmatpush1.bf16.msra.mxu0 0
    %3405 = vmatprep.subr.bf16.mxu0 0
    %3406 = vmatpush1.bf16.msra.mxu0 0
    %3407 = vmatprep.subr.bf16.mxu0 0
    %3408 = vmatpush1.bf16.msra.mxu0 0
    %3409 = vmatprep.subr.bf16.mxu0 0
    %3410 = vmatpush1.bf16.msra.mxu0 0
    %3411 = vmatprep.subr.bf16.mxu0 0
    %3412 = vmatpush1.bf16.msra.mxu0 0
    %3413 = vmatprep.subr.bf16.mxu0 0
    %3414 = vmatpush1.bf16.msra.mxu0 0
    %3415 = vmatprep.subr.bf16.mxu0 0
    %3416 = vmatpush1.bf16.msra.mxu0 0
    %3417 = vmatprep.subr.bf16.mxu0 0
    %3418 = vmatpush1.bf16.msra.mxu0 0
    %3419 = vmatprep.subr.bf16.mxu0 0
    %3420 = vmatpush1.bf16.msra.mxu0 0
    %3421 = vmatprep.subr.bf16.mxu0 0
    %3422 = vmatpush1.bf16.msra.mxu0 0
    %3423 = vmatprep.subr.bf16.mxu0 0
    %3424 = vmatpush1.bf16.msra.mxu0 0
    %3425 = vmatprep.subr.bf16.mxu0 0
    %3426 = vmatpush1.bf16.msra.mxu0 0
    %3427 = vmatprep.subr.bf16.mxu0 0
    %3428 = vmatpush1.bf16.msra.mxu0 0
    %3429 = vmatprep.mubr.bf16.mxu0 0
    %3430 = vmatmul.mubr.bf16.gmra.mrb[0].mxu0 %v3395
    %v3431 = vpop.f32.mrb[0].mxu0
    %v3432 = vadd.f32 0.0, %v3431
    %v3433 = vpop.f32.mrb[0].mxu0
    %v3434 = vpop.f32.mrb[0].mxu0
    %v3435 = vpop.f32.mrb[0].mxu0
    %3436 = vdwg.mxu0
    %v3437 = vpack.c.bf16 %v3432, %v3432
    %s3438 = scalar_lea.vmem [#allocation7], 16
    %v3439 = vld [vmem:[%s3438] sm:$0xf]
    %v3440 = vld [vmem:[%s3438 + $0x4] sm:$0xf]
    %v3441 = vld [vmem:[%s3438 + $0x8] sm:$0xf]
    %v3442 = vld [vmem:[%s3438 + $0xc] sm:$0xf]
    %v3447 = vunpack.c.l.b16 %v3439
    %v3448 = vunpack.c.l.b16 %v3440
    %v3449 = vunpack.c.l.b16 %v3441
    %v3450 = vunpack.c.l.b16 %v3442
    %v3451 = vpack.c.b16 %v3448, %v3447
    %v3452 = vpack.c.b16 %v3450, %v3449
    %vm3455 = vcmask 261120
    %v3457 = vsel %vm3455, %v3437, 0
    %3459 = vmatprep.subr.bf16.mxu0 0
    %3460 = vmatpush1.bf16.msra.mxu0 %v3451
    %3461 = vmatprep.subr.bf16.mxu0 0
    %3462 = vmatpush1.bf16.msra.mxu0 %v3452
    %3463 = vmatprep.subr.bf16.mxu0 0
    %3464 = vmatpush1.bf16.msra.mxu0 0
    %3465 = vmatprep.subr.bf16.mxu0 0
    %3466 = vmatpush1.bf16.msra.mxu0 0
    %3467 = vmatprep.subr.bf16.mxu0 0
    %3468 = vmatpush1.bf16.msra.mxu0 0
    %3469 = vmatprep.subr.bf16.mxu0 0
    %3470 = vmatpush1.bf16.msra.mxu0 0
    %3471 = vmatprep.subr.bf16.mxu0 0
    %3472 = vmatpush1.bf16.msra.mxu0 0
    %3473 = vmatprep.subr.bf16.mxu0 0
    %3474 = vmatpush1.bf16.msra.mxu0 0
    %3475 = vmatprep.subr.bf16.mxu0 0
    %3476 = vmatpush1.bf16.msra.mxu0 0
    %3477 = vmatprep.subr.bf16.mxu0 0
    %3478 = vmatpush1.bf16.msra.mxu0 0
    %3479 = vmatprep.subr.bf16.mxu0 0
    %3480 = vmatpush1.bf16.msra.mxu0 0
    %3481 = vmatprep.subr.bf16.mxu0 0
    %3482 = vmatpush1.bf16.msra.mxu0 0
    %3483 = vmatprep.subr.bf16.mxu0 0
    %3484 = vmatpush1.bf16.msra.mxu0 0
    %3485 = vmatprep.subr.bf16.mxu0 0
    %3486 = vmatpush1.bf16.msra.mxu0 0
    %3487 = vmatprep.subr.bf16.mxu0 0
    %3488 = vmatpush1.bf16.msra.mxu0 0
    %3489 = vmatprep.subr.bf16.mxu0 0
    %3490 = vmatpush1.bf16.msra.mxu0 0
    %3491 = vmatprep.mubr.bf16.mxu0 0
    %3492 = vmatmul.mubr.bf16.gmra.mrb[0].mxu0 %v3457
    %v3493 = vpop.f32.mrb[0].mxu0
    %v3494 = vadd.f32 0.0, %v3493
    %v3495 = vpop.f32.mrb[0].mxu0
    %v3496 = vpop.f32.mrb[0].mxu0
    %v3497 = vpop.f32.mrb[0].mxu0
    %3498 = vdwg.mxu0
    %v3503 = vunpack.c.l.b16 %v3388
    %v3504 = vunpack.c.l.b16 %v3389
    %v3505 = vunpack.c.l.b16 %v3390
    %v3506 = vunpack.c.l.b16 %v3391
    %v3507 = vpack.c.b16 %v3504, %v3503
    %v3508 = vpack.c.b16 %v3506, %v3505
    %v3512 = vsel %vm3455, %v3387, 0
    %3514 = vmatprep.subr.bf16.mxu0 0
    %3515 = vmatpush1.bf16.msra.mxu0 %v3507
    %3516 = vmatprep.subr.bf16.mxu0 0
    %3517 = vmatpush1.bf16.msra.mxu0 %v3508
    %3518 = vmatprep.subr.bf16.mxu0 0
    %3519 = vmatpush1.bf16.msra.mxu0 0
    %3520 = vmatprep.subr.bf16.mxu0 0
    %3521 = vmatpush1.bf16.msra.mxu0 0
    %3522 = vmatprep.subr.bf16.mxu0 0
    %3523 = vmatpush1.bf16.msra.mxu0 0
    %3524 = vmatprep.subr.bf16.mxu0 0
    %3525 = vmatpush1.bf16.msra.mxu0 0
    %3526 = vmatprep.subr.bf16.mxu0 0
    %3527 = vmatpush1.bf16.msra.mxu0 0
    %3528 = vmatprep.subr.bf16.mxu0 0
    %3529 = vmatpush1.bf16.msra.mxu0 0
    %3530 = vmatprep.subr.bf16.mxu0 0
    %3531 = vmatpush1.bf16.msra.mxu0 0
    %3532 = vmatprep.subr.bf16.mxu0 0
    %3533 = vmatpush1.bf16.msra.mxu0 0
    %3534 = vmatprep.subr.bf16.mxu0 0
    %3535 = vmatpush1.bf16.msra.mxu0 0
    %3536 = vmatprep.subr.bf16.mxu0 0
    %3537 = vmatpush1.bf16.msra.mxu0 0
    %3538 = vmatprep.subr.bf16.mxu0 0
    %3539 = vmatpush1.bf16.msra.mxu0 0
    %3540 = vmatprep.subr.bf16.mxu0 0
    %3541 = vmatpush1.bf16.msra.mxu0 0
    %3542 = vmatprep.subr.bf16.mxu0 0
    %3543 = vmatpush1.bf16.msra.mxu0 0
    %3544 = vmatprep.subr.bf16.mxu0 0
    %3545 = vmatpush1.bf16.msra.mxu0 0
    %3546 = vmatprep.mubr.bf16.mxu0 0
    %3547 = vmatmul.mubr.bf16.gmra.mrb[0].mxu0 %v3512
    %v3548 = vpop.f32.mrb[0].mxu0
    %v3549 = vadd.f32 %v3494, %v3548
    %v3550 = vpop.f32.mrb[0].mxu0
    %v3551 = vpop.f32.mrb[0].mxu0
    %v3552 = vpop.f32.mrb[0].mxu0
    %3553 = vdwg.mxu0
    %s3554 = scalar_lea.vmem %s15, 4
    %v3555 = vld [vmem:[%s3554] sm:$0x3]
    %v3557 = vsel %vm2480, %v3555, 0
    %3559 = vmatprep.subr.bf16.mxu0 0
    %3560 = vmatpush1.bf16.msra.mxu0 %v3342
    %3561 = vmatprep.subr.bf16.mxu0 0
    %3562 = vmatpush1.bf16.msra.mxu0 0
    %3563 = vmatprep.subr.bf16.mxu0 0
    %3564 = vmatpush1.bf16.msra.mxu0 0
    %3565 = vmatprep.subr.bf16.mxu0 0
    %3566 = vmatpush1.bf16.msra.mxu0 0
    %3567 = vmatprep.subr.bf16.mxu0 0
    %3568 = vmatpush1.bf16.msra.mxu0 0
    %3569 = vmatprep.subr.bf16.mxu0 0
    %3570 = vmatpush1.bf16.msra.mxu0 0
    %3571 = vmatprep.subr.bf16.mxu0 0
    %3572 = vmatpush1.bf16.msra.mxu0 0
    %3573 = vmatprep.subr.bf16.mxu0 0
    %3574 = vmatpush1.bf16.msra.mxu0 0
    %3575 = vmatprep.subr.bf16.mxu0 0
    %3576 = vmatpush1.bf16.msra.mxu0 0
    %3577 = vmatprep.subr.bf16.mxu0 0
    %3578 = vmatpush1.bf16.msra.mxu0 0
    %3579 = vmatprep.subr.bf16.mxu0 0
    %3580 = vmatpush1.bf16.msra.mxu0 0
    %3581 = vmatprep.subr.bf16.mxu0 0
    %3582 = vmatpush1.bf16.msra.mxu0 0
    %3583 = vmatprep.subr.bf16.mxu0 0
    %3584 = vmatpush1.bf16.msra.mxu0 0
    %3585 = vmatprep.subr.bf16.mxu0 0
    %3586 = vmatpush1.bf16.msra.mxu0 0
    %3587 = vmatprep.subr.bf16.mxu0 0
    %3588 = vmatpush1.bf16.msra.mxu0 0
    %3589 = vmatprep.subr.bf16.mxu0 0
    %3590 = vmatpush1.bf16.msra.mxu0 0
    %3591 = vmatprep.mubr.bf16.mxu0 0
    %3592 = vmatmul.mubr.bf16.gmra.mrb[0].mxu0 %v3557
    %v3593 = vpop.f32.mrb[0].mxu0
    %v3594 = vadd.f32 0.0, %v3593
    %v3595 = vpop.f32.mrb[0].mxu0
    %v3596 = vpop.f32.mrb[0].mxu0
    %v3597 = vpop.f32.mrb[0].mxu0
    %3598 = vdwg.mxu0
    %v3599 = vpack.c.bf16 %v3594, %v3594
    %s3600 = scalar_lea.vmem [#allocation7], 32
    %v3601 = vld [vmem:[%s3600] sm:$0xf]
    %v3602 = vld [vmem:[%s3600 + $0x4] sm:$0xf]
    %v3603 = vld [vmem:[%s3600 + $0x8] sm:$0xf]
    %v3604 = vld [vmem:[%s3600 + $0xc] sm:$0xf]
    %v3609 = vunpack.c.l.b16 %v3601
    %v3610 = vunpack.c.l.b16 %v3602
    %v3611 = vunpack.c.l.b16 %v3603
    %v3612 = vunpack.c.l.b16 %v3604
    %v3613 = vpack.c.b16 %v3610, %v3609
    %v3614 = vpack.c.b16 %v3612, %v3611
    %v3618 = vsel %vm3455, %v3599, 0
    %3620 = vmatprep.subr.bf16.mxu0 0
    %3621 = vmatpush1.bf16.msra.mxu0 %v3613
    %3622 = vmatprep.subr.bf16.mxu0 0
    %3623 = vmatpush1.bf16.msra.mxu0 %v3614
    %3624 = vmatprep.subr.bf16.mxu0 0
    %3625 = vmatpush1.bf16.msra.mxu0 0
    %3626 = vmatprep.subr.bf16.mxu0 0
    %3627 = vmatpush1.bf16.msra.mxu0 0
    %3628 = vmatprep.subr.bf16.mxu0 0
    %3629 = vmatpush1.bf16.msra.mxu0 0
    %3630 = vmatprep.subr.bf16.mxu0 0
    %3631 = vmatpush1.bf16.msra.mxu0 0
    %3632 = vmatprep.subr.bf16.mxu0 0
    %3633 = vmatpush1.bf16.msra.mxu0 0
    %3634 = vmatprep.subr.bf16.mxu0 0
    %3635 = vmatpush1.bf16.msra.mxu0 0
    %3636 = vmatprep.subr.bf16.mxu0 0
    %3637 = vmatpush1.bf16.msra.mxu0 0
    %3638 = vmatprep.subr.bf16.mxu0 0
    %3639 = vmatpush1.bf16.msra.mxu0 0
    %3640 = vmatprep.subr.bf16.mxu0 0
    %3641 = vmatpush1.bf16.msra.mxu0 0
    %3642 = vmatprep.subr.bf16.mxu0 0
    %3643 = vmatpush1.bf16.msra.mxu0 0
    %3644 = vmatprep.subr.bf16.mxu0 0
    %3645 = vmatpush1.bf16.msra.mxu0 0
    %3646 = vmatprep.subr.bf16.mxu0 0
    %3647 = vmatpush1.bf16.msra.mxu0 0
    %3648 = vmatprep.subr.bf16.mxu0 0
    %3649 = vmatpush1.bf16.msra.mxu0 0
    %3650 = vmatprep.subr.bf16.mxu0 0
    %3651 = vmatpush1.bf16.msra.mxu0 0
    %3652 = vmatprep.mubr.bf16.mxu0 0
    %3653 = vmatmul.mubr.bf16.gmra.mrb[0].mxu0 %v3618
    %v3654 = vpop.f32.mrb[0].mxu0
    %v3655 = vadd.f32 0.0, %v3654
    %v3656 = vpop.f32.mrb[0].mxu0
    %v3657 = vpop.f32.mrb[0].mxu0
    %v3658 = vpop.f32.mrb[0].mxu0
    %3659 = vdwg.mxu0
    %v3660 = vadd.f32 %v3549, %v3655
    %s3661 = scalar_lea.vmem %s15, 6
    %v3662 = vld [vmem:[%s3661] sm:$0x3]
    %v3664 = vsel %vm2480, %v3662, 0
    %3666 = vmatprep.subr.bf16.mxu0 0
    %3667 = vmatpush1.bf16.msra.mxu0 %v3342
    %3668 = vmatprep.subr.bf16.mxu0 0
    %3669 = vmatpush1.bf16.msra.mxu0 0
    %3670 = vmatprep.subr.bf16.mxu0 0
    %3671 = vmatpush1.bf16.msra.mxu0 0
    %3672 = vmatprep.subr.bf16.mxu0 0
    %3673 = vmatpush1.bf16.msra.mxu0 0
    %3674 = vmatprep.subr.bf16.mxu0 0
    %3675 = vmatpush1.bf16.msra.mxu0 0
    %3676 = vmatprep.subr.bf16.mxu0 0
    %3677 = vmatpush1.bf16.msra.mxu0 0
    %3678 = vmatprep.subr.bf16.mxu0 0
    %3679 = vmatpush1.bf16.msra.mxu0 0
    %3680 = vmatprep.subr.bf16.mxu0 0
    %3681 = vmatpush1.bf16.msra.mxu0 0
    %3682 = vmatprep.subr.bf16.mxu0 0
    %3683 = vmatpush1.bf16.msra.mxu0 0
    %3684 = vmatprep.subr.bf16.mxu0 0
    %3685 = vmatpush1.bf16.msra.mxu0 0
    %3686 = vmatprep.subr.bf16.mxu0 0
    %3687 = vmatpush1.bf16.msra.mxu0 0
    %3688 = vmatprep.subr.bf16.mxu0 0
    %3689 = vmatpush1.bf16.msra.mxu0 0
    %3690 = vmatprep.subr.bf16.mxu0 0
    %3691 = vmatpush1.bf16.msra.mxu0 0
    %3692 = vmatprep.subr.bf16.mxu0 0
    %3693 = vmatpush1.bf16.msra.mxu0 0
    %3694 = vmatprep.subr.bf16.mxu0 0
    %3695 = vmatpush1.bf16.msra.mxu0 0
    %3696 = vmatprep.subr.bf16.mxu0 0
    %3697 = vmatpush1.bf16.msra.mxu0 0
    %3698 = vmatprep.mubr.bf16.mxu0 0
    %3699 = vmatmul.mubr.bf16.gmra.mrb[0].mxu0 %v3664
    %v3700 = vpop.f32.mrb[0].mxu0
    %v3701 = vadd.f32 0.0, %v3700
    %v3702 = vpop.f32.mrb[0].mxu0
    %v3703 = vpop.f32.mrb[0].mxu0
    %v3704 = vpop.f32.mrb[0].mxu0
    %3705 = vdwg.mxu0
    %v3706 = vpack.c.bf16 %v3701, %v3701
    %s3707 = scalar_lea.vmem [#allocation7], 48
    %v3708 = vld [vmem:[%s3707] sm:$0xf]
    %v3709 = vld [vmem:[%s3707 + $0x4] sm:$0xf]
    %v3710 = vld [vmem:[%s3707 + $0x8] sm:$0xf]
    %v3711 = vld [vmem:[%s3707 + $0xc] sm:$0xf]
    %v3716 = vunpack.c.l.b16 %v3708
    %v3717 = vunpack.c.l.b16 %v3709
    %v3718 = vunpack.c.l.b16 %v3710
    %v3719 = vunpack.c.l.b16 %v3711
    %v3720 = vpack.c.b16 %v3717, %v3716
    %v3721 = vpack.c.b16 %v3719, %v3718
    %v3725 = vsel %vm3455, %v3706, 0
    %3727 = vmatprep.subr.bf16.mxu0 0
    %3728 = vmatpush1.bf16.msra.mxu0 %v3720
    %3729 = vmatprep.subr.bf16.mxu0 0
    %3730 = vmatpush1.bf16.msra.mxu0 %v3721
    %3731 = vmatprep.subr.bf16.mxu0 0
    %3732 = vmatpush1.bf16.msra.mxu0 0
    %3733 = vmatprep.subr.bf16.mxu0 0
    %3734 = vmatpush1.bf16.msra.mxu0 0
    %3735 = vmatprep.subr.bf16.mxu0 0
    %3736 = vmatpush1.bf16.msra.mxu0 0
    %3737 = vmatprep.subr.bf16.mxu0 0
    %3738 = vmatpush1.bf16.msra.mxu0 0
    %3739 = vmatprep.subr.bf16.mxu0 0
    %3740 = vmatpush1.bf16.msra.mxu0 0
    %3741 = vmatprep.subr.bf16.mxu0 0
    %3742 = vmatpush1.bf16.msra.mxu0 0
    %3743 = vmatprep.subr.bf16.mxu0 0
    %3744 = vmatpush1.bf16.msra.mxu0 0
    %3745 = vmatprep.subr.bf16.mxu0 0
    %3746 = vmatpush1.bf16.msra.mxu0 0
    %3747 = vmatprep.subr.bf16.mxu0 0
    %3748 = vmatpush1.bf16.msra.mxu0 0
    %3749 = vmatprep.subr.bf16.mxu0 0
    %3750 = vmatpush1.bf16.msra.mxu0 0
    %3751 = vmatprep.subr.bf16.mxu0 0
    %3752 = vmatpush1.bf16.msra.mxu0 0
    %3753 = vmatprep.subr.bf16.mxu0 0
    %3754 = vmatpush1.bf16.msra.mxu0 0
    %3755 = vmatprep.subr.bf16.mxu0 0
    %3756 = vmatpush1.bf16.msra.mxu0 0
    %3757 = vmatprep.subr.bf16.mxu0 0
    %3758 = vmatpush1.bf16.msra.mxu0 0
    %3759 = vmatprep.mubr.bf16.mxu0 0
    %3760 = vmatmul.mubr.bf16.gmra.mrb[0].mxu0 %v3725
    %v3761 = vpop.f32.mrb[0].mxu0
    %v3762 = vadd.f32 0.0, %v3761
    %v3763 = vpop.f32.mrb[0].mxu0
    %v3764 = vpop.f32.mrb[0].mxu0
    %v3765 = vpop.f32.mrb[0].mxu0
    %3766 = vdwg.mxu0
    %v3767 = vadd.f32 %v3660, %v3762
    %s3768 = scalar_lea.vmem %s15, 8
    %v3769 = vld [vmem:[%s3768] sm:$0x3]
    %v3771 = vsel %vm2480, %v3769, 0
    %3773 = vmatprep.subr.bf16.mxu0 0
    %3774 = vmatpush1.bf16.msra.mxu0 %v3342
    %3775 = vmatprep.subr.bf16.mxu0 0
    %3776 = vmatpush1.bf16.msra.mxu0 0
    %3777 = vmatprep.subr.bf16.mxu0 0
    %3778 = vmatpush1.bf16.msra.mxu0 0
    %3779 = vmatprep.subr.bf16.mxu0 0
    %3780 = vmatpush1.bf16.msra.mxu0 0
    %3781 = vmatprep.subr.bf16.mxu0 0
    %3782 = vmatpush1.bf16.msra.mxu0 0
    %3783 = vmatprep.subr.bf16.mxu0 0
    %3784 = vmatpush1.bf16.msra.mxu0 0
    %3785 = vmatprep.subr.bf16.mxu0 0
    %3786 = vmatpush1.bf16.msra.mxu0 0
    %3787 = vmatprep.subr.bf16.mxu0 0
    %3788 = vmatpush1.bf16.msra.mxu0 0
    %3789 = vmatprep.subr.bf16.mxu0 0
    %3790 = vmatpush1.bf16.msra.mxu0 0
    %3791 = vmatprep.subr.bf16.mxu0 0
    %3792 = vmatpush1.bf16.msra.mxu0 0
    %3793 = vmatprep.subr.bf16.mxu0 0
    %3794 = vmatpush1.bf16.msra.mxu0 0
    %3795 = vmatprep.subr.bf16.mxu0 0
    %3796 = vmatpush1.bf16.msra.mxu0 0
    %3797 = vmatprep.subr.bf16.mxu0 0
    %3798 = vmatpush1.bf16.msra.mxu0 0
    %3799 = vmatprep.subr.bf16.mxu0 0
    %3800 = vmatpush1.bf16.msra.mxu0 0
    %3801 = vmatprep.subr.bf16.mxu0 0
    %3802 = vmatpush1.bf16.msra.mxu0 0
    %3803 = vmatprep.subr.bf16.mxu0 0
    %3804 = vmatpush1.bf16.msra.mxu0 0
    %3805 = vmatprep.mubr.bf16.mxu0 0
    %3806 = vmatmul.mubr.bf16.gmra.mrb[0].mxu0 %v3771
    %v3807 = vpop.f32.mrb[0].mxu0
    %v3808 = vadd.f32 0.0, %v3807
    %v3809 = vpop.f32.mrb[0].mxu0
    %v3810 = vpop.f32.mrb[0].mxu0
    %v3811 = vpop.f32.mrb[0].mxu0
    %3812 = vdwg.mxu0
    %v3813 = vpack.c.bf16 %v3808, %v3808
    %s3814 = scalar_lea.vmem [#allocation7], 64
    %v3815 = vld [vmem:[%s3814] sm:$0xf]
    %v3816 = vld [vmem:[%s3814 + $0x4] sm:$0xf]
    %v3817 = vld [vmem:[%s3814 + $0x8] sm:$0xf]
    %v3818 = vld [vmem:[%s3814 + $0xc] sm:$0xf]
    %v3823 = vunpack.c.l.b16 %v3815
    %v3824 = vunpack.c.l.b16 %v3816
    %v3825 = vunpack.c.l.b16 %v3817
    %v3826 = vunpack.c.l.b16 %v3818
    %v3827 = vpack.c.b16 %v3824, %v3823
    %v3828 = vpack.c.b16 %v3826, %v3825
    %v3832 = vsel %vm3455, %v3813, 0
    %3834 = vmatprep.subr.bf16.mxu0 0
    %3835 = vmatpush1.bf16.msra.mxu0 %v3827
    %3836 = vmatprep.subr.bf16.mxu0 0
    %3837 = vmatpush1.bf16.msra.mxu0 %v3828
    %3838 = vmatprep.subr.bf16.mxu0 0
    %3839 = vmatpush1.bf16.msra.mxu0 0
    %3840 = vmatprep.subr.bf16.mxu0 0
    %3841 = vmatpush1.bf16.msra.mxu0 0
    %3842 = vmatprep.subr.bf16.mxu0 0
    %3843 = vmatpush1.bf16.msra.mxu0 0
    %3844 = vmatprep.subr.bf16.mxu0 0
    %3845 = vmatpush1.bf16.msra.mxu0 0
    %3846 = vmatprep.subr.bf16.mxu0 0
    %3847 = vmatpush1.bf16.msra.mxu0 0
    %3848 = vmatprep.subr.bf16.mxu0 0
    %3849 = vmatpush1.bf16.msra.mxu0 0
    %3850 = vmatprep.subr.bf16.mxu0 0
    %3851 = vmatpush1.bf16.msra.mxu0 0
    %3852 = vmatprep.subr.bf16.mxu0 0
    %3853 = vmatpush1.bf16.msra.mxu0 0
    %3854 = vmatprep.subr.bf16.mxu0 0
    %3855 = vmatpush1.bf16.msra.mxu0 0
    %3856 = vmatprep.subr.bf16.mxu0 0
    %3857 = vmatpush1.bf16.msra.mxu0 0
    %3858 = vmatprep.subr.bf16.mxu0 0
    %3859 = vmatpush1.bf16.msra.mxu0 0
    %3860 = vmatprep.subr.bf16.mxu0 0
    %3861 = vmatpush1.bf16.msra.mxu0 0
    %3862 = vmatprep.subr.bf16.mxu0 0
    %3863 = vmatpush1.bf16.msra.mxu0 0
    %3864 = vmatprep.subr.bf16.mxu0 0
    %3865 = vmatpush1.bf16.msra.mxu0 0
    %3866 = vmatprep.mubr.bf16.mxu0 0
    %3867 = vmatmul.mubr.bf16.gmra.mrb[0].mxu0 %v3832
    %v3868 = vpop.f32.mrb[0].mxu0
    %v3869 = vadd.f32 0.0, %v3868
    %v3870 = vpop.f32.mrb[0].mxu0
    %v3871 = vpop.f32.mrb[0].mxu0
    %v3872 = vpop.f32.mrb[0].mxu0
    %3873 = vdwg.mxu0
    %v3874 = vadd.f32 %v3767, %v3869
    %s3875 = scalar_lea.vmem %s15, 10
    %v3876 = vld [vmem:[%s3875] sm:$0x3]
    %v3878 = vsel %vm2480, %v3876, 0
    %3880 = vmatprep.subr.bf16.mxu0 0
    %3881 = vmatpush1.bf16.msra.mxu0 %v3342
    %3882 = vmatprep.subr.bf16.mxu0 0
    %3883 = vmatpush1.bf16.msra.mxu0 0
    %3884 = vmatprep.subr.bf16.mxu0 0
    %3885 = vmatpush1.bf16.msra.mxu0 0
    %3886 = vmatprep.subr.bf16.mxu0 0
    %3887 = vmatpush1.bf16.msra.mxu0 0
    %3888 = vmatprep.subr.bf16.mxu0 0
    %3889 = vmatpush1.bf16.msra.mxu0 0
    %3890 = vmatprep.subr.bf16.mxu0 0
    %3891 = vmatpush1.bf16.msra.mxu0 0
    %3892 = vmatprep.subr.bf16.mxu0 0
    %3893 = vmatpush1.bf16.msra.mxu0 0
    %3894 = vmatprep.subr.bf16.mxu0 0
    %3895 = vmatpush1.bf16.msra.mxu0 0
    %3896 = vmatprep.subr.bf16.mxu0 0
    %3897 = vmatpush1.bf16.msra.mxu0 0
    %3898 = vmatprep.subr.bf16.mxu0 0
    %3899 = vmatpush1.bf16.msra.mxu0 0
    %3900 = vmatprep.subr.bf16.mxu0 0
    %3901 = vmatpush1.bf16.msra.mxu0 0
    %3902 = vmatprep.subr.bf16.mxu0 0
    %3903 = vmatpush1.bf16.msra.mxu0 0
    %3904 = vmatprep.subr.bf16.mxu0 0
    %3905 = vmatpush1.bf16.msra.mxu0 0
    %3906 = vmatprep.subr.bf16.mxu0 0
    %3907 = vmatpush1.bf16.msra.mxu0 0
    %3908 = vmatprep.subr.bf16.mxu0 0
    %3909 = vmatpush1.bf16.msra.mxu0 0
    %3910 = vmatprep.subr.bf16.mxu0 0
    %3911 = vmatpush1.bf16.msra.mxu0 0
    %3912 = vmatprep.mubr.bf16.mxu0 0
    %3913 = vmatmul.mubr.bf16.gmra.mrb[0].mxu0 %v3878
    %v3914 = vpop.f32.mrb[0].mxu0
    %v3915 = vadd.f32 0.0, %v3914
    %v3916 = vpop.f32.mrb[0].mxu0
    %v3917 = vpop.f32.mrb[0].mxu0
    %v3918 = vpop.f32.mrb[0].mxu0
    %3919 = vdwg.mxu0
    %v3920 = vpack.c.bf16 %v3915, %v3915
    %s3921 = scalar_lea.vmem [#allocation7], 80
    %v3922 = vld [vmem:[%s3921] sm:$0xf]
    %v3923 = vld [vmem:[%s3921 + $0x4] sm:$0xf]
    %v3924 = vld [vmem:[%s3921 + $0x8] sm:$0xf]
    %v3925 = vld [vmem:[%s3921 + $0xc] sm:$0xf]
    %v3930 = vunpack.c.l.b16 %v3922
    %v3931 = vunpack.c.l.b16 %v3923
    %v3932 = vunpack.c.l.b16 %v3924
    %v3933 = vunpack.c.l.b16 %v3925
    %v3934 = vpack.c.b16 %v3931, %v3930
    %v3935 = vpack.c.b16 %v3933, %v3932
    %v3939 = vsel %vm3455, %v3920, 0
    %3941 = vmatprep.subr.bf16.mxu0 0
    %3942 = vmatpush1.bf16.msra.mxu0 %v3934
    %3943 = vmatprep.subr.bf16.mxu0 0
    %3944 = vmatpush1.bf16.msra.mxu0 %v3935
    %3945 = vmatprep.subr.bf16.mxu0 0
    %3946 = vmatpush1.bf16.msra.mxu0 0
    %3947 = vmatprep.subr.bf16.mxu0 0
    %3948 = vmatpush1.bf16.msra.mxu0 0
    %3949 = vmatprep.subr.bf16.mxu0 0
    %3950 = vmatpush1.bf16.msra.mxu0 0
    %3951 = vmatprep.subr.bf16.mxu0 0
    %3952 = vmatpush1.bf16.msra.mxu0 0
    %3953 = vmatprep.subr.bf16.mxu0 0
    %3954 = vmatpush1.bf16.msra.mxu0 0
    %3955 = vmatprep.subr.bf16.mxu0 0
    %3956 = vmatpush1.bf16.msra.mxu0 0
    %3957 = vmatprep.subr.bf16.mxu0 0
    %3958 = vmatpush1.bf16.msra.mxu0 0
    %3959 = vmatprep.subr.bf16.mxu0 0
    %3960 = vmatpush1.bf16.msra.mxu0 0
    %3961 = vmatprep.subr.bf16.mxu0 0
    %3962 = vmatpush1.bf16.msra.mxu0 0
    %3963 = vmatprep.subr.bf16.mxu0 0
    %3964 = vmatpush1.bf16.msra.mxu0 0
    %3965 = vmatprep.subr.bf16.mxu0 0
    %3966 = vmatpush1.bf16.msra.mxu0 0
    %3967 = vmatprep.subr.bf16.mxu0 0
    %3968 = vmatpush1.bf16.msra.mxu0 0
    %3969 = vmatprep.subr.bf16.mxu0 0
    %3970 = vmatpush1.bf16.msra.mxu0 0
    %3971 = vmatprep.subr.bf16.mxu0 0
    %3972 = vmatpush1.bf16.msra.mxu0 0
    %3973 = vmatprep.mubr.bf16.mxu0 0
    %3974 = vmatmul.mubr.bf16.gmra.mrb[0].mxu0 %v3939
    %v3975 = vpop.f32.mrb[0].mxu0
    %v3976 = vadd.f32 0.0, %v3975
    %v3977 = vpop.f32.mrb[0].mxu0
    %v3978 = vpop.f32.mrb[0].mxu0
    %v3979 = vpop.f32.mrb[0].mxu0
    %3980 = vdwg.mxu0
    %v3981 = vadd.f32 %v3874, %v3976
    %s3982 = scalar_lea.vmem %s15, 12
    %v3983 = vld [vmem:[%s3982] sm:$0x3]
    %v3985 = vsel %vm2480, %v3983, 0
    %3987 = vmatprep.subr.bf16.mxu0 0
    %3988 = vmatpush1.bf16.msra.mxu0 %v3342
    %3989 = vmatprep.subr.bf16.mxu0 0
    %3990 = vmatpush1.bf16.msra.mxu0 0
    %3991 = vmatprep.subr.bf16.mxu0 0
    %3992 = vmatpush1.bf16.msra.mxu0 0
    %3993 = vmatprep.subr.bf16.mxu0 0
    %3994 = vmatpush1.bf16.msra.mxu0 0
    %3995 = vmatprep.subr.bf16.mxu0 0
    %3996 = vmatpush1.bf16.msra.mxu0 0
    %3997 = vmatprep.subr.bf16.mxu0 0
    %3998 = vmatpush1.bf16.msra.mxu0 0
    %3999 = vmatprep.subr.bf16.mxu0 0
    %4000 = vmatpush1.bf16.msra.mxu0 0
    %4001 = vmatprep.subr.bf16.mxu0 0
    %4002 = vmatpush1.bf16.msra.mxu0 0
    %4003 = vmatprep.subr.bf16.mxu0 0
    %4004 = vmatpush1.bf16.msra.mxu0 0
    %4005 = vmatprep.subr.bf16.mxu0 0
    %4006 = vmatpush1.bf16.msra.mxu0 0
    %4007 = vmatprep.subr.bf16.mxu0 0
    %4008 = vmatpush1.bf16.msra.mxu0 0
    %4009 = vmatprep.subr.bf16.mxu0 0
    %4010 = vmatpush1.bf16.msra.mxu0 0
    %4011 = vmatprep.subr.bf16.mxu0 0
    %4012 = vmatpush1.bf16.msra.mxu0 0
    %4013 = vmatprep.subr.bf16.mxu0 0
    %4014 = vmatpush1.bf16.msra.mxu0 0
    %4015 = vmatprep.subr.bf16.mxu0 0
    %4016 = vmatpush1.bf16.msra.mxu0 0
    %4017 = vmatprep.subr.bf16.mxu0 0
    %4018 = vmatpush1.bf16.msra.mxu0 0
    %4019 = vmatprep.mubr.bf16.mxu0 0
    %4020 = vmatmul.mubr.bf16.gmra.mrb[0].mxu0 %v3985
    %v4021 = vpop.f32.mrb[0].mxu0
    %v4022 = vadd.f32 0.0, %v4021
    %v4023 = vpop.f32.mrb[0].mxu0
    %v4024 = vpop.f32.mrb[0].mxu0
    %v4025 = vpop.f32.mrb[0].mxu0
    %4026 = vdwg.mxu0
    %v4027 = vpack.c.bf16 %v4022, %v4022
    %s4028 = scalar_lea.vmem [#allocation7], 96
    %v4029 = vld [vmem:[%s4028] sm:$0xf]
    %v4030 = vld [vmem:[%s4028 + $0x4] sm:$0xf]
    %v4031 = vld [vmem:[%s4028 + $0x8] sm:$0xf]
    %v4032 = vld [vmem:[%s4028 + $0xc] sm:$0xf]
    %v4037 = vunpack.c.l.b16 %v4029
    %v4038 = vunpack.c.l.b16 %v4030
    %v4039 = vunpack.c.l.b16 %v4031
    %v4040 = vunpack.c.l.b16 %v4032
    %v4041 = vpack.c.b16 %v4038, %v4037
    %v4042 = vpack.c.b16 %v4040, %v4039
    %v4046 = vsel %vm3455, %v4027, 0
    %4048 = vmatprep.subr.bf16.mxu0 0
    %4049 = vmatpush1.bf16.msra.mxu0 %v4041
    %4050 = vmatprep.subr.bf16.mxu0 0
    %4051 = vmatpush1.bf16.msra.mxu0 %v4042
    %4052 = vmatprep.subr.bf16.mxu0 0
    %4053 = vmatpush1.bf16.msra.mxu0 0
    %4054 = vmatprep.subr.bf16.mxu0 0
    %4055 = vmatpush1.bf16.msra.mxu0 0
    %4056 = vmatprep.subr.bf16.mxu0 0
    %4057 = vmatpush1.bf16.msra.mxu0 0
    %4058 = vmatprep.subr.bf16.mxu0 0
    %4059 = vmatpush1.bf16.msra.mxu0 0
    %4060 = vmatprep.subr.bf16.mxu0 0
    %4061 = vmatpush1.bf16.msra.mxu0 0
    %4062 = vmatprep.subr.bf16.mxu0 0
    %4063 = vmatpush1.bf16.msra.mxu0 0
    %4064 = vmatprep.subr.bf16.mxu0 0
    %4065 = vmatpush1.bf16.msra.mxu0 0
    %4066 = vmatprep.subr.bf16.mxu0 0
    %4067 = vmatpush1.bf16.msra.mxu0 0
    %4068 = vmatprep.subr.bf16.mxu0 0
    %4069 = vmatpush1.bf16.msra.mxu0 0
    %4070 = vmatprep.subr.bf16.mxu0 0
    %4071 = vmatpush1.bf16.msra.mxu0 0
    %4072 = vmatprep.subr.bf16.mxu0 0
    %4073 = vmatpush1.bf16.msra.mxu0 0
    %4074 = vmatprep.subr.bf16.mxu0 0
    %4075 = vmatpush1.bf16.msra.mxu0 0
    %4076 = vmatprep.subr.bf16.mxu0 0
    %4077 = vmatpush1.bf16.msra.mxu0 0
    %4078 = vmatprep.subr.bf16.mxu0 0
    %4079 = vmatpush1.bf16.msra.mxu0 0
    %4080 = vmatprep.mubr.bf16.mxu0 0
    %4081 = vmatmul.mubr.bf16.gmra.mrb[0].mxu0 %v4046
    %v4082 = vpop.f32.mrb[0].mxu0
    %v4083 = vadd.f32 0.0, %v4082
    %v4084 = vpop.f32.mrb[0].mxu0
    %v4085 = vpop.f32.mrb[0].mxu0
    %v4086 = vpop.f32.mrb[0].mxu0
    %4087 = vdwg.mxu0
    %v4088 = vadd.f32 %v3981, %v4083
    %s4089 = scalar_lea.vmem %s15, 14
    %v4090 = vld [vmem:[%s4089] sm:$0x3]
    %v4092 = vsel %vm2480, %v4090, 0
    %4094 = vmatprep.subr.bf16.mxu0 0
    %4095 = vmatpush1.bf16.msra.mxu0 %v3342
    %4096 = vmatprep.subr.bf16.mxu0 0
    %4097 = vmatpush1.bf16.msra.mxu0 0
    %4098 = vmatprep.subr.bf16.mxu0 0
    %4099 = vmatpush1.bf16.msra.mxu0 0
    %4100 = vmatprep.subr.bf16.mxu0 0
    %4101 = vmatpush1.bf16.msra.mxu0 0
    %4102 = vmatprep.subr.bf16.mxu0 0
    %4103 = vmatpush1.bf16.msra.mxu0 0
    %4104 = vmatprep.subr.bf16.mxu0 0
    %4105 = vmatpush1.bf16.msra.mxu0 0
    %4106 = vmatprep.subr.bf16.mxu0 0
    %4107 = vmatpush1.bf16.msra.mxu0 0
    %4108 = vmatprep.subr.bf16.mxu0 0
    %4109 = vmatpush1.bf16.msra.mxu0 0
    %4110 = vmatprep.subr.bf16.mxu0 0
    %4111 = vmatpush1.bf16.msra.mxu0 0
    %4112 = vmatprep.subr.bf16.mxu0 0
    %4113 = vmatpush1.bf16.msra.mxu0 0
    %4114 = vmatprep.subr.bf16.mxu0 0
    %4115 = vmatpush1.bf16.msra.mxu0 0
    %4116 = vmatprep.subr.bf16.mxu0 0
    %4117 = vmatpush1.bf16.msra.mxu0 0
    %4118 = vmatprep.subr.bf16.mxu0 0
    %4119 = vmatpush1.bf16.msra.mxu0 0
    %4120 = vmatprep.subr.bf16.mxu0 0
    %4121 = vmatpush1.bf16.msra.mxu0 0
    %4122 = vmatprep.subr.bf16.mxu0 0
    %4123 = vmatpush1.bf16.msra.mxu0 0
    %4124 = vmatprep.subr.bf16.mxu0 0
    %4125 = vmatpush1.bf16.msra.mxu0 0
    %4126 = vmatprep.mubr.bf16.mxu0 0
    %4127 = vmatmul.mubr.bf16.gmra.mrb[0].mxu0 %v4092
    %v4128 = vpop.f32.mrb[0].mxu0
    %v4129 = vadd.f32 0.0, %v4128
    %v4130 = vpop.f32.mrb[0].mxu0
    %v4131 = vpop.f32.mrb[0].mxu0
    %v4132 = vpop.f32.mrb[0].mxu0
    %4133 = vdwg.mxu0
    %v4134 = vpack.c.bf16 %v4129, %v4129
    %s4135 = scalar_lea.vmem [#allocation7], 112
    %v4136 = vld [vmem:[%s4135] sm:$0xf]
    %v4137 = vld [vmem:[%s4135 + $0x4] sm:$0xf]
    %v4138 = vld [vmem:[%s4135 + $0x8] sm:$0xf]
    %v4139 = vld [vmem:[%s4135 + $0xc] sm:$0xf]
    %v4144 = vunpack.c.l.b16 %v4136
    %v4145 = vunpack.c.l.b16 %v4137
    %v4146 = vunpack.c.l.b16 %v4138
    %v4147 = vunpack.c.l.b16 %v4139
    %v4148 = vpack.c.b16 %v4145, %v4144
    %v4149 = vpack.c.b16 %v4147, %v4146
    %v4153 = vsel %vm3455, %v4134, 0
    %4155 = vmatprep.subr.bf16.mxu0 0
    %4156 = vmatpush1.bf16.msra.mxu0 %v4148
    %4157 = vmatprep.subr.bf16.mxu0 0
    %4158 = vmatpush1.bf16.msra.mxu0 %v4149
    %4159 = vmatprep.subr.bf16.mxu0 0
    %4160 = vmatpush1.bf16.msra.mxu0 0
    %4161 = vmatprep.subr.bf16.mxu0 0
    %4162 = vmatpush1.bf16.msra.mxu0 0
    %4163 = vmatprep.subr.bf16.mxu0 0
    %4164 = vmatpush1.bf16.msra.mxu0 0
    %4165 = vmatprep.subr.bf16.mxu0 0
    %4166 = vmatpush1.bf16.msra.mxu0 0
    %4167 = vmatprep.subr.bf16.mxu0 0
    %4168 = vmatpush1.bf16.msra.mxu0 0
    %4169 = vmatprep.subr.bf16.mxu0 0
    %4170 = vmatpush1.bf16.msra.mxu0 0
    %4171 = vmatprep.subr.bf16.mxu0 0
    %4172 = vmatpush1.bf16.msra.mxu0 0
    %4173 = vmatprep.subr.bf16.mxu0 0
    %4174 = vmatpush1.bf16.msra.mxu0 0
    %4175 = vmatprep.subr.bf16.mxu0 0
    %4176 = vmatpush1.bf16.msra.mxu0 0
    %4177 = vmatprep.subr.bf16.mxu0 0
    %4178 = vmatpush1.bf16.msra.mxu0 0
    %4179 = vmatprep.subr.bf16.mxu0 0
    %4180 = vmatpush1.bf16.msra.mxu0 0
    %4181 = vmatprep.subr.bf16.mxu0 0
    %4182 = vmatpush1.bf16.msra.mxu0 0
    %4183 = vmatprep.subr.bf16.mxu0 0
    %4184 = vmatpush1.bf16.msra.mxu0 0
    %4185 = vmatprep.subr.bf16.mxu0 0
    %4186 = vmatpush1.bf16.msra.mxu0 0
    %4187 = vmatprep.mubr.bf16.mxu0 0
    %4188 = vmatmul.mubr.bf16.gmra.mrb[0].mxu0 %v4153
    %v4189 = vpop.f32.mrb[0].mxu0
    %v4190 = vadd.f32 0.0, %v4189
    %v4191 = vpop.f32.mrb[0].mxu0
    %v4192 = vpop.f32.mrb[0].mxu0
    %v4193 = vpop.f32.mrb[0].mxu0
    %4194 = vdwg.mxu0
    %v4195 = vadd.f32 %v4088, %v4190
    %s4196 = scalar_lea.vmem %s15, 16
    %v4197 = vld [vmem:[%s4196] sm:$0x3]
    %v4199 = vsel %vm2480, %v4197, 0
    %4201 = vmatprep.subr.bf16.mxu0 0
    %4202 = vmatpush1.bf16.msra.mxu0 %v3342
    %4203 = vmatprep.subr.bf16.mxu0 0
    %4204 = vmatpush1.bf16.msra.mxu0 0
    %4205 = vmatprep.subr.bf16.mxu0 0
    %4206 = vmatpush1.bf16.msra.mxu0 0
    %4207 = vmatprep.subr.bf16.mxu0 0
    %4208 = vmatpush1.bf16.msra.mxu0 0
    %4209 = vmatprep.subr.bf16.mxu0 0
    %4210 = vmatpush1.bf16.msra.mxu0 0
    %4211 = vmatprep.subr.bf16.mxu0 0
    %4212 = vmatpush1.bf16.msra.mxu0 0
    %4213 = vmatprep.subr.bf16.mxu0 0
    %4214 = vmatpush1.bf16.msra.mxu0 0
    %4215 = vmatprep.subr.bf16.mxu0 0
    %4216 = vmatpush1.bf16.msra.mxu0 0
    %4217 = vmatprep.subr.bf16.mxu0 0
    %4218 = vmatpush1.bf16.msra.mxu0 0
    %4219 = vmatprep.subr.bf16.mxu0 0
    %4220 = vmatpush1.bf16.msra.mxu0 0
    %4221 = vmatprep.subr.bf16.mxu0 0
    %4222 = vmatpush1.bf16.msra.mxu0 0
    %4223 = vmatprep.subr.bf16.mxu0 0
    %4224 = vmatpush1.bf16.msra.mxu0 0
    %4225 = vmatprep.subr.bf16.mxu0 0
    %4226 = vmatpush1.bf16.msra.mxu0 0
    %4227 = vmatprep.subr.bf16.mxu0 0
    %4228 = vmatpush1.bf16.msra.mxu0 0
    %4229 = vmatprep.subr.bf16.mxu0 0
    %4230 = vmatpush1.bf16.msra.mxu0 0
    %4231 = vmatprep.subr.bf16.mxu0 0
    %4232 = vmatpush1.bf16.msra.mxu0 0
    %4233 = vmatprep.mubr.bf16.mxu0 0
    %4234 = vmatmul.mubr.bf16.gmra.mrb[0].mxu0 %v4199
    %v4235 = vpop.f32.mrb[0].mxu0
    %v4236 = vadd.f32 0.0, %v4235
    %v4237 = vpop.f32.mrb[0].mxu0
    %v4238 = vpop.f32.mrb[0].mxu0
    %v4239 = vpop.f32.mrb[0].mxu0
    %4240 = vdwg.mxu0
    %v4241 = vpack.c.bf16 %v4236, %v4236
    %s4242 = scalar_lea.vmem [#allocation7], 128
    %v4243 = vld [vmem:[%s4242] sm:$0xf]
    %v4244 = vld [vmem:[%s4242 + $0x4] sm:$0xf]
    %v4245 = vld [vmem:[%s4242 + $0x8] sm:$0xf]
    %v4246 = vld [vmem:[%s4242 + $0xc] sm:$0xf]
    %v4251 = vunpack.c.l.b16 %v4243
    %v4252 = vunpack.c.l.b16 %v4244
    %v4253 = vunpack.c.l.b16 %v4245
    %v4254 = vunpack.c.l.b16 %v4246
    %v4255 = vpack.c.b16 %v4252, %v4251
    %v4256 = vpack.c.b16 %v4254, %v4253
    %v4260 = vsel %vm3455, %v4241, 0
    %4262 = vmatprep.subr.bf16.mxu0 0
    %4263 = vmatpush1.bf16.msra.mxu0 %v4255
    %4264 = vmatprep.subr.bf16.mxu0 0
    %4265 = vmatpush1.bf16.msra.mxu0 %v4256
    %4266 = vmatprep.subr.bf16.mxu0 0
    %4267 = vmatpush1.bf16.msra.mxu0 0
    %4268 = vmatprep.subr.bf16.mxu0 0
    %4269 = vmatpush1.bf16.msra.mxu0 0
    %4270 = vmatprep.subr.bf16.mxu0 0
    %4271 = vmatpush1.bf16.msra.mxu0 0
    %4272 = vmatprep.subr.bf16.mxu0 0
    %4273 = vmatpush1.bf16.msra.mxu0 0
    %4274 = vmatprep.subr.bf16.mxu0 0
    %4275 = vmatpush1.bf16.msra.mxu0 0
    %4276 = vmatprep.subr.bf16.mxu0 0
    %4277 = vmatpush1.bf16.msra.mxu0 0
    %4278 = vmatprep.subr.bf16.mxu0 0
    %4279 = vmatpush1.bf16.msra.mxu0 0
    %4280 = vmatprep.subr.bf16.mxu0 0
    %4281 = vmatpush1.bf16.msra.mxu0 0
    %4282 = vmatprep.subr.bf16.mxu0 0
    %4283 = vmatpush1.bf16.msra.mxu0 0
    %4284 = vmatprep.subr.bf16.mxu0 0
    %4285 = vmatpush1.bf16.msra.mxu0 0
    %4286 = vmatprep.subr.bf16.mxu0 0
    %4287 = vmatpush1.bf16.msra.mxu0 0
    %4288 = vmatprep.subr.bf16.mxu0 0
    %4289 = vmatpush1.bf16.msra.mxu0 0
    %4290 = vmatprep.subr.bf16.mxu0 0
    %4291 = vmatpush1.bf16.msra.mxu0 0
    %4292 = vmatprep.subr.bf16.mxu0 0
    %4293 = vmatpush1.bf16.msra.mxu0 0
    %4294 = vmatprep.mubr.bf16.mxu0 0
    %4295 = vmatmul.mubr.bf16.gmra.mrb[0].mxu0 %v4260
    %v4296 = vpop.f32.mrb[0].mxu0
    %v4297 = vadd.f32 0.0, %v4296
    %v4298 = vpop.f32.mrb[0].mxu0
    %v4299 = vpop.f32.mrb[0].mxu0
    %v4300 = vpop.f32.mrb[0].mxu0
    %4301 = vdwg.mxu0
    %v4302 = vadd.f32 %v4195, %v4297
    %v4303 = vld [vmem:[#allocation9] sm:$0x1]
    %v4305 = vlaneseq
    %v4306 = vshrl.u32 %v4305, 7
    %v4307 = vsub.s32 0, %v4306
    %v4308 = vrot.slane %v4303, %v4307
    %v4310 = vadd.f32 %v4302, %v4308
    %v4311 = vmax.f32 %v4310, 0.0
    %v4312 = vpack.c.bf16 %v4311, %v4311
    %v4313 = vld [vmem:[#allocation10] sm:$0xf]
    %v4314 = vld [vmem:[#allocation10 + $0x4] sm:$0xf]
    %v4315 = vld [vmem:[#allocation12] sm:$0x1]
    %v4317 = vlaneseq
    %v4318 = vshrl.u32 %v4317, 7
    %v4319 = vsub.s32 0, %v4318
    %v4320 = vrot.slane %v4315, %v4319
    %v4324 = vunpack.c.l.b16 %v4313
    %v4325 = vunpack.c.l.b16 %v4314
    %v4326 = vpack.c.b16 %v4325, %v4324
    %v4329 = vsel %vm2480, %v2359, 0
    %v4332 = vsel %vm2480, %v2360, 0
    %v4335 = vsel %vm2480, %v2361, 0
    %v4338 = vsel %vm2480, %v2362, 0
    %4340 = vmatprep.subr.bf16.mxu0 0
    %4341 = vmatpush1.bf16.msra.mxu0 %v4326
    %4342 = vmatprep.subr.bf16.mxu0 0
    %4343 = vmatpush1.bf16.msra.mxu0 0
    %4344 = vmatprep.subr.bf16.mxu0 0
    %4345 = vmatpush1.bf16.msra.mxu0 0
    %4346 = vmatprep.subr.bf16.mxu0 0
    %4347 = vmatpush1.bf16.msra.mxu0 0
    %4348 = vmatprep.subr.bf16.mxu0 0
    %4349 = vmatpush1.bf16.msra.mxu0 0
    %4350 = vmatprep.subr.bf16.mxu0 0
    %4351 = vmatpush1.bf16.msra.mxu0 0
    %4352 = vmatprep.subr.bf16.mxu0 0
    %4353 = vmatpush1.bf16.msra.mxu0 0
    %4354 = vmatprep.subr.bf16.mxu0 0
    %4355 = vmatpush1.bf16.msra.mxu0 0
    %4356 = vmatprep.subr.bf16.mxu0 0
    %4357 = vmatpush1.bf16.msra.mxu0 0
    %4358 = vmatprep.subr.bf16.mxu0 0
    %4359 = vmatpush1.bf16.msra.mxu0 0
    %4360 = vmatprep.subr.bf16.mxu0 0
    %4361 = vmatpush1.bf16.msra.mxu0 0
    %4362 = vmatprep.subr.bf16.mxu0 0
    %4363 = vmatpush1.bf16.msra.mxu0 0
    %4364 = vmatprep.subr.bf16.mxu0 0
    %4365 = vmatpush1.bf16.msra.mxu0 0
    %4366 = vmatprep.subr.bf16.mxu0 0
    %4367 = vmatpush1.bf16.msra.mxu0 0
    %4368 = vmatprep.subr.bf16.mxu0 0
    %4369 = vmatpush1.bf16.msra.mxu0 0
    %4370 = vmatprep.subr.bf16.mxu0 0
    %4371 = vmatpush1.bf16.msra.mxu0 0
    %4372 = vmatprep.mubr.bf16.mxu0 0
    %4373 = vmatmul.mubr.bf16.gmra.mrb[0].mxu0 %v4329
    %v4374 = vpop.f32.mrb[0].mxu0
    %v4375 = vadd.f32 %v4320, %v4374
    %v4376 = vpop.f32.mrb[0].mxu0
    %v4377 = vpop.f32.mrb[0].mxu0
    %v4378 = vadd.f32 %v4320, %v4377
    %v4379 = vpop.f32.mrb[0].mxu0
    %4380 = vmatprep.mubr.bf16.mxu0 0
    %4381 = vmatmul.mubr.bf16.gmra.mrb[0].mxu0 %v4332
    %v4382 = vpop.f32.mrb[0].mxu0
    %v4383 = vadd.f32 %v4320, %v4382
    %v4384 = vpop.f32.mrb[0].mxu0
    %v4385 = vpop.f32.mrb[0].mxu0
    %v4386 = vadd.f32 %v4320, %v4385
    %v4387 = vpop.f32.mrb[0].mxu0
    %4388 = vmatprep.mubr.bf16.mxu0 0
    %4389 = vmatmul.mubr.bf16.gmra.mrb[0].mxu0 %v4335
    %v4390 = vpop.f32.mrb[0].mxu0
    %v4391 = vadd.f32 %v4320, %v4390
    %v4392 = vpop.f32.mrb[0].mxu0
    %v4393 = vpop.f32.mrb[0].mxu0
    %v4394 = vadd.f32 %v4320, %v4393
    %v4395 = vpop.f32.mrb[0].mxu0
    %4396 = vmatprep.mubr.bf16.mxu0 0
    %4397 = vmatmul.mubr.bf16.gmra.mrb[0].mxu0 %v4338
    %v4398 = vpop.f32.mrb[0].mxu0
    %v4399 = vadd.f32 %v4320, %v4398
    %v4400 = vpop.f32.mrb[0].mxu0
    %v4401 = vpop.f32.mrb[0].mxu0
    %v4402 = vadd.f32 %v4320, %v4401
    %v4403 = vpop.f32.mrb[0].mxu0
    %4404 = vdwg.mxu0
    %v4405 = vld [vmem:[#allocation13] sm:$0xf]
    %v4406 = vld [vmem:[#allocation13 + $0x4] sm:$0xf]
    %v4407 = vld [vmem:[#allocation13 + $0x8] sm:$0xf]
    %v4408 = vld [vmem:[#allocation13 + $0xc] sm:$0xf]
    %v4409 = vld [vmem:[#allocation15] sm:$0x1]
    %v4411 = vlaneseq
    %v4412 = vshrl.u32 %v4411, 7
    %v4413 = vsub.s32 0, %v4412
    %v4414 = vrot.slane %v4409, %v4413
    %v4420 = vunpack.c.l.b16 %v4405
    %v4421 = vunpack.c.l.b16 %v4406
    %v4422 = vunpack.c.l.b16 %v4407
    %v4423 = vunpack.c.l.b16 %v4408
    %v4424 = vpack.c.b16 %v4421, %v4420
    %v4425 = vpack.c.b16 %v4423, %v4422
    %v4429 = vsel %vm3455, %v3342, 0
    %4431 = vmatprep.subr.bf16.mxu0 0
    %4432 = vmatpush1.bf16.msra.mxu0 %v4424
    %4433 = vmatprep.subr.bf16.mxu0 0
    %4434 = vmatpush1.bf16.msra.mxu0 %v4425
    %4435 = vmatprep.subr.bf16.mxu0 0
    %4436 = vmatpush1.bf16.msra.mxu0 0
    %4437 = vmatprep.subr.bf16.mxu0 0
    %4438 = vmatpush1.bf16.msra.mxu0 0
    %4439 = vmatprep.subr.bf16.mxu0 0
    %4440 = vmatpush1.bf16.msra.mxu0 0
    %4441 = vmatprep.subr.bf16.mxu0 0
    %4442 = vmatpush1.bf16.msra.mxu0 0
    %4443 = vmatprep.subr.bf16.mxu0 0
    %4444 = vmatpush1.bf16.msra.mxu0 0
    %4445 = vmatprep.subr.bf16.mxu0 0
    %4446 = vmatpush1.bf16.msra.mxu0 0
    %4447 = vmatprep.subr.bf16.mxu0 0
    %4448 = vmatpush1.bf16.msra.mxu0 0
    %4449 = vmatprep.subr.bf16.mxu0 0
    %4450 = vmatpush1.bf16.msra.mxu0 0
    %4451 = vmatprep.subr.bf16.mxu0 0
    %4452 = vmatpush1.bf16.msra.mxu0 0
    %4453 = vmatprep.subr.bf16.mxu0 0
    %4454 = vmatpush1.bf16.msra.mxu0 0
    %4455 = vmatprep.subr.bf16.mxu0 0
    %4456 = vmatpush1.bf16.msra.mxu0 0
    %4457 = vmatprep.subr.bf16.mxu0 0
    %4458 = vmatpush1.bf16.msra.mxu0 0
    %4459 = vmatprep.subr.bf16.mxu0 0
    %4460 = vmatpush1.bf16.msra.mxu0 0
    %4461 = vmatprep.subr.bf16.mxu0 0
    %4462 = vmatpush1.bf16.msra.mxu0 0
    %4463 = vmatprep.mubr.bf16.mxu0 0
    %4464 = vmatmul.mubr.bf16.gmra.mrb[0].mxu0 %v4429
    %v4465 = vpop.f32.mrb[0].mxu0
    %v4466 = vadd.f32 %v4414, %v4465
    %v4467 = vpop.f32.mrb[0].mxu0
    %v4468 = vpop.f32.mrb[0].mxu0
    %v4469 = vadd.f32 %v4414, %v4468
    %v4470 = vpop.f32.mrb[0].mxu0
    %4471 = vdwg.mxu0
    %v4472 = vld [vmem:[%s29] sm:$0xf]
    %v4473 = vld [vmem:[%s29 + $0x4] sm:$0xf]
    %v4474 = vld [vmem:[%s29 + $0x8] sm:$0xf]
    %v4475 = vld [vmem:[%s29 + $0xc] sm:$0xf]
    %v4476 = vld [vmem:[%s29 + $0x10] sm:$0xf]
    %v4477 = vld [vmem:[%s29 + $0x14] sm:$0xf]
    %v4478 = vld [vmem:[%s29 + $0x18] sm:$0xf]
    %v4479 = vld [vmem:[%s29 + $0x1c] sm:$0xf]
    %v4480 = vld [vmem:[#allocation16] sm:$0x1]
    %v4482 = vlaneseq
    %v4483 = vshrl.u32 %v4482, 7
    %v4484 = vsub.s32 0, %v4483
    %v4485 = vrot.slane %v4480, %v4484
    %v4495 = vunpack.c.l.b16 %v4472
    %v4496 = vunpack.c.l.b16 %v4473
    %v4497 = vunpack.c.l.b16 %v4474
    %v4498 = vunpack.c.l.b16 %v4475
    %v4499 = vunpack.c.l.b16 %v4476
    %v4500 = vunpack.c.l.b16 %v4477
    %v4501 = vunpack.c.l.b16 %v4478
    %v4502 = vunpack.c.l.b16 %v4479
    %v4503 = vpack.c.b16 %v4496, %v4495
    %v4504 = vpack.c.b16 %v4498, %v4497
    %v4505 = vpack.c.b16 %v4500, %v4499
    %v4506 = vpack.c.b16 %v4502, %v4501
    %v4512 = vsel %vm2370, %v4312, 0
    %4514 = vmatprep.subr.bf16.mxu0 0
    %4515 = vmatpush1.bf16.msra.mxu0 %v4503
    %4516 = vmatprep.subr.bf16.mxu0 0
    %4517 = vmatpush1.bf16.msra.mxu0 %v4504
    %4518 = vmatprep.subr.bf16.mxu0 0
    %4519 = vmatpush1.bf16.msra.mxu0 %v4505
    %4520 = vmatprep.subr.bf16.mxu0 0
    %4521 = vmatpush1.bf16.msra.mxu0 %v4506
    %4522 = vmatprep.subr.bf16.mxu0 0
    %4523 = vmatpush1.bf16.msra.mxu0 0
    %4524 = vmatprep.subr.bf16.mxu0 0
    %4525 = vmatpush1.bf16.msra.mxu0 0
    %4526 = vmatprep.subr.bf16.mxu0 0
    %4527 = vmatpush1.bf16.msra.mxu0 0
    %4528 = vmatprep.subr.bf16.mxu0 0
    %4529 = vmatpush1.bf16.msra.mxu0 0
    %4530 = vmatprep.subr.bf16.mxu0 0
    %4531 = vmatpush1.bf16.msra.mxu0 0
    %4532 = vmatprep.subr.bf16.mxu0 0
    %4533 = vmatpush1.bf16.msra.mxu0 0
    %4534 = vmatprep.subr.bf16.mxu0 0
    %4535 = vmatpush1.bf16.msra.mxu0 0
    %4536 = vmatprep.subr.bf16.mxu0 0
    %4537 = vmatpush1.bf16.msra.mxu0 0
    %4538 = vmatprep.subr.bf16.mxu0 0
    %4539 = vmatpush1.bf16.msra.mxu0 0
    %4540 = vmatprep.subr.bf16.mxu0 0
    %4541 = vmatpush1.bf16.msra.mxu0 0
    %4542 = vmatprep.subr.bf16.mxu0 0
    %4543 = vmatpush1.bf16.msra.mxu0 0
    %4544 = vmatprep.subr.bf16.mxu0 0
    %4545 = vmatpush1.bf16.msra.mxu0 0
    %4546 = vmatprep.mubr.bf16.mxu0 0
    %4547 = vmatmul.mubr.bf16.gmra.mrb[0].mxu0 %v4512
    %v4548 = vpop.f32.mrb[0].mxu0
    %v4549 = vadd.f32 %v4485, %v4548
    %v4550 = vpop.f32.mrb[0].mxu0
    %v4551 = vpop.f32.mrb[0].mxu0
    %v4552 = vpop.f32.mrb[0].mxu0
    %4553 = vdwg.mxu0
    %v4554 = vpack.c.bf16 %v4549, %v4549
    %v4555 = vld [vmem:[%s45] sm:$0x3]
    %vm4556 = vcmask 31744
    %v4558 = vsel %vm4556, %v4555, 0
    %vm4560 = vcmask 1041408
    %v4562 = vsel %vm4560, %v4554, 0
    %4564 = vmatprep.subr.bf16.mxu0 0
    %4565 = vmatpush1.bf16.msra.mxu0 %v4562
    %4566 = vmatprep.subr.bf16.mxu0 0
    %4567 = vmatpush1.bf16.msra.mxu0 0
    %4568 = vmatprep.subr.bf16.mxu0 0
    %4569 = vmatpush1.bf16.msra.mxu0 0
    %4570 = vmatprep.subr.bf16.mxu0 0
    %4571 = vmatpush1.bf16.msra.mxu0 0
    %4572 = vmatprep.subr.bf16.mxu0 0
    %4573 = vmatpush1.bf16.msra.mxu0 0
    %4574 = vmatprep.subr.bf16.mxu0 0
    %4575 = vmatpush1.bf16.msra.mxu0 0
    %4576 = vmatprep.subr.bf16.mxu0 0
    %4577 = vmatpush1.bf16.msra.mxu0 0
    %4578 = vmatprep.subr.bf16.mxu0 0
    %4579 = vmatpush1.bf16.msra.mxu0 0
    %4580 = vmatprep.subr.bf16.mxu0 0
    %4581 = vmatpush1.bf16.msra.mxu0 0
    %4582 = vmatprep.subr.bf16.mxu0 0
    %4583 = vmatpush1.bf16.msra.mxu0 0
    %4584 = vmatprep.subr.bf16.mxu0 0
    %4585 = vmatpush1.bf16.msra.mxu0 0
    %4586 = vmatprep.subr.bf16.mxu0 0
    %4587 = vmatpush1.bf16.msra.mxu0 0
    %4588 = vmatprep.subr.bf16.mxu0 0
    %4589 = vmatpush1.bf16.msra.mxu0 0
    %4590 = vmatprep.subr.bf16.mxu0 0
    %4591 = vmatpush1.bf16.msra.mxu0 0
    %4592 = vmatprep.subr.bf16.mxu0 0
    %4593 = vmatpush1.bf16.msra.mxu0 0
    %4594 = vmatprep.subr.bf16.mxu0 0
    %4595 = vmatpush1.bf16.msra.mxu0 0
    %4596 = vmatprep.mubr.bf16.mxu0 0
    %4597 = vmatmul.mubr.bf16.gmra.mrb[0].mxu0 %v4558
    %v4598 = vpop.f32.mrb[0].mxu0
    %v4599 = vadd.f32 0.0, %v4598
    %v4600 = vpop.f32.mrb[0].mxu0
    %v4601 = vpop.f32.mrb[0].mxu0
    %v4602 = vpop.f32.mrb[0].mxu0
    %4603 = vdwg.mxu0
    %v4604 = vpack.c.bf16 %v4599, %v4599
    %v4605 = vld [vmem:[#allocation27] sm:$0xf]
    %v4606 = vld [vmem:[#allocation27 + $0x4] sm:$0xf]
    %v4607 = vld [vmem:[#allocation27 + $0x8] sm:$0xf]
    %v4608 = vld [vmem:[#allocation27 + $0xc] sm:$0xf]
    %s4609 = scalar_lea.vmem %s45, 2
    %v4610 = vld [vmem:[%s4609] sm:$0x3]
    %v4612 = vsel %vm4556, %v4610, 0
    %4614 = vmatprep.subr.bf16.mxu0 0
    %4615 = vmatpush1.bf16.msra.mxu0 %v4562
    %4616 = vmatprep.subr.bf16.mxu0 0
    %4617 = vmatpush1.bf16.msra.mxu0 0
    %4618 = vmatprep.subr.bf16.mxu0 0
    %4619 = vmatpush1.bf16.msra.mxu0 0
    %4620 = vmatprep.subr.bf16.mxu0 0
    %4621 = vmatpush1.bf16.msra.mxu0 0
    %4622 = vmatprep.subr.bf16.mxu0 0
    %4623 = vmatpush1.bf16.msra.mxu0 0
    %4624 = vmatprep.subr.bf16.mxu0 0
    %4625 = vmatpush1.bf16.msra.mxu0 0
    %4626 = vmatprep.subr.bf16.mxu0 0
    %4627 = vmatpush1.bf16.msra.mxu0 0
    %4628 = vmatprep.subr.bf16.mxu0 0
    %4629 = vmatpush1.bf16.msra.mxu0 0
    %4630 = vmatprep.subr.bf16.mxu0 0
    %4631 = vmatpush1.bf16.msra.mxu0 0
    %4632 = vmatprep.subr.bf16.mxu0 0
    %4633 = vmatpush1.bf16.msra.mxu0 0
    %4634 = vmatprep.subr.bf16.mxu0 0
    %4635 = vmatpush1.bf16.msra.mxu0 0
    %4636 = vmatprep.subr.bf16.mxu0 0
    %4637 = vmatpush1.bf16.msra.mxu0 0
    %4638 = vmatprep.subr.bf16.mxu0 0
    %4639 = vmatpush1.bf16.msra.mxu0 0
    %4640 = vmatprep.subr.bf16.mxu0 0
    %4641 = vmatpush1.bf16.msra.mxu0 0
    %4642 = vmatprep.subr.bf16.mxu0 0
    %4643 = vmatpush1.bf16.msra.mxu0 0
    %4644 = vmatprep.subr.bf16.mxu0 0
    %4645 = vmatpush1.bf16.msra.mxu0 0
    %4646 = vmatprep.mubr.bf16.mxu0 0
    %4647 = vmatmul.mubr.bf16.gmra.mrb[0].mxu0 %v4612
    %v4648 = vpop.f32.mrb[0].mxu0
    %v4649 = vadd.f32 0.0, %v4648
    %v4650 = vpop.f32.mrb[0].mxu0
    %v4651 = vpop.f32.mrb[0].mxu0
    %v4652 = vpop.f32.mrb[0].mxu0
    %4653 = vdwg.mxu0
    %v4654 = vpack.c.bf16 %v4649, %v4649
    %s4655 = scalar_lea.vmem [#allocation27], 16
    %v4656 = vld [vmem:[%s4655] sm:$0xf]
    %v4657 = vld [vmem:[%s4655 + $0x4] sm:$0xf]
    %v4658 = vld [vmem:[%s4655 + $0x8] sm:$0xf]
    %v4659 = vld [vmem:[%s4655 + $0xc] sm:$0xf]
    %v4664 = vunpack.c.l.b16 %v4656
    %v4665 = vunpack.c.l.b16 %v4657
    %v4666 = vunpack.c.l.b16 %v4658
    %v4667 = vunpack.c.l.b16 %v4659
    %v4668 = vpack.c.b16 %v4665, %v4664
    %v4669 = vpack.c.b16 %v4667, %v4666
    %v4673 = vsel %vm3455, %v4654, 0
    %4675 = vmatprep.subr.bf16.mxu0 0
    %4676 = vmatpush1.bf16.msra.mxu0 %v4668
    %4677 = vmatprep.subr.bf16.mxu0 0
    %4678 = vmatpush1.bf16.msra.mxu0 %v4669
    %4679 = vmatprep.subr.bf16.mxu0 0
    %4680 = vmatpush1.bf16.msra.mxu0 0
    %4681 = vmatprep.subr.bf16.mxu0 0
    %4682 = vmatpush1.bf16.msra.mxu0 0
    %4683 = vmatprep.subr.bf16.mxu0 0
    %4684 = vmatpush1.bf16.msra.mxu0 0
    %4685 = vmatprep.subr.bf16.mxu0 0
    %4686 = vmatpush1.bf16.msra.mxu0 0
    %4687 = vmatprep.subr.bf16.mxu0 0
    %4688 = vmatpush1.bf16.msra.mxu0 0
    %4689 = vmatprep.subr.bf16.mxu0 0
    %4690 = vmatpush1.bf16.msra.mxu0 0
    %4691 = vmatprep.subr.bf16.mxu0 0
    %4692 = vmatpush1.bf16.msra.mxu0 0
    %4693 = vmatprep.subr.bf16.mxu0 0
    %4694 = vmatpush1.bf16.msra.mxu0 0
    %4695 = vmatprep.subr.bf16.mxu0 0
    %4696 = vmatpush1.bf16.msra.mxu0 0
    %4697 = vmatprep.subr.bf16.mxu0 0
    %4698 = vmatpush1.bf16.msra.mxu0 0
    %4699 = vmatprep.subr.bf16.mxu0 0
    %4700 = vmatpush1.bf16.msra.mxu0 0
    %4701 = vmatprep.subr.bf16.mxu0 0
    %4702 = vmatpush1.bf16.msra.mxu0 0
    %4703 = vmatprep.subr.bf16.mxu0 0
    %4704 = vmatpush1.bf16.msra.mxu0 0
    %4705 = vmatprep.subr.bf16.mxu0 0
    %4706 = vmatpush1.bf16.msra.mxu0 0
    %4707 = vmatprep.mubr.bf16.mxu0 0
    %4708 = vmatmul.mubr.bf16.gmra.mrb[0].mxu0 %v4673
    %v4709 = vpop.f32.mrb[0].mxu0
    %v4710 = vadd.f32 0.0, %v4709
    %v4711 = vpop.f32.mrb[0].mxu0
    %v4712 = vpop.f32.mrb[0].mxu0
    %v4713 = vpop.f32.mrb[0].mxu0
    %4714 = vdwg.mxu0
    %v4719 = vunpack.c.l.b16 %v4605
    %v4720 = vunpack.c.l.b16 %v4606
    %v4721 = vunpack.c.l.b16 %v4607
    %v4722 = vunpack.c.l.b16 %v4608
    %v4723 = vpack.c.b16 %v4720, %v4719
    %v4724 = vpack.c.b16 %v4722, %v4721
    %v4728 = vsel %vm3455, %v4604, 0
    %4730 = vmatprep.subr.bf16.mxu0 0
    %4731 = vmatpush1.bf16.msra.mxu0 %v4723
    %4732 = vmatprep.subr.bf16.mxu0 0
    %4733 = vmatpush1.bf16.msra.mxu0 %v4724
    %4734 = vmatprep.subr.bf16.mxu0 0
    %4735 = vmatpush1.bf16.msra.mxu0 0
    %4736 = vmatprep.subr.bf16.mxu0 0
    %4737 = vmatpush1.bf16.msra.mxu0 0
    %4738 = vmatprep.subr.bf16.mxu0 0
    %4739 = vmatpush1.bf16.msra.mxu0 0
    %4740 = vmatprep.subr.bf16.mxu0 0
    %4741 = vmatpush1.bf16.msra.mxu0 0
    %4742 = vmatprep.subr.bf16.mxu0 0
    %4743 = vmatpush1.bf16.msra.mxu0 0
    %4744 = vmatprep.subr.bf16.mxu0 0
    %4745 = vmatpush1.bf16.msra.mxu0 0
    %4746 = vmatprep.subr.bf16.mxu0 0
    %4747 = vmatpush1.bf16.msra.mxu0 0
    %4748 = vmatprep.subr.bf16.mxu0 0
    %4749 = vmatpush1.bf16.msra.mxu0 0
    %4750 = vmatprep.subr.bf16.mxu0 0
    %4751 = vmatpush1.bf16.msra.mxu0 0
    %4752 = vmatprep.subr.bf16.mxu0 0
    %4753 = vmatpush1.bf16.msra.mxu0 0
    %4754 = vmatprep.subr.bf16.mxu0 0
    %4755 = vmatpush1.bf16.msra.mxu0 0
    %4756 = vmatprep.subr.bf16.mxu0 0
    %4757 = vmatpush1.bf16.msra.mxu0 0
    %4758 = vmatprep.subr.bf16.mxu0 0
    %4759 = vmatpush1.bf16.msra.mxu0 0
    %4760 = vmatprep.subr.bf16.mxu0 0
    %4761 = vmatpush1.bf16.msra.mxu0 0
    %4762 = vmatprep.mubr.bf16.mxu0 0
    %4763 = vmatmul.mubr.bf16.gmra.mrb[0].mxu0 %v4728
    %v4764 = vpop.f32.mrb[0].mxu0
    %v4765 = vadd.f32 %v4710, %v4764
    %v4766 = vpop.f32.mrb[0].mxu0
    %v4767 = vpop.f32.mrb[0].mxu0
    %v4768 = vpop.f32.mrb[0].mxu0
    %4769 = vdwg.mxu0
    %s4770 = scalar_lea.vmem %s45, 4
    %v4771 = vld [vmem:[%s4770] sm:$0x3]
    %v4773 = vsel %vm4556, %v4771, 0
    %4775 = vmatprep.subr.bf16.mxu0 0
    %4776 = vmatpush1.bf16.msra.mxu0 %v4562
    %4777 = vmatprep.subr.bf16.mxu0 0
    %4778 = vmatpush1.bf16.msra.mxu0 0
    %4779 = vmatprep.subr.bf16.mxu0 0
    %4780 = vmatpush1.bf16.msra.mxu0 0
    %4781 = vmatprep.subr.bf16.mxu0 0
    %4782 = vmatpush1.bf16.msra.mxu0 0
    %4783 = vmatprep.subr.bf16.mxu0 0
    %4784 = vmatpush1.bf16.msra.mxu0 0
    %4785 = vmatprep.subr.bf16.mxu0 0
    %4786 = vmatpush1.bf16.msra.mxu0 0
    %4787 = vmatprep.subr.bf16.mxu0 0
    %4788 = vmatpush1.bf16.msra.mxu0 0
    %4789 = vmatprep.subr.bf16.mxu0 0
    %4790 = vmatpush1.bf16.msra.mxu0 0
    %4791 = vmatprep.subr.bf16.mxu0 0
    %4792 = vmatpush1.bf16.msra.mxu0 0
    %4793 = vmatprep.subr.bf16.mxu0 0
    %4794 = vmatpush1.bf16.msra.mxu0 0
    %4795 = vmatprep.subr.bf16.mxu0 0
    %4796 = vmatpush1.bf16.msra.mxu0 0
    %4797 = vmatprep.subr.bf16.mxu0 0
    %4798 = vmatpush1.bf16.msra.mxu0 0
    %4799 = vmatprep.subr.bf16.mxu0 0
    %4800 = vmatpush1.bf16.msra.mxu0 0
    %4801 = vmatprep.subr.bf16.mxu0 0
    %4802 = vmatpush1.bf16.msra.mxu0 0
    %4803 = vmatprep.subr.bf16.mxu0 0
    %4804 = vmatpush1.bf16.msra.mxu0 0
    %4805 = vmatprep.subr.bf16.mxu0 0
    %4806 = vmatpush1.bf16.msra.mxu0 0
    %4807 = vmatprep.mubr.bf16.mxu0 0
    %4808 = vmatmul.mubr.bf16.gmra.mrb[0].mxu0 %v4773
    %v4809 = vpop.f32.mrb[0].mxu0
    %v4810 = vadd.f32 0.0, %v4809
    %v4811 = vpop.f32.mrb[0].mxu0
    %v4812 = vpop.f32.mrb[0].mxu0
    %v4813 = vpop.f32.mrb[0].mxu0
    %4814 = vdwg.mxu0
    %v4815 = vpack.c.bf16 %v4810, %v4810
    %s4816 = scalar_lea.vmem [#allocation27], 32
    %v4817 = vld [vmem:[%s4816] sm:$0xf]
    %v4818 = vld [vmem:[%s4816 + $0x4] sm:$0xf]
    %v4819 = vld [vmem:[%s4816 + $0x8] sm:$0xf]
    %v4820 = vld [vmem:[%s4816 + $0xc] sm:$0xf]
    %v4825 = vunpack.c.l.b16 %v4817
    %v4826 = vunpack.c.l.b16 %v4818
    %v4827 = vunpack.c.l.b16 %v4819
    %v4828 = vunpack.c.l.b16 %v4820
    %v4829 = vpack.c.b16 %v4826, %v4825
    %v4830 = vpack.c.b16 %v4828, %v4827
    %v4834 = vsel %vm3455, %v4815, 0
    %4836 = vmatprep.subr.bf16.mxu0 0
    %4837 = vmatpush1.bf16.msra.mxu0 %v4829
    %4838 = vmatprep.subr.bf16.mxu0 0
    %4839 = vmatpush1.bf16.msra.mxu0 %v4830
    %4840 = vmatprep.subr.bf16.mxu0 0
    %4841 = vmatpush1.bf16.msra.mxu0 0
    %4842 = vmatprep.subr.bf16.mxu0 0
    %4843 = vmatpush1.bf16.msra.mxu0 0
    %4844 = vmatprep.subr.bf16.mxu0 0
    %4845 = vmatpush1.bf16.msra.mxu0 0
    %4846 = vmatprep.subr.bf16.mxu0 0
    %4847 = vmatpush1.bf16.msra.mxu0 0
    %4848 = vmatprep.subr.bf16.mxu0 0
    %4849 = vmatpush1.bf16.msra.mxu0 0
    %4850 = vmatprep.subr.bf16.mxu0 0
    %4851 = vmatpush1.bf16.msra.mxu0 0
    %4852 = vmatprep.subr.bf16.mxu0 0
    %4853 = vmatpush1.bf16.msra.mxu0 0
    %4854 = vmatprep.subr.bf16.mxu0 0
    %4855 = vmatpush1.bf16.msra.mxu0 0
    %4856 = vmatprep.subr.bf16.mxu0 0
    %4857 = vmatpush1.bf16.msra.mxu0 0
    %4858 = vmatprep.subr.bf16.mxu0 0
    %4859 = vmatpush1.bf16.msra.mxu0 0
    %4860 = vmatprep.subr.bf16.mxu0 0
    %4861 = vmatpush1.bf16.msra.mxu0 0
    %4862 = vmatprep.subr.bf16.mxu0 0
    %4863 = vmatpush1.bf16.msra.mxu0 0
    %4864 = vmatprep.subr.bf16.mxu0 0
    %4865 = vmatpush1.bf16.msra.mxu0 0
    %4866 = vmatprep.subr.bf16.mxu0 0
    %4867 = vmatpush1.bf16.msra.mxu0 0
    %4868 = vmatprep.mubr.bf16.mxu0 0
    %4869 = vmatmul.mubr.bf16.gmra.mrb[0].mxu0 %v4834
    %v4870 = vpop.f32.mrb[0].mxu0
    %v4871 = vadd.f32 0.0, %v4870
    %v4872 = vpop.f32.mrb[0].mxu0
    %v4873 = vpop.f32.mrb[0].mxu0
    %v4874 = vpop.f32.mrb[0].mxu0
    %4875 = vdwg.mxu0
    %v4876 = vadd.f32 %v4765, %v4871
    %s4877 = scalar_lea.vmem %s45, 6
    %v4878 = vld [vmem:[%s4877] sm:$0x3]
    %v4880 = vsel %vm4556, %v4878, 0
    %4882 = vmatprep.subr.bf16.mxu0 0
    %4883 = vmatpush1.bf16.msra.mxu0 %v4562
    %4884 = vmatprep.subr.bf16.mxu0 0
    %4885 = vmatpush1.bf16.msra.mxu0 0
    %4886 = vmatprep.subr.bf16.mxu0 0
    %4887 = vmatpush1.bf16.msra.mxu0 0
    %4888 = vmatprep.subr.bf16.mxu0 0
    %4889 = vmatpush1.bf16.msra.mxu0 0
    %4890 = vmatprep.subr.bf16.mxu0 0
    %4891 = vmatpush1.bf16.msra.mxu0 0
    %4892 = vmatprep.subr.bf16.mxu0 0
    %4893 = vmatpush1.bf16.msra.mxu0 0
    %4894 = vmatprep.subr.bf16.mxu0 0
    %4895 = vmatpush1.bf16.msra.mxu0 0
    %4896 = vmatprep.subr.bf16.mxu0 0
    %4897 = vmatpush1.bf16.msra.mxu0 0
    %4898 = vmatprep.subr.bf16.mxu0 0
    %4899 = vmatpush1.bf16.msra.mxu0 0
    %4900 = vmatprep.subr.bf16.mxu0 0
    %4901 = vmatpush1.bf16.msra.mxu0 0
    %4902 = vmatprep.subr.bf16.mxu0 0
    %4903 = vmatpush1.bf16.msra.mxu0 0
    %4904 = vmatprep.subr.bf16.mxu0 0
    %4905 = vmatpush1.bf16.msra.mxu0 0
    %4906 = vmatprep.subr.bf16.mxu0 0
    %4907 = vmatpush1.bf16.msra.mxu0 0
    %4908 = vmatprep.subr.bf16.mxu0 0
    %4909 = vmatpush1.bf16.msra.mxu0 0
    %4910 = vmatprep.subr.bf16.mxu0 0
    %4911 = vmatpush1.bf16.msra.mxu0 0
    %4912 = vmatprep.subr.bf16.mxu0 0
    %4913 = vmatpush1.bf16.msra.mxu0 0
    %4914 = vmatprep.mubr.bf16.mxu0 0
    %4915 = vmatmul.mubr.bf16.gmra.mrb[0].mxu0 %v4880
    %v4916 = vpop.f32.mrb[0].mxu0
    %v4917 = vadd.f32 0.0, %v4916
    %v4918 = vpop.f32.mrb[0].mxu0
    %v4919 = vpop.f32.mrb[0].mxu0
    %v4920 = vpop.f32.mrb[0].mxu0
    %4921 = vdwg.mxu0
    %v4922 = vpack.c.bf16 %v4917, %v4917
    %s4923 = scalar_lea.vmem [#allocation27], 48
    %v4924 = vld [vmem:[%s4923] sm:$0xf]
    %v4925 = vld [vmem:[%s4923 + $0x4] sm:$0xf]
    %v4926 = vld [vmem:[%s4923 + $0x8] sm:$0xf]
    %v4927 = vld [vmem:[%s4923 + $0xc] sm:$0xf]
    %v4932 = vunpack.c.l.b16 %v4924
    %v4933 = vunpack.c.l.b16 %v4925
    %v4934 = vunpack.c.l.b16 %v4926
    %v4935 = vunpack.c.l.b16 %v4927
    %v4936 = vpack.c.b16 %v4933, %v4932
    %v4937 = vpack.c.b16 %v4935, %v4934
    %v4941 = vsel %vm3455, %v4922, 0
    %4943 = vmatprep.subr.bf16.mxu0 0
    %4944 = vmatpush1.bf16.msra.mxu0 %v4936
    %4945 = vmatprep.subr.bf16.mxu0 0
    %4946 = vmatpush1.bf16.msra.mxu0 %v4937
    %4947 = vmatprep.subr.bf16.mxu0 0
    %4948 = vmatpush1.bf16.msra.mxu0 0
    %4949 = vmatprep.subr.bf16.mxu0 0
    %4950 = vmatpush1.bf16.msra.mxu0 0
    %4951 = vmatprep.subr.bf16.mxu0 0
    %4952 = vmatpush1.bf16.msra.mxu0 0
    %4953 = vmatprep.subr.bf16.mxu0 0
    %4954 = vmatpush1.bf16.msra.mxu0 0
    %4955 = vmatprep.subr.bf16.mxu0 0
    %4956 = vmatpush1.bf16.msra.mxu0 0
    %4957 = vmatprep.subr.bf16.mxu0 0
    %4958 = vmatpush1.bf16.msra.mxu0 0
    %4959 = vmatprep.subr.bf16.mxu0 0
    %4960 = vmatpush1.bf16.msra.mxu0 0
    %4961 = vmatprep.subr.bf16.mxu0 0
    %4962 = vmatpush1.bf16.msra.mxu0 0
    %4963 = vmatprep.subr.bf16.mxu0 0
    %4964 = vmatpush1.bf16.msra.mxu0 0
    %4965 = vmatprep.subr.bf16.mxu0 0
    %4966 = vmatpush1.bf16.msra.mxu0 0
    %4967 = vmatprep.subr.bf16.mxu0 0
    %4968 = vmatpush1.bf16.msra.mxu0 0
    %4969 = vmatprep.subr.bf16.mxu0 0
    %4970 = vmatpush1.bf16.msra.mxu0 0
    %4971 = vmatprep.subr.bf16.mxu0 0
    %4972 = vmatpush1.bf16.msra.mxu0 0
    %4973 = vmatprep.subr.bf16.mxu0 0
    %4974 = vmatpush1.bf16.msra.mxu0 0
    %4975 = vmatprep.mubr.bf16.mxu0 0
    %4976 = vmatmul.mubr.bf16.gmra.mrb[0].mxu0 %v4941
    %v4977 = vpop.f32.mrb[0].mxu0
    %v4978 = vadd.f32 0.0, %v4977
    %v4979 = vpop.f32.mrb[0].mxu0
    %v4980 = vpop.f32.mrb[0].mxu0
    %v4981 = vpop.f32.mrb[0].mxu0
    %4982 = vdwg.mxu0
    %v4983 = vadd.f32 %v4876, %v4978
    %s4984 = scalar_lea.vmem %s45, 8
    %v4985 = vld [vmem:[%s4984] sm:$0x3]
    %v4987 = vsel %vm4556, %v4985, 0
    %4989 = vmatprep.subr.bf16.mxu0 0
    %4990 = vmatpush1.bf16.msra.mxu0 %v4562
    %4991 = vmatprep.subr.bf16.mxu0 0
    %4992 = vmatpush1.bf16.msra.mxu0 0
    %4993 = vmatprep.subr.bf16.mxu0 0
    %4994 = vmatpush1.bf16.msra.mxu0 0
    %4995 = vmatprep.subr.bf16.mxu0 0
    %4996 = vmatpush1.bf16.msra.mxu0 0
    %4997 = vmatprep.subr.bf16.mxu0 0
    %4998 = vmatpush1.bf16.msra.mxu0 0
    %4999 = vmatprep.subr.bf16.mxu0 0
    %5000 = vmatpush1.bf16.msra.mxu0 0
    %5001 = vmatprep.subr.bf16.mxu0 0
    %5002 = vmatpush1.bf16.msra.mxu0 0
    %5003 = vmatprep.subr.bf16.mxu0 0
    %5004 = vmatpush1.bf16.msra.mxu0 0
    %5005 = vmatprep.subr.bf16.mxu0 0
    %5006 = vmatpush1.bf16.msra.mxu0 0
    %5007 = vmatprep.subr.bf16.mxu0 0
    %5008 = vmatpush1.bf16.msra.mxu0 0
    %5009 = vmatprep.subr.bf16.mxu0 0
    %5010 = vmatpush1.bf16.msra.mxu0 0
    %5011 = vmatprep.subr.bf16.mxu0 0
    %5012 = vmatpush1.bf16.msra.mxu0 0
    %5013 = vmatprep.subr.bf16.mxu0 0
    %5014 = vmatpush1.bf16.msra.mxu0 0
    %5015 = vmatprep.subr.bf16.mxu0 0
    %5016 = vmatpush1.bf16.msra.mxu0 0
    %5017 = vmatprep.subr.bf16.mxu0 0
    %5018 = vmatpush1.bf16.msra.mxu0 0
    %5019 = vmatprep.subr.bf16.mxu0 0
    %5020 = vmatpush1.bf16.msra.mxu0 0
    %5021 = vmatprep.mubr.bf16.mxu0 0
    %5022 = vmatmul.mubr.bf16.gmra.mrb[0].mxu0 %v4987
    %v5023 = vpop.f32.mrb[0].mxu0
    %v5024 = vadd.f32 0.0, %v5023
    %v5025 = vpop.f32.mrb[0].mxu0
    %v5026 = vpop.f32.mrb[0].mxu0
    %v5027 = vpop.f32.mrb[0].mxu0
    %5028 = vdwg.mxu0
    %v5029 = vpack.c.bf16 %v5024, %v5024
    %s5030 = scalar_lea.vmem [#allocation27], 64
    %v5031 = vld [vmem:[%s5030] sm:$0xf]
    %v5032 = vld [vmem:[%s5030 + $0x4] sm:$0xf]
    %v5033 = vld [vmem:[%s5030 + $0x8] sm:$0xf]
    %v5034 = vld [vmem:[%s5030 + $0xc] sm:$0xf]
    %v5039 = vunpack.c.l.b16 %v5031
    %v5040 = vunpack.c.l.b16 %v5032
    %v5041 = vunpack.c.l.b16 %v5033
    %v5042 = vunpack.c.l.b16 %v5034
    %v5043 = vpack.c.b16 %v5040, %v5039
    %v5044 = vpack.c.b16 %v5042, %v5041
    %v5048 = vsel %vm3455, %v5029, 0
    %5050 = vmatprep.subr.bf16.mxu0 0
    %5051 = vmatpush1.bf16.msra.mxu0 %v5043
    %5052 = vmatprep.subr.bf16.mxu0 0
    %5053 = vmatpush1.bf16.msra.mxu0 %v5044
    %5054 = vmatprep.subr.bf16.mxu0 0
    %5055 = vmatpush1.bf16.msra.mxu0 0
    %5056 = vmatprep.subr.bf16.mxu0 0
    %5057 = vmatpush1.bf16.msra.mxu0 0
    %5058 = vmatprep.subr.bf16.mxu0 0
    %5059 = vmatpush1.bf16.msra.mxu0 0
    %5060 = vmatprep.subr.bf16.mxu0 0
    %5061 = vmatpush1.bf16.msra.mxu0 0
    %5062 = vmatprep.subr.bf16.mxu0 0
    %5063 = vmatpush1.bf16.msra.mxu0 0
    %5064 = vmatprep.subr.bf16.mxu0 0
    %5065 = vmatpush1.bf16.msra.mxu0 0
    %5066 = vmatprep.subr.bf16.mxu0 0
    %5067 = vmatpush1.bf16.msra.mxu0 0
    %5068 = vmatprep.subr.bf16.mxu0 0
    %5069 = vmatpush1.bf16.msra.mxu0 0
    %5070 = vmatprep.subr.bf16.mxu0 0
    %5071 = vmatpush1.bf16.msra.mxu0 0
    %5072 = vmatprep.subr.bf16.mxu0 0
    %5073 = vmatpush1.bf16.msra.mxu0 0
    %5074 = vmatprep.subr.bf16.mxu0 0
    %5075 = vmatpush1.bf16.msra.mxu0 0
    %5076 = vmatprep.subr.bf16.mxu0 0
    %5077 = vmatpush1.bf16.msra.mxu0 0
    %5078 = vmatprep.subr.bf16.mxu0 0
    %5079 = vmatpush1.bf16.msra.mxu0 0
    %5080 = vmatprep.subr.bf16.mxu0 0
    %5081 = vmatpush1.bf16.msra.mxu0 0
    %5082 = vmatprep.mubr.bf16.mxu0 0
    %5083 = vmatmul.mubr.bf16.gmra.mrb[0].mxu0 %v5048
    %v5084 = vpop.f32.mrb[0].mxu0
    %v5085 = vadd.f32 0.0, %v5084
    %v5086 = vpop.f32.mrb[0].mxu0
    %v5087 = vpop.f32.mrb[0].mxu0
    %v5088 = vpop.f32.mrb[0].mxu0
    %5089 = vdwg.mxu0
    %v5090 = vadd.f32 %v4983, %v5085
    %s5091 = scalar_lea.vmem %s45, 10
    %v5092 = vld [vmem:[%s5091] sm:$0x3]
    %v5094 = vsel %vm4556, %v5092, 0
    %5096 = vmatprep.subr.bf16.mxu0 0
    %5097 = vmatpush1.bf16.msra.mxu0 %v4562
    %5098 = vmatprep.subr.bf16.mxu0 0
    %5099 = vmatpush1.bf16.msra.mxu0 0
    %5100 = vmatprep.subr.bf16.mxu0 0
    %5101 = vmatpush1.bf16.msra.mxu0 0
    %5102 = vmatprep.subr.bf16.mxu0 0
    %5103 = vmatpush1.bf16.msra.mxu0 0
    %5104 = vmatprep.subr.bf16.mxu0 0
    %5105 = vmatpush1.bf16.msra.mxu0 0
    %5106 = vmatprep.subr.bf16.mxu0 0
    %5107 = vmatpush1.bf16.msra.mxu0 0
    %5108 = vmatprep.subr.bf16.mxu0 0
    %5109 = vmatpush1.bf16.msra.mxu0 0
    %5110 = vmatprep.subr.bf16.mxu0 0
    %5111 = vmatpush1.bf16.msra.mxu0 0
    %5112 = vmatprep.subr.bf16.mxu0 0
    %5113 = vmatpush1.bf16.msra.mxu0 0
    %5114 = vmatprep.subr.bf16.mxu0 0
    %5115 = vmatpush1.bf16.msra.mxu0 0
    %5116 = vmatprep.subr.bf16.mxu0 0
    %5117 = vmatpush1.bf16.msra.mxu0 0
    %5118 = vmatprep.subr.bf16.mxu0 0
    %5119 = vmatpush1.bf16.msra.mxu0 0
    %5120 = vmatprep.subr.bf16.mxu0 0
    %5121 = vmatpush1.bf16.msra.mxu0 0
    %5122 = vmatprep.subr.bf16.mxu0 0
    %5123 = vmatpush1.bf16.msra.mxu0 0
    %5124 = vmatprep.subr.bf16.mxu0 0
    %5125 = vmatpush1.bf16.msra.mxu0 0
    %5126 = vmatprep.subr.bf16.mxu0 0
    %5127 = vmatpush1.bf16.msra.mxu0 0
    %5128 = vmatprep.mubr.bf16.mxu0 0
    %5129 = vmatmul.mubr.bf16.gmra.mrb[0].mxu0 %v5094
    %v5130 = vpop.f32.mrb[0].mxu0
    %v5131 = vadd.f32 0.0, %v5130
    %v5132 = vpop.f32.mrb[0].mxu0
    %v5133 = vpop.f32.mrb[0].mxu0
    %v5134 = vpop.f32.mrb[0].mxu0
    %5135 = vdwg.mxu0
    %v5136 = vpack.c.bf16 %v5131, %v5131
    %s5137 = scalar_lea.vmem [#allocation27], 80
    %v5138 = vld [vmem:[%s5137] sm:$0xf]
    %v5139 = vld [vmem:[%s5137 + $0x4] sm:$0xf]
    %v5140 = vld [vmem:[%s5137 + $0x8] sm:$0xf]
    %v5141 = vld [vmem:[%s5137 + $0xc] sm:$0xf]
    %v5146 = vunpack.c.l.b16 %v5138
    %v5147 = vunpack.c.l.b16 %v5139
    %v5148 = vunpack.c.l.b16 %v5140
    %v5149 = vunpack.c.l.b16 %v5141
    %v5150 = vpack.c.b16 %v5147, %v5146
    %v5151 = vpack.c.b16 %v5149, %v5148
    %v5155 = vsel %vm3455, %v5136, 0
    %5157 = vmatprep.subr.bf16.mxu0 0
    %5158 = vmatpush1.bf16.msra.mxu0 %v5150
    %5159 = vmatprep.subr.bf16.mxu0 0
    %5160 = vmatpush1.bf16.msra.mxu0 %v5151
    %5161 = vmatprep.subr.bf16.mxu0 0
    %5162 = vmatpush1.bf16.msra.mxu0 0
    %5163 = vmatprep.subr.bf16.mxu0 0
    %5164 = vmatpush1.bf16.msra.mxu0 0
    %5165 = vmatprep.subr.bf16.mxu0 0
    %5166 = vmatpush1.bf16.msra.mxu0 0
    %5167 = vmatprep.subr.bf16.mxu0 0
    %5168 = vmatpush1.bf16.msra.mxu0 0
    %5169 = vmatprep.subr.bf16.mxu0 0
    %5170 = vmatpush1.bf16.msra.mxu0 0
    %5171 = vmatprep.subr.bf16.mxu0 0
    %5172 = vmatpush1.bf16.msra.mxu0 0
    %5173 = vmatprep.subr.bf16.mxu0 0
    %5174 = vmatpush1.bf16.msra.mxu0 0
    %5175 = vmatprep.subr.bf16.mxu0 0
    %5176 = vmatpush1.bf16.msra.mxu0 0
    %5177 = vmatprep.subr.bf16.mxu0 0
    %5178 = vmatpush1.bf16.msra.mxu0 0
    %5179 = vmatprep.subr.bf16.mxu0 0
    %5180 = vmatpush1.bf16.msra.mxu0 0
    %5181 = vmatprep.subr.bf16.mxu0 0
    %5182 = vmatpush1.bf16.msra.mxu0 0
    %5183 = vmatprep.subr.bf16.mxu0 0
    %5184 = vmatpush1.bf16.msra.mxu0 0
    %5185 = vmatprep.subr.bf16.mxu0 0
    %5186 = vmatpush1.bf16.msra.mxu0 0
    %5187 = vmatprep.subr.bf16.mxu0 0
    %5188 = vmatpush1.bf16.msra.mxu0 0
    %5189 = vmatprep.mubr.bf16.mxu0 0
    %5190 = vmatmul.mubr.bf16.gmra.mrb[0].mxu0 %v5155
    %v5191 = vpop.f32.mrb[0].mxu0
    %v5192 = vadd.f32 0.0, %v5191
    %v5193 = vpop.f32.mrb[0].mxu0
    %v5194 = vpop.f32.mrb[0].mxu0
    %v5195 = vpop.f32.mrb[0].mxu0
    %5196 = vdwg.mxu0
    %v5197 = vadd.f32 %v5090, %v5192
    %s5198 = scalar_lea.vmem %s45, 12
    %v5199 = vld [vmem:[%s5198] sm:$0x3]
    %v5201 = vsel %vm4556, %v5199, 0
    %5203 = vmatprep.subr.bf16.mxu0 0
    %5204 = vmatpush1.bf16.msra.mxu0 %v4562
    %5205 = vmatprep.subr.bf16.mxu0 0
    %5206 = vmatpush1.bf16.msra.mxu0 0
    %5207 = vmatprep.subr.bf16.mxu0 0
    %5208 = vmatpush1.bf16.msra.mxu0 0
    %5209 = vmatprep.subr.bf16.mxu0 0
    %5210 = vmatpush1.bf16.msra.mxu0 0
    %5211 = vmatprep.subr.bf16.mxu0 0
    %5212 = vmatpush1.bf16.msra.mxu0 0
    %5213 = vmatprep.subr.bf16.mxu0 0
    %5214 = vmatpush1.bf16.msra.mxu0 0
    %5215 = vmatprep.subr.bf16.mxu0 0
    %5216 = vmatpush1.bf16.msra.mxu0 0
    %5217 = vmatprep.subr.bf16.mxu0 0
    %5218 = vmatpush1.bf16.msra.mxu0 0
    %5219 = vmatprep.subr.bf16.mxu0 0
    %5220 = vmatpush1.bf16.msra.mxu0 0
    %5221 = vmatprep.subr.bf16.mxu0 0
    %5222 = vmatpush1.bf16.msra.mxu0 0
    %5223 = vmatprep.subr.bf16.mxu0 0
    %5224 = vmatpush1.bf16.msra.mxu0 0
    %5225 = vmatprep.subr.bf16.mxu0 0
    %5226 = vmatpush1.bf16.msra.mxu0 0
    %5227 = vmatprep.subr.bf16.mxu0 0
    %5228 = vmatpush1.bf16.msra.mxu0 0
    %5229 = vmatprep.subr.bf16.mxu0 0
    %5230 = vmatpush1.bf16.msra.mxu0 0
    %5231 = vmatprep.subr.bf16.mxu0 0
    %5232 = vmatpush1.bf16.msra.mxu0 0
    %5233 = vmatprep.subr.bf16.mxu0 0
    %5234 = vmatpush1.bf16.msra.mxu0 0
    %5235 = vmatprep.mubr.bf16.mxu0 0
    %5236 = vmatmul.mubr.bf16.gmra.mrb[0].mxu0 %v5201
    %v5237 = vpop.f32.mrb[0].mxu0
    %v5238 = vadd.f32 0.0, %v5237
    %v5239 = vpop.f32.mrb[0].mxu0
    %v5240 = vpop.f32.mrb[0].mxu0
    %v5241 = vpop.f32.mrb[0].mxu0
    %5242 = vdwg.mxu0
    %v5243 = vpack.c.bf16 %v5238, %v5238
    %s5244 = scalar_lea.vmem [#allocation27], 96
    %v5245 = vld [vmem:[%s5244] sm:$0xf]
    %v5246 = vld [vmem:[%s5244 + $0x4] sm:$0xf]
    %v5247 = vld [vmem:[%s5244 + $0x8] sm:$0xf]
    %v5248 = vld [vmem:[%s5244 + $0xc] sm:$0xf]
    %v5253 = vunpack.c.l.b16 %v5245
    %v5254 = vunpack.c.l.b16 %v5246
    %v5255 = vunpack.c.l.b16 %v5247
    %v5256 = vunpack.c.l.b16 %v5248
    %v5257 = vpack.c.b16 %v5254, %v5253
    %v5258 = vpack.c.b16 %v5256, %v5255
    %v5262 = vsel %vm3455, %v5243, 0
    %5264 = vmatprep.subr.bf16.mxu0 0
    %5265 = vmatpush1.bf16.msra.mxu0 %v5257
    %5266 = vmatprep.subr.bf16.mxu0 0
    %5267 = vmatpush1.bf16.msra.mxu0 %v5258
    %5268 = vmatprep.subr.bf16.mxu0 0
    %5269 = vmatpush1.bf16.msra.mxu0 0
    %5270 = vmatprep.subr.bf16.mxu0 0
    %5271 = vmatpush1.bf16.msra.mxu0 0
    %5272 = vmatprep.subr.bf16.mxu0 0
    %5273 = vmatpush1.bf16.msra.mxu0 0
    %5274 = vmatprep.subr.bf16.mxu0 0
    %5275 = vmatpush1.bf16.msra.mxu0 0
    %5276 = vmatprep.subr.bf16.mxu0 0
    %5277 = vmatpush1.bf16.msra.mxu0 0
    %5278 = vmatprep.subr.bf16.mxu0 0
    %5279 = vmatpush1.bf16.msra.mxu0 0
    %5280 = vmatprep.subr.bf16.mxu0 0
    %5281 = vmatpush1.bf16.msra.mxu0 0
    %5282 = vmatprep.subr.bf16.mxu0 0
    %5283 = vmatpush1.bf16.msra.mxu0 0
    %5284 = vmatprep.subr.bf16.mxu0 0
    %5285 = vmatpush1.bf16.msra.mxu0 0
    %5286 = vmatprep.subr.bf16.mxu0 0
    %5287 = vmatpush1.bf16.msra.mxu0 0
    %5288 = vmatprep.subr.bf16.mxu0 0
    %5289 = vmatpush1.bf16.msra.mxu0 0
    %5290 = vmatprep.subr.bf16.mxu0 0
    %5291 = vmatpush1.bf16.msra.mxu0 0
    %5292 = vmatprep.subr.bf16.mxu0 0
    %5293 = vmatpush1.bf16.msra.mxu0 0
    %5294 = vmatprep.subr.bf16.mxu0 0
    %5295 = vmatpush1.bf16.msra.mxu0 0
    %5296 = vmatprep.mubr.bf16.mxu0 0
    %5297 = vmatmul.mubr.bf16.gmra.mrb[0].mxu0 %v5262
    %v5298 = vpop.f32.mrb[0].mxu0
    %v5299 = vadd.f32 0.0, %v5298
    %v5300 = vpop.f32.mrb[0].mxu0
    %v5301 = vpop.f32.mrb[0].mxu0
    %v5302 = vpop.f32.mrb[0].mxu0
    %5303 = vdwg.mxu0
    %v5304 = vadd.f32 %v5197, %v5299
    %s5305 = scalar_lea.vmem %s45, 14
    %v5306 = vld [vmem:[%s5305] sm:$0x3]
    %v5308 = vsel %vm4556, %v5306, 0
    %5310 = vmatprep.subr.bf16.mxu0 0
    %5311 = vmatpush1.bf16.msra.mxu0 %v4562
    %5312 = vmatprep.subr.bf16.mxu0 0
    %5313 = vmatpush1.bf16.msra.mxu0 0
    %5314 = vmatprep.subr.bf16.mxu0 0
    %5315 = vmatpush1.bf16.msra.mxu0 0
    %5316 = vmatprep.subr.bf16.mxu0 0
    %5317 = vmatpush1.bf16.msra.mxu0 0
    %5318 = vmatprep.subr.bf16.mxu0 0
    %5319 = vmatpush1.bf16.msra.mxu0 0
    %5320 = vmatprep.subr.bf16.mxu0 0
    %5321 = vmatpush1.bf16.msra.mxu0 0
    %5322 = vmatprep.subr.bf16.mxu0 0
    %5323 = vmatpush1.bf16.msra.mxu0 0
    %5324 = vmatprep.subr.bf16.mxu0 0
    %5325 = vmatpush1.bf16.msra.mxu0 0
    %5326 = vmatprep.subr.bf16.mxu0 0
    %5327 = vmatpush1.bf16.msra.mxu0 0
    %5328 = vmatprep.subr.bf16.mxu0 0
    %5329 = vmatpush1.bf16.msra.mxu0 0
    %5330 = vmatprep.subr.bf16.mxu0 0
    %5331 = vmatpush1.bf16.msra.mxu0 0
    %5332 = vmatprep.subr.bf16.mxu0 0
    %5333 = vmatpush1.bf16.msra.mxu0 0
    %5334 = vmatprep.subr.bf16.mxu0 0
    %5335 = vmatpush1.bf16.msra.mxu0 0
    %5336 = vmatprep.subr.bf16.mxu0 0
    %5337 = vmatpush1.bf16.msra.mxu0 0
    %5338 = vmatprep.subr.bf16.mxu0 0
    %5339 = vmatpush1.bf16.msra.mxu0 0
    %5340 = vmatprep.subr.bf16.mxu0 0
    %5341 = vmatpush1.bf16.msra.mxu0 0
    %5342 = vmatprep.mubr.bf16.mxu0 0
    %5343 = vmatmul.mubr.bf16.gmra.mrb[0].mxu0 %v5308
    %v5344 = vpop.f32.mrb[0].mxu0
    %v5345 = vadd.f32 0.0, %v5344
    %v5346 = vpop.f32.mrb[0].mxu0
    %v5347 = vpop.f32.mrb[0].mxu0
    %v5348 = vpop.f32.mrb[0].mxu0
    %5349 = vdwg.mxu0
    %v5350 = vpack.c.bf16 %v5345, %v5345
    %s5351 = scalar_lea.vmem [#allocation27], 112
    %v5352 = vld [vmem:[%s5351] sm:$0xf]
    %v5353 = vld [vmem:[%s5351 + $0x4] sm:$0xf]
    %v5354 = vld [vmem:[%s5351 + $0x8] sm:$0xf]
    %v5355 = vld [vmem:[%s5351 + $0xc] sm:$0xf]
    %v5360 = vunpack.c.l.b16 %v5352
    %v5361 = vunpack.c.l.b16 %v5353
    %v5362 = vunpack.c.l.b16 %v5354
    %v5363 = vunpack.c.l.b16 %v5355
    %v5364 = vpack.c.b16 %v5361, %v5360
    %v5365 = vpack.c.b16 %v5363, %v5362
    %v5369 = vsel %vm3455, %v5350, 0
    %5371 = vmatprep.subr.bf16.mxu0 0
    %5372 = vmatpush1.bf16.msra.mxu0 %v5364
    %5373 = vmatprep.subr.bf16.mxu0 0
    %5374 = vmatpush1.bf16.msra.mxu0 %v5365
    %5375 = vmatprep.subr.bf16.mxu0 0
    %5376 = vmatpush1.bf16.msra.mxu0 0
    %5377 = vmatprep.subr.bf16.mxu0 0
    %5378 = vmatpush1.bf16.msra.mxu0 0
    %5379 = vmatprep.subr.bf16.mxu0 0
    %5380 = vmatpush1.bf16.msra.mxu0 0
    %5381 = vmatprep.subr.bf16.mxu0 0
    %5382 = vmatpush1.bf16.msra.mxu0 0
    %5383 = vmatprep.subr.bf16.mxu0 0
    %5384 = vmatpush1.bf16.msra.mxu0 0
    %5385 = vmatprep.subr.bf16.mxu0 0
    %5386 = vmatpush1.bf16.msra.mxu0 0
    %5387 = vmatprep.subr.bf16.mxu0 0
    %5388 = vmatpush1.bf16.msra.mxu0 0
    %5389 = vmatprep.subr.bf16.mxu0 0
    %5390 = vmatpush1.bf16.msra.mxu0 0
    %5391 = vmatprep.subr.bf16.mxu0 0
    %5392 = vmatpush1.bf16.msra.mxu0 0
    %5393 = vmatprep.subr.bf16.mxu0 0
    %5394 = vmatpush1.bf16.msra.mxu0 0
    %5395 = vmatprep.subr.bf16.mxu0 0
    %5396 = vmatpush1.bf16.msra.mxu0 0
    %5397 = vmatprep.subr.bf16.mxu0 0
    %5398 = vmatpush1.bf16.msra.mxu0 0
    %5399 = vmatprep.subr.bf16.mxu0 0
    %5400 = vmatpush1.bf16.msra.mxu0 0
    %5401 = vmatprep.subr.bf16.mxu0 0
    %5402 = vmatpush1.bf16.msra.mxu0 0
    %5403 = vmatprep.mubr.bf16.mxu0 0
    %5404 = vmatmul.mubr.bf16.gmra.mrb[0].mxu0 %v5369
    %v5405 = vpop.f32.mrb[0].mxu0
    %v5406 = vadd.f32 0.0, %v5405
    %v5407 = vpop.f32.mrb[0].mxu0
    %v5408 = vpop.f32.mrb[0].mxu0
    %v5409 = vpop.f32.mrb[0].mxu0
    %5410 = vdwg.mxu0
    %v5411 = vadd.f32 %v5304, %v5406
    %s5412 = scalar_lea.vmem %s45, 16
    %v5413 = vld [vmem:[%s5412] sm:$0x3]
    %v5415 = vsel %vm4556, %v5413, 0
    %5417 = vmatprep.subr.bf16.mxu0 0
    %5418 = vmatpush1.bf16.msra.mxu0 %v4562
    %5419 = vmatprep.subr.bf16.mxu0 0
    %5420 = vmatpush1.bf16.msra.mxu0 0
    %5421 = vmatprep.subr.bf16.mxu0 0
    %5422 = vmatpush1.bf16.msra.mxu0 0
    %5423 = vmatprep.subr.bf16.mxu0 0
    %5424 = vmatpush1.bf16.msra.mxu0 0
    %5425 = vmatprep.subr.bf16.mxu0 0
    %5426 = vmatpush1.bf16.msra.mxu0 0
    %5427 = vmatprep.subr.bf16.mxu0 0
    %5428 = vmatpush1.bf16.msra.mxu0 0
    %5429 = vmatprep.subr.bf16.mxu0 0
    %5430 = vmatpush1.bf16.msra.mxu0 0
    %5431 = vmatprep.subr.bf16.mxu0 0
    %5432 = vmatpush1.bf16.msra.mxu0 0
    %5433 = vmatprep.subr.bf16.mxu0 0
    %5434 = vmatpush1.bf16.msra.mxu0 0
    %5435 = vmatprep.subr.bf16.mxu0 0
    %5436 = vmatpush1.bf16.msra.mxu0 0
    %5437 = vmatprep.subr.bf16.mxu0 0
    %5438 = vmatpush1.bf16.msra.mxu0 0
    %5439 = vmatprep.subr.bf16.mxu0 0
    %5440 = vmatpush1.bf16.msra.mxu0 0
    %5441 = vmatprep.subr.bf16.mxu0 0
    %5442 = vmatpush1.bf16.msra.mxu0 0
    %5443 = vmatprep.subr.bf16.mxu0 0
    %5444 = vmatpush1.bf16.msra.mxu0 0
    %5445 = vmatprep.subr.bf16.mxu0 0
    %5446 = vmatpush1.bf16.msra.mxu0 0
    %5447 = vmatprep.subr.bf16.mxu0 0
    %5448 = vmatpush1.bf16.msra.mxu0 0
    %5449 = vmatprep.mubr.bf16.mxu0 0
    %5450 = vmatmul.mubr.bf16.gmra.mrb[0].mxu0 %v5415
    %v5451 = vpop.f32.mrb[0].mxu0
    %v5452 = vadd.f32 0.0, %v5451
    %v5453 = vpop.f32.mrb[0].mxu0
    %v5454 = vpop.f32.mrb[0].mxu0
    %v5455 = vpop.f32.mrb[0].mxu0
    %5456 = vdwg.mxu0
    %v5457 = vpack.c.bf16 %v5452, %v5452
    %s5458 = scalar_lea.vmem [#allocation27], 128
    %v5459 = vld [vmem:[%s5458] sm:$0xf]
    %v5460 = vld [vmem:[%s5458 + $0x4] sm:$0xf]
    %v5461 = vld [vmem:[%s5458 + $0x8] sm:$0xf]
    %v5462 = vld [vmem:[%s5458 + $0xc] sm:$0xf]
    %v5467 = vunpack.c.l.b16 %v5459
    %v5468 = vunpack.c.l.b16 %v5460
    %v5469 = vunpack.c.l.b16 %v5461
    %v5470 = vunpack.c.l.b16 %v5462
    %v5471 = vpack.c.b16 %v5468, %v5467
    %v5472 = vpack.c.b16 %v5470, %v5469
    %v5476 = vsel %vm3455, %v5457, 0
    %5478 = vmatprep.subr.bf16.mxu0 0
    %5479 = vmatpush1.bf16.msra.mxu0 %v5471
    %5480 = vmatprep.subr.bf16.mxu0 0
    %5481 = vmatpush1.bf16.msra.mxu0 %v5472
    %5482 = vmatprep.subr.bf16.mxu0 0
    %5483 = vmatpush1.bf16.msra.mxu0 0
    %5484 = vmatprep.subr.bf16.mxu0 0
    %5485 = vmatpush1.bf16.msra.mxu0 0
    %5486 = vmatprep.subr.bf16.mxu0 0
    %5487 = vmatpush1.bf16.msra.mxu0 0
    %5488 = vmatprep.subr.bf16.mxu0 0
    %5489 = vmatpush1.bf16.msra.mxu0 0
    %5490 = vmatprep.subr.bf16.mxu0 0
    %5491 = vmatpush1.bf16.msra.mxu0 0
    %5492 = vmatprep.subr.bf16.mxu0 0
    %5493 = vmatpush1.bf16.msra.mxu0 0
    %5494 = vmatprep.subr.bf16.mxu0 0
    %5495 = vmatpush1.bf16.msra.mxu0 0
    %5496 = vmatprep.subr.bf16.mxu0 0
    %5497 = vmatpush1.bf16.msra.mxu0 0
    %5498 = vmatprep.subr.bf16.mxu0 0
    %5499 = vmatpush1.bf16.msra.mxu0 0
    %5500 = vmatprep.subr.bf16.mxu0 0
    %5501 = vmatpush1.bf16.msra.mxu0 0
    %5502 = vmatprep.subr.bf16.mxu0 0
    %5503 = vmatpush1.bf16.msra.mxu0 0
    %5504 = vmatprep.subr.bf16.mxu0 0
    %5505 = vmatpush1.bf16.msra.mxu0 0
    %5506 = vmatprep.subr.bf16.mxu0 0
    %5507 = vmatpush1.bf16.msra.mxu0 0
    %5508 = vmatprep.subr.bf16.mxu0 0
    %5509 = vmatpush1.bf16.msra.mxu0 0
    %5510 = vmatprep.mubr.bf16.mxu0 0
    %5511 = vmatmul.mubr.bf16.gmra.mrb[0].mxu0 %v5476
    %v5512 = vpop.f32.mrb[0].mxu0
    %v5513 = vadd.f32 0.0, %v5512
    %v5514 = vpop.f32.mrb[0].mxu0
    %v5515 = vpop.f32.mrb[0].mxu0
    %v5516 = vpop.f32.mrb[0].mxu0
    %5517 = vdwg.mxu0
    %v5518 = vadd.f32 %v5411, %v5513
    %v5519 = vld [vmem:[#allocation28] sm:$0x1]
    %v5521 = vlaneseq
    %v5522 = vshrl.u32 %v5521, 7
    %v5523 = vsub.s32 0, %v5522
    %v5524 = vrot.slane %v5519, %v5523
    %v5526 = vadd.f32 %v5518, %v5524
    %v5527 = vld [vmem:[%s51] sm:$0xf]
    %v5528 = vld [vmem:[%s51 + $0x4] sm:$0xf]
    %v5531 = vunpack.c.l.b16 %v5527
    %v5532 = vunpack.c.l.b16 %v5528
    %v5533 = vpack.c.b16 %v5532, %v5531
    %v5535 = vsel %vm4556, %v5533, 0
    %5537 = vmatprep.subr.bf16.mxu0 0
    %5538 = vmatpush1.bf16.msra.mxu0 %v4562
    %5539 = vmatprep.subr.bf16.mxu0 0
    %5540 = vmatpush1.bf16.msra.mxu0 0
    %5541 = vmatprep.subr.bf16.mxu0 0
    %5542 = vmatpush1.bf16.msra.mxu0 0
    %5543 = vmatprep.subr.bf16.mxu0 0
    %5544 = vmatpush1.bf16.msra.mxu0 0
    %5545 = vmatprep.subr.bf16.mxu0 0
    %5546 = vmatpush1.bf16.msra.mxu0 0
    %5547 = vmatprep.subr.bf16.mxu0 0
    %5548 = vmatpush1.bf16.msra.mxu0 0
    %5549 = vmatprep.subr.bf16.mxu0 0
    %5550 = vmatpush1.bf16.msra.mxu0 0
    %5551 = vmatprep.subr.bf16.mxu0 0
    %5552 = vmatpush1.bf16.msra.mxu0 0
    %5553 = vmatprep.subr.bf16.mxu0 0
    %5554 = vmatpush1.bf16.msra.mxu0 0
    %5555 = vmatprep.subr.bf16.mxu0 0
    %5556 = vmatpush1.bf16.msra.mxu0 0
    %5557 = vmatprep.subr.bf16.mxu0 0
    %5558 = vmatpush1.bf16.msra.mxu0 0
    %5559 = vmatprep.subr.bf16.mxu0 0
    %5560 = vmatpush1.bf16.msra.mxu0 0
    %5561 = vmatprep.subr.bf16.mxu0 0
    %5562 = vmatpush1.bf16.msra.mxu0 0
    %5563 = vmatprep.subr.bf16.mxu0 0
    %5564 = vmatpush1.bf16.msra.mxu0 0
    %5565 = vmatprep.subr.bf16.mxu0 0
    %5566 = vmatpush1.bf16.msra.mxu0 0
    %5567 = vmatprep.subr.bf16.mxu0 0
    %5568 = vmatpush1.bf16.msra.mxu0 0
    %5569 = vmatprep.mubr.bf16.mxu0 0
    %5570 = vmatmul.mubr.bf16.gmra.mrb[0].mxu0 %v5535
    %v5571 = vpop.f32.mrb[0].mxu0
    %v5572 = vadd.f32 0.0, %v5571
    %v5573 = vpop.f32.mrb[0].mxu0
    %v5574 = vpop.f32.mrb[0].mxu0
    %v5575 = vadd.f32 0.0, %v5574
    %v5576 = vpop.f32.mrb[0].mxu0
    %5577 = vdwg.mxu0
    %v5578 = vadd.f32 %v4466, %v5572
    %v5579 = vadd.f32 %v4469, %v5575
    %v5580 = vpack.c.bf16 %v5579, %v5578
    %v5581 = vld [vmem:[#allocation22] sm:$0xf]
    %v5582 = vld [vmem:[#allocation22 + $0x4] sm:$0xf]
    %v5585 = vunpack.c.l.b16 %v5581
    %v5586 = vunpack.c.l.b16 %v5582
    %v5587 = vpack.c.b16 %v5586, %v5585
    %v5589 = vsel %vm2480, %v5587, 0
    %5591 = vmatprep.subr.bf16.mxu0 0
    %5592 = vmatpush1.bf16.msra.mxu0 %v5580
    %5593 = vmatprep.subr.bf16.mxu0 0
    %5594 = vmatpush1.bf16.msra.mxu0 0
    %5595 = vmatprep.subr.bf16.mxu0 0
    %5596 = vmatpush1.bf16.msra.mxu0 0
    %5597 = vmatprep.subr.bf16.mxu0 0
    %5598 = vmatpush1.bf16.msra.mxu0 0
    %5599 = vmatprep.subr.bf16.mxu0 0
    %5600 = vmatpush1.bf16.msra.mxu0 0
    %5601 = vmatprep.subr.bf16.mxu0 0
    %5602 = vmatpush1.bf16.msra.mxu0 0
    %5603 = vmatprep.subr.bf16.mxu0 0
    %5604 = vmatpush1.bf16.msra.mxu0 0
    %5605 = vmatprep.subr.bf16.mxu0 0
    %5606 = vmatpush1.bf16.msra.mxu0 0
    %5607 = vmatprep.subr.bf16.mxu0 0
    %5608 = vmatpush1.bf16.msra.mxu0 0
    %5609 = vmatprep.subr.bf16.mxu0 0
    %5610 = vmatpush1.bf16.msra.mxu0 0
    %5611 = vmatprep.subr.bf16.mxu0 0
    %5612 = vmatpush1.bf16.msra.mxu0 0
    %5613 = vmatprep.subr.bf16.mxu0 0
    %5614 = vmatpush1.bf16.msra.mxu0 0
    %5615 = vmatprep.subr.bf16.mxu0 0
    %5616 = vmatpush1.bf16.msra.mxu0 0
    %5617 = vmatprep.subr.bf16.mxu0 0
    %5618 = vmatpush1.bf16.msra.mxu0 0
    %5619 = vmatprep.subr.bf16.mxu0 0
    %5620 = vmatpush1.bf16.msra.mxu0 0
    %5621 = vmatprep.subr.bf16.mxu0 0
    %5622 = vmatpush1.bf16.msra.mxu0 0
    %5623 = vmatprep.mubr.bf16.mxu0 0
    %5624 = vmatmul.mubr.bf16.gmra.mrb[0].mxu0 %v5589
    %v5625 = vpop.f32.mrb[0].mxu0
    %v5626 = vadd.f32 0.0, %v5625
    %v5627 = vpop.f32.mrb[0].mxu0
    %v5628 = vpop.f32.mrb[0].mxu0
    %v5629 = vadd.f32 0.0, %v5628
    %v5630 = vpop.f32.mrb[0].mxu0
    %5631 = vdwg.mxu0
    %v5632 = vpack.c.bf16 %v5629, %v5626
    %v5633 = vld [vmem:[#allocation24] sm:$0xf]
    %v5634 = vld [vmem:[#allocation24 + $0x4] sm:$0xf]
    %v5635 = vld [vmem:[#allocation24 + $0x8] sm:$0xf]
    %v5636 = vld [vmem:[#allocation24 + $0xc] sm:$0xf]
    %s5637 = scalar_lea.vmem [#allocation22], 8
    %v5638 = vld [vmem:[%s5637] sm:$0xf]
    %v5639 = vld [vmem:[%s5637 + $0x4] sm:$0xf]
    %v5642 = vunpack.c.l.b16 %v5638
    %v5643 = vunpack.c.l.b16 %v5639
    %v5644 = vpack.c.b16 %v5643, %v5642
    %v5646 = vsel %vm2480, %v5644, 0
    %5648 = vmatprep.subr.bf16.mxu0 0
    %5649 = vmatpush1.bf16.msra.mxu0 %v5580
    %5650 = vmatprep.subr.bf16.mxu0 0
    %5651 = vmatpush1.bf16.msra.mxu0 0
    %5652 = vmatprep.subr.bf16.mxu0 0
    %5653 = vmatpush1.bf16.msra.mxu0 0
    %5654 = vmatprep.subr.bf16.mxu0 0
    %5655 = vmatpush1.bf16.msra.mxu0 0
    %5656 = vmatprep.subr.bf16.mxu0 0
    %5657 = vmatpush1.bf16.msra.mxu0 0
    %5658 = vmatprep.subr.bf16.mxu0 0
    %5659 = vmatpush1.bf16.msra.mxu0 0
    %5660 = vmatprep.subr.bf16.mxu0 0
    %5661 = vmatpush1.bf16.msra.mxu0 0
    %5662 = vmatprep.subr.bf16.mxu0 0
    %5663 = vmatpush1.bf16.msra.mxu0 0
    %5664 = vmatprep.subr.bf16.mxu0 0
    %5665 = vmatpush1.bf16.msra.mxu0 0
    %5666 = vmatprep.subr.bf16.mxu0 0
    %5667 = vmatpush1.bf16.msra.mxu0 0
    %5668 = vmatprep.subr.bf16.mxu0 0
    %5669 = vmatpush1.bf16.msra.mxu0 0
    %5670 = vmatprep.subr.bf16.mxu0 0
    %5671 = vmatpush1.bf16.msra.mxu0 0
    %5672 = vmatprep.subr.bf16.mxu0 0
    %5673 = vmatpush1.bf16.msra.mxu0 0
    %5674 = vmatprep.subr.bf16.mxu0 0
    %5675 = vmatpush1.bf16.msra.mxu0 0
    %5676 = vmatprep.subr.bf16.mxu0 0
    %5677 = vmatpush1.bf16.msra.mxu0 0
    %5678 = vmatprep.subr.bf16.mxu0 0
    %5679 = vmatpush1.bf16.msra.mxu0 0
    %5680 = vmatprep.mubr.bf16.mxu0 0
    %5681 = vmatmul.mubr.bf16.gmra.mrb[0].mxu0 %v5646
    %v5682 = vpop.f32.mrb[0].mxu0
    %v5683 = vadd.f32 0.0, %v5682
    %v5684 = vpop.f32.mrb[0].mxu0
    %v5685 = vpop.f32.mrb[0].mxu0
    %v5686 = vadd.f32 0.0, %v5685
    %v5687 = vpop.f32.mrb[0].mxu0
    %5688 = vdwg.mxu0
    %v5689 = vpack.c.bf16 %v5686, %v5683
    %s5690 = scalar_lea.vmem [#allocation24], 16
    %v5691 = vld [vmem:[%s5690] sm:$0xf]
    %v5692 = vld [vmem:[%s5690 + $0x4] sm:$0xf]
    %v5693 = vld [vmem:[%s5690 + $0x8] sm:$0xf]
    %v5694 = vld [vmem:[%s5690 + $0xc] sm:$0xf]
    %v5699 = vunpack.c.l.b16 %v5691
    %v5700 = vunpack.c.l.b16 %v5692
    %v5701 = vunpack.c.l.b16 %v5693
    %v5702 = vunpack.c.l.b16 %v5694
    %v5703 = vpack.c.b16 %v5700, %v5699
    %v5704 = vpack.c.b16 %v5702, %v5701
    %v5708 = vsel %vm3455, %v5689, 0
    %5710 = vmatprep.subr.bf16.mxu0 0
    %5711 = vmatpush1.bf16.msra.mxu0 %v5703
    %5712 = vmatprep.subr.bf16.mxu0 0
    %5713 = vmatpush1.bf16.msra.mxu0 %v5704
    %5714 = vmatprep.subr.bf16.mxu0 0
    %5715 = vmatpush1.bf16.msra.mxu0 0
    %5716 = vmatprep.subr.bf16.mxu0 0
    %5717 = vmatpush1.bf16.msra.mxu0 0
    %5718 = vmatprep.subr.bf16.mxu0 0
    %5719 = vmatpush1.bf16.msra.mxu0 0
    %5720 = vmatprep.subr.bf16.mxu0 0
    %5721 = vmatpush1.bf16.msra.mxu0 0
    %5722 = vmatprep.subr.bf16.mxu0 0
    %5723 = vmatpush1.bf16.msra.mxu0 0
    %5724 = vmatprep.subr.bf16.mxu0 0
    %5725 = vmatpush1.bf16.msra.mxu0 0
    %5726 = vmatprep.subr.bf16.mxu0 0
    %5727 = vmatpush1.bf16.msra.mxu0 0
    %5728 = vmatprep.subr.bf16.mxu0 0
    %5729 = vmatpush1.bf16.msra.mxu0 0
    %5730 = vmatprep.subr.bf16.mxu0 0
    %5731 = vmatpush1.bf16.msra.mxu0 0
    %5732 = vmatprep.subr.bf16.mxu0 0
    %5733 = vmatpush1.bf16.msra.mxu0 0
    %5734 = vmatprep.subr.bf16.mxu0 0
    %5735 = vmatpush1.bf16.msra.mxu0 0
    %5736 = vmatprep.subr.bf16.mxu0 0
    %5737 = vmatpush1.bf16.msra.mxu0 0
    %5738 = vmatprep.subr.bf16.mxu0 0
    %5739 = vmatpush1.bf16.msra.mxu0 0
    %5740 = vmatprep.subr.bf16.mxu0 0
    %5741 = vmatpush1.bf16.msra.mxu0 0
    %5742 = vmatprep.mubr.bf16.mxu0 0
    %5743 = vmatmul.mubr.bf16.gmra.mrb[0].mxu0 %v5708
    %v5744 = vpop.f32.mrb[0].mxu0
    %v5745 = vadd.f32 0.0, %v5744
    %v5746 = vpop.f32.mrb[0].mxu0
    %v5747 = vpop.f32.mrb[0].mxu0
    %v5748 = vadd.f32 0.0, %v5747
    %v5749 = vpop.f32.mrb[0].mxu0
    %5750 = vdwg.mxu0
    %v5755 = vunpack.c.l.b16 %v5633
    %v5756 = vunpack.c.l.b16 %v5634
    %v5757 = vunpack.c.l.b16 %v5635
    %v5758 = vunpack.c.l.b16 %v5636
    %v5759 = vpack.c.b16 %v5756, %v5755
    %v5760 = vpack.c.b16 %v5758, %v5757
    %v5764 = vsel %vm3455, %v5632, 0
    %5766 = vmatprep.subr.bf16.mxu0 0
    %5767 = vmatpush1.bf16.msra.mxu0 %v5759
    %5768 = vmatprep.subr.bf16.mxu0 0
    %5769 = vmatpush1.bf16.msra.mxu0 %v5760
    %5770 = vmatprep.subr.bf16.mxu0 0
    %5771 = vmatpush1.bf16.msra.mxu0 0
    %5772 = vmatprep.subr.bf16.mxu0 0
    %5773 = vmatpush1.bf16.msra.mxu0 0
    %5774 = vmatprep.subr.bf16.mxu0 0
    %5775 = vmatpush1.bf16.msra.mxu0 0
    %5776 = vmatprep.subr.bf16.mxu0 0
    %5777 = vmatpush1.bf16.msra.mxu0 0
    %5778 = vmatprep.subr.bf16.mxu0 0
    %5779 = vmatpush1.bf16.msra.mxu0 0
    %5780 = vmatprep.subr.bf16.mxu0 0
    %5781 = vmatpush1.bf16.msra.mxu0 0
    %5782 = vmatprep.subr.bf16.mxu0 0
    %5783 = vmatpush1.bf16.msra.mxu0 0
    %5784 = vmatprep.subr.bf16.mxu0 0
    %5785 = vmatpush1.bf16.msra.mxu0 0
    %5786 = vmatprep.subr.bf16.mxu0 0
    %5787 = vmatpush1.bf16.msra.mxu0 0
    %5788 = vmatprep.subr.bf16.mxu0 0
    %5789 = vmatpush1.bf16.msra.mxu0 0
    %5790 = vmatprep.subr.bf16.mxu0 0
    %5791 = vmatpush1.bf16.msra.mxu0 0
    %5792 = vmatprep.subr.bf16.mxu0 0
    %5793 = vmatpush1.bf16.msra.mxu0 0
    %5794 = vmatprep.subr.bf16.mxu0 0
    %5795 = vmatpush1.bf16.msra.mxu0 0
    %5796 = vmatprep.subr.bf16.mxu0 0
    %5797 = vmatpush1.bf16.msra.mxu0 0
    %5798 = vmatprep.mubr.bf16.mxu0 0
    %5799 = vmatmul.mubr.bf16.gmra.mrb[0].mxu0 %v5764
    %v5800 = vpop.f32.mrb[0].mxu0
    %v5801 = vadd.f32 %v5745, %v5800
    %v5802 = vpop.f32.mrb[0].mxu0
    %v5803 = vpop.f32.mrb[0].mxu0
    %v5804 = vadd.f32 %v5748, %v5803
    %v5805 = vpop.f32.mrb[0].mxu0
    %5806 = vdwg.mxu0
    %s5807 = scalar_lea.vmem [#allocation22], 16
    %v5808 = vld [vmem:[%s5807] sm:$0xf]
    %v5809 = vld [vmem:[%s5807 + $0x4] sm:$0xf]
    %v5812 = vunpack.c.l.b16 %v5808
    %v5813 = vunpack.c.l.b16 %v5809
    %v5814 = vpack.c.b16 %v5813, %v5812
    %v5816 = vsel %vm2480, %v5814, 0
    %5818 = vmatprep.subr.bf16.mxu0 0
    %5819 = vmatpush1.bf16.msra.mxu0 %v5580
    %5820 = vmatprep.subr.bf16.mxu0 0
    %5821 = vmatpush1.bf16.msra.mxu0 0
    %5822 = vmatprep.subr.bf16.mxu0 0
    %5823 = vmatpush1.bf16.msra.mxu0 0
    %5824 = vmatprep.subr.bf16.mxu0 0
    %5825 = vmatpush1.bf16.msra.mxu0 0
    %5826 = vmatprep.subr.bf16.mxu0 0
    %5827 = vmatpush1.bf16.msra.mxu0 0
    %5828 = vmatprep.subr.bf16.mxu0 0
    %5829 = vmatpush1.bf16.msra.mxu0 0
    %5830 = vmatprep.subr.bf16.mxu0 0
    %5831 = vmatpush1.bf16.msra.mxu0 0
    %5832 = vmatprep.subr.bf16.mxu0 0
    %5833 = vmatpush1.bf16.msra.mxu0 0
    %5834 = vmatprep.subr.bf16.mxu0 0
    %5835 = vmatpush1.bf16.msra.mxu0 0
    %5836 = vmatprep.subr.bf16.mxu0 0
    %5837 = vmatpush1.bf16.msra.mxu0 0
    %5838 = vmatprep.subr.bf16.mxu0 0
    %5839 = vmatpush1.bf16.msra.mxu0 0
    %5840 = vmatprep.subr.bf16.mxu0 0
    %5841 = vmatpush1.bf16.msra.mxu0 0
    %5842 = vmatprep.subr.bf16.mxu0 0
    %5843 = vmatpush1.bf16.msra.mxu0 0
    %5844 = vmatprep.subr.bf16.mxu0 0
    %5845 = vmatpush1.bf16.msra.mxu0 0
    %5846 = vmatprep.subr.bf16.mxu0 0
    %5847 = vmatpush1.bf16.msra.mxu0 0
    %5848 = vmatprep.subr.bf16.mxu0 0
    %5849 = vmatpush1.bf16.msra.mxu0 0
    %5850 = vmatprep.mubr.bf16.mxu0 0
    %5851 = vmatmul.mubr.bf16.gmra.mrb[0].mxu0 %v5816
    %v5852 = vpop.f32.mrb[0].mxu0
    %v5853 = vadd.f32 0.0, %v5852
    %v5854 = vpop.f32.mrb[0].mxu0
    %v5855 = vpop.f32.mrb[0].mxu0
    %v5856 = vadd.f32 0.0, %v5855
    %v5857 = vpop.f32.mrb[0].mxu0
    %5858 = vdwg.mxu0
    %v5859 = vpack.c.bf16 %v5856, %v5853
    %s5860 = scalar_lea.vmem [#allocation24], 32
    %v5861 = vld [vmem:[%s5860] sm:$0xf]
    %v5862 = vld [vmem:[%s5860 + $0x4] sm:$0xf]
    %v5863 = vld [vmem:[%s5860 + $0x8] sm:$0xf]
    %v5864 = vld [vmem:[%s5860 + $0xc] sm:$0xf]
    %v5869 = vunpack.c.l.b16 %v5861
    %v5870 = vunpack.c.l.b16 %v5862
    %v5871 = vunpack.c.l.b16 %v5863
    %v5872 = vunpack.c.l.b16 %v5864
    %v5873 = vpack.c.b16 %v5870, %v5869
    %v5874 = vpack.c.b16 %v5872, %v5871
    %v5878 = vsel %vm3455, %v5859, 0
    %5880 = vmatprep.subr.bf16.mxu0 0
    %5881 = vmatpush1.bf16.msra.mxu0 %v5873
    %5882 = vmatprep.subr.bf16.mxu0 0
    %5883 = vmatpush1.bf16.msra.mxu0 %v5874
    %5884 = vmatprep.subr.bf16.mxu0 0
    %5885 = vmatpush1.bf16.msra.mxu0 0
    %5886 = vmatprep.subr.bf16.mxu0 0
    %5887 = vmatpush1.bf16.msra.mxu0 0
    %5888 = vmatprep.subr.bf16.mxu0 0
    %5889 = vmatpush1.bf16.msra.mxu0 0
    %5890 = vmatprep.subr.bf16.mxu0 0
    %5891 = vmatpush1.bf16.msra.mxu0 0
    %5892 = vmatprep.subr.bf16.mxu0 0
    %5893 = vmatpush1.bf16.msra.mxu0 0
    %5894 = vmatprep.subr.bf16.mxu0 0
    %5895 = vmatpush1.bf16.msra.mxu0 0
    %5896 = vmatprep.subr.bf16.mxu0 0
    %5897 = vmatpush1.bf16.msra.mxu0 0
    %5898 = vmatprep.subr.bf16.mxu0 0
    %5899 = vmatpush1.bf16.msra.mxu0 0
    %5900 = vmatprep.subr.bf16.mxu0 0
    %5901 = vmatpush1.bf16.msra.mxu0 0
    %5902 = vmatprep.subr.bf16.mxu0 0
    %5903 = vmatpush1.bf16.msra.mxu0 0
    %5904 = vmatprep.subr.bf16.mxu0 0
    %5905 = vmatpush1.bf16.msra.mxu0 0
    %5906 = vmatprep.subr.bf16.mxu0 0
    %5907 = vmatpush1.bf16.msra.mxu0 0
    %5908 = vmatprep.subr.bf16.mxu0 0
    %5909 = vmatpush1.bf16.msra.mxu0 0
    %5910 = vmatprep.subr.bf16.mxu0 0
    %5911 = vmatpush1.bf16.msra.mxu0 0
    %5912 = vmatprep.mubr.bf16.mxu0 0
    %5913 = vmatmul.mubr.bf16.gmra.mrb[0].mxu0 %v5878
    %v5914 = vpop.f32.mrb[0].mxu0
    %v5915 = vadd.f32 0.0, %v5914
    %v5916 = vpop.f32.mrb[0].mxu0
    %v5917 = vpop.f32.mrb[0].mxu0
    %v5918 = vadd.f32 0.0, %v5917
    %v5919 = vpop.f32.mrb[0].mxu0
    %5920 = vdwg.mxu0
    %v5921 = vadd.f32 %v5801, %v5915
    %v5922 = vadd.f32 %v5804, %v5918
    %s5923 = scalar_lea.vmem [#allocation22], 24
    %v5924 = vld [vmem:[%s5923] sm:$0xf]
    %v5925 = vld [vmem:[%s5923 + $0x4] sm:$0xf]
    %v5928 = vunpack.c.l.b16 %v5924
    %v5929 = vunpack.c.l.b16 %v5925
    %v5930 = vpack.c.b16 %v5929, %v5928
    %v5932 = vsel %vm2480, %v5930, 0
    %5934 = vmatprep.subr.bf16.mxu0 0
    %5935 = vmatpush1.bf16.msra.mxu0 %v5580
    %5936 = vmatprep.subr.bf16.mxu0 0
    %5937 = vmatpush1.bf16.msra.mxu0 0
    %5938 = vmatprep.subr.bf16.mxu0 0
    %5939 = vmatpush1.bf16.msra.mxu0 0
    %5940 = vmatprep.subr.bf16.mxu0 0
    %5941 = vmatpush1.bf16.msra.mxu0 0
    %5942 = vmatprep.subr.bf16.mxu0 0
    %5943 = vmatpush1.bf16.msra.mxu0 0
    %5944 = vmatprep.subr.bf16.mxu0 0
    %5945 = vmatpush1.bf16.msra.mxu0 0
    %5946 = vmatprep.subr.bf16.mxu0 0
    %5947 = vmatpush1.bf16.msra.mxu0 0
    %5948 = vmatprep.subr.bf16.mxu0 0
    %5949 = vmatpush1.bf16.msra.mxu0 0
    %5950 = vmatprep.subr.bf16.mxu0 0
    %5951 = vmatpush1.bf16.msra.mxu0 0
    %5952 = vmatprep.subr.bf16.mxu0 0
    %5953 = vmatpush1.bf16.msra.mxu0 0
    %5954 = vmatprep.subr.bf16.mxu0 0
    %5955 = vmatpush1.bf16.msra.mxu0 0
    %5956 = vmatprep.subr.bf16.mxu0 0
    %5957 = vmatpush1.bf16.msra.mxu0 0
    %5958 = vmatprep.subr.bf16.mxu0 0
    %5959 = vmatpush1.bf16.msra.mxu0 0
    %5960 = vmatprep.subr.bf16.mxu0 0
    %5961 = vmatpush1.bf16.msra.mxu0 0
    %5962 = vmatprep.subr.bf16.mxu0 0
    %5963 = vmatpush1.bf16.msra.mxu0 0
    %5964 = vmatprep.subr.bf16.mxu0 0
    %5965 = vmatpush1.bf16.msra.mxu0 0
    %5966 = vmatprep.mubr.bf16.mxu0 0
    %5967 = vmatmul.mubr.bf16.gmra.mrb[0].mxu0 %v5932
    %v5968 = vpop.f32.mrb[0].mxu0
    %v5969 = vadd.f32 0.0, %v5968
    %v5970 = vpop.f32.mrb[0].mxu0
    %v5971 = vpop.f32.mrb[0].mxu0
    %v5972 = vadd.f32 0.0, %v5971
    %v5973 = vpop.f32.mrb[0].mxu0
    %5974 = vdwg.mxu0
    %v5975 = vpack.c.bf16 %v5972, %v5969
    %s5976 = scalar_lea.vmem [#allocation24], 48
    %v5977 = vld [vmem:[%s5976] sm:$0xf]
    %v5978 = vld [vmem:[%s5976 + $0x4] sm:$0xf]
    %v5979 = vld [vmem:[%s5976 + $0x8] sm:$0xf]
    %v5980 = vld [vmem:[%s5976 + $0xc] sm:$0xf]
    %v5985 = vunpack.c.l.b16 %v5977
    %v5986 = vunpack.c.l.b16 %v5978
    %v5987 = vunpack.c.l.b16 %v5979
    %v5988 = vunpack.c.l.b16 %v5980
    %v5989 = vpack.c.b16 %v5986, %v5985
    %v5990 = vpack.c.b16 %v5988, %v5987
    %v5994 = vsel %vm3455, %v5975, 0
    %5996 = vmatprep.subr.bf16.mxu0 0
    %5997 = vmatpush1.bf16.msra.mxu0 %v5989
    %5998 = vmatprep.subr.bf16.mxu0 0
    %5999 = vmatpush1.bf16.msra.mxu0 %v5990
    %6000 = vmatprep.subr.bf16.mxu0 0
    %6001 = vmatpush1.bf16.msra.mxu0 0
    %6002 = vmatprep.subr.bf16.mxu0 0
    %6003 = vmatpush1.bf16.msra.mxu0 0
    %6004 = vmatprep.subr.bf16.mxu0 0
    %6005 = vmatpush1.bf16.msra.mxu0 0
    %6006 = vmatprep.subr.bf16.mxu0 0
    %6007 = vmatpush1.bf16.msra.mxu0 0
    %6008 = vmatprep.subr.bf16.mxu0 0
    %6009 = vmatpush1.bf16.msra.mxu0 0
    %6010 = vmatprep.subr.bf16.mxu0 0
    %6011 = vmatpush1.bf16.msra.mxu0 0
    %6012 = vmatprep.subr.bf16.mxu0 0
    %6013 = vmatpush1.bf16.msra.mxu0 0
    %6014 = vmatprep.subr.bf16.mxu0 0
    %6015 = vmatpush1.bf16.msra.mxu0 0
    %6016 = vmatprep.subr.bf16.mxu0 0
    %6017 = vmatpush1.bf16.msra.mxu0 0
    %6018 = vmatprep.subr.bf16.mxu0 0
    %6019 = vmatpush1.bf16.msra.mxu0 0
    %6020 = vmatprep.subr.bf16.mxu0 0
    %6021 = vmatpush1.bf16.msra.mxu0 0
    %6022 = vmatprep.subr.bf16.mxu0 0
    %6023 = vmatpush1.bf16.msra.mxu0 0
    %6024 = vmatprep.subr.bf16.mxu0 0
    %6025 = vmatpush1.bf16.msra.mxu0 0
    %6026 = vmatprep.subr.bf16.mxu0 0
    %6027 = vmatpush1.bf16.msra.mxu0 0
    %6028 = vmatprep.mubr.bf16.mxu0 0
    %6029 = vmatmul.mubr.bf16.gmra.mrb[0].mxu0 %v5994
    %v6030 = vpop.f32.mrb[0].mxu0
    %v6031 = vadd.f32 0.0, %v6030
    %v6032 = vpop.f32.mrb[0].mxu0
    %v6033 = vpop.f32.mrb[0].mxu0
    %v6034 = vadd.f32 0.0, %v6033
    %v6035 = vpop.f32.mrb[0].mxu0
    %6036 = vdwg.mxu0
    %v6037 = vadd.f32 %v5921, %v6031
    %v6038 = vadd.f32 %v5922, %v6034
    %s6039 = scalar_lea.vmem [#allocation22], 32
    %v6040 = vld [vmem:[%s6039] sm:$0xf]
    %v6041 = vld [vmem:[%s6039 + $0x4] sm:$0xf]
    %v6044 = vunpack.c.l.b16 %v6040
    %v6045 = vunpack.c.l.b16 %v6041
    %v6046 = vpack.c.b16 %v6045, %v6044
    %v6048 = vsel %vm2480, %v6046, 0
    %6050 = vmatprep.subr.bf16.mxu0 0
    %6051 = vmatpush1.bf16.msra.mxu0 %v5580
    %6052 = vmatprep.subr.bf16.mxu0 0
    %6053 = vmatpush1.bf16.msra.mxu0 0
    %6054 = vmatprep.subr.bf16.mxu0 0
    %6055 = vmatpush1.bf16.msra.mxu0 0
    %6056 = vmatprep.subr.bf16.mxu0 0
    %6057 = vmatpush1.bf16.msra.mxu0 0
    %6058 = vmatprep.subr.bf16.mxu0 0
    %6059 = vmatpush1.bf16.msra.mxu0 0
    %6060 = vmatprep.subr.bf16.mxu0 0
    %6061 = vmatpush1.bf16.msra.mxu0 0
    %6062 = vmatprep.subr.bf16.mxu0 0
    %6063 = vmatpush1.bf16.msra.mxu0 0
    %6064 = vmatprep.subr.bf16.mxu0 0
    %6065 = vmatpush1.bf16.msra.mxu0 0
    %6066 = vmatprep.subr.bf16.mxu0 0
    %6067 = vmatpush1.bf16.msra.mxu0 0
    %6068 = vmatprep.subr.bf16.mxu0 0
    %6069 = vmatpush1.bf16.msra.mxu0 0
    %6070 = vmatprep.subr.bf16.mxu0 0
    %6071 = vmatpush1.bf16.msra.mxu0 0
    %6072 = vmatprep.subr.bf16.mxu0 0
    %6073 = vmatpush1.bf16.msra.mxu0 0
    %6074 = vmatprep.subr.bf16.mxu0 0
    %6075 = vmatpush1.bf16.msra.mxu0 0
    %6076 = vmatprep.subr.bf16.mxu0 0
    %6077 = vmatpush1.bf16.msra.mxu0 0
    %6078 = vmatprep.subr.bf16.mxu0 0
    %6079 = vmatpush1.bf16.msra.mxu0 0
    %6080 = vmatprep.subr.bf16.mxu0 0
    %6081 = vmatpush1.bf16.msra.mxu0 0
    %6082 = vmatprep.mubr.bf16.mxu0 0
    %6083 = vmatmul.mubr.bf16.gmra.mrb[0].mxu0 %v6048
    %v6084 = vpop.f32.mrb[0].mxu0
    %v6085 = vadd.f32 0.0, %v6084
    %v6086 = vpop.f32.mrb[0].mxu0
    %v6087 = vpop.f32.mrb[0].mxu0
    %v6088 = vadd.f32 0.0, %v6087
    %v6089 = vpop.f32.mrb[0].mxu0
    %6090 = vdwg.mxu0
    %v6091 = vpack.c.bf16 %v6088, %v6085
    %s6092 = scalar_lea.vmem [#allocation24], 64
    %v6093 = vld [vmem:[%s6092] sm:$0xf]
    %v6094 = vld [vmem:[%s6092 + $0x4] sm:$0xf]
    %v6095 = vld [vmem:[%s6092 + $0x8] sm:$0xf]
    %v6096 = vld [vmem:[%s6092 + $0xc] sm:$0xf]
    %v6101 = vunpack.c.l.b16 %v6093
    %v6102 = vunpack.c.l.b16 %v6094
    %v6103 = vunpack.c.l.b16 %v6095
    %v6104 = vunpack.c.l.b16 %v6096
    %v6105 = vpack.c.b16 %v6102, %v6101
    %v6106 = vpack.c.b16 %v6104, %v6103
    %v6110 = vsel %vm3455, %v6091, 0
    %6112 = vmatprep.subr.bf16.mxu0 0
    %6113 = vmatpush1.bf16.msra.mxu0 %v6105
    %6114 = vmatprep.subr.bf16.mxu0 0
    %6115 = vmatpush1.bf16.msra.mxu0 %v6106
    %6116 = vmatprep.subr.bf16.mxu0 0
    %6117 = vmatpush1.bf16.msra.mxu0 0
    %6118 = vmatprep.subr.bf16.mxu0 0
    %6119 = vmatpush1.bf16.msra.mxu0 0
    %6120 = vmatprep.subr.bf16.mxu0 0
    %6121 = vmatpush1.bf16.msra.mxu0 0
    %6122 = vmatprep.subr.bf16.mxu0 0
    %6123 = vmatpush1.bf16.msra.mxu0 0
    %6124 = vmatprep.subr.bf16.mxu0 0
    %6125 = vmatpush1.bf16.msra.mxu0 0
    %6126 = vmatprep.subr.bf16.mxu0 0
    %6127 = vmatpush1.bf16.msra.mxu0 0
    %6128 = vmatprep.subr.bf16.mxu0 0
    %6129 = vmatpush1.bf16.msra.mxu0 0
    %6130 = vmatprep.subr.bf16.mxu0 0
    %6131 = vmatpush1.bf16.msra.mxu0 0
    %6132 = vmatprep.subr.bf16.mxu0 0
    %6133 = vmatpush1.bf16.msra.mxu0 0
    %6134 = vmatprep.subr.bf16.mxu0 0
    %6135 = vmatpush1.bf16.msra.mxu0 0
    %6136 = vmatprep.subr.bf16.mxu0 0
    %6137 = vmatpush1.bf16.msra.mxu0 0
    %6138 = vmatprep.subr.bf16.mxu0 0
    %6139 = vmatpush1.bf16.msra.mxu0 0
    %6140 = vmatprep.subr.bf16.mxu0 0
    %6141 = vmatpush1.bf16.msra.mxu0 0
    %6142 = vmatprep.subr.bf16.mxu0 0
    %6143 = vmatpush1.bf16.msra.mxu0 0
    %6144 = vmatprep.mubr.bf16.mxu0 0
    %6145 = vmatmul.mubr.bf16.gmra.mrb[0].mxu0 %v6110
    %v6146 = vpop.f32.mrb[0].mxu0
    %v6147 = vadd.f32 0.0, %v6146
    %v6148 = vpop.f32.mrb[0].mxu0
    %v6149 = vpop.f32.mrb[0].mxu0
    %v6150 = vadd.f32 0.0, %v6149
    %v6151 = vpop.f32.mrb[0].mxu0
    %6152 = vdwg.mxu0
    %v6153 = vadd.f32 %v6037, %v6147
    %v6154 = vadd.f32 %v6038, %v6150
    %s6155 = scalar_lea.vmem [#allocation22], 40
    %v6156 = vld [vmem:[%s6155] sm:$0xf]
    %v6157 = vld [vmem:[%s6155 + $0x4] sm:$0xf]
    %v6160 = vunpack.c.l.b16 %v6156
    %v6161 = vunpack.c.l.b16 %v6157
    %v6162 = vpack.c.b16 %v6161, %v6160
    %v6164 = vsel %vm2480, %v6162, 0
    %6166 = vmatprep.subr.bf16.mxu0 0
    %6167 = vmatpush1.bf16.msra.mxu0 %v5580
    %6168 = vmatprep.subr.bf16.mxu0 0
    %6169 = vmatpush1.bf16.msra.mxu0 0
    %6170 = vmatprep.subr.bf16.mxu0 0
    %6171 = vmatpush1.bf16.msra.mxu0 0
    %6172 = vmatprep.subr.bf16.mxu0 0
    %6173 = vmatpush1.bf16.msra.mxu0 0
    %6174 = vmatprep.subr.bf16.mxu0 0
    %6175 = vmatpush1.bf16.msra.mxu0 0
    %6176 = vmatprep.subr.bf16.mxu0 0
    %6177 = vmatpush1.bf16.msra.mxu0 0
    %6178 = vmatprep.subr.bf16.mxu0 0
    %6179 = vmatpush1.bf16.msra.mxu0 0
    %6180 = vmatprep.subr.bf16.mxu0 0
    %6181 = vmatpush1.bf16.msra.mxu0 0
    %6182 = vmatprep.subr.bf16.mxu0 0
    %6183 = vmatpush1.bf16.msra.mxu0 0
    %6184 = vmatprep.subr.bf16.mxu0 0
    %6185 = vmatpush1.bf16.msra.mxu0 0
    %6186 = vmatprep.subr.bf16.mxu0 0
    %6187 = vmatpush1.bf16.msra.mxu0 0
    %6188 = vmatprep.subr.bf16.mxu0 0
    %6189 = vmatpush1.bf16.msra.mxu0 0
    %6190 = vmatprep.subr.bf16.mxu0 0
    %6191 = vmatpush1.bf16.msra.mxu0 0
    %6192 = vmatprep.subr.bf16.mxu0 0
    %6193 = vmatpush1.bf16.msra.mxu0 0
    %6194 = vmatprep.subr.bf16.mxu0 0
    %6195 = vmatpush1.bf16.msra.mxu0 0
    %6196 = vmatprep.subr.bf16.mxu0 0
    %6197 = vmatpush1.bf16.msra.mxu0 0
    %6198 = vmatprep.mubr.bf16.mxu0 0
    %6199 = vmatmul.mubr.bf16.gmra.mrb[0].mxu0 %v6164
    %v6200 = vpop.f32.mrb[0].mxu0
    %v6201 = vadd.f32 0.0, %v6200
    %v6202 = vpop.f32.mrb[0].mxu0
    %v6203 = vpop.f32.mrb[0].mxu0
    %v6204 = vadd.f32 0.0, %v6203
    %v6205 = vpop.f32.mrb[0].mxu0
    %6206 = vdwg.mxu0
    %v6207 = vpack.c.bf16 %v6204, %v6201
    %s6208 = scalar_lea.vmem [#allocation24], 80
    %v6209 = vld [vmem:[%s6208] sm:$0xf]
    %v6210 = vld [vmem:[%s6208 + $0x4] sm:$0xf]
    %v6211 = vld [vmem:[%s6208 + $0x8] sm:$0xf]
    %v6212 = vld [vmem:[%s6208 + $0xc] sm:$0xf]
    %v6217 = vunpack.c.l.b16 %v6209
    %v6218 = vunpack.c.l.b16 %v6210
    %v6219 = vunpack.c.l.b16 %v6211
    %v6220 = vunpack.c.l.b16 %v6212
    %v6221 = vpack.c.b16 %v6218, %v6217
    %v6222 = vpack.c.b16 %v6220, %v6219
    %v6226 = vsel %vm3455, %v6207, 0
    %6228 = vmatprep.subr.bf16.mxu0 0
    %6229 = vmatpush1.bf16.msra.mxu0 %v6221
    %6230 = vmatprep.subr.bf16.mxu0 0
    %6231 = vmatpush1.bf16.msra.mxu0 %v6222
    %6232 = vmatprep.subr.bf16.mxu0 0
    %6233 = vmatpush1.bf16.msra.mxu0 0
    %6234 = vmatprep.subr.bf16.mxu0 0
    %6235 = vmatpush1.bf16.msra.mxu0 0
    %6236 = vmatprep.subr.bf16.mxu0 0
    %6237 = vmatpush1.bf16.msra.mxu0 0
    %6238 = vmatprep.subr.bf16.mxu0 0
    %6239 = vmatpush1.bf16.msra.mxu0 0
    %6240 = vmatprep.subr.bf16.mxu0 0
    %6241 = vmatpush1.bf16.msra.mxu0 0
    %6242 = vmatprep.subr.bf16.mxu0 0
    %6243 = vmatpush1.bf16.msra.mxu0 0
    %6244 = vmatprep.subr.bf16.mxu0 0
    %6245 = vmatpush1.bf16.msra.mxu0 0
    %6246 = vmatprep.subr.bf16.mxu0 0
    %6247 = vmatpush1.bf16.msra.mxu0 0
    %6248 = vmatprep.subr.bf16.mxu0 0
    %6249 = vmatpush1.bf16.msra.mxu0 0
    %6250 = vmatprep.subr.bf16.mxu0 0
    %6251 = vmatpush1.bf16.msra.mxu0 0
    %6252 = vmatprep.subr.bf16.mxu0 0
    %6253 = vmatpush1.bf16.msra.mxu0 0
    %6254 = vmatprep.subr.bf16.mxu0 0
    %6255 = vmatpush1.bf16.msra.mxu0 0
    %6256 = vmatprep.subr.bf16.mxu0 0
    %6257 = vmatpush1.bf16.msra.mxu0 0
    %6258 = vmatprep.subr.bf16.mxu0 0
    %6259 = vmatpush1.bf16.msra.mxu0 0
    %6260 = vmatprep.mubr.bf16.mxu0 0
    %6261 = vmatmul.mubr.bf16.gmra.mrb[0].mxu0 %v6226
    %v6262 = vpop.f32.mrb[0].mxu0
    %v6263 = vadd.f32 0.0, %v6262
    %v6264 = vpop.f32.mrb[0].mxu0
    %v6265 = vpop.f32.mrb[0].mxu0
    %v6266 = vadd.f32 0.0, %v6265
    %v6267 = vpop.f32.mrb[0].mxu0
    %6268 = vdwg.mxu0
    %v6269 = vadd.f32 %v6153, %v6263
    %v6270 = vadd.f32 %v6154, %v6266
    %s6271 = scalar_lea.vmem [#allocation22], 48
    %v6272 = vld [vmem:[%s6271] sm:$0xf]
    %v6273 = vld [vmem:[%s6271 + $0x4] sm:$0xf]
    %v6276 = vunpack.c.l.b16 %v6272
    %v6277 = vunpack.c.l.b16 %v6273
    %v6278 = vpack.c.b16 %v6277, %v6276
    %v6280 = vsel %vm2480, %v6278, 0
    %6282 = vmatprep.subr.bf16.mxu0 0
    %6283 = vmatpush1.bf16.msra.mxu0 %v5580
    %6284 = vmatprep.subr.bf16.mxu0 0
    %6285 = vmatpush1.bf16.msra.mxu0 0
    %6286 = vmatprep.subr.bf16.mxu0 0
    %6287 = vmatpush1.bf16.msra.mxu0 0
    %6288 = vmatprep.subr.bf16.mxu0 0
    %6289 = vmatpush1.bf16.msra.mxu0 0
    %6290 = vmatprep.subr.bf16.mxu0 0
    %6291 = vmatpush1.bf16.msra.mxu0 0
    %6292 = vmatprep.subr.bf16.mxu0 0
    %6293 = vmatpush1.bf16.msra.mxu0 0
    %6294 = vmatprep.subr.bf16.mxu0 0
    %6295 = vmatpush1.bf16.msra.mxu0 0
    %6296 = vmatprep.subr.bf16.mxu0 0
    %6297 = vmatpush1.bf16.msra.mxu0 0
    %6298 = vmatprep.subr.bf16.mxu0 0
    %6299 = vmatpush1.bf16.msra.mxu0 0
    %6300 = vmatprep.subr.bf16.mxu0 0
    %6301 = vmatpush1.bf16.msra.mxu0 0
    %6302 = vmatprep.subr.bf16.mxu0 0
    %6303 = vmatpush1.bf16.msra.mxu0 0
    %6304 = vmatprep.subr.bf16.mxu0 0
    %6305 = vmatpush1.bf16.msra.mxu0 0
    %6306 = vmatprep.subr.bf16.mxu0 0
    %6307 = vmatpush1.bf16.msra.mxu0 0
    %6308 = vmatprep.subr.bf16.mxu0 0
    %6309 = vmatpush1.bf16.msra.mxu0 0
    %6310 = vmatprep.subr.bf16.mxu0 0
    %6311 = vmatpush1.bf16.msra.mxu0 0
    %6312 = vmatprep.subr.bf16.mxu0 0
    %6313 = vmatpush1.bf16.msra.mxu0 0
    %6314 = vmatprep.mubr.bf16.mxu0 0
    %6315 = vmatmul.mubr.bf16.gmra.mrb[0].mxu0 %v6280
    %v6316 = vpop.f32.mrb[0].mxu0
    %v6317 = vadd.f32 0.0, %v6316
    %v6318 = vpop.f32.mrb[0].mxu0
    %v6319 = vpop.f32.mrb[0].mxu0
    %v6320 = vadd.f32 0.0, %v6319
    %v6321 = vpop.f32.mrb[0].mxu0
    %6322 = vdwg.mxu0
    %v6323 = vpack.c.bf16 %v6320, %v6317
    %s6324 = scalar_lea.vmem [#allocation24], 96
    %v6325 = vld [vmem:[%s6324] sm:$0xf]
    %v6326 = vld [vmem:[%s6324 + $0x4] sm:$0xf]
    %v6327 = vld [vmem:[%s6324 + $0x8] sm:$0xf]
    %v6328 = vld [vmem:[%s6324 + $0xc] sm:$0xf]
    %v6333 = vunpack.c.l.b16 %v6325
    %v6334 = vunpack.c.l.b16 %v6326
    %v6335 = vunpack.c.l.b16 %v6327
    %v6336 = vunpack.c.l.b16 %v6328
    %v6337 = vpack.c.b16 %v6334, %v6333
    %v6338 = vpack.c.b16 %v6336, %v6335
    %v6342 = vsel %vm3455, %v6323, 0
    %6344 = vmatprep.subr.bf16.mxu0 0
    %6345 = vmatpush1.bf16.msra.mxu0 %v6337
    %6346 = vmatprep.subr.bf16.mxu0 0
    %6347 = vmatpush1.bf16.msra.mxu0 %v6338
    %6348 = vmatprep.subr.bf16.mxu0 0
    %6349 = vmatpush1.bf16.msra.mxu0 0
    %6350 = vmatprep.subr.bf16.mxu0 0
    %6351 = vmatpush1.bf16.msra.mxu0 0
    %6352 = vmatprep.subr.bf16.mxu0 0
    %6353 = vmatpush1.bf16.msra.mxu0 0
    %6354 = vmatprep.subr.bf16.mxu0 0
    %6355 = vmatpush1.bf16.msra.mxu0 0
    %6356 = vmatprep.subr.bf16.mxu0 0
    %6357 = vmatpush1.bf16.msra.mxu0 0
    %6358 = vmatprep.subr.bf16.mxu0 0
    %6359 = vmatpush1.bf16.msra.mxu0 0
    %6360 = vmatprep.subr.bf16.mxu0 0
    %6361 = vmatpush1.bf16.msra.mxu0 0
    %6362 = vmatprep.subr.bf16.mxu0 0
    %6363 = vmatpush1.bf16.msra.mxu0 0
    %6364 = vmatprep.subr.bf16.mxu0 0
    %6365 = vmatpush1.bf16.msra.mxu0 0
    %6366 = vmatprep.subr.bf16.mxu0 0
    %6367 = vmatpush1.bf16.msra.mxu0 0
    %6368 = vmatprep.subr.bf16.mxu0 0
    %6369 = vmatpush1.bf16.msra.mxu0 0
    %6370 = vmatprep.subr.bf16.mxu0 0
    %6371 = vmatpush1.bf16.msra.mxu0 0
    %6372 = vmatprep.subr.bf16.mxu0 0
    %6373 = vmatpush1.bf16.msra.mxu0 0
    %6374 = vmatprep.subr.bf16.mxu0 0
    %6375 = vmatpush1.bf16.msra.mxu0 0
    %6376 = vmatprep.mubr.bf16.mxu0 0
    %6377 = vmatmul.mubr.bf16.gmra.mrb[0].mxu0 %v6342
    %v6378 = vpop.f32.mrb[0].mxu0
    %v6379 = vadd.f32 0.0, %v6378
    %v6380 = vpop.f32.mrb[0].mxu0
    %v6381 = vpop.f32.mrb[0].mxu0
    %v6382 = vadd.f32 0.0, %v6381
    %v6383 = vpop.f32.mrb[0].mxu0
    %6384 = vdwg.mxu0
    %v6385 = vadd.f32 %v6269, %v6379
    %v6386 = vadd.f32 %v6270, %v6382
    %s6387 = scalar_lea.vmem [#allocation22], 56
    %v6388 = vld [vmem:[%s6387] sm:$0xf]
    %v6389 = vld [vmem:[%s6387 + $0x4] sm:$0xf]
    %v6392 = vunpack.c.l.b16 %v6388
    %v6393 = vunpack.c.l.b16 %v6389
    %v6394 = vpack.c.b16 %v6393, %v6392
    %v6396 = vsel %vm2480, %v6394, 0
    %6398 = vmatprep.subr.bf16.mxu0 0
    %6399 = vmatpush1.bf16.msra.mxu0 %v5580
    %6400 = vmatprep.subr.bf16.mxu0 0
    %6401 = vmatpush1.bf16.msra.mxu0 0
    %6402 = vmatprep.subr.bf16.mxu0 0
    %6403 = vmatpush1.bf16.msra.mxu0 0
    %6404 = vmatprep.subr.bf16.mxu0 0
    %6405 = vmatpush1.bf16.msra.mxu0 0
    %6406 = vmatprep.subr.bf16.mxu0 0
    %6407 = vmatpush1.bf16.msra.mxu0 0
    %6408 = vmatprep.subr.bf16.mxu0 0
    %6409 = vmatpush1.bf16.msra.mxu0 0
    %6410 = vmatprep.subr.bf16.mxu0 0
    %6411 = vmatpush1.bf16.msra.mxu0 0
    %6412 = vmatprep.subr.bf16.mxu0 0
    %6413 = vmatpush1.bf16.msra.mxu0 0
    %6414 = vmatprep.subr.bf16.mxu0 0
    %6415 = vmatpush1.bf16.msra.mxu0 0
    %6416 = vmatprep.subr.bf16.mxu0 0
    %6417 = vmatpush1.bf16.msra.mxu0 0
    %6418 = vmatprep.subr.bf16.mxu0 0
    %6419 = vmatpush1.bf16.msra.mxu0 0
    %6420 = vmatprep.subr.bf16.mxu0 0
    %6421 = vmatpush1.bf16.msra.mxu0 0
    %6422 = vmatprep.subr.bf16.mxu0 0
    %6423 = vmatpush1.bf16.msra.mxu0 0
    %6424 = vmatprep.subr.bf16.mxu0 0
    %6425 = vmatpush1.bf16.msra.mxu0 0
    %6426 = vmatprep.subr.bf16.mxu0 0
    %6427 = vmatpush1.bf16.msra.mxu0 0
    %6428 = vmatprep.subr.bf16.mxu0 0
    %6429 = vmatpush1.bf16.msra.mxu0 0
    %6430 = vmatprep.mubr.bf16.mxu0 0
    %6431 = vmatmul.mubr.bf16.gmra.mrb[0].mxu0 %v6396
    %v6432 = vpop.f32.mrb[0].mxu0
    %v6433 = vadd.f32 0.0, %v6432
    %v6434 = vpop.f32.mrb[0].mxu0
    %v6435 = vpop.f32.mrb[0].mxu0
    %v6436 = vadd.f32 0.0, %v6435
    %v6437 = vpop.f32.mrb[0].mxu0
    %6438 = vdwg.mxu0
    %v6439 = vpack.c.bf16 %v6436, %v6433
    %s6440 = scalar_lea.vmem [#allocation24], 112
    %v6441 = vld [vmem:[%s6440] sm:$0xf]
    %v6442 = vld [vmem:[%s6440 + $0x4] sm:$0xf]
    %v6443 = vld [vmem:[%s6440 + $0x8] sm:$0xf]
    %v6444 = vld [vmem:[%s6440 + $0xc] sm:$0xf]
    %v6449 = vunpack.c.l.b16 %v6441
    %v6450 = vunpack.c.l.b16 %v6442
    %v6451 = vunpack.c.l.b16 %v6443
    %v6452 = vunpack.c.l.b16 %v6444
    %v6453 = vpack.c.b16 %v6450, %v6449
    %v6454 = vpack.c.b16 %v6452, %v6451
    %v6458 = vsel %vm3455, %v6439, 0
    %6460 = vmatprep.subr.bf16.mxu0 0
    %6461 = vmatpush1.bf16.msra.mxu0 %v6453
    %6462 = vmatprep.subr.bf16.mxu0 0
    %6463 = vmatpush1.bf16.msra.mxu0 %v6454
    %6464 = vmatprep.subr.bf16.mxu0 0
    %6465 = vmatpush1.bf16.msra.mxu0 0
    %6466 = vmatprep.subr.bf16.mxu0 0
    %6467 = vmatpush1.bf16.msra.mxu0 0
    %6468 = vmatprep.subr.bf16.mxu0 0
    %6469 = vmatpush1.bf16.msra.mxu0 0
    %6470 = vmatprep.subr.bf16.mxu0 0
    %6471 = vmatpush1.bf16.msra.mxu0 0
    %6472 = vmatprep.subr.bf16.mxu0 0
    %6473 = vmatpush1.bf16.msra.mxu0 0
    %6474 = vmatprep.subr.bf16.mxu0 0
    %6475 = vmatpush1.bf16.msra.mxu0 0
    %6476 = vmatprep.subr.bf16.mxu0 0
    %6477 = vmatpush1.bf16.msra.mxu0 0
    %6478 = vmatprep.subr.bf16.mxu0 0
    %6479 = vmatpush1.bf16.msra.mxu0 0
    %6480 = vmatprep.subr.bf16.mxu0 0
    %6481 = vmatpush1.bf16.msra.mxu0 0
    %6482 = vmatprep.subr.bf16.mxu0 0
    %6483 = vmatpush1.bf16.msra.mxu0 0
    %6484 = vmatprep.subr.bf16.mxu0 0
    %6485 = vmatpush1.bf16.msra.mxu0 0
    %6486 = vmatprep.subr.bf16.mxu0 0
    %6487 = vmatpush1.bf16.msra.mxu0 0
    %6488 = vmatprep.subr.bf16.mxu0 0
    %6489 = vmatpush1.bf16.msra.mxu0 0
    %6490 = vmatprep.subr.bf16.mxu0 0
    %6491 = vmatpush1.bf16.msra.mxu0 0
    %6492 = vmatprep.mubr.bf16.mxu0 0
    %6493 = vmatmul.mubr.bf16.gmra.mrb[0].mxu0 %v6458
    %v6494 = vpop.f32.mrb[0].mxu0
    %v6495 = vadd.f32 0.0, %v6494
    %v6496 = vpop.f32.mrb[0].mxu0
    %v6497 = vpop.f32.mrb[0].mxu0
    %v6498 = vadd.f32 0.0, %v6497
    %v6499 = vpop.f32.mrb[0].mxu0
    %6500 = vdwg.mxu0
    %v6501 = vadd.f32 %v6385, %v6495
    %v6502 = vadd.f32 %v6386, %v6498
    %s6503 = scalar_lea.vmem [#allocation22], 64
    %v6504 = vld [vmem:[%s6503] sm:$0xf]
    %v6505 = vld [vmem:[%s6503 + $0x4] sm:$0xf]
    %v6508 = vunpack.c.l.b16 %v6504
    %v6509 = vunpack.c.l.b16 %v6505
    %v6510 = vpack.c.b16 %v6509, %v6508
    %v6512 = vsel %vm2480, %v6510, 0
    %6514 = vmatprep.subr.bf16.mxu0 0
    %6515 = vmatpush1.bf16.msra.mxu0 %v5580
    %6516 = vmatprep.subr.bf16.mxu0 0
    %6517 = vmatpush1.bf16.msra.mxu0 0
    %6518 = vmatprep.subr.bf16.mxu0 0
    %6519 = vmatpush1.bf16.msra.mxu0 0
    %6520 = vmatprep.subr.bf16.mxu0 0
    %6521 = vmatpush1.bf16.msra.mxu0 0
    %6522 = vmatprep.subr.bf16.mxu0 0
    %6523 = vmatpush1.bf16.msra.mxu0 0
    %6524 = vmatprep.subr.bf16.mxu0 0
    %6525 = vmatpush1.bf16.msra.mxu0 0
    %6526 = vmatprep.subr.bf16.mxu0 0
    %6527 = vmatpush1.bf16.msra.mxu0 0
    %6528 = vmatprep.subr.bf16.mxu0 0
    %6529 = vmatpush1.bf16.msra.mxu0 0
    %6530 = vmatprep.subr.bf16.mxu0 0
    %6531 = vmatpush1.bf16.msra.mxu0 0
    %6532 = vmatprep.subr.bf16.mxu0 0
    %6533 = vmatpush1.bf16.msra.mxu0 0
    %6534 = vmatprep.subr.bf16.mxu0 0
    %6535 = vmatpush1.bf16.msra.mxu0 0
    %6536 = vmatprep.subr.bf16.mxu0 0
    %6537 = vmatpush1.bf16.msra.mxu0 0
    %6538 = vmatprep.subr.bf16.mxu0 0
    %6539 = vmatpush1.bf16.msra.mxu0 0
    %6540 = vmatprep.subr.bf16.mxu0 0
    %6541 = vmatpush1.bf16.msra.mxu0 0
    %6542 = vmatprep.subr.bf16.mxu0 0
    %6543 = vmatpush1.bf16.msra.mxu0 0
    %6544 = vmatprep.subr.bf16.mxu0 0
    %6545 = vmatpush1.bf16.msra.mxu0 0
    %6546 = vmatprep.mubr.bf16.mxu0 0
    %6547 = vmatmul.mubr.bf16.gmra.mrb[0].mxu0 %v6512
    %v6548 = vpop.f32.mrb[0].mxu0
    %v6549 = vadd.f32 0.0, %v6548
    %v6550 = vpop.f32.mrb[0].mxu0
    %v6551 = vpop.f32.mrb[0].mxu0
    %v6552 = vadd.f32 0.0, %v6551
    %v6553 = vpop.f32.mrb[0].mxu0
    %6554 = vdwg.mxu0
    %v6555 = vpack.c.bf16 %v6552, %v6549
    %s6556 = scalar_lea.vmem [#allocation24], 128
    %v6557 = vld [vmem:[%s6556] sm:$0xf]
    %v6558 = vld [vmem:[%s6556 + $0x4] sm:$0xf]
    %v6559 = vld [vmem:[%s6556 + $0x8] sm:$0xf]
    %v6560 = vld [vmem:[%s6556 + $0xc] sm:$0xf]
    %v6565 = vunpack.c.l.b16 %v6557
    %v6566 = vunpack.c.l.b16 %v6558
    %v6567 = vunpack.c.l.b16 %v6559
    %v6568 = vunpack.c.l.b16 %v6560
    %v6569 = vpack.c.b16 %v6566, %v6565
    %v6570 = vpack.c.b16 %v6568, %v6567
    %v6574 = vsel %vm3455, %v6555, 0
    %6576 = vmatprep.subr.bf16.mxu0 0
    %6577 = vmatpush1.bf16.msra.mxu0 %v6569
    %6578 = vmatprep.subr.bf16.mxu0 0
    %6579 = vmatpush1.bf16.msra.mxu0 %v6570
    %6580 = vmatprep.subr.bf16.mxu0 0
    %6581 = vmatpush1.bf16.msra.mxu0 0
    %6582 = vmatprep.subr.bf16.mxu0 0
    %6583 = vmatpush1.bf16.msra.mxu0 0
    %6584 = vmatprep.subr.bf16.mxu0 0
    %6585 = vmatpush1.bf16.msra.mxu0 0
    %6586 = vmatprep.subr.bf16.mxu0 0
    %6587 = vmatpush1.bf16.msra.mxu0 0
    %6588 = vmatprep.subr.bf16.mxu0 0
    %6589 = vmatpush1.bf16.msra.mxu0 0
    %6590 = vmatprep.subr.bf16.mxu0 0
    %6591 = vmatpush1.bf16.msra.mxu0 0
    %6592 = vmatprep.subr.bf16.mxu0 0
    %6593 = vmatpush1.bf16.msra.mxu0 0
    %6594 = vmatprep.subr.bf16.mxu0 0
    %6595 = vmatpush1.bf16.msra.mxu0 0
    %6596 = vmatprep.subr.bf16.mxu0 0
    %6597 = vmatpush1.bf16.msra.mxu0 0
    %6598 = vmatprep.subr.bf16.mxu0 0
    %6599 = vmatpush1.bf16.msra.mxu0 0
    %6600 = vmatprep.subr.bf16.mxu0 0
    %6601 = vmatpush1.bf16.msra.mxu0 0
    %6602 = vmatprep.subr.bf16.mxu0 0
    %6603 = vmatpush1.bf16.msra.mxu0 0
    %6604 = vmatprep.subr.bf16.mxu0 0
    %6605 = vmatpush1.bf16.msra.mxu0 0
    %6606 = vmatprep.subr.bf16.mxu0 0
    %6607 = vmatpush1.bf16.msra.mxu0 0
    %6608 = vmatprep.mubr.bf16.mxu0 0
    %6609 = vmatmul.mubr.bf16.gmra.mrb[0].mxu0 %v6574
    %v6610 = vpop.f32.mrb[0].mxu0
    %v6611 = vadd.f32 0.0, %v6610
    %v6612 = vpop.f32.mrb[0].mxu0
    %v6613 = vpop.f32.mrb[0].mxu0
    %v6614 = vadd.f32 0.0, %v6613
    %v6615 = vpop.f32.mrb[0].mxu0
    %6616 = vdwg.mxu0
    %v6617 = vadd.f32 %v6501, %v6611
    %v6618 = vadd.f32 %v6502, %v6614
    %v6619 = vld [vmem:[#allocation25] sm:$0x1]
    %v6621 = vlaneseq
    %v6622 = vshrl.u32 %v6621, 7
    %v6623 = vsub.s32 0, %v6622
    %v6624 = vrot.slane %v6619, %v6623
    %v6626 = vadd.f32 %v6617, %v6624
    %v6627 = vadd.f32 %v6618, %v6624
    %v6628 = vld [vmem:[%s53] sm:$0xf]
    %v6629 = vld [vmem:[%s53 + $0x4] sm:$0xf]
    %v6630 = vld [vmem:[%s53 + $0x8] sm:$0xf]
    %v6631 = vld [vmem:[%s53 + $0xc] sm:$0xf]
    %v6632 = vld [vmem:[%s53 + $0x10] sm:$0xf]
    %v6633 = vld [vmem:[%s53 + $0x14] sm:$0xf]
    %v6634 = vld [vmem:[%s53 + $0x18] sm:$0xf]
    %v6635 = vld [vmem:[%s53 + $0x1c] sm:$0xf]
    %v6644 = vunpack.c.l.b16 %v6628
    %v6645 = vunpack.c.l.b16 %v6629
    %v6646 = vunpack.c.l.b16 %v6630
    %v6647 = vunpack.c.l.b16 %v6631
    %v6648 = vunpack.c.l.b16 %v6632
    %v6649 = vunpack.c.l.b16 %v6633
    %v6650 = vunpack.c.l.b16 %v6634
    %v6651 = vunpack.c.l.b16 %v6635
    %v6652 = vpack.c.b16 %v6645, %v6644
    %v6653 = vpack.c.b16 %v6647, %v6646
    %v6654 = vpack.c.b16 %v6649, %v6648
    %v6655 = vpack.c.b16 %v6651, %v6650
    %v6657 = vsel %vm2480, %v6652, 0
    %v6660 = vsel %vm2480, %v6653, 0
    %v6663 = vsel %vm2480, %v6654, 0
    %v6666 = vsel %vm2480, %v6655, 0
    %6668 = vmatprep.subr.bf16.mxu0 0
    %6669 = vmatpush1.bf16.msra.mxu0 %v5580
    %6670 = vmatprep.subr.bf16.mxu0 0
    %6671 = vmatpush1.bf16.msra.mxu0 0
    %6672 = vmatprep.subr.bf16.mxu0 0
    %6673 = vmatpush1.bf16.msra.mxu0 0
    %6674 = vmatprep.subr.bf16.mxu0 0
    %6675 = vmatpush1.bf16.msra.mxu0 0
    %6676 = vmatprep.subr.bf16.mxu0 0
    %6677 = vmatpush1.bf16.msra.mxu0 0
    %6678 = vmatprep.subr.bf16.mxu0 0
    %6679 = vmatpush1.bf16.msra.mxu0 0
    %6680 = vmatprep.subr.bf16.mxu0 0
    %6681 = vmatpush1.bf16.msra.mxu0 0
    %6682 = vmatprep.subr.bf16.mxu0 0
    %6683 = vmatpush1.bf16.msra.mxu0 0
    %6684 = vmatprep.subr.bf16.mxu0 0
    %6685 = vmatpush1.bf16.msra.mxu0 0
    %6686 = vmatprep.subr.bf16.mxu0 0
    %6687 = vmatpush1.bf16.msra.mxu0 0
    %6688 = vmatprep.subr.bf16.mxu0 0
    %6689 = vmatpush1.bf16.msra.mxu0 0
    %6690 = vmatprep.subr.bf16.mxu0 0
    %6691 = vmatpush1.bf16.msra.mxu0 0
    %6692 = vmatprep.subr.bf16.mxu0 0
    %6693 = vmatpush1.bf16.msra.mxu0 0
    %6694 = vmatprep.subr.bf16.mxu0 0
    %6695 = vmatpush1.bf16.msra.mxu0 0
    %6696 = vmatprep.subr.bf16.mxu0 0
    %6697 = vmatpush1.bf16.msra.mxu0 0
    %6698 = vmatprep.subr.bf16.mxu0 0
    %6699 = vmatpush1.bf16.msra.mxu0 0
    %6700 = vmatprep.mubr.bf16.mxu0 0
    %6701 = vmatmul.mubr.bf16.gmra.mrb[0].mxu0 %v6657
    %v6702 = vpop.f32.mrb[0].mxu0
    %v6703 = vadd.f32 0.0, %v6702
    %v6704 = vpop.f32.mrb[0].mxu0
    %v6705 = vpop.f32.mrb[0].mxu0
    %v6706 = vadd.f32 0.0, %v6705
    %v6707 = vpop.f32.mrb[0].mxu0
    %6708 = vmatprep.mubr.bf16.mxu0 0
    %6709 = vmatmul.mubr.bf16.gmra.mrb[0].mxu0 %v6660
    %v6710 = vpop.f32.mrb[0].mxu0
    %v6711 = vadd.f32 0.0, %v6710
    %v6712 = vpop.f32.mrb[0].mxu0
    %v6713 = vpop.f32.mrb[0].mxu0
    %v6714 = vadd.f32 0.0, %v6713
    %v6715 = vpop.f32.mrb[0].mxu0
    %6716 = vmatprep.mubr.bf16.mxu0 0
    %6717 = vmatmul.mubr.bf16.gmra.mrb[0].mxu0 %v6663
    %v6718 = vpop.f32.mrb[0].mxu0
    %v6719 = vadd.f32 0.0, %v6718
    %v6720 = vpop.f32.mrb[0].mxu0
    %v6721 = vpop.f32.mrb[0].mxu0
    %v6722 = vadd.f32 0.0, %v6721
    %v6723 = vpop.f32.mrb[0].mxu0
    %6724 = vmatprep.mubr.bf16.mxu0 0
    %6725 = vmatmul.mubr.bf16.gmra.mrb[0].mxu0 %v6666
    %v6726 = vpop.f32.mrb[0].mxu0
    %v6727 = vadd.f32 0.0, %v6726
    %v6728 = vpop.f32.mrb[0].mxu0
    %v6729 = vpop.f32.mrb[0].mxu0
    %v6730 = vadd.f32 0.0, %v6729
    %v6731 = vpop.f32.mrb[0].mxu0
    %6732 = vdwg.mxu0
    %v6733 = vadd.f32 %v4375, %v6703
    %v6734 = vadd.f32 %v4378, %v6706
    %v6735 = vadd.f32 %v4383, %v6711
    %v6736 = vadd.f32 %v4386, %v6714
    %v6737 = vadd.f32 %v4391, %v6719
    %v6738 = vadd.f32 %v4394, %v6722
    %v6739 = vadd.f32 %v4399, %v6727
    %v6740 = vadd.f32 %v4402, %v6730
    %v6741 = vpack.c.bf16 %v6734, %v6733
    %v6742 = vpack.c.bf16 %v6736, %v6735
    %v6743 = vpack.c.bf16 %v6738, %v6737
    %v6744 = vpack.c.bf16 %v6740, %v6739
    %v6745 = vld [vmem:[#allocation18] sm:$0xf]
    %v6746 = vld [vmem:[#allocation18 + $0x4] sm:$0xf]
    %v6747 = vld [vmem:[#allocation18 + $0x8] sm:$0xf]
    %v6748 = vld [vmem:[#allocation18 + $0xc] sm:$0xf]
    %v6749 = vld [vmem:[#allocation18 + $0x10] sm:$0xf]
    %v6750 = vld [vmem:[#allocation18 + $0x14] sm:$0xf]
    %v6751 = vld [vmem:[#allocation18 + $0x18] sm:$0xf]
    %v6752 = vld [vmem:[#allocation18 + $0x1c] sm:$0xf]
    %v6761 = vunpack.c.l.b16 %v6745
    %v6762 = vunpack.c.l.b16 %v6746
    %v6763 = vunpack.c.l.b16 %v6747
    %v6764 = vunpack.c.l.b16 %v6748
    %v6765 = vunpack.c.l.b16 %v6749
    %v6766 = vunpack.c.l.b16 %v6750
    %v6767 = vunpack.c.l.b16 %v6751
    %v6768 = vunpack.c.l.b16 %v6752
    %v6769 = vpack.c.b16 %v6762, %v6761
    %v6770 = vpack.c.b16 %v6764, %v6763
    %v6771 = vpack.c.b16 %v6766, %v6765
    %v6772 = vpack.c.b16 %v6768, %v6767
    %v6774 = vsel %vm2370, %v6769, 0
    %v6777 = vsel %vm2370, %v6770, 0
    %v6780 = vsel %vm2370, %v6771, 0
    %v6783 = vsel %vm2370, %v6772, 0
    %6785 = vmatprep.subr.bf16.mxu0 0
    %6786 = vmatpush1.bf16.msra.mxu0 %v6741
    %6787 = vmatprep.subr.bf16.mxu0 0
    %6788 = vmatpush1.bf16.msra.mxu0 %v6742
    %6789 = vmatprep.subr.bf16.mxu0 0
    %6790 = vmatpush1.bf16.msra.mxu0 %v6743
    %6791 = vmatprep.subr.bf16.mxu0 0
    %6792 = vmatpush1.bf16.msra.mxu0 %v6744
    %6793 = vmatprep.subr.bf16.mxu0 0
    %6794 = vmatpush1.bf16.msra.mxu0 0
    %6795 = vmatprep.subr.bf16.mxu0 0
    %6796 = vmatpush1.bf16.msra.mxu0 0
    %6797 = vmatprep.subr.bf16.mxu0 0
    %6798 = vmatpush1.bf16.msra.mxu0 0
    %6799 = vmatprep.subr.bf16.mxu0 0
    %6800 = vmatpush1.bf16.msra.mxu0 0
    %6801 = vmatprep.subr.bf16.mxu0 0
    %6802 = vmatpush1.bf16.msra.mxu0 0
    %6803 = vmatprep.subr.bf16.mxu0 0
    %6804 = vmatpush1.bf16.msra.mxu0 0
    %6805 = vmatprep.subr.bf16.mxu0 0
    %6806 = vmatpush1.bf16.msra.mxu0 0
    %6807 = vmatprep.subr.bf16.mxu0 0
    %6808 = vmatpush1.bf16.msra.mxu0 0
    %6809 = vmatprep.subr.bf16.mxu0 0
    %6810 = vmatpush1.bf16.msra.mxu0 0
    %6811 = vmatprep.subr.bf16.mxu0 0
    %6812 = vmatpush1.bf16.msra.mxu0 0
    %6813 = vmatprep.subr.bf16.mxu0 0
    %6814 = vmatpush1.bf16.msra.mxu0 0
    %6815 = vmatprep.subr.bf16.mxu0 0
    %6816 = vmatpush1.bf16.msra.mxu0 0
    %6817 = vmatprep.mubr.bf16.mxu0 0
    %6818 = vmatmul.mubr.bf16.gmra.mrb[0].mxu0 %v6774
    %v6819 = vpop.f32.mrb[0].mxu0
    %v6820 = vadd.f32 0.0, %v6819
    %v6821 = vpop.f32.mrb[0].mxu0
    %v6822 = vpop.f32.mrb[0].mxu0
    %v6823 = vadd.f32 0.0, %v6822
    %v6824 = vpop.f32.mrb[0].mxu0
    %6825 = vmatprep.mubr.bf16.mxu0 0
    %6826 = vmatmul.mubr.bf16.gmra.mrb[0].mxu0 %v6777
    %v6827 = vpop.f32.mrb[0].mxu0
    %v6828 = vadd.f32 0.0, %v6827
    %v6829 = vpop.f32.mrb[0].mxu0
    %v6830 = vpop.f32.mrb[0].mxu0
    %v6831 = vadd.f32 0.0, %v6830
    %v6832 = vpop.f32.mrb[0].mxu0
    %6833 = vmatprep.mubr.bf16.mxu0 0
    %6834 = vmatmul.mubr.bf16.gmra.mrb[0].mxu0 %v6780
    %v6835 = vpop.f32.mrb[0].mxu0
    %v6836 = vadd.f32 0.0, %v6835
    %v6837 = vpop.f32.mrb[0].mxu0
    %v6838 = vpop.f32.mrb[0].mxu0
    %v6839 = vadd.f32 0.0, %v6838
    %v6840 = vpop.f32.mrb[0].mxu0
    %6841 = vmatprep.mubr.bf16.mxu0 0
    %6842 = vmatmul.mubr.bf16.gmra.mrb[0].mxu0 %v6783
    %v6843 = vpop.f32.mrb[0].mxu0
    %v6844 = vadd.f32 0.0, %v6843
    %v6845 = vpop.f32.mrb[0].mxu0
    %v6846 = vpop.f32.mrb[0].mxu0
    %v6847 = vadd.f32 0.0, %v6846
    %v6848 = vpop.f32.mrb[0].mxu0
    %6849 = vdwg.mxu0
    %v6850 = vpack.c.bf16 %v6823, %v6820
    %v6851 = vpack.c.bf16 %v6831, %v6828
    %v6852 = vpack.c.bf16 %v6839, %v6836
    %v6853 = vpack.c.bf16 %v6847, %v6844
    %v6854 = vld [vmem:[#allocation19] sm:$0xf]
    %v6855 = vld [vmem:[#allocation19 + $0x4] sm:$0xf]
    %v6856 = vld [vmem:[#allocation19 + $0x8] sm:$0xf]
    %v6857 = vld [vmem:[#allocation19 + $0xc] sm:$0xf]
    %s6858 = scalar_lea.vmem [#allocation18], 32
    %v6859 = vld [vmem:[%s6858] sm:$0xf]
    %v6860 = vld [vmem:[%s6858 + $0x4] sm:$0xf]
    %v6861 = vld [vmem:[%s6858 + $0x8] sm:$0xf]
    %v6862 = vld [vmem:[%s6858 + $0xc] sm:$0xf]
    %v6863 = vld [vmem:[%s6858 + $0x10] sm:$0xf]
    %v6864 = vld [vmem:[%s6858 + $0x14] sm:$0xf]
    %v6865 = vld [vmem:[%s6858 + $0x18] sm:$0xf]
    %v6866 = vld [vmem:[%s6858 + $0x1c] sm:$0xf]
    %v6875 = vunpack.c.l.b16 %v6859
    %v6876 = vunpack.c.l.b16 %v6860
    %v6877 = vunpack.c.l.b16 %v6861
    %v6878 = vunpack.c.l.b16 %v6862
    %v6879 = vunpack.c.l.b16 %v6863
    %v6880 = vunpack.c.l.b16 %v6864
    %v6881 = vunpack.c.l.b16 %v6865
    %v6882 = vunpack.c.l.b16 %v6866
    %v6883 = vpack.c.b16 %v6876, %v6875
    %v6884 = vpack.c.b16 %v6878, %v6877
    %v6885 = vpack.c.b16 %v6880, %v6879
    %v6886 = vpack.c.b16 %v6882, %v6881
    %v6888 = vsel %vm2370, %v6883, 0
    %v6891 = vsel %vm2370, %v6884, 0
    %v6894 = vsel %vm2370, %v6885, 0
    %v6897 = vsel %vm2370, %v6886, 0
    %6899 = vmatprep.subr.bf16.mxu0 0
    %6900 = vmatpush1.bf16.msra.mxu0 %v6741
    %6901 = vmatprep.subr.bf16.mxu0 0
    %6902 = vmatpush1.bf16.msra.mxu0 %v6742
    %6903 = vmatprep.subr.bf16.mxu0 0
    %6904 = vmatpush1.bf16.msra.mxu0 %v6743
    %6905 = vmatprep.subr.bf16.mxu0 0
    %6906 = vmatpush1.bf16.msra.mxu0 %v6744
    %6907 = vmatprep.subr.bf16.mxu0 0
    %6908 = vmatpush1.bf16.msra.mxu0 0
    %6909 = vmatprep.subr.bf16.mxu0 0
    %6910 = vmatpush1.bf16.msra.mxu0 0
    %6911 = vmatprep.subr.bf16.mxu0 0
    %6912 = vmatpush1.bf16.msra.mxu0 0
    %6913 = vmatprep.subr.bf16.mxu0 0
    %6914 = vmatpush1.bf16.msra.mxu0 0
    %6915 = vmatprep.subr.bf16.mxu0 0
    %6916 = vmatpush1.bf16.msra.mxu0 0
    %6917 = vmatprep.subr.bf16.mxu0 0
    %6918 = vmatpush1.bf16.msra.mxu0 0
    %6919 = vmatprep.subr.bf16.mxu0 0
    %6920 = vmatpush1.bf16.msra.mxu0 0
    %6921 = vmatprep.subr.bf16.mxu0 0
    %6922 = vmatpush1.bf16.msra.mxu0 0
    %6923 = vmatprep.subr.bf16.mxu0 0
    %6924 = vmatpush1.bf16.msra.mxu0 0
    %6925 = vmatprep.subr.bf16.mxu0 0
    %6926 = vmatpush1.bf16.msra.mxu0 0
    %6927 = vmatprep.subr.bf16.mxu0 0
    %6928 = vmatpush1.bf16.msra.mxu0 0
    %6929 = vmatprep.subr.bf16.mxu0 0
    %6930 = vmatpush1.bf16.msra.mxu0 0
    %6931 = vmatprep.mubr.bf16.mxu0 0
    %6932 = vmatmul.mubr.bf16.gmra.mrb[0].mxu0 %v6888
    %v6933 = vpop.f32.mrb[0].mxu0
    %v6934 = vadd.f32 0.0, %v6933
    %v6935 = vpop.f32.mrb[0].mxu0
    %v6936 = vpop.f32.mrb[0].mxu0
    %v6937 = vadd.f32 0.0, %v6936
    %v6938 = vpop.f32.mrb[0].mxu0
    %6939 = vmatprep.mubr.bf16.mxu0 0
    %6940 = vmatmul.mubr.bf16.gmra.mrb[0].mxu0 %v6891
    %v6941 = vpop.f32.mrb[0].mxu0
    %v6942 = vadd.f32 0.0, %v6941
    %v6943 = vpop.f32.mrb[0].mxu0
    %v6944 = vpop.f32.mrb[0].mxu0
    %v6945 = vadd.f32 0.0, %v6944
    %v6946 = vpop.f32.mrb[0].mxu0
    %6947 = vmatprep.mubr.bf16.mxu0 0
    %6948 = vmatmul.mubr.bf16.gmra.mrb[0].mxu0 %v6894
    %v6949 = vpop.f32.mrb[0].mxu0
    %v6950 = vadd.f32 0.0, %v6949
    %v6951 = vpop.f32.mrb[0].mxu0
    %v6952 = vpop.f32.mrb[0].mxu0
    %v6953 = vadd.f32 0.0, %v6952
    %v6954 = vpop.f32.mrb[0].mxu0
    %6955 = vmatprep.mubr.bf16.mxu0 0
    %6956 = vmatmul.mubr.bf16.gmra.mrb[0].mxu0 %v6897
    %v6957 = vpop.f32.mrb[0].mxu0
    %v6958 = vadd.f32 0.0, %v6957
    %v6959 = vpop.f32.mrb[0].mxu0
    %v6960 = vpop.f32.mrb[0].mxu0
    %v6961 = vadd.f32 0.0, %v6960
    %v6962 = vpop.f32.mrb[0].mxu0
    %6963 = vdwg.mxu0
    %v6964 = vpack.c.bf16 %v6937, %v6934
    %v6965 = vpack.c.bf16 %v6945, %v6942
    %v6966 = vpack.c.bf16 %v6953, %v6950
    %v6967 = vpack.c.bf16 %v6961, %v6958
    %s6968 = scalar_lea.vmem [#allocation19], 16
    %v6969 = vld [vmem:[%s6968] sm:$0xf]
    %v6970 = vld [vmem:[%s6968 + $0x4] sm:$0xf]
    %v6971 = vld [vmem:[%s6968 + $0x8] sm:$0xf]
    %v6972 = vld [vmem:[%s6968 + $0xc] sm:$0xf]
    %v6977 = vunpack.c.l.b16 %v6969
    %v6978 = vunpack.c.l.b16 %v6970
    %v6979 = vunpack.c.l.b16 %v6971
    %v6980 = vunpack.c.l.b16 %v6972
    %v6981 = vpack.c.b16 %v6978, %v6977
    %v6982 = vpack.c.b16 %v6980, %v6979
    %v6986 = vsel %vm3455, %v6964, 0
    %v6989 = vsel %vm3455, %v6965, 0
    %v6992 = vsel %vm3455, %v6966, 0
    %v6995 = vsel %vm3455, %v6967, 0
    %6997 = vmatprep.subr.bf16.mxu0 0
    %6998 = vmatpush1.bf16.msra.mxu0 %v6981
    %6999 = vmatprep.subr.bf16.mxu0 0
    %7000 = vmatpush1.bf16.msra.mxu0 %v6982
    %7001 = vmatprep.subr.bf16.mxu0 0
    %7002 = vmatpush1.bf16.msra.mxu0 0
    %7003 = vmatprep.subr.bf16.mxu0 0
    %7004 = vmatpush1.bf16.msra.mxu0 0
    %7005 = vmatprep.subr.bf16.mxu0 0
    %7006 = vmatpush1.bf16.msra.mxu0 0
    %7007 = vmatprep.subr.bf16.mxu0 0
    %7008 = vmatpush1.bf16.msra.mxu0 0
    %7009 = vmatprep.subr.bf16.mxu0 0
    %7010 = vmatpush1.bf16.msra.mxu0 0
    %7011 = vmatprep.subr.bf16.mxu0 0
    %7012 = vmatpush1.bf16.msra.mxu0 0
    %7013 = vmatprep.subr.bf16.mxu0 0
    %7014 = vmatpush1.bf16.msra.mxu0 0
    %7015 = vmatprep.subr.bf16.mxu0 0
    %7016 = vmatpush1.bf16.msra.mxu0 0
    %7017 = vmatprep.subr.bf16.mxu0 0
    %7018 = vmatpush1.bf16.msra.mxu0 0
    %7019 = vmatprep.subr.bf16.mxu0 0
    %7020 = vmatpush1.bf16.msra.mxu0 0
    %7021 = vmatprep.subr.bf16.mxu0 0
    %7022 = vmatpush1.bf16.msra.mxu0 0
    %7023 = vmatprep.subr.bf16.mxu0 0
    %7024 = vmatpush1.bf16.msra.mxu0 0
    %7025 = vmatprep.subr.bf16.mxu0 0
    %7026 = vmatpush1.bf16.msra.mxu0 0
    %7027 = vmatprep.subr.bf16.mxu0 0
    %7028 = vmatpush1.bf16.msra.mxu0 0
    %7029 = vmatprep.mubr.bf16.mxu0 0
    %7030 = vmatmul.mubr.bf16.gmra.mrb[0].mxu0 %v6986
    %v7031 = vpop.f32.mrb[0].mxu0
    %v7032 = vadd.f32 0.0, %v7031
    %v7033 = vpop.f32.mrb[0].mxu0
    %v7034 = vpop.f32.mrb[0].mxu0
    %v7035 = vadd.f32 0.0, %v7034
    %v7036 = vpop.f32.mrb[0].mxu0
    %7037 = vmatprep.mubr.bf16.mxu0 0
    %7038 = vmatmul.mubr.bf16.gmra.mrb[0].mxu0 %v6989
    %v7039 = vpop.f32.mrb[0].mxu0
    %v7040 = vadd.f32 0.0, %v7039
    %v7041 = vpop.f32.mrb[0].mxu0
    %v7042 = vpop.f32.mrb[0].mxu0
    %v7043 = vadd.f32 0.0, %v7042
    %v7044 = vpop.f32.mrb[0].mxu0
    %7045 = vmatprep.mubr.bf16.mxu0 0
    %7046 = vmatmul.mubr.bf16.gmra.mrb[0].mxu0 %v6992
    %v7047 = vpop.f32.mrb[0].mxu0
    %v7048 = vadd.f32 0.0, %v7047
    %v7049 = vpop.f32.mrb[0].mxu0
    %v7050 = vpop.f32.mrb[0].mxu0
    %v7051 = vadd.f32 0.0, %v7050
    %v7052 = vpop.f32.mrb[0].mxu0
    %7053 = vmatprep.mubr.bf16.mxu0 0
    %7054 = vmatmul.mubr.bf16.gmra.mrb[0].mxu0 %v6995
    %v7055 = vpop.f32.mrb[0].mxu0
    %v7056 = vadd.f32 0.0, %v7055
    %v7057 = vpop.f32.mrb[0].mxu0
    %v7058 = vpop.f32.mrb[0].mxu0
    %v7059 = vadd.f32 0.0, %v7058
    %v7060 = vpop.f32.mrb[0].mxu0
    %7061 = vdwg.mxu0
    %v7066 = vunpack.c.l.b16 %v6854
    %v7067 = vunpack.c.l.b16 %v6855
    %v7068 = vunpack.c.l.b16 %v6856
    %v7069 = vunpack.c.l.b16 %v6857
    %v7070 = vpack.c.b16 %v7067, %v7066
    %v7071 = vpack.c.b16 %v7069, %v7068
    %v7075 = vsel %vm3455, %v6850, 0
    %v7078 = vsel %vm3455, %v6851, 0
    %v7081 = vsel %vm3455, %v6852, 0
    %v7084 = vsel %vm3455, %v6853, 0
    %7086 = vmatprep.subr.bf16.mxu0 0
    %7087 = vmatpush1.bf16.msra.mxu0 %v7070
    %7088 = vmatprep.subr.bf16.mxu0 0
    %7089 = vmatpush1.bf16.msra.mxu0 %v7071
    %7090 = vmatprep.subr.bf16.mxu0 0
    %7091 = vmatpush1.bf16.msra.mxu0 0
    %7092 = vmatprep.subr.bf16.mxu0 0
    %7093 = vmatpush1.bf16.msra.mxu0 0
    %7094 = vmatprep.subr.bf16.mxu0 0
    %7095 = vmatpush1.bf16.msra.mxu0 0
    %7096 = vmatprep.subr.bf16.mxu0 0
    %7097 = vmatpush1.bf16.msra.mxu0 0
    %7098 = vmatprep.subr.bf16.mxu0 0
    %7099 = vmatpush1.bf16.msra.mxu0 0
    %7100 = vmatprep.subr.bf16.mxu0 0
    %7101 = vmatpush1.bf16.msra.mxu0 0
    %7102 = vmatprep.subr.bf16.mxu0 0
    %7103 = vmatpush1.bf16.msra.mxu0 0
    %7104 = vmatprep.subr.bf16.mxu0 0
    %7105 = vmatpush1.bf16.msra.mxu0 0
    %7106 = vmatprep.subr.bf16.mxu0 0
    %7107 = vmatpush1.bf16.msra.mxu0 0
    %7108 = vmatprep.subr.bf16.mxu0 0
    %7109 = vmatpush1.bf16.msra.mxu0 0
    %7110 = vmatprep.subr.bf16.mxu0 0
    %7111 = vmatpush1.bf16.msra.mxu0 0
    %7112 = vmatprep.subr.bf16.mxu0 0
    %7113 = vmatpush1.bf16.msra.mxu0 0
    %7114 = vmatprep.subr.bf16.mxu0 0
    %7115 = vmatpush1.bf16.msra.mxu0 0
    %7116 = vmatprep.subr.bf16.mxu0 0
    %7117 = vmatpush1.bf16.msra.mxu0 0
    %7118 = vmatprep.mubr.bf16.mxu0 0
    %7119 = vmatmul.mubr.bf16.gmra.mrb[0].mxu0 %v7075
    %v7120 = vpop.f32.mrb[0].mxu0
    %v7121 = vadd.f32 %v7032, %v7120
    %v7122 = vpop.f32.mrb[0].mxu0
    %v7123 = vpop.f32.mrb[0].mxu0
    %v7124 = vadd.f32 %v7035, %v7123
    %v7125 = vpop.f32.mrb[0].mxu0
    %7126 = vmatprep.mubr.bf16.mxu0 0
    %7127 = vmatmul.mubr.bf16.gmra.mrb[0].mxu0 %v7078
    %v7128 = vpop.f32.mrb[0].mxu0
    %v7129 = vadd.f32 %v7040, %v7128
    %v7130 = vpop.f32.mrb[0].mxu0
    %v7131 = vpop.f32.mrb[0].mxu0
    %v7132 = vadd.f32 %v7043, %v7131
    %v7133 = vpop.f32.mrb[0].mxu0
    %7134 = vmatprep.mubr.bf16.mxu0 0
    %7135 = vmatmul.mubr.bf16.gmra.mrb[0].mxu0 %v7081
    %v7136 = vpop.f32.mrb[0].mxu0
    %v7137 = vadd.f32 %v7048, %v7136
    %v7138 = vpop.f32.mrb[0].mxu0
    %v7139 = vpop.f32.mrb[0].mxu0
    %v7140 = vadd.f32 %v7051, %v7139
    %v7141 = vpop.f32.mrb[0].mxu0
    %7142 = vmatprep.mubr.bf16.mxu0 0
    %7143 = vmatmul.mubr.bf16.gmra.mrb[0].mxu0 %v7084
    %v7144 = vpop.f32.mrb[0].mxu0
    %v7145 = vadd.f32 %v7056, %v7144
    %v7146 = vpop.f32.mrb[0].mxu0
    %v7147 = vpop.f32.mrb[0].mxu0
    %v7148 = vadd.f32 %v7059, %v7147
    %v7149 = vpop.f32.mrb[0].mxu0
    %7150 = vdwg.mxu0
    %s7151 = scalar_lea.vmem [#allocation18], 64
    %v7152 = vld [vmem:[%s7151] sm:$0xf]
    %v7153 = vld [vmem:[%s7151 + $0x4] sm:$0xf]
    %v7154 = vld [vmem:[%s7151 + $0x8] sm:$0xf]
    %v7155 = vld [vmem:[%s7151 + $0xc] sm:$0xf]
    %v7156 = vld [vmem:[%s7151 + $0x10] sm:$0xf]
    %v7157 = vld [vmem:[%s7151 + $0x14] sm:$0xf]
    %v7158 = vld [vmem:[%s7151 + $0x18] sm:$0xf]
    %v7159 = vld [vmem:[%s7151 + $0x1c] sm:$0xf]
    %v7168 = vunpack.c.l.b16 %v7152
    %v7169 = vunpack.c.l.b16 %v7153
    %v7170 = vunpack.c.l.b16 %v7154
    %v7171 = vunpack.c.l.b16 %v7155
    %v7172 = vunpack.c.l.b16 %v7156
    %v7173 = vunpack.c.l.b16 %v7157
    %v7174 = vunpack.c.l.b16 %v7158
    %v7175 = vunpack.c.l.b16 %v7159
    %v7176 = vpack.c.b16 %v7169, %v7168
    %v7177 = vpack.c.b16 %v7171, %v7170
    %v7178 = vpack.c.b16 %v7173, %v7172
    %v7179 = vpack.c.b16 %v7175, %v7174
    %v7181 = vsel %vm2370, %v7176, 0
    %v7184 = vsel %vm2370, %v7177, 0
    %v7187 = vsel %vm2370, %v7178, 0
    %v7190 = vsel %vm2370, %v7179, 0
    %7192 = vmatprep.subr.bf16.mxu0 0
    %7193 = vmatpush1.bf16.msra.mxu0 %v6741
    %7194 = vmatprep.subr.bf16.mxu0 0
    %7195 = vmatpush1.bf16.msra.mxu0 %v6742
    %7196 = vmatprep.subr.bf16.mxu0 0
    %7197 = vmatpush1.bf16.msra.mxu0 %v6743
    %7198 = vmatprep.subr.bf16.mxu0 0
    %7199 = vmatpush1.bf16.msra.mxu0 %v6744
    %7200 = vmatprep.subr.bf16.mxu0 0
    %7201 = vmatpush1.bf16.msra.mxu0 0
    %7202 = vmatprep.subr.bf16.mxu0 0
    %7203 = vmatpush1.bf16.msra.mxu0 0
    %7204 = vmatprep.subr.bf16.mxu0 0
    %7205 = vmatpush1.bf16.msra.mxu0 0
    %7206 = vmatprep.subr.bf16.mxu0 0
    %7207 = vmatpush1.bf16.msra.mxu0 0
    %7208 = vmatprep.subr.bf16.mxu0 0
    %7209 = vmatpush1.bf16.msra.mxu0 0
    %7210 = vmatprep.subr.bf16.mxu0 0
    %7211 = vmatpush1.bf16.msra.mxu0 0
    %7212 = vmatprep.subr.bf16.mxu0 0
    %7213 = vmatpush1.bf16.msra.mxu0 0
    %7214 = vmatprep.subr.bf16.mxu0 0
    %7215 = vmatpush1.bf16.msra.mxu0 0
    %7216 = vmatprep.subr.bf16.mxu0 0
    %7217 = vmatpush1.bf16.msra.mxu0 0
    %7218 = vmatprep.subr.bf16.mxu0 0
    %7219 = vmatpush1.bf16.msra.mxu0 0
    %7220 = vmatprep.subr.bf16.mxu0 0
    %7221 = vmatpush1.bf16.msra.mxu0 0
    %7222 = vmatprep.subr.bf16.mxu0 0
    %7223 = vmatpush1.bf16.msra.mxu0 0
    %7224 = vmatprep.mubr.bf16.mxu0 0
    %7225 = vmatmul.mubr.bf16.gmra.mrb[0].mxu0 %v7181
    %v7226 = vpop.f32.mrb[0].mxu0
    %v7227 = vadd.f32 0.0, %v7226
    %v7228 = vpop.f32.mrb[0].mxu0
    %v7229 = vpop.f32.mrb[0].mxu0
    %v7230 = vadd.f32 0.0, %v7229
    %v7231 = vpop.f32.mrb[0].mxu0
    %7232 = vmatprep.mubr.bf16.mxu0 0
    %7233 = vmatmul.mubr.bf16.gmra.mrb[0].mxu0 %v7184
    %v7234 = vpop.f32.mrb[0].mxu0
    %v7235 = vadd.f32 0.0, %v7234
    %v7236 = vpop.f32.mrb[0].mxu0
    %v7237 = vpop.f32.mrb[0].mxu0
    %v7238 = vadd.f32 0.0, %v7237
    %v7239 = vpop.f32.mrb[0].mxu0
    %7240 = vmatprep.mubr.bf16.mxu0 0
    %7241 = vmatmul.mubr.bf16.gmra.mrb[0].mxu0 %v7187
    %v7242 = vpop.f32.mrb[0].mxu0
    %v7243 = vadd.f32 0.0, %v7242
    %v7244 = vpop.f32.mrb[0].mxu0
    %v7245 = vpop.f32.mrb[0].mxu0
    %v7246 = vadd.f32 0.0, %v7245
    %v7247 = vpop.f32.mrb[0].mxu0
    %7248 = vmatprep.mubr.bf16.mxu0 0
    %7249 = vmatmul.mubr.bf16.gmra.mrb[0].mxu0 %v7190
    %v7250 = vpop.f32.mrb[0].mxu0
    %v7251 = vadd.f32 0.0, %v7250
    %v7252 = vpop.f32.mrb[0].mxu0
    %v7253 = vpop.f32.mrb[0].mxu0
    %v7254 = vadd.f32 0.0, %v7253
    %v7255 = vpop.f32.mrb[0].mxu0
    %7256 = vdwg.mxu0
    %v7257 = vpack.c.bf16 %v7230, %v7227
    %v7258 = vpack.c.bf16 %v7238, %v7235
    %v7259 = vpack.c.bf16 %v7246, %v7243
    %v7260 = vpack.c.bf16 %v7254, %v7251
    %s7261 = scalar_lea.vmem [#allocation19], 32
    %v7262 = vld [vmem:[%s7261] sm:$0xf]
    %v7263 = vld [vmem:[%s7261 + $0x4] sm:$0xf]
    %v7264 = vld [vmem:[%s7261 + $0x8] sm:$0xf]
    %v7265 = vld [vmem:[%s7261 + $0xc] sm:$0xf]
    %v7270 = vunpack.c.l.b16 %v7262
    %v7271 = vunpack.c.l.b16 %v7263
    %v7272 = vunpack.c.l.b16 %v7264
    %v7273 = vunpack.c.l.b16 %v7265
    %v7274 = vpack.c.b16 %v7271, %v7270
    %v7275 = vpack.c.b16 %v7273, %v7272
    %v7279 = vsel %vm3455, %v7257, 0
    %v7282 = vsel %vm3455, %v7258, 0
    %v7285 = vsel %vm3455, %v7259, 0
    %v7288 = vsel %vm3455, %v7260, 0
    %7290 = vmatprep.subr.bf16.mxu0 0
    %7291 = vmatpush1.bf16.msra.mxu0 %v7274
    %7292 = vmatprep.subr.bf16.mxu0 0
    %7293 = vmatpush1.bf16.msra.mxu0 %v7275
    %7294 = vmatprep.subr.bf16.mxu0 0
    %7295 = vmatpush1.bf16.msra.mxu0 0
    %7296 = vmatprep.subr.bf16.mxu0 0
    %7297 = vmatpush1.bf16.msra.mxu0 0
    %7298 = vmatprep.subr.bf16.mxu0 0
    %7299 = vmatpush1.bf16.msra.mxu0 0
    %7300 = vmatprep.subr.bf16.mxu0 0
    %7301 = vmatpush1.bf16.msra.mxu0 0
    %7302 = vmatprep.subr.bf16.mxu0 0
    %7303 = vmatpush1.bf16.msra.mxu0 0
    %7304 = vmatprep.subr.bf16.mxu0 0
    %7305 = vmatpush1.bf16.msra.mxu0 0
    %7306 = vmatprep.subr.bf16.mxu0 0
    %7307 = vmatpush1.bf16.msra.mxu0 0
    %7308 = vmatprep.subr.bf16.mxu0 0
    %7309 = vmatpush1.bf16.msra.mxu0 0
    %7310 = vmatprep.subr.bf16.mxu0 0
    %7311 = vmatpush1.bf16.msra.mxu0 0
    %7312 = vmatprep.subr.bf16.mxu0 0
    %7313 = vmatpush1.bf16.msra.mxu0 0
    %7314 = vmatprep.subr.bf16.mxu0 0
    %7315 = vmatpush1.bf16.msra.mxu0 0
    %7316 = vmatprep.subr.bf16.mxu0 0
    %7317 = vmatpush1.bf16.msra.mxu0 0
    %7318 = vmatprep.subr.bf16.mxu0 0
    %7319 = vmatpush1.bf16.msra.mxu0 0
    %7320 = vmatprep.subr.bf16.mxu0 0
    %7321 = vmatpush1.bf16.msra.mxu0 0
    %7322 = vmatprep.mubr.bf16.mxu0 0
    %7323 = vmatmul.mubr.bf16.gmra.mrb[0].mxu0 %v7279
    %v7324 = vpop.f32.mrb[0].mxu0
    %v7325 = vadd.f32 0.0, %v7324
    %v7326 = vpop.f32.mrb[0].mxu0
    %v7327 = vpop.f32.mrb[0].mxu0
    %v7328 = vadd.f32 0.0, %v7327
    %v7329 = vpop.f32.mrb[0].mxu0
    %7330 = vmatprep.mubr.bf16.mxu0 0
    %7331 = vmatmul.mubr.bf16.gmra.mrb[0].mxu0 %v7282
    %v7332 = vpop.f32.mrb[0].mxu0
    %v7333 = vadd.f32 0.0, %v7332
    %v7334 = vpop.f32.mrb[0].mxu0
    %v7335 = vpop.f32.mrb[0].mxu0
    %v7336 = vadd.f32 0.0, %v7335
    %v7337 = vpop.f32.mrb[0].mxu0
    %7338 = vmatprep.mubr.bf16.mxu0 0
    %7339 = vmatmul.mubr.bf16.gmra.mrb[0].mxu0 %v7285
    %v7340 = vpop.f32.mrb[0].mxu0
    %v7341 = vadd.f32 0.0, %v7340
    %v7342 = vpop.f32.mrb[0].mxu0
    %v7343 = vpop.f32.mrb[0].mxu0
    %v7344 = vadd.f32 0.0, %v7343
    %v7345 = vpop.f32.mrb[0].mxu0
    %7346 = vmatprep.mubr.bf16.mxu0 0
    %7347 = vmatmul.mubr.bf16.gmra.mrb[0].mxu0 %v7288
    %v7348 = vpop.f32.mrb[0].mxu0
    %v7349 = vadd.f32 0.0, %v7348
    %v7350 = vpop.f32.mrb[0].mxu0
    %v7351 = vpop.f32.mrb[0].mxu0
    %v7352 = vadd.f32 0.0, %v7351
    %v7353 = vpop.f32.mrb[0].mxu0
    %7354 = vdwg.mxu0
    %v7355 = vadd.f32 %v7121, %v7325
    %v7356 = vadd.f32 %v7124, %v7328
    %v7357 = vadd.f32 %v7129, %v7333
    %v7358 = vadd.f32 %v7132, %v7336
    %v7359 = vadd.f32 %v7137, %v7341
    %v7360 = vadd.f32 %v7140, %v7344
    %v7361 = vadd.f32 %v7145, %v7349
    %v7362 = vadd.f32 %v7148, %v7352
    %s7363 = scalar_lea.vmem [#allocation18], 96
    %v7364 = vld [vmem:[%s7363] sm:$0xf]
    %v7365 = vld [vmem:[%s7363 + $0x4] sm:$0xf]
    %v7366 = vld [vmem:[%s7363 + $0x8] sm:$0xf]
    %v7367 = vld [vmem:[%s7363 + $0xc] sm:$0xf]
    %v7368 = vld [vmem:[%s7363 + $0x10] sm:$0xf]
    %v7369 = vld [vmem:[%s7363 + $0x14] sm:$0xf]
    %v7370 = vld [vmem:[%s7363 + $0x18] sm:$0xf]
    %v7371 = vld [vmem:[%s7363 + $0x1c] sm:$0xf]
    %v7380 = vunpack.c.l.b16 %v7364
    %v7381 = vunpack.c.l.b16 %v7365
    %v7382 = vunpack.c.l.b16 %v7366
    %v7383 = vunpack.c.l.b16 %v7367
    %v7384 = vunpack.c.l.b16 %v7368
    %v7385 = vunpack.c.l.b16 %v7369
    %v7386 = vunpack.c.l.b16 %v7370
    %v7387 = vunpack.c.l.b16 %v7371
    %v7388 = vpack.c.b16 %v7381, %v7380
    %v7389 = vpack.c.b16 %v7383, %v7382
    %v7390 = vpack.c.b16 %v7385, %v7384
    %v7391 = vpack.c.b16 %v7387, %v7386
    %v7393 = vsel %vm2370, %v7388, 0
    %v7396 = vsel %vm2370, %v7389, 0
    %v7399 = vsel %vm2370, %v7390, 0
    %v7402 = vsel %vm2370, %v7391, 0
    %7404 = vmatprep.subr.bf16.mxu0 0
    %7405 = vmatpush1.bf16.msra.mxu0 %v6741
    %7406 = vmatprep.subr.bf16.mxu0 0
    %7407 = vmatpush1.bf16.msra.mxu0 %v6742
    %7408 = vmatprep.subr.bf16.mxu0 0
    %7409 = vmatpush1.bf16.msra.mxu0 %v6743
    %7410 = vmatprep.subr.bf16.mxu0 0
    %7411 = vmatpush1.bf16.msra.mxu0 %v6744
    %7412 = vmatprep.subr.bf16.mxu0 0
    %7413 = vmatpush1.bf16.msra.mxu0 0
    %7414 = vmatprep.subr.bf16.mxu0 0
    %7415 = vmatpush1.bf16.msra.mxu0 0
    %7416 = vmatprep.subr.bf16.mxu0 0
    %7417 = vmatpush1.bf16.msra.mxu0 0
    %7418 = vmatprep.subr.bf16.mxu0 0
    %7419 = vmatpush1.bf16.msra.mxu0 0
    %7420 = vmatprep.subr.bf16.mxu0 0
    %7421 = vmatpush1.bf16.msra.mxu0 0
    %7422 = vmatprep.subr.bf16.mxu0 0
    %7423 = vmatpush1.bf16.msra.mxu0 0
    %7424 = vmatprep.subr.bf16.mxu0 0
    %7425 = vmatpush1.bf16.msra.mxu0 0
    %7426 = vmatprep.subr.bf16.mxu0 0
    %7427 = vmatpush1.bf16.msra.mxu0 0
    %7428 = vmatprep.subr.bf16.mxu0 0
    %7429 = vmatpush1.bf16.msra.mxu0 0
    %7430 = vmatprep.subr.bf16.mxu0 0
    %7431 = vmatpush1.bf16.msra.mxu0 0
    %7432 = vmatprep.subr.bf16.mxu0 0
    %7433 = vmatpush1.bf16.msra.mxu0 0
    %7434 = vmatprep.subr.bf16.mxu0 0
    %7435 = vmatpush1.bf16.msra.mxu0 0
    %7436 = vmatprep.mubr.bf16.mxu0 0
    %7437 = vmatmul.mubr.bf16.gmra.mrb[0].mxu0 %v7393
    %v7438 = vpop.f32.mrb[0].mxu0
    %v7439 = vadd.f32 0.0, %v7438
    %v7440 = vpop.f32.mrb[0].mxu0
    %v7441 = vpop.f32.mrb[0].mxu0
    %v7442 = vadd.f32 0.0, %v7441
    %v7443 = vpop.f32.mrb[0].mxu0
    %7444 = vmatprep.mubr.bf16.mxu0 0
    %7445 = vmatmul.mubr.bf16.gmra.mrb[0].mxu0 %v7396
    %v7446 = vpop.f32.mrb[0].mxu0
    %v7447 = vadd.f32 0.0, %v7446
    %v7448 = vpop.f32.mrb[0].mxu0
    %v7449 = vpop.f32.mrb[0].mxu0
    %v7450 = vadd.f32 0.0, %v7449
    %v7451 = vpop.f32.mrb[0].mxu0
    %7452 = vmatprep.mubr.bf16.mxu0 0
    %7453 = vmatmul.mubr.bf16.gmra.mrb[0].mxu0 %v7399
    %v7454 = vpop.f32.mrb[0].mxu0
    %v7455 = vadd.f32 0.0, %v7454
    %v7456 = vpop.f32.mrb[0].mxu0
    %v7457 = vpop.f32.mrb[0].mxu0
    %v7458 = vadd.f32 0.0, %v7457
    %v7459 = vpop.f32.mrb[0].mxu0
    %7460 = vmatprep.mubr.bf16.mxu0 0
    %7461 = vmatmul.mubr.bf16.gmra.mrb[0].mxu0 %v7402
    %v7462 = vpop.f32.mrb[0].mxu0
    %v7463 = vadd.f32 0.0, %v7462
    %v7464 = vpop.f32.mrb[0].mxu0
    %v7465 = vpop.f32.mrb[0].mxu0
    %v7466 = vadd.f32 0.0, %v7465
    %v7467 = vpop.f32.mrb[0].mxu0
    %7468 = vdwg.mxu0
    %v7469 = vpack.c.bf16 %v7442, %v7439
    %v7470 = vpack.c.bf16 %v7450, %v7447
    %v7471 = vpack.c.bf16 %v7458, %v7455
    %v7472 = vpack.c.bf16 %v7466, %v7463
    %s7473 = scalar_lea.vmem [#allocation19], 48
    %v7474 = vld [vmem:[%s7473] sm:$0xf]
    %v7475 = vld [vmem:[%s7473 + $0x4] sm:$0xf]
    %v7476 = vld [vmem:[%s7473 + $0x8] sm:$0xf]
    %v7477 = vld [vmem:[%s7473 + $0xc] sm:$0xf]
    %v7482 = vunpack.c.l.b16 %v7474
    %v7483 = vunpack.c.l.b16 %v7475
    %v7484 = vunpack.c.l.b16 %v7476
    %v7485 = vunpack.c.l.b16 %v7477
    %v7486 = vpack.c.b16 %v7483, %v7482
    %v7487 = vpack.c.b16 %v7485, %v7484
    %v7491 = vsel %vm3455, %v7469, 0
    %v7494 = vsel %vm3455, %v7470, 0
    %v7497 = vsel %vm3455, %v7471, 0
    %v7500 = vsel %vm3455, %v7472, 0
    %7502 = vmatprep.subr.bf16.mxu0 0
    %7503 = vmatpush1.bf16.msra.mxu0 %v7486
    %7504 = vmatprep.subr.bf16.mxu0 0
    %7505 = vmatpush1.bf16.msra.mxu0 %v7487
    %7506 = vmatprep.subr.bf16.mxu0 0
    %7507 = vmatpush1.bf16.msra.mxu0 0
    %7508 = vmatprep.subr.bf16.mxu0 0
    %7509 = vmatpush1.bf16.msra.mxu0 0
    %7510 = vmatprep.subr.bf16.mxu0 0
    %7511 = vmatpush1.bf16.msra.mxu0 0
    %7512 = vmatprep.subr.bf16.mxu0 0
    %7513 = vmatpush1.bf16.msra.mxu0 0
    %7514 = vmatprep.subr.bf16.mxu0 0
    %7515 = vmatpush1.bf16.msra.mxu0 0
    %7516 = vmatprep.subr.bf16.mxu0 0
    %7517 = vmatpush1.bf16.msra.mxu0 0
    %7518 = vmatprep.subr.bf16.mxu0 0
    %7519 = vmatpush1.bf16.msra.mxu0 0
    %7520 = vmatprep.subr.bf16.mxu0 0
    %7521 = vmatpush1.bf16.msra.mxu0 0
    %7522 = vmatprep.subr.bf16.mxu0 0
    %7523 = vmatpush1.bf16.msra.mxu0 0
    %7524 = vmatprep.subr.bf16.mxu0 0
    %7525 = vmatpush1.bf16.msra.mxu0 0
    %7526 = vmatprep.subr.bf16.mxu0 0
    %7527 = vmatpush1.bf16.msra.mxu0 0
    %7528 = vmatprep.subr.bf16.mxu0 0
    %7529 = vmatpush1.bf16.msra.mxu0 0
    %7530 = vmatprep.subr.bf16.mxu0 0
    %7531 = vmatpush1.bf16.msra.mxu0 0
    %7532 = vmatprep.subr.bf16.mxu0 0
    %7533 = vmatpush1.bf16.msra.mxu0 0
    %7534 = vmatprep.mubr.bf16.mxu0 0
    %7535 = vmatmul.mubr.bf16.gmra.mrb[0].mxu0 %v7491
    %v7536 = vpop.f32.mrb[0].mxu0
    %v7537 = vadd.f32 0.0, %v7536
    %v7538 = vpop.f32.mrb[0].mxu0
    %v7539 = vpop.f32.mrb[0].mxu0
    %v7540 = vadd.f32 0.0, %v7539
    %v7541 = vpop.f32.mrb[0].mxu0
    %7542 = vmatprep.mubr.bf16.mxu0 0
    %7543 = vmatmul.mubr.bf16.gmra.mrb[0].mxu0 %v7494
    %v7544 = vpop.f32.mrb[0].mxu0
    %v7545 = vadd.f32 0.0, %v7544
    %v7546 = vpop.f32.mrb[0].mxu0
    %v7547 = vpop.f32.mrb[0].mxu0
    %v7548 = vadd.f32 0.0, %v7547
    %v7549 = vpop.f32.mrb[0].mxu0
    %7550 = vmatprep.mubr.bf16.mxu0 0
    %7551 = vmatmul.mubr.bf16.gmra.mrb[0].mxu0 %v7497
    %v7552 = vpop.f32.mrb[0].mxu0
    %v7553 = vadd.f32 0.0, %v7552
    %v7554 = vpop.f32.mrb[0].mxu0
    %v7555 = vpop.f32.mrb[0].mxu0
    %v7556 = vadd.f32 0.0, %v7555
    %v7557 = vpop.f32.mrb[0].mxu0
    %7558 = vmatprep.mubr.bf16.mxu0 0
    %7559 = vmatmul.mubr.bf16.gmra.mrb[0].mxu0 %v7500
    %v7560 = vpop.f32.mrb[0].mxu0
    %v7561 = vadd.f32 0.0, %v7560
    %v7562 = vpop.f32.mrb[0].mxu0
    %v7563 = vpop.f32.mrb[0].mxu0
    %v7564 = vadd.f32 0.0, %v7563
    %v7565 = vpop.f32.mrb[0].mxu0
    %7566 = vdwg.mxu0
    %v7567 = vadd.f32 %v7355, %v7537
    %v7568 = vadd.f32 %v7356, %v7540
    %v7569 = vadd.f32 %v7357, %v7545
    %v7570 = vadd.f32 %v7358, %v7548
    %v7571 = vadd.f32 %v7359, %v7553
    %v7572 = vadd.f32 %v7360, %v7556
    %v7573 = vadd.f32 %v7361, %v7561
    %v7574 = vadd.f32 %v7362, %v7564
    %s7575 = scalar_lea.vmem [#allocation18], 128
    %v7576 = vld [vmem:[%s7575] sm:$0xf]
    %v7577 = vld [vmem:[%s7575 + $0x4] sm:$0xf]
    %v7578 = vld [vmem:[%s7575 + $0x8] sm:$0xf]
    %v7579 = vld [vmem:[%s7575 + $0xc] sm:$0xf]
    %v7580 = vld [vmem:[%s7575 + $0x10] sm:$0xf]
    %v7581 = vld [vmem:[%s7575 + $0x14] sm:$0xf]
    %v7582 = vld [vmem:[%s7575 + $0x18] sm:$0xf]
    %v7583 = vld [vmem:[%s7575 + $0x1c] sm:$0xf]
    %v7592 = vunpack.c.l.b16 %v7576
    %v7593 = vunpack.c.l.b16 %v7577
    %v7594 = vunpack.c.l.b16 %v7578
    %v7595 = vunpack.c.l.b16 %v7579
    %v7596 = vunpack.c.l.b16 %v7580
    %v7597 = vunpack.c.l.b16 %v7581
    %v7598 = vunpack.c.l.b16 %v7582
    %v7599 = vunpack.c.l.b16 %v7583
    %v7600 = vpack.c.b16 %v7593, %v7592
    %v7601 = vpack.c.b16 %v7595, %v7594
    %v7602 = vpack.c.b16 %v7597, %v7596
    %v7603 = vpack.c.b16 %v7599, %v7598
    %v7605 = vsel %vm2370, %v7600, 0
    %v7608 = vsel %vm2370, %v7601, 0
    %v7611 = vsel %vm2370, %v7602, 0
    %v7614 = vsel %vm2370, %v7603, 0
    %7616 = vmatprep.subr.bf16.mxu0 0
    %7617 = vmatpush1.bf16.msra.mxu0 %v6741
    %7618 = vmatprep.subr.bf16.mxu0 0
    %7619 = vmatpush1.bf16.msra.mxu0 %v6742
    %7620 = vmatprep.subr.bf16.mxu0 0
    %7621 = vmatpush1.bf16.msra.mxu0 %v6743
    %7622 = vmatprep.subr.bf16.mxu0 0
    %7623 = vmatpush1.bf16.msra.mxu0 %v6744
    %7624 = vmatprep.subr.bf16.mxu0 0
    %7625 = vmatpush1.bf16.msra.mxu0 0
    %7626 = vmatprep.subr.bf16.mxu0 0
    %7627 = vmatpush1.bf16.msra.mxu0 0
    %7628 = vmatprep.subr.bf16.mxu0 0
    %7629 = vmatpush1.bf16.msra.mxu0 0
    %7630 = vmatprep.subr.bf16.mxu0 0
    %7631 = vmatpush1.bf16.msra.mxu0 0
    %7632 = vmatprep.subr.bf16.mxu0 0
    %7633 = vmatpush1.bf16.msra.mxu0 0
    %7634 = vmatprep.subr.bf16.mxu0 0
    %7635 = vmatpush1.bf16.msra.mxu0 0
    %7636 = vmatprep.subr.bf16.mxu0 0
    %7637 = vmatpush1.bf16.msra.mxu0 0
    %7638 = vmatprep.subr.bf16.mxu0 0
    %7639 = vmatpush1.bf16.msra.mxu0 0
    %7640 = vmatprep.subr.bf16.mxu0 0
    %7641 = vmatpush1.bf16.msra.mxu0 0
    %7642 = vmatprep.subr.bf16.mxu0 0
    %7643 = vmatpush1.bf16.msra.mxu0 0
    %7644 = vmatprep.subr.bf16.mxu0 0
    %7645 = vmatpush1.bf16.msra.mxu0 0
    %7646 = vmatprep.subr.bf16.mxu0 0
    %7647 = vmatpush1.bf16.msra.mxu0 0
    %7648 = vmatprep.mubr.bf16.mxu0 0
    %7649 = vmatmul.mubr.bf16.gmra.mrb[0].mxu0 %v7605
    %v7650 = vpop.f32.mrb[0].mxu0
    %v7651 = vadd.f32 0.0, %v7650
    %v7652 = vpop.f32.mrb[0].mxu0
    %v7653 = vpop.f32.mrb[0].mxu0
    %v7654 = vadd.f32 0.0, %v7653
    %v7655 = vpop.f32.mrb[0].mxu0
    %7656 = vmatprep.mubr.bf16.mxu0 0
    %7657 = vmatmul.mubr.bf16.gmra.mrb[0].mxu0 %v7608
    %v7658 = vpop.f32.mrb[0].mxu0
    %v7659 = vadd.f32 0.0, %v7658
    %v7660 = vpop.f32.mrb[0].mxu0
    %v7661 = vpop.f32.mrb[0].mxu0
    %v7662 = vadd.f32 0.0, %v7661
    %v7663 = vpop.f32.mrb[0].mxu0
    %7664 = vmatprep.mubr.bf16.mxu0 0
    %7665 = vmatmul.mubr.bf16.gmra.mrb[0].mxu0 %v7611
    %v7666 = vpop.f32.mrb[0].mxu0
    %v7667 = vadd.f32 0.0, %v7666
    %v7668 = vpop.f32.mrb[0].mxu0
    %v7669 = vpop.f32.mrb[0].mxu0
    %v7670 = vadd.f32 0.0, %v7669
    %v7671 = vpop.f32.mrb[0].mxu0
    %7672 = vmatprep.mubr.bf16.mxu0 0
    %7673 = vmatmul.mubr.bf16.gmra.mrb[0].mxu0 %v7614
    %v7674 = vpop.f32.mrb[0].mxu0
    %v7675 = vadd.f32 0.0, %v7674
    %v7676 = vpop.f32.mrb[0].mxu0
    %v7677 = vpop.f32.mrb[0].mxu0
    %v7678 = vadd.f32 0.0, %v7677
    %v7679 = vpop.f32.mrb[0].mxu0
    %7680 = vdwg.mxu0
    %v7681 = vpack.c.bf16 %v7654, %v7651
    %v7682 = vpack.c.bf16 %v7662, %v7659
    %v7683 = vpack.c.bf16 %v7670, %v7667
    %v7684 = vpack.c.bf16 %v7678, %v7675
    %s7685 = scalar_lea.vmem [#allocation19], 64
    %v7686 = vld [vmem:[%s7685] sm:$0xf]
    %v7687 = vld [vmem:[%s7685 + $0x4] sm:$0xf]
    %v7688 = vld [vmem:[%s7685 + $0x8] sm:$0xf]
    %v7689 = vld [vmem:[%s7685 + $0xc] sm:$0xf]
    %v7694 = vunpack.c.l.b16 %v7686
    %v7695 = vunpack.c.l.b16 %v7687
    %v7696 = vunpack.c.l.b16 %v7688
    %v7697 = vunpack.c.l.b16 %v7689
    %v7698 = vpack.c.b16 %v7695, %v7694
    %v7699 = vpack.c.b16 %v7697, %v7696
    %v7703 = vsel %vm3455, %v7681, 0
    %v7706 = vsel %vm3455, %v7682, 0
    %v7709 = vsel %vm3455, %v7683, 0
    %v7712 = vsel %vm3455, %v7684, 0
    %7714 = vmatprep.subr.bf16.mxu0 0
    %7715 = vmatpush1.bf16.msra.mxu0 %v7698
    %7716 = vmatprep.subr.bf16.mxu0 0
    %7717 = vmatpush1.bf16.msra.mxu0 %v7699
    %7718 = vmatprep.subr.bf16.mxu0 0
    %7719 = vmatpush1.bf16.msra.mxu0 0
    %7720 = vmatprep.subr.bf16.mxu0 0
    %7721 = vmatpush1.bf16.msra.mxu0 0
    %7722 = vmatprep.subr.bf16.mxu0 0
    %7723 = vmatpush1.bf16.msra.mxu0 0
    %7724 = vmatprep.subr.bf16.mxu0 0
    %7725 = vmatpush1.bf16.msra.mxu0 0
    %7726 = vmatprep.subr.bf16.mxu0 0
    %7727 = vmatpush1.bf16.msra.mxu0 0
    %7728 = vmatprep.subr.bf16.mxu0 0
    %7729 = vmatpush1.bf16.msra.mxu0 0
    %7730 = vmatprep.subr.bf16.mxu0 0
    %7731 = vmatpush1.bf16.msra.mxu0 0
    %7732 = vmatprep.subr.bf16.mxu0 0
    %7733 = vmatpush1.bf16.msra.mxu0 0
    %7734 = vmatprep.subr.bf16.mxu0 0
    %7735 = vmatpush1.bf16.msra.mxu0 0
    %7736 = vmatprep.subr.bf16.mxu0 0
    %7737 = vmatpush1.bf16.msra.mxu0 0
    %7738 = vmatprep.subr.bf16.mxu0 0
    %7739 = vmatpush1.bf16.msra.mxu0 0
    %7740 = vmatprep.subr.bf16.mxu0 0
    %7741 = vmatpush1.bf16.msra.mxu0 0
    %7742 = vmatprep.subr.bf16.mxu0 0
    %7743 = vmatpush1.bf16.msra.mxu0 0
    %7744 = vmatprep.subr.bf16.mxu0 0
    %7745 = vmatpush1.bf16.msra.mxu0 0
    %7746 = vmatprep.mubr.bf16.mxu0 0
    %7747 = vmatmul.mubr.bf16.gmra.mrb[0].mxu0 %v7703
    %v7748 = vpop.f32.mrb[0].mxu0
    %v7749 = vadd.f32 0.0, %v7748
    %v7750 = vpop.f32.mrb[0].mxu0
    %v7751 = vpop.f32.mrb[0].mxu0
    %v7752 = vadd.f32 0.0, %v7751
    %v7753 = vpop.f32.mrb[0].mxu0
    %7754 = vmatprep.mubr.bf16.mxu0 0
    %7755 = vmatmul.mubr.bf16.gmra.mrb[0].mxu0 %v7706
    %v7756 = vpop.f32.mrb[0].mxu0
    %v7757 = vadd.f32 0.0, %v7756
    %v7758 = vpop.f32.mrb[0].mxu0
    %v7759 = vpop.f32.mrb[0].mxu0
    %v7760 = vadd.f32 0.0, %v7759
    %v7761 = vpop.f32.mrb[0].mxu0
    %7762 = vmatprep.mubr.bf16.mxu0 0
    %7763 = vmatmul.mubr.bf16.gmra.mrb[0].mxu0 %v7709
    %v7764 = vpop.f32.mrb[0].mxu0
    %v7765 = vadd.f32 0.0, %v7764
    %v7766 = vpop.f32.mrb[0].mxu0
    %v7767 = vpop.f32.mrb[0].mxu0
    %v7768 = vadd.f32 0.0, %v7767
    %v7769 = vpop.f32.mrb[0].mxu0
    %7770 = vmatprep.mubr.bf16.mxu0 0
    %7771 = vmatmul.mubr.bf16.gmra.mrb[0].mxu0 %v7712
    %v7772 = vpop.f32.mrb[0].mxu0
    %v7773 = vadd.f32 0.0, %v7772
    %v7774 = vpop.f32.mrb[0].mxu0
    %v7775 = vpop.f32.mrb[0].mxu0
    %v7776 = vadd.f32 0.0, %v7775
    %v7777 = vpop.f32.mrb[0].mxu0
    %7778 = vdwg.mxu0
    %v7779 = vadd.f32 %v7567, %v7749
    %v7780 = vadd.f32 %v7568, %v7752
    %v7781 = vadd.f32 %v7569, %v7757
    %v7782 = vadd.f32 %v7570, %v7760
    %v7783 = vadd.f32 %v7571, %v7765
    %v7784 = vadd.f32 %v7572, %v7768
    %v7785 = vadd.f32 %v7573, %v7773
    %v7786 = vadd.f32 %v7574, %v7776
    %s7787 = scalar_lea.vmem [#allocation18], 160
    %v7788 = vld [vmem:[%s7787] sm:$0xf]
    %v7789 = vld [vmem:[%s7787 + $0x4] sm:$0xf]
    %v7790 = vld [vmem:[%s7787 + $0x8] sm:$0xf]
    %v7791 = vld [vmem:[%s7787 + $0xc] sm:$0xf]
    %v7792 = vld [vmem:[%s7787 + $0x10] sm:$0xf]
    %v7793 = vld [vmem:[%s7787 + $0x14] sm:$0xf]
    %v7794 = vld [vmem:[%s7787 + $0x18] sm:$0xf]
    %v7795 = vld [vmem:[%s7787 + $0x1c] sm:$0xf]
    %v7804 = vunpack.c.l.b16 %v7788
    %v7805 = vunpack.c.l.b16 %v7789
    %v7806 = vunpack.c.l.b16 %v7790
    %v7807 = vunpack.c.l.b16 %v7791
    %v7808 = vunpack.c.l.b16 %v7792
    %v7809 = vunpack.c.l.b16 %v7793
    %v7810 = vunpack.c.l.b16 %v7794
    %v7811 = vunpack.c.l.b16 %v7795
    %v7812 = vpack.c.b16 %v7805, %v7804
    %v7813 = vpack.c.b16 %v7807, %v7806
    %v7814 = vpack.c.b16 %v7809, %v7808
    %v7815 = vpack.c.b16 %v7811, %v7810
    %v7817 = vsel %vm2370, %v7812, 0
    %v7820 = vsel %vm2370, %v7813, 0
    %v7823 = vsel %vm2370, %v7814, 0
    %v7826 = vsel %vm2370, %v7815, 0
    %7828 = vmatprep.subr.bf16.mxu0 0
    %7829 = vmatpush1.bf16.msra.mxu0 %v6741
    %7830 = vmatprep.subr.bf16.mxu0 0
    %7831 = vmatpush1.bf16.msra.mxu0 %v6742
    %7832 = vmatprep.subr.bf16.mxu0 0
    %7833 = vmatpush1.bf16.msra.mxu0 %v6743
    %7834 = vmatprep.subr.bf16.mxu0 0
    %7835 = vmatpush1.bf16.msra.mxu0 %v6744
    %7836 = vmatprep.subr.bf16.mxu0 0
    %7837 = vmatpush1.bf16.msra.mxu0 0
    %7838 = vmatprep.subr.bf16.mxu0 0
    %7839 = vmatpush1.bf16.msra.mxu0 0
    %7840 = vmatprep.subr.bf16.mxu0 0
    %7841 = vmatpush1.bf16.msra.mxu0 0
    %7842 = vmatprep.subr.bf16.mxu0 0
    %7843 = vmatpush1.bf16.msra.mxu0 0
    %7844 = vmatprep.subr.bf16.mxu0 0
    %7845 = vmatpush1.bf16.msra.mxu0 0
    %7846 = vmatprep.subr.bf16.mxu0 0
    %7847 = vmatpush1.bf16.msra.mxu0 0
    %7848 = vmatprep.subr.bf16.mxu0 0
    %7849 = vmatpush1.bf16.msra.mxu0 0
    %7850 = vmatprep.subr.bf16.mxu0 0
    %7851 = vmatpush1.bf16.msra.mxu0 0
    %7852 = vmatprep.subr.bf16.mxu0 0
    %7853 = vmatpush1.bf16.msra.mxu0 0
    %7854 = vmatprep.subr.bf16.mxu0 0
    %7855 = vmatpush1.bf16.msra.mxu0 0
    %7856 = vmatprep.subr.bf16.mxu0 0
    %7857 = vmatpush1.bf16.msra.mxu0 0
    %7858 = vmatprep.subr.bf16.mxu0 0
    %7859 = vmatpush1.bf16.msra.mxu0 0
    %7860 = vmatprep.mubr.bf16.mxu0 0
    %7861 = vmatmul.mubr.bf16.gmra.mrb[0].mxu0 %v7817
    %v7862 = vpop.f32.mrb[0].mxu0
    %v7863 = vadd.f32 0.0, %v7862
    %v7864 = vpop.f32.mrb[0].mxu0
    %v7865 = vpop.f32.mrb[0].mxu0
    %v7866 = vadd.f32 0.0, %v7865
    %v7867 = vpop.f32.mrb[0].mxu0
    %7868 = vmatprep.mubr.bf16.mxu0 0
    %7869 = vmatmul.mubr.bf16.gmra.mrb[0].mxu0 %v7820
    %v7870 = vpop.f32.mrb[0].mxu0
    %v7871 = vadd.f32 0.0, %v7870
    %v7872 = vpop.f32.mrb[0].mxu0
    %v7873 = vpop.f32.mrb[0].mxu0
    %v7874 = vadd.f32 0.0, %v7873
    %v7875 = vpop.f32.mrb[0].mxu0
    %7876 = vmatprep.mubr.bf16.mxu0 0
    %7877 = vmatmul.mubr.bf16.gmra.mrb[0].mxu0 %v7823
    %v7878 = vpop.f32.mrb[0].mxu0
    %v7879 = vadd.f32 0.0, %v7878
    %v7880 = vpop.f32.mrb[0].mxu0
    %v7881 = vpop.f32.mrb[0].mxu0
    %v7882 = vadd.f32 0.0, %v7881
    %v7883 = vpop.f32.mrb[0].mxu0
    %7884 = vmatprep.mubr.bf16.mxu0 0
    %7885 = vmatmul.mubr.bf16.gmra.mrb[0].mxu0 %v7826
    %v7886 = vpop.f32.mrb[0].mxu0
    %v7887 = vadd.f32 0.0, %v7886
    %v7888 = vpop.f32.mrb[0].mxu0
    %v7889 = vpop.f32.mrb[0].mxu0
    %v7890 = vadd.f32 0.0, %v7889
    %v7891 = vpop.f32.mrb[0].mxu0
    %7892 = vdwg.mxu0
    %v7893 = vpack.c.bf16 %v7866, %v7863
    %v7894 = vpack.c.bf16 %v7874, %v7871
    %v7895 = vpack.c.bf16 %v7882, %v7879
    %v7896 = vpack.c.bf16 %v7890, %v7887
    %s7897 = scalar_lea.vmem [#allocation19], 80
    %v7898 = vld [vmem:[%s7897] sm:$0xf]
    %v7899 = vld [vmem:[%s7897 + $0x4] sm:$0xf]
    %v7900 = vld [vmem:[%s7897 + $0x8] sm:$0xf]
    %v7901 = vld [vmem:[%s7897 + $0xc] sm:$0xf]
    %v7906 = vunpack.c.l.b16 %v7898
    %v7907 = vunpack.c.l.b16 %v7899
    %v7908 = vunpack.c.l.b16 %v7900
    %v7909 = vunpack.c.l.b16 %v7901
    %v7910 = vpack.c.b16 %v7907, %v7906
    %v7911 = vpack.c.b16 %v7909, %v7908
    %v7915 = vsel %vm3455, %v7893, 0
    %v7918 = vsel %vm3455, %v7894, 0
    %v7921 = vsel %vm3455, %v7895, 0
    %v7924 = vsel %vm3455, %v7896, 0
    %7926 = vmatprep.subr.bf16.mxu0 0
    %7927 = vmatpush1.bf16.msra.mxu0 %v7910
    %7928 = vmatprep.subr.bf16.mxu0 0
    %7929 = vmatpush1.bf16.msra.mxu0 %v7911
    %7930 = vmatprep.subr.bf16.mxu0 0
    %7931 = vmatpush1.bf16.msra.mxu0 0
    %7932 = vmatprep.subr.bf16.mxu0 0
    %7933 = vmatpush1.bf16.msra.mxu0 0
    %7934 = vmatprep.subr.bf16.mxu0 0
    %7935 = vmatpush1.bf16.msra.mxu0 0
    %7936 = vmatprep.subr.bf16.mxu0 0
    %7937 = vmatpush1.bf16.msra.mxu0 0
    %7938 = vmatprep.subr.bf16.mxu0 0
    %7939 = vmatpush1.bf16.msra.mxu0 0
    %7940 = vmatprep.subr.bf16.mxu0 0
    %7941 = vmatpush1.bf16.msra.mxu0 0
    %7942 = vmatprep.subr.bf16.mxu0 0
    %7943 = vmatpush1.bf16.msra.mxu0 0
    %7944 = vmatprep.subr.bf16.mxu0 0
    %7945 = vmatpush1.bf16.msra.mxu0 0
    %7946 = vmatprep.subr.bf16.mxu0 0
    %7947 = vmatpush1.bf16.msra.mxu0 0
    %7948 = vmatprep.subr.bf16.mxu0 0
    %7949 = vmatpush1.bf16.msra.mxu0 0
    %7950 = vmatprep.subr.bf16.mxu0 0
    %7951 = vmatpush1.bf16.msra.mxu0 0
    %7952 = vmatprep.subr.bf16.mxu0 0
    %7953 = vmatpush1.bf16.msra.mxu0 0
    %7954 = vmatprep.subr.bf16.mxu0 0
    %7955 = vmatpush1.bf16.msra.mxu0 0
    %7956 = vmatprep.subr.bf16.mxu0 0
    %7957 = vmatpush1.bf16.msra.mxu0 0
    %7958 = vmatprep.mubr.bf16.mxu0 0
    %7959 = vmatmul.mubr.bf16.gmra.mrb[0].mxu0 %v7915
    %v7960 = vpop.f32.mrb[0].mxu0
    %v7961 = vadd.f32 0.0, %v7960
    %v7962 = vpop.f32.mrb[0].mxu0
    %v7963 = vpop.f32.mrb[0].mxu0
    %v7964 = vadd.f32 0.0, %v7963
    %v7965 = vpop.f32.mrb[0].mxu0
    %7966 = vmatprep.mubr.bf16.mxu0 0
    %7967 = vmatmul.mubr.bf16.gmra.mrb[0].mxu0 %v7918
    %v7968 = vpop.f32.mrb[0].mxu0
    %v7969 = vadd.f32 0.0, %v7968
    %v7970 = vpop.f32.mrb[0].mxu0
    %v7971 = vpop.f32.mrb[0].mxu0
    %v7972 = vadd.f32 0.0, %v7971
    %v7973 = vpop.f32.mrb[0].mxu0
    %7974 = vmatprep.mubr.bf16.mxu0 0
    %7975 = vmatmul.mubr.bf16.gmra.mrb[0].mxu0 %v7921
    %v7976 = vpop.f32.mrb[0].mxu0
    %v7977 = vadd.f32 0.0, %v7976
    %v7978 = vpop.f32.mrb[0].mxu0
    %v7979 = vpop.f32.mrb[0].mxu0
    %v7980 = vadd.f32 0.0, %v7979
    %v7981 = vpop.f32.mrb[0].mxu0
    %7982 = vmatprep.mubr.bf16.mxu0 0
    %7983 = vmatmul.mubr.bf16.gmra.mrb[0].mxu0 %v7924
    %v7984 = vpop.f32.mrb[0].mxu0
    %v7985 = vadd.f32 0.0, %v7984
    %v7986 = vpop.f32.mrb[0].mxu0
    %v7987 = vpop.f32.mrb[0].mxu0
    %v7988 = vadd.f32 0.0, %v7987
    %v7989 = vpop.f32.mrb[0].mxu0
    %7990 = vdwg.mxu0
    %v7991 = vadd.f32 %v7779, %v7961
    %v7992 = vadd.f32 %v7780, %v7964
    %v7993 = vadd.f32 %v7781, %v7969
    %v7994 = vadd.f32 %v7782, %v7972
    %v7995 = vadd.f32 %v7783, %v7977
    %v7996 = vadd.f32 %v7784, %v7980
    %v7997 = vadd.f32 %v7785, %v7985
    %v7998 = vadd.f32 %v7786, %v7988
    %s7999 = scalar_lea.vmem [#allocation18], 192
    %v8000 = vld [vmem:[%s7999] sm:$0xf]
    %v8001 = vld [vmem:[%s7999 + $0x4] sm:$0xf]
    %v8002 = vld [vmem:[%s7999 + $0x8] sm:$0xf]
    %v8003 = vld [vmem:[%s7999 + $0xc] sm:$0xf]
    %v8004 = vld [vmem:[%s7999 + $0x10] sm:$0xf]
    %v8005 = vld [vmem:[%s7999 + $0x14] sm:$0xf]
    %v8006 = vld [vmem:[%s7999 + $0x18] sm:$0xf]
    %v8007 = vld [vmem:[%s7999 + $0x1c] sm:$0xf]
    %v8016 = vunpack.c.l.b16 %v8000
    %v8017 = vunpack.c.l.b16 %v8001
    %v8018 = vunpack.c.l.b16 %v8002
    %v8019 = vunpack.c.l.b16 %v8003
    %v8020 = vunpack.c.l.b16 %v8004
    %v8021 = vunpack.c.l.b16 %v8005
    %v8022 = vunpack.c.l.b16 %v8006
    %v8023 = vunpack.c.l.b16 %v8007
    %v8024 = vpack.c.b16 %v8017, %v8016
    %v8025 = vpack.c.b16 %v8019, %v8018
    %v8026 = vpack.c.b16 %v8021, %v8020
    %v8027 = vpack.c.b16 %v8023, %v8022
    %v8029 = vsel %vm2370, %v8024, 0
    %v8032 = vsel %vm2370, %v8025, 0
    %v8035 = vsel %vm2370, %v8026, 0
    %v8038 = vsel %vm2370, %v8027, 0
    %8040 = vmatprep.subr.bf16.mxu0 0
    %8041 = vmatpush1.bf16.msra.mxu0 %v6741
    %8042 = vmatprep.subr.bf16.mxu0 0
    %8043 = vmatpush1.bf16.msra.mxu0 %v6742
    %8044 = vmatprep.subr.bf16.mxu0 0
    %8045 = vmatpush1.bf16.msra.mxu0 %v6743
    %8046 = vmatprep.subr.bf16.mxu0 0
    %8047 = vmatpush1.bf16.msra.mxu0 %v6744
    %8048 = vmatprep.subr.bf16.mxu0 0
    %8049 = vmatpush1.bf16.msra.mxu0 0
    %8050 = vmatprep.subr.bf16.mxu0 0
    %8051 = vmatpush1.bf16.msra.mxu0 0
    %8052 = vmatprep.subr.bf16.mxu0 0
    %8053 = vmatpush1.bf16.msra.mxu0 0
    %8054 = vmatprep.subr.bf16.mxu0 0
    %8055 = vmatpush1.bf16.msra.mxu0 0
    %8056 = vmatprep.subr.bf16.mxu0 0
    %8057 = vmatpush1.bf16.msra.mxu0 0
    %8058 = vmatprep.subr.bf16.mxu0 0
    %8059 = vmatpush1.bf16.msra.mxu0 0
    %8060 = vmatprep.subr.bf16.mxu0 0
    %8061 = vmatpush1.bf16.msra.mxu0 0
    %8062 = vmatprep.subr.bf16.mxu0 0
    %8063 = vmatpush1.bf16.msra.mxu0 0
    %8064 = vmatprep.subr.bf16.mxu0 0
    %8065 = vmatpush1.bf16.msra.mxu0 0
    %8066 = vmatprep.subr.bf16.mxu0 0
    %8067 = vmatpush1.bf16.msra.mxu0 0
    %8068 = vmatprep.subr.bf16.mxu0 0
    %8069 = vmatpush1.bf16.msra.mxu0 0
    %8070 = vmatprep.subr.bf16.mxu0 0
    %8071 = vmatpush1.bf16.msra.mxu0 0
    %8072 = vmatprep.mubr.bf16.mxu0 0
    %8073 = vmatmul.mubr.bf16.gmra.mrb[0].mxu0 %v8029
    %v8074 = vpop.f32.mrb[0].mxu0
    %v8075 = vadd.f32 0.0, %v8074
    %v8076 = vpop.f32.mrb[0].mxu0
    %v8077 = vpop.f32.mrb[0].mxu0
    %v8078 = vadd.f32 0.0, %v8077
    %v8079 = vpop.f32.mrb[0].mxu0
    %8080 = vmatprep.mubr.bf16.mxu0 0
    %8081 = vmatmul.mubr.bf16.gmra.mrb[0].mxu0 %v8032
    %v8082 = vpop.f32.mrb[0].mxu0
    %v8083 = vadd.f32 0.0, %v8082
    %v8084 = vpop.f32.mrb[0].mxu0
    %v8085 = vpop.f32.mrb[0].mxu0
    %v8086 = vadd.f32 0.0, %v8085
    %v8087 = vpop.f32.mrb[0].mxu0
    %8088 = vmatprep.mubr.bf16.mxu0 0
    %8089 = vmatmul.mubr.bf16.gmra.mrb[0].mxu0 %v8035
    %v8090 = vpop.f32.mrb[0].mxu0
    %v8091 = vadd.f32 0.0, %v8090
    %v8092 = vpop.f32.mrb[0].mxu0
    %v8093 = vpop.f32.mrb[0].mxu0
    %v8094 = vadd.f32 0.0, %v8093
    %v8095 = vpop.f32.mrb[0].mxu0
    %8096 = vmatprep.mubr.bf16.mxu0 0
    %8097 = vmatmul.mubr.bf16.gmra.mrb[0].mxu0 %v8038
    %v8098 = vpop.f32.mrb[0].mxu0
    %v8099 = vadd.f32 0.0, %v8098
    %v8100 = vpop.f32.mrb[0].mxu0
    %v8101 = vpop.f32.mrb[0].mxu0
    %v8102 = vadd.f32 0.0, %v8101
    %v8103 = vpop.f32.mrb[0].mxu0
    %8104 = vdwg.mxu0
    %v8105 = vpack.c.bf16 %v8078, %v8075
    %v8106 = vpack.c.bf16 %v8086, %v8083
    %v8107 = vpack.c.bf16 %v8094, %v8091
    %v8108 = vpack.c.bf16 %v8102, %v8099
    %s8109 = scalar_lea.vmem [#allocation19], 96
    %v8110 = vld [vmem:[%s8109] sm:$0xf]
    %v8111 = vld [vmem:[%s8109 + $0x4] sm:$0xf]
    %v8112 = vld [vmem:[%s8109 + $0x8] sm:$0xf]
    %v8113 = vld [vmem:[%s8109 + $0xc] sm:$0xf]
    %v8118 = vunpack.c.l.b16 %v8110
    %v8119 = vunpack.c.l.b16 %v8111
    %v8120 = vunpack.c.l.b16 %v8112
    %v8121 = vunpack.c.l.b16 %v8113
    %v8122 = vpack.c.b16 %v8119, %v8118
    %v8123 = vpack.c.b16 %v8121, %v8120
    %v8127 = vsel %vm3455, %v8105, 0
    %v8130 = vsel %vm3455, %v8106, 0
    %v8133 = vsel %vm3455, %v8107, 0
    %v8136 = vsel %vm3455, %v8108, 0
    %8138 = vmatprep.subr.bf16.mxu0 0
    %8139 = vmatpush1.bf16.msra.mxu0 %v8122
    %8140 = vmatprep.subr.bf16.mxu0 0
    %8141 = vmatpush1.bf16.msra.mxu0 %v8123
    %8142 = vmatprep.subr.bf16.mxu0 0
    %8143 = vmatpush1.bf16.msra.mxu0 0
    %8144 = vmatprep.subr.bf16.mxu0 0
    %8145 = vmatpush1.bf16.msra.mxu0 0
    %8146 = vmatprep.subr.bf16.mxu0 0
    %8147 = vmatpush1.bf16.msra.mxu0 0
    %8148 = vmatprep.subr.bf16.mxu0 0
    %8149 = vmatpush1.bf16.msra.mxu0 0
    %8150 = vmatprep.subr.bf16.mxu0 0
    %8151 = vmatpush1.bf16.msra.mxu0 0
    %8152 = vmatprep.subr.bf16.mxu0 0
    %8153 = vmatpush1.bf16.msra.mxu0 0
    %8154 = vmatprep.subr.bf16.mxu0 0
    %8155 = vmatpush1.bf16.msra.mxu0 0
    %8156 = vmatprep.subr.bf16.mxu0 0
    %8157 = vmatpush1.bf16.msra.mxu0 0
    %8158 = vmatprep.subr.bf16.mxu0 0
    %8159 = vmatpush1.bf16.msra.mxu0 0
    %8160 = vmatprep.subr.bf16.mxu0 0
    %8161 = vmatpush1.bf16.msra.mxu0 0
    %8162 = vmatprep.subr.bf16.mxu0 0
    %8163 = vmatpush1.bf16.msra.mxu0 0
    %8164 = vmatprep.subr.bf16.mxu0 0
    %8165 = vmatpush1.bf16.msra.mxu0 0
    %8166 = vmatprep.subr.bf16.mxu0 0
    %8167 = vmatpush1.bf16.msra.mxu0 0
    %8168 = vmatprep.subr.bf16.mxu0 0
    %8169 = vmatpush1.bf16.msra.mxu0 0
    %8170 = vmatprep.mubr.bf16.mxu0 0
    %8171 = vmatmul.mubr.bf16.gmra.mrb[0].mxu0 %v8127
    %v8172 = vpop.f32.mrb[0].mxu0
    %v8173 = vadd.f32 0.0, %v8172
    %v8174 = vpop.f32.mrb[0].mxu0
    %v8175 = vpop.f32.mrb[0].mxu0
    %v8176 = vadd.f32 0.0, %v8175
    %v8177 = vpop.f32.mrb[0].mxu0
    %8178 = vmatprep.mubr.bf16.mxu0 0
    %8179 = vmatmul.mubr.bf16.gmra.mrb[0].mxu0 %v8130
    %v8180 = vpop.f32.mrb[0].mxu0
    %v8181 = vadd.f32 0.0, %v8180
    %v8182 = vpop.f32.mrb[0].mxu0
    %v8183 = vpop.f32.mrb[0].mxu0
    %v8184 = vadd.f32 0.0, %v8183
    %v8185 = vpop.f32.mrb[0].mxu0
    %8186 = vmatprep.mubr.bf16.mxu0 0
    %8187 = vmatmul.mubr.bf16.gmra.mrb[0].mxu0 %v8133
    %v8188 = vpop.f32.mrb[0].mxu0
    %v8189 = vadd.f32 0.0, %v8188
    %v8190 = vpop.f32.mrb[0].mxu0
    %v8191 = vpop.f32.mrb[0].mxu0
    %v8192 = vadd.f32 0.0, %v8191
    %v8193 = vpop.f32.mrb[0].mxu0
    %8194 = vmatprep.mubr.bf16.mxu0 0
    %8195 = vmatmul.mubr.bf16.gmra.mrb[0].mxu0 %v8136
    %v8196 = vpop.f32.mrb[0].mxu0
    %v8197 = vadd.f32 0.0, %v8196
    %v8198 = vpop.f32.mrb[0].mxu0
    %v8199 = vpop.f32.mrb[0].mxu0
    %v8200 = vadd.f32 0.0, %v8199
    %v8201 = vpop.f32.mrb[0].mxu0
    %8202 = vdwg.mxu0
    %v8203 = vadd.f32 %v7991, %v8173
    %v8204 = vadd.f32 %v7992, %v8176
    %v8205 = vadd.f32 %v7993, %v8181
    %v8206 = vadd.f32 %v7994, %v8184
    %v8207 = vadd.f32 %v7995, %v8189
    %v8208 = vadd.f32 %v7996, %v8192
    %v8209 = vadd.f32 %v7997, %v8197
    %v8210 = vadd.f32 %v7998, %v8200
    %s8211 = scalar_lea.vmem [#allocation18], 224
    %v8212 = vld [vmem:[%s8211] sm:$0xf]
    %v8213 = vld [vmem:[%s8211 + $0x4] sm:$0xf]
    %v8214 = vld [vmem:[%s8211 + $0x8] sm:$0xf]
    %v8215 = vld [vmem:[%s8211 + $0xc] sm:$0xf]
    %v8216 = vld [vmem:[%s8211 + $0x10] sm:$0xf]
    %v8217 = vld [vmem:[%s8211 + $0x14] sm:$0xf]
    %v8218 = vld [vmem:[%s8211 + $0x18] sm:$0xf]
    %v8219 = vld [vmem:[%s8211 + $0x1c] sm:$0xf]
    %v8228 = vunpack.c.l.b16 %v8212
    %v8229 = vunpack.c.l.b16 %v8213
    %v8230 = vunpack.c.l.b16 %v8214
    %v8231 = vunpack.c.l.b16 %v8215
    %v8232 = vunpack.c.l.b16 %v8216
    %v8233 = vunpack.c.l.b16 %v8217
    %v8234 = vunpack.c.l.b16 %v8218
    %v8235 = vunpack.c.l.b16 %v8219
    %v8236 = vpack.c.b16 %v8229, %v8228
    %v8237 = vpack.c.b16 %v8231, %v8230
    %v8238 = vpack.c.b16 %v8233, %v8232
    %v8239 = vpack.c.b16 %v8235, %v8234
    %v8241 = vsel %vm2370, %v8236, 0
    %v8244 = vsel %vm2370, %v8237, 0
    %v8247 = vsel %vm2370, %v8238, 0
    %v8250 = vsel %vm2370, %v8239, 0
    %8252 = vmatprep.subr.bf16.mxu0 0
    %8253 = vmatpush1.bf16.msra.mxu0 %v6741
    %8254 = vmatprep.subr.bf16.mxu0 0
    %8255 = vmatpush1.bf16.msra.mxu0 %v6742
    %8256 = vmatprep.subr.bf16.mxu0 0
    %8257 = vmatpush1.bf16.msra.mxu0 %v6743
    %8258 = vmatprep.subr.bf16.mxu0 0
    %8259 = vmatpush1.bf16.msra.mxu0 %v6744
    %8260 = vmatprep.subr.bf16.mxu0 0
    %8261 = vmatpush1.bf16.msra.mxu0 0
    %8262 = vmatprep.subr.bf16.mxu0 0
    %8263 = vmatpush1.bf16.msra.mxu0 0
    %8264 = vmatprep.subr.bf16.mxu0 0
    %8265 = vmatpush1.bf16.msra.mxu0 0
    %8266 = vmatprep.subr.bf16.mxu0 0
    %8267 = vmatpush1.bf16.msra.mxu0 0
    %8268 = vmatprep.subr.bf16.mxu0 0
    %8269 = vmatpush1.bf16.msra.mxu0 0
    %8270 = vmatprep.subr.bf16.mxu0 0
    %8271 = vmatpush1.bf16.msra.mxu0 0
    %8272 = vmatprep.subr.bf16.mxu0 0
    %8273 = vmatpush1.bf16.msra.mxu0 0
    %8274 = vmatprep.subr.bf16.mxu0 0
    %8275 = vmatpush1.bf16.msra.mxu0 0
    %8276 = vmatprep.subr.bf16.mxu0 0
    %8277 = vmatpush1.bf16.msra.mxu0 0
    %8278 = vmatprep.subr.bf16.mxu0 0
    %8279 = vmatpush1.bf16.msra.mxu0 0
    %8280 = vmatprep.subr.bf16.mxu0 0
    %8281 = vmatpush1.bf16.msra.mxu0 0
    %8282 = vmatprep.subr.bf16.mxu0 0
    %8283 = vmatpush1.bf16.msra.mxu0 0
    %8284 = vmatprep.mubr.bf16.mxu0 0
    %8285 = vmatmul.mubr.bf16.gmra.mrb[0].mxu0 %v8241
    %v8286 = vpop.f32.mrb[0].mxu0
    %v8287 = vadd.f32 0.0, %v8286
    %v8288 = vpop.f32.mrb[0].mxu0
    %v8289 = vpop.f32.mrb[0].mxu0
    %v8290 = vadd.f32 0.0, %v8289
    %v8291 = vpop.f32.mrb[0].mxu0
    %8292 = vmatprep.mubr.bf16.mxu0 0
    %8293 = vmatmul.mubr.bf16.gmra.mrb[0].mxu0 %v8244
    %v8294 = vpop.f32.mrb[0].mxu0
    %v8295 = vadd.f32 0.0, %v8294
    %v8296 = vpop.f32.mrb[0].mxu0
    %v8297 = vpop.f32.mrb[0].mxu0
    %v8298 = vadd.f32 0.0, %v8297
    %v8299 = vpop.f32.mrb[0].mxu0
    %8300 = vmatprep.mubr.bf16.mxu0 0
    %8301 = vmatmul.mubr.bf16.gmra.mrb[0].mxu0 %v8247
    %v8302 = vpop.f32.mrb[0].mxu0
    %v8303 = vadd.f32 0.0, %v8302
    %v8304 = vpop.f32.mrb[0].mxu0
    %v8305 = vpop.f32.mrb[0].mxu0
    %v8306 = vadd.f32 0.0, %v8305
    %v8307 = vpop.f32.mrb[0].mxu0
    %8308 = vmatprep.mubr.bf16.mxu0 0
    %8309 = vmatmul.mubr.bf16.gmra.mrb[0].mxu0 %v8250
    %v8310 = vpop.f32.mrb[0].mxu0
    %v8311 = vadd.f32 0.0, %v8310
    %v8312 = vpop.f32.mrb[0].mxu0
    %v8313 = vpop.f32.mrb[0].mxu0
    %v8314 = vadd.f32 0.0, %v8313
    %v8315 = vpop.f32.mrb[0].mxu0
    %8316 = vdwg.mxu0
    %v8317 = vpack.c.bf16 %v8290, %v8287
    %v8318 = vpack.c.bf16 %v8298, %v8295
    %v8319 = vpack.c.bf16 %v8306, %v8303
    %v8320 = vpack.c.bf16 %v8314, %v8311
    %s8321 = scalar_lea.vmem [#allocation19], 112
    %v8322 = vld [vmem:[%s8321] sm:$0xf]
    %v8323 = vld [vmem:[%s8321 + $0x4] sm:$0xf]
    %v8324 = vld [vmem:[%s8321 + $0x8] sm:$0xf]
    %v8325 = vld [vmem:[%s8321 + $0xc] sm:$0xf]
    %v8330 = vunpack.c.l.b16 %v8322
    %v8331 = vunpack.c.l.b16 %v8323
    %v8332 = vunpack.c.l.b16 %v8324
    %v8333 = vunpack.c.l.b16 %v8325
    %v8334 = vpack.c.b16 %v8331, %v8330
    %v8335 = vpack.c.b16 %v8333, %v8332
    %v8339 = vsel %vm3455, %v8317, 0
    %v8342 = vsel %vm3455, %v8318, 0
    %v8345 = vsel %vm3455, %v8319, 0
    %v8348 = vsel %vm3455, %v8320, 0
    %8350 = vmatprep.subr.bf16.mxu0 0
    %8351 = vmatpush1.bf16.msra.mxu0 %v8334
    %8352 = vmatprep.subr.bf16.mxu0 0
    %8353 = vmatpush1.bf16.msra.mxu0 %v8335
    %8354 = vmatprep.subr.bf16.mxu0 0
    %8355 = vmatpush1.bf16.msra.mxu0 0
    %8356 = vmatprep.subr.bf16.mxu0 0
    %8357 = vmatpush1.bf16.msra.mxu0 0
    %8358 = vmatprep.subr.bf16.mxu0 0
    %8359 = vmatpush1.bf16.msra.mxu0 0
    %8360 = vmatprep.subr.bf16.mxu0 0
    %8361 = vmatpush1.bf16.msra.mxu0 0
    %8362 = vmatprep.subr.bf16.mxu0 0
    %8363 = vmatpush1.bf16.msra.mxu0 0
    %8364 = vmatprep.subr.bf16.mxu0 0
    %8365 = vmatpush1.bf16.msra.mxu0 0
    %8366 = vmatprep.subr.bf16.mxu0 0
    %8367 = vmatpush1.bf16.msra.mxu0 0
    %8368 = vmatprep.subr.bf16.mxu0 0
    %8369 = vmatpush1.bf16.msra.mxu0 0
    %8370 = vmatprep.subr.bf16.mxu0 0
    %8371 = vmatpush1.bf16.msra.mxu0 0
    %8372 = vmatprep.subr.bf16.mxu0 0
    %8373 = vmatpush1.bf16.msra.mxu0 0
    %8374 = vmatprep.subr.bf16.mxu0 0
    %8375 = vmatpush1.bf16.msra.mxu0 0
    %8376 = vmatprep.subr.bf16.mxu0 0
    %8377 = vmatpush1.bf16.msra.mxu0 0
    %8378 = vmatprep.subr.bf16.mxu0 0
    %8379 = vmatpush1.bf16.msra.mxu0 0
    %8380 = vmatprep.subr.bf16.mxu0 0
    %8381 = vmatpush1.bf16.msra.mxu0 0
    %8382 = vmatprep.mubr.bf16.mxu0 0
    %8383 = vmatmul.mubr.bf16.gmra.mrb[0].mxu0 %v8339
    %v8384 = vpop.f32.mrb[0].mxu0
    %v8385 = vadd.f32 0.0, %v8384
    %v8386 = vpop.f32.mrb[0].mxu0
    %v8387 = vpop.f32.mrb[0].mxu0
    %v8388 = vadd.f32 0.0, %v8387
    %v8389 = vpop.f32.mrb[0].mxu0
    %8390 = vmatprep.mubr.bf16.mxu0 0
    %8391 = vmatmul.mubr.bf16.gmra.mrb[0].mxu0 %v8342
    %v8392 = vpop.f32.mrb[0].mxu0
    %v8393 = vadd.f32 0.0, %v8392
    %v8394 = vpop.f32.mrb[0].mxu0
    %v8395 = vpop.f32.mrb[0].mxu0
    %v8396 = vadd.f32 0.0, %v8395
    %v8397 = vpop.f32.mrb[0].mxu0
    %8398 = vmatprep.mubr.bf16.mxu0 0
    %8399 = vmatmul.mubr.bf16.gmra.mrb[0].mxu0 %v8345
    %v8400 = vpop.f32.mrb[0].mxu0
    %v8401 = vadd.f32 0.0, %v8400
    %v8402 = vpop.f32.mrb[0].mxu0
    %v8403 = vpop.f32.mrb[0].mxu0
    %v8404 = vadd.f32 0.0, %v8403
    %v8405 = vpop.f32.mrb[0].mxu0
    %8406 = vmatprep.mubr.bf16.mxu0 0
    %8407 = vmatmul.mubr.bf16.gmra.mrb[0].mxu0 %v8348
    %v8408 = vpop.f32.mrb[0].mxu0
    %v8409 = vadd.f32 0.0, %v8408
    %v8410 = vpop.f32.mrb[0].mxu0
    %v8411 = vpop.f32.mrb[0].mxu0
    %v8412 = vadd.f32 0.0, %v8411
    %v8413 = vpop.f32.mrb[0].mxu0
    %8414 = vdwg.mxu0
    %v8415 = vadd.f32 %v8203, %v8385
    %v8416 = vadd.f32 %v8204, %v8388
    %v8417 = vadd.f32 %v8205, %v8393
    %v8418 = vadd.f32 %v8206, %v8396
    %v8419 = vadd.f32 %v8207, %v8401
    %v8420 = vadd.f32 %v8208, %v8404
    %v8421 = vadd.f32 %v8209, %v8409
    %v8422 = vadd.f32 %v8210, %v8412
    %s8423 = scalar_lea.vmem [#allocation18], 256
    %v8424 = vld [vmem:[%s8423] sm:$0xf]
    %v8425 = vld [vmem:[%s8423 + $0x4] sm:$0xf]
    %v8426 = vld [vmem:[%s8423 + $0x8] sm:$0xf]
    %v8427 = vld [vmem:[%s8423 + $0xc] sm:$0xf]
    %v8428 = vld [vmem:[%s8423 + $0x10] sm:$0xf]
    %v8429 = vld [vmem:[%s8423 + $0x14] sm:$0xf]
    %v8430 = vld [vmem:[%s8423 + $0x18] sm:$0xf]
    %v8431 = vld [vmem:[%s8423 + $0x1c] sm:$0xf]
    %v8440 = vunpack.c.l.b16 %v8424
    %v8441 = vunpack.c.l.b16 %v8425
    %v8442 = vunpack.c.l.b16 %v8426
    %v8443 = vunpack.c.l.b16 %v8427
    %v8444 = vunpack.c.l.b16 %v8428
    %v8445 = vunpack.c.l.b16 %v8429
    %v8446 = vunpack.c.l.b16 %v8430
    %v8447 = vunpack.c.l.b16 %v8431
    %v8448 = vpack.c.b16 %v8441, %v8440
    %v8449 = vpack.c.b16 %v8443, %v8442
    %v8450 = vpack.c.b16 %v8445, %v8444
    %v8451 = vpack.c.b16 %v8447, %v8446
    %v8453 = vsel %vm2370, %v8448, 0
    %v8456 = vsel %vm2370, %v8449, 0
    %v8459 = vsel %vm2370, %v8450, 0
    %v8462 = vsel %vm2370, %v8451, 0
    %8464 = vmatprep.subr.bf16.mxu0 0
    %8465 = vmatpush1.bf16.msra.mxu0 %v6741
    %8466 = vmatprep.subr.bf16.mxu0 0
    %8467 = vmatpush1.bf16.msra.mxu0 %v6742
    %8468 = vmatprep.subr.bf16.mxu0 0
    %8469 = vmatpush1.bf16.msra.mxu0 %v6743
    %8470 = vmatprep.subr.bf16.mxu0 0
    %8471 = vmatpush1.bf16.msra.mxu0 %v6744
    %8472 = vmatprep.subr.bf16.mxu0 0
    %8473 = vmatpush1.bf16.msra.mxu0 0
    %8474 = vmatprep.subr.bf16.mxu0 0
    %8475 = vmatpush1.bf16.msra.mxu0 0
    %8476 = vmatprep.subr.bf16.mxu0 0
    %8477 = vmatpush1.bf16.msra.mxu0 0
    %8478 = vmatprep.subr.bf16.mxu0 0
    %8479 = vmatpush1.bf16.msra.mxu0 0
    %8480 = vmatprep.subr.bf16.mxu0 0
    %8481 = vmatpush1.bf16.msra.mxu0 0
    %8482 = vmatprep.subr.bf16.mxu0 0
    %8483 = vmatpush1.bf16.msra.mxu0 0
    %8484 = vmatprep.subr.bf16.mxu0 0
    %8485 = vmatpush1.bf16.msra.mxu0 0
    %8486 = vmatprep.subr.bf16.mxu0 0
    %8487 = vmatpush1.bf16.msra.mxu0 0
    %8488 = vmatprep.subr.bf16.mxu0 0
    %8489 = vmatpush1.bf16.msra.mxu0 0
    %8490 = vmatprep.subr.bf16.mxu0 0
    %8491 = vmatpush1.bf16.msra.mxu0 0
    %8492 = vmatprep.subr.bf16.mxu0 0
    %8493 = vmatpush1.bf16.msra.mxu0 0
    %8494 = vmatprep.subr.bf16.mxu0 0
    %8495 = vmatpush1.bf16.msra.mxu0 0
    %8496 = vmatprep.mubr.bf16.mxu0 0
    %8497 = vmatmul.mubr.bf16.gmra.mrb[0].mxu0 %v8453
    %v8498 = vpop.f32.mrb[0].mxu0
    %v8499 = vadd.f32 0.0, %v8498
    %v8500 = vpop.f32.mrb[0].mxu0
    %v8501 = vpop.f32.mrb[0].mxu0
    %v8502 = vadd.f32 0.0, %v8501
    %v8503 = vpop.f32.mrb[0].mxu0
    %8504 = vmatprep.mubr.bf16.mxu0 0
    %8505 = vmatmul.mubr.bf16.gmra.mrb[0].mxu0 %v8456
    %v8506 = vpop.f32.mrb[0].mxu0
    %v8507 = vadd.f32 0.0, %v8506
    %v8508 = vpop.f32.mrb[0].mxu0
    %v8509 = vpop.f32.mrb[0].mxu0
    %v8510 = vadd.f32 0.0, %v8509
    %v8511 = vpop.f32.mrb[0].mxu0
    %8512 = vmatprep.mubr.bf16.mxu0 0
    %8513 = vmatmul.mubr.bf16.gmra.mrb[0].mxu0 %v8459
    %v8514 = vpop.f32.mrb[0].mxu0
    %v8515 = vadd.f32 0.0, %v8514
    %v8516 = vpop.f32.mrb[0].mxu0
    %v8517 = vpop.f32.mrb[0].mxu0
    %v8518 = vadd.f32 0.0, %v8517
    %v8519 = vpop.f32.mrb[0].mxu0
    %8520 = vmatprep.mubr.bf16.mxu0 0
    %8521 = vmatmul.mubr.bf16.gmra.mrb[0].mxu0 %v8462
    %v8522 = vpop.f32.mrb[0].mxu0
    %v8523 = vadd.f32 0.0, %v8522
    %v8524 = vpop.f32.mrb[0].mxu0
    %v8525 = vpop.f32.mrb[0].mxu0
    %v8526 = vadd.f32 0.0, %v8525
    %v8527 = vpop.f32.mrb[0].mxu0
    %8528 = vdwg.mxu0
    %v8529 = vpack.c.bf16 %v8502, %v8499
    %v8530 = vpack.c.bf16 %v8510, %v8507
    %v8531 = vpack.c.bf16 %v8518, %v8515
    %v8532 = vpack.c.bf16 %v8526, %v8523
    %s8533 = scalar_lea.vmem [#allocation19], 128
    %v8534 = vld [vmem:[%s8533] sm:$0xf]
    %v8535 = vld [vmem:[%s8533 + $0x4] sm:$0xf]
    %v8536 = vld [vmem:[%s8533 + $0x8] sm:$0xf]
    %v8537 = vld [vmem:[%s8533 + $0xc] sm:$0xf]
    %v8542 = vunpack.c.l.b16 %v8534
    %v8543 = vunpack.c.l.b16 %v8535
    %v8544 = vunpack.c.l.b16 %v8536
    %v8545 = vunpack.c.l.b16 %v8537
    %v8546 = vpack.c.b16 %v8543, %v8542
    %v8547 = vpack.c.b16 %v8545, %v8544
    %v8551 = vsel %vm3455, %v8529, 0
    %v8554 = vsel %vm3455, %v8530, 0
    %v8557 = vsel %vm3455, %v8531, 0
    %v8560 = vsel %vm3455, %v8532, 0
    %8562 = vmatprep.subr.bf16.mxu0 0
    %8563 = vmatpush1.bf16.msra.mxu0 %v8546
    %8564 = vmatprep.subr.bf16.mxu0 0
    %8565 = vmatpush1.bf16.msra.mxu0 %v8547
    %8566 = vmatprep.subr.bf16.mxu0 0
    %8567 = vmatpush1.bf16.msra.mxu0 0
    %8568 = vmatprep.subr.bf16.mxu0 0
    %8569 = vmatpush1.bf16.msra.mxu0 0
    %8570 = vmatprep.subr.bf16.mxu0 0
    %8571 = vmatpush1.bf16.msra.mxu0 0
    %8572 = vmatprep.subr.bf16.mxu0 0
    %8573 = vmatpush1.bf16.msra.mxu0 0
    %8574 = vmatprep.subr.bf16.mxu0 0
    %8575 = vmatpush1.bf16.msra.mxu0 0
    %8576 = vmatprep.subr.bf16.mxu0 0
    %8577 = vmatpush1.bf16.msra.mxu0 0
    %8578 = vmatprep.subr.bf16.mxu0 0
    %8579 = vmatpush1.bf16.msra.mxu0 0
    %8580 = vmatprep.subr.bf16.mxu0 0
    %8581 = vmatpush1.bf16.msra.mxu0 0
    %8582 = vmatprep.subr.bf16.mxu0 0
    %8583 = vmatpush1.bf16.msra.mxu0 0
    %8584 = vmatprep.subr.bf16.mxu0 0
    %8585 = vmatpush1.bf16.msra.mxu0 0
    %8586 = vmatprep.subr.bf16.mxu0 0
    %8587 = vmatpush1.bf16.msra.mxu0 0
    %8588 = vmatprep.subr.bf16.mxu0 0
    %8589 = vmatpush1.bf16.msra.mxu0 0
    %8590 = vmatprep.subr.bf16.mxu0 0
    %8591 = vmatpush1.bf16.msra.mxu0 0
    %8592 = vmatprep.subr.bf16.mxu0 0
    %8593 = vmatpush1.bf16.msra.mxu0 0
    %8594 = vmatprep.mubr.bf16.mxu0 0
    %8595 = vmatmul.mubr.bf16.gmra.mrb[0].mxu0 %v8551
    %v8596 = vpop.f32.mrb[0].mxu0
    %v8597 = vadd.f32 0.0, %v8596
    %v8598 = vpop.f32.mrb[0].mxu0
    %v8599 = vpop.f32.mrb[0].mxu0
    %v8600 = vadd.f32 0.0, %v8599
    %v8601 = vpop.f32.mrb[0].mxu0
    %8602 = vmatprep.mubr.bf16.mxu0 0
    %8603 = vmatmul.mubr.bf16.gmra.mrb[0].mxu0 %v8554
    %v8604 = vpop.f32.mrb[0].mxu0
    %v8605 = vadd.f32 0.0, %v8604
    %v8606 = vpop.f32.mrb[0].mxu0
    %v8607 = vpop.f32.mrb[0].mxu0
    %v8608 = vadd.f32 0.0, %v8607
    %v8609 = vpop.f32.mrb[0].mxu0
    %8610 = vmatprep.mubr.bf16.mxu0 0
    %8611 = vmatmul.mubr.bf16.gmra.mrb[0].mxu0 %v8557
    %v8612 = vpop.f32.mrb[0].mxu0
    %v8613 = vadd.f32 0.0, %v8612
    %v8614 = vpop.f32.mrb[0].mxu0
    %v8615 = vpop.f32.mrb[0].mxu0
    %v8616 = vadd.f32 0.0, %v8615
    %v8617 = vpop.f32.mrb[0].mxu0
    %8618 = vmatprep.mubr.bf16.mxu0 0
    %8619 = vmatmul.mubr.bf16.gmra.mrb[0].mxu0 %v8560
    %v8620 = vpop.f32.mrb[0].mxu0
    %v8621 = vadd.f32 0.0, %v8620
    %v8622 = vpop.f32.mrb[0].mxu0
    %v8623 = vpop.f32.mrb[0].mxu0
    %v8624 = vadd.f32 0.0, %v8623
    %v8625 = vpop.f32.mrb[0].mxu0
    %8626 = vdwg.mxu0
    %v8627 = vadd.f32 %v8415, %v8597
    %v8628 = vadd.f32 %v8416, %v8600
    %v8629 = vadd.f32 %v8417, %v8605
    %v8630 = vadd.f32 %v8418, %v8608
    %v8631 = vadd.f32 %v8419, %v8613
    %v8632 = vadd.f32 %v8420, %v8616
    %v8633 = vadd.f32 %v8421, %v8621
    %v8634 = vadd.f32 %v8422, %v8624
    %v8635 = vld [vmem:[#allocation21] sm:$0x1]
    %v8637 = vlaneseq
    %v8638 = vshrl.u32 %v8637, 7
    %v8639 = vsub.s32 0, %v8638
    %v8640 = vrot.slane %v8635, %v8639
    %v8642 = vadd.f32 %v8627, %v8640
    %v8643 = vadd.f32 %v8628, %v8640
    %v8644 = vadd.f32 %v8629, %v8640
    %v8645 = vadd.f32 %v8630, %v8640
    %v8646 = vadd.f32 %v8631, %v8640
    %v8647 = vadd.f32 %v8632, %v8640
    %v8648 = vadd.f32 %v8633, %v8640
    %v8649 = vadd.f32 %v8634, %v8640
    %8650 = vst.msk [vmem:[%s55] sm:$0xff] %vm3455, %v8642
    %8651 = vst.msk [vmem:[%s55 + $0x8] sm:$0xff] %vm3455, %v8643
    %8652 = vst.msk [vmem:[%s55 + $0x10] sm:$0xff] %vm3455, %v8644
    %8653 = vst.msk [vmem:[%s55 + $0x18] sm:$0xff] %vm3455, %v8645
    %8654 = vst.msk [vmem:[%s55 + $0x20] sm:$0xff] %vm3455, %v8646
    %8655 = vst.msk [vmem:[%s55 + $0x28] sm:$0xff] %vm3455, %v8647
    %8656 = vst.msk [vmem:[%s55 + $0x30] sm:$0xff] %vm3455, %v8648
    %8657 = vst.msk [vmem:[%s55 + $0x38] sm:$0xff] %vm3455, %v8649
    %8658 = vst.msk [vmem:[%s57] sm:$0xff] %vm3455, %v6626
    %8659 = vst.msk [vmem:[%s57 + $0x8] sm:$0xff] %vm3455, %v6627
    %vm8660 = vcmask 257024
    %8661 = vst.msk [vmem:[%s59] sm:$0xf] %vm8660, %v5526
    %vm8662 = vcmask 253952
    %8663 = vst.msk [vmem:[%s61] sm:$0x1] %vm8662, %v5526
    // Predicated region
    $region182: #{backbone_with_fpn_forward.1} parent=1 // pred_check
      _
    $region183: #{backbone_with_fpn_forward.1} parent=1 // pred_check_branch
      %8665 = sbr.rel (0) target = $region185
    $region184: #{backbone_with_fpn_forward.1} parent=1 // pred_region
      _
    $region185: #{backbone_with_fpn_forward.1} parent=1 // pred_fallthru
      _
    // Predicated region
    $region186: #{backbone_with_fpn_forward.1} parent=1 // pred_check
      _
    $region187: #{backbone_with_fpn_forward.1} parent=1 // pred_check_branch
      %8667 = sbr.rel (0) target = $region189
    $region188: #{backbone_with_fpn_forward.1} parent=1 // pred_region
      _
    $region189: #{backbone_with_fpn_forward.1} parent=1 // pred_fallthru
      _
    // Predicated region
    $region190: #{backbone_with_fpn_forward.1} parent=1 // pred_check
      _
    $region191: #{backbone_with_fpn_forward.1} parent=1 // pred_check_branch
      %8669 = sbr.rel (0) target = $region193
    $region192: #{backbone_with_fpn_forward.1} parent=1 // pred_region
      _
    $region193: #{backbone_with_fpn_forward.1} parent=1 // pred_fallthru
      _
    // Predicated region
    $region194: #{backbone_with_fpn_forward.1} parent=1 // pred_check
      _
    $region195: #{backbone_with_fpn_forward.1} parent=1 // pred_check_branch
      %8671 = sbr.rel (0) target = $region197
    $region196: #{backbone_with_fpn_forward.1} parent=1 // pred_region
      _
    $region197: #{backbone_with_fpn_forward.1} parent=1 // pred_fallthru
      _
    // Predicated region
    $region198: #{backbone_with_fpn_forward.1} parent=1 // pred_check
      _
    $region199: #{backbone_with_fpn_forward.1} parent=1 // pred_check_branch
      %8673 = sbr.rel (0) target = $region201
    $region200: #{backbone_with_fpn_forward.1} parent=1 // pred_region
      _
    $region201: #{backbone_with_fpn_forward.1} parent=1 // pred_fallthru
      _
    // Predicated region
    $region202: #{backbone_with_fpn_forward.1} parent=1 // pred_check
      _
    $region203: #{backbone_with_fpn_forward.1} parent=1 // pred_check_branch
      %8675 = sbr.rel (0) target = $region205
    $region204: #{backbone_with_fpn_forward.1} parent=1 // pred_region
      _
    $region205: #{backbone_with_fpn_forward.1} parent=1 // pred_fallthru
      _
    // Predicated region
    $region206: #{backbone_with_fpn_forward.1} parent=1 // pred_check
      _
    $region207: #{backbone_with_fpn_forward.1} parent=1 // pred_check_branch
      %8677 = sbr.rel (0) target = $region209
    $region208: #{backbone_with_fpn_forward.1} parent=1 // pred_region
      _
    $region209: #{backbone_with_fpn_forward.1} parent=1 // pred_fallthru
      _
    // Predicated region
    $region210: #{backbone_with_fpn_forward.1} parent=1 // pred_check
      _
    $region211: #{backbone_with_fpn_forward.1} parent=1 // pred_check_branch
      %8679 = sbr.rel (0) target = $region213
    $region212: #{backbone_with_fpn_forward.1} parent=1 // pred_region
      _
    $region213: #{backbone_with_fpn_forward.1} parent=1 // pred_fallthru
      _
    %8680 = vsyncpa [#allocation3], 1
    %8681 = vsyncpa [#allocation5], 1
    %8682 = vsyncpa [#allocation8], 1
    %8683 = vsyncpa [#allocation11], 1
    %8684 = vsyncpa [#allocation14], 1
    %8685 = vsyncpa [#allocation17], 1
    %8686 = vsyncpa [#allocation20], 1
    %8687 = vsyncpa [#allocation23], 1
    %8688 = vsyncpa [#allocation26], 1
    %8689 = vsyncpa [#allocation29], 1

</llo_original>
